<compile_context>
chip_gen: v5e
topology: v5e:2x2
jax: 0.10.0
libtpu: 0.0.40
codegen_flags: <defaults>
</compile_context>

<pallas_src>
import functools
import math

import jax
import jax.numpy as jnp
from jax import lax
from jax.experimental import pallas as pl
from jax.experimental.pallas import tpu as pltpu

FFT_LEN = 512
WIN_LEN = 400
WIN_INC = 100
N_BINS = FFT_LEN // 2 + 1          # 257 (onesided)
N_SUB = 264                        # bins padded to a multiple of 8 (sublane-dense)
EPS = 1e-8
LN10 = math.log(10.0)


def _round_up(x, m):
    return ((x + m - 1) // m) * m


# ----------------------------------------------------------------------------
# Kernel: fused STFT (bf16 MXU matmuls, bins-on-sublanes) + ILD/IPD partial sums.
#   grid   = (batch, split, frame_tile); frame_tile is the reduction axis (last).
#   frames : (B, 4, 512, f_pad) bf16, signals per batch = [tgt_l, tgt_r, out_l, out_r],
#            frames on the last (lane) axis.
#   dft_t  : (528, 512) bf16, rows = [cos bins 0..256 | 0-pad | -sin bins | 0-pad],
#            Hann window folded into the columns.
#   out    : (B, n_split, 2, tile_f) f32 accumulator;
#            row 0 = per-lane sum |ild diff|, row 1 = per-lane sum |ipd diff|.
# ----------------------------------------------------------------------------
def _stft_loss_kernel(frames_ref, dft_ref, out_ref, *, n_inner, n_frames, tile_f):
    t = pl.program_id(2)

    @pl.when(t == 0)
    def _():
        out_ref[...] = jnp.zeros_like(out_ref)

    dft_t = dft_ref[...]                                           # (528, 512) bf16

    # Four per-signal windowed real-DFTs on the MXU: (528,512) x (512,tile_f) -> f32.
    # Bins land on sublanes (257 real of 264), frames on lanes (all real).
    spec = [jnp.dot(dft_t, frames_ref[0, s], preferred_element_type=jnp.float32)
            for s in range(4)]                                     # 4 x (528, tile_f)
    re = [s_[:N_SUB] for s_ in spec]                               # (264, tile_f)
    im = [s_[N_SUB:] for s_ in spec]

    # ---- ILD (dB): one wide log per signal, no divides / reciprocals ----
    c_db = 10.0 / LN10
    lm = [jnp.log(r * r + i * i + EPS) for r, i in zip(re, im)]    # log(|.|^2 + eps)
    ild_abs = c_db * jnp.abs((lm[0] - lm[1]) - (lm[2] - lm[3]))    # (264, tile_f)

    # ---- IPD (rad): angle(L * conj(R)), unwrapped difference ----
    cr_t = re[0] * re[1] + im[0] * im[1]
    ci_t = im[0] * re[1] - re[0] * im[1]
    cr_o = re[2] * re[3] + im[2] * im[3]
    ci_o = im[2] * re[3] - re[2] * im[3]
    ipd_abs = jnp.abs(jnp.arctan2(ci_t, cr_t) - jnp.arctan2(ci_o, cr_o))

    # Reduce over bins (sublanes), mask out padded tail frames (lanes), and do a
    # single accumulator store per step.
    start = (pl.program_id(1) * n_inner + t) * tile_f
    lane = lax.broadcasted_iota(jnp.int32, (1, tile_f), 1)
    valid = (lane + start) < n_frames
    ild_sum = jnp.where(valid, jnp.sum(ild_abs, axis=0, keepdims=True), 0.0)
    ipd_sum = jnp.where(valid, jnp.sum(ipd_abs, axis=0, keepdims=True), 0.0)
    out_ref[...] += jnp.concatenate([ild_sum, ipd_sum], axis=0)[None, None]


def _stft_loss_sums(frames, dft_t, tile_f, n_split, n_frames):
    B, _, _, f_pad = frames.shape
    n_ft = f_pad // tile_f
    n_inner = n_ft // n_split
    kernel = functools.partial(_stft_loss_kernel, n_inner=n_inner,
                               n_frames=n_frames, tile_f=tile_f)
    return pl.pallas_call(
        kernel,
        out_shape=jax.ShapeDtypeStruct((B, n_split, 2, tile_f), jnp.float32),
        grid_spec=pltpu.PrefetchScalarGridSpec(
            num_scalar_prefetch=0,
            grid=(B, n_split, n_inner),
            in_specs=[
                pl.BlockSpec((1, 4, FFT_LEN, tile_f),
                             lambda b, s, t: (b, 0, 0, s * n_inner + t)),
                pl.BlockSpec((2 * N_SUB, FFT_LEN), lambda b, s, t: (0, 0)),
            ],
            out_specs=pl.BlockSpec((1, 1, 2, tile_f),
                                   lambda b, s, t: (b, s, 0, 0)),
        ),
        compiler_params=pltpu.CompilerParams(
            dimension_semantics=("parallel", "parallel", "arbitrary"),
            vmem_limit_bytes=32 * 1024 * 1024),
    )(frames, dft_t)


# ----------------------------------------------------------------------------
# Glue: transposed windowed-DFT matrix + transposed framing.
# ----------------------------------------------------------------------------
def _dft_matrix_t():
    t = jnp.arange(WIN_LEN, dtype=jnp.float32)
    hann = 0.5 - 0.5 * jnp.cos(2.0 * math.pi * t / WIN_LEN)        # periodic hann(400)
    left = (FFT_LEN - WIN_LEN) // 2
    window = jnp.zeros((FFT_LEN,), jnp.float32).at[left:left + WIN_LEN].set(hann)

    k = jnp.arange(N_BINS, dtype=jnp.int32)[:, None]               # bins on rows
    n = jnp.arange(FFT_LEN, dtype=jnp.int32)[None, :]              # time on cols
    phase = (2.0 * math.pi / FFT_LEN) * ((k * n) % FFT_LEN).astype(jnp.float32)
    cos_m = jnp.cos(phase) * window[None, :]                       # window folded in
    sin_m = -jnp.sin(phase) * window[None, :]
    pad = N_SUB - N_BINS
    cos_m = jnp.pad(cos_m, ((0, pad), (0, 0)))
    sin_m = jnp.pad(sin_m, ((0, pad), (0, 0)))
    return jnp.concatenate([cos_m, sin_m], axis=0).astype(jnp.bfloat16)   # (528, 512)


def _frame_t(x, f_pad):
    # x: (N, T) f32 -> (N, FFT_LEN, f_pad) bf16, frames on the LAST (lane) axis.
    # Cast to bf16 before the gather (halves the framed-tensor HBM traffic); the
    # zero tail only feeds padded frames which are masked out inside the kernel.
    # TODO(synk): building frames in-kernel from the raw padded signal (manual
    # make_async_copy of a tile_f*100+412-sample chunk per grid step) would cut
    # the ~5x-redundant framed-tensor HBM traffic entirely; kept host-side here.
    pad = FFT_LEN // 2
    xp = jnp.pad(x.astype(jnp.bfloat16), ((0, 0), (pad, pad)), mode="reflect")
    need = (f_pad - 1) * WIN_INC + FFT_LEN
    if xp.shape[-1] < need:
        xp = jnp.pad(xp, ((0, 0), (0, need - xp.shape[-1])))
    idx = jnp.arange(FFT_LEN)[:, None] + jnp.arange(f_pad)[None, :] * WIN_INC
    return xp[:, idx]                                              # (N, 512, f_pad)


def binaural_loss(model_output, targets, *, ild_weight=0.1, ipd_weight=1.0,
                  stoi_weight=0.0, snr_loss_weight=1.0):
    B, C, T = model_output.shape
    assert C == 2, "expected [B, 2, T] binaural signals"
    assert T > FFT_LEN // 2, "reflect padding (center=True) needs T > fft_len/2"
    model_output = model_output.astype(jnp.float32)
    targets = targets.astype(jnp.float32)

    # ---- spectral terms (fused STFT + ILD/IPD kernel) ----
    n_frames = 1 + T // WIN_INC                       # torch.stft, center=True
    tile_f = min(256, _round_up(n_frames, 128))       # frames on lanes -> 128-multiple
    f_pad = _round_up(n_frames, tile_f)
    n_ft = f_pad // tile_f
    n_split = 2 if (n_ft >= 2 and n_ft % 2 == 0) else 1   # keep both v7x TCs busy

    # signal order per batch element: [tgt_l, tgt_r, out_l, out_r]
    sigs = jnp.stack([targets[:, 0], targets[:, 1],
                      model_output[:, 0], model_output[:, 1]], axis=1)   # (B,4,T)
    frames = _frame_t(sigs.reshape(B * 4, T), f_pad)                     # (4B,512,f_pad)
    frames = frames.reshape(B, 4, FFT_LEN, f_pad)
    dft_t = _dft_matrix_t()                                              # (528,512) bf16

    sums = _stft_loss_sums(frames, dft_t, tile_f, n_split, n_frames)     # (B,ns,2,tile_f)
    denom = float(B * n_frames * N_BINS)
    ild_loss = jnp.sum(sums[:, :, 0, :]) / denom
    ipd_loss = jnp.sum(sums[:, :, 1, :]) / denom

    # ---- SNR term (time domain): trivial memory-bound row reduction; plain XLA
    # already runs it at the HBM roofline, so no Pallas kernel here.
    num = jnp.sum(targets * targets, axis=-1)                            # (B, 2)
    den = jnp.sum((targets - model_output) ** 2, axis=-1)                # (B, 2)
    snr = (10.0 / LN10) * jnp.log(num / (den + EPS) + EPS)               # dB
    snr_loss_lr = -(jnp.mean(snr[:, 0]) + jnp.mean(snr[:, 1])) * 0.5

    # TODO(synk): NegSTOILoss (octave-band filterbank + short-time correlation)
    # has no clean Pallas equivalent; stoi_weight defaults to 0 so it is skipped.
    loss = (snr_loss_weight * snr_loss_lr
            + ild_weight * ild_loss
            + ipd_weight * ipd_loss)
    return loss


if __name__ == "__main__":
    key = jax.random.PRNGKey(0)
    k1, k2 = jax.random.split(key)
    B, C, T = 2, 2, 1600  # 0.1 s at 16 kHz; small but consistent with win_len=400
    targets = jax.random.normal(k1, (B, C, T), dtype=jnp.float32)
    model_output = targets + 0.1 * jax.random.normal(k2, (B, C, T), dtype=jnp.float32)

    loss = jax.jit(binaural_loss)(model_output, targets)
    jax.block_until_ready(loss)
    assert loss.shape == () and bool(jnp.isfinite(loss))
    print("KERNEL_OK")
</pallas_src>

<mosaic_0001>
module attributes {stable_mosaic.version = 11 : i64} {
  func.func @_stft_loss_kernel(%arg0: i32, %arg1: i32, %arg2: i32, %arg3: memref<1x4x512x128xbf16, #tpu.memory_space<vmem>>, %arg4: memref<528x512xbf16, #tpu.memory_space<vmem>>, %arg5: memref<1x1x2x128xf32, #tpu.memory_space<vmem>>) attributes {dimension_semantics = [#tpu.dimension_semantics<parallel>, #tpu.dimension_semantics<parallel>, #tpu.dimension_semantics<arbitrary>], iteration_bounds = array<i64: 2, 1, 1>, scalar_prefetch = 0 : i64, scratch_operands = 0 : i64, tpu.core_type = #tpu.core_type<tc>, window_params = [{transform_indices = @transform_0, window_bounds = array<i64: 1, 4, 512, 128>}, {pipeline_mode = #tpu.pipeline_mode<synchronous>, transform_indices = @transform_1, window_bounds = array<i64: 528, 512>}, {transform_indices = @transform_2, window_bounds = array<i64: 1, 1, 2, 128>}]} {
    %c0_i32 = arith.constant 0 : i32
    %0 = arith.cmpi eq, %arg2, %c0_i32 : i32
    %1 = arith.extui %0 : i1 to i32
    %c0_i32_0 = arith.constant 0 : i32
    %2 = arith.cmpi ne, %1, %c0_i32_0 : i32
    scf.if %2 {
      %cst_35 = arith.constant 0.000000e+00 : f32
      %91 = vector.broadcast %cst_35 : f32 to vector<1x1x2x128xf32>
      %c0_36 = arith.constant 0 : index
      %c0_37 = arith.constant 0 : index
      %c0_38 = arith.constant 0 : index
      %c0_39 = arith.constant 0 : index
      %92 = vector.load %arg5[%c0_36, %c0_37, %c0_38, %c0_39] : memref<1x1x2x128xf32, #tpu.memory_space<vmem>>, vector<1x1x2x128xf32>
      tpu.vector_store %arg5[%c0_36, %c0_37, %c0_38, %c0_39], %91 {strides = array<i32>} : memref<1x1x2x128xf32, #tpu.memory_space<vmem>>, vector<1x1x2x128xf32>,
    } else {
    }
    %c0 = arith.constant 0 : index
    %c0_1 = arith.constant 0 : index
    %3 = vector.load %arg4[%c0, %c0_1] : memref<528x512xbf16, #tpu.memory_space<vmem>>, vector<528x512xbf16>
    %c0_2 = arith.constant 0 : index
    %c0_3 = arith.constant 0 : index
    %c0_4 = arith.constant 0 : index
    %c0_5 = arith.constant 0 : index
    %4 = vector.load %arg3[%c0_2, %c0_3, %c0_4, %c0_5] : memref<1x4x512x128xbf16, #tpu.memory_space<vmem>>, vector<1x1x512x128xbf16>
    %5 = vector.shape_cast %4 : vector<1x1x512x128xbf16> to vector<512x128xbf16>
    %cst = arith.constant dense<0.000000e+00> : vector<528x128xf32>
    %6 = tpu.matmul %3, %5, %cst {dimension_numbers = #tpu.dot_dimension_numbers<[1], [0], [0], [1], [0, 0, 1, 1], [], []>} : vector<528x512xbf16>, vector<512x128xbf16>, vector<528x128xf32> -> vector<528x128xf32>
    %c0_6 = arith.constant 0 : index
    %c1 = arith.constant 1 : index
    %c0_7 = arith.constant 0 : index
    %c0_8 = arith.constant 0 : index
    %7 = vector.load %arg3[%c0_6, %c1, %c0_7, %c0_8] : memref<1x4x512x128xbf16, #tpu.memory_space<vmem>>, vector<1x1x512x128xbf16>
    %8 = vector.shape_cast %7 : vector<1x1x512x128xbf16> to vector<512x128xbf16>
    %cst_9 = arith.constant dense<0.000000e+00> : vector<528x128xf32>
    %9 = tpu.matmul %3, %8, %cst_9 {dimension_numbers = #tpu.dot_dimension_numbers<[1], [0], [0], [1], [0, 0, 1, 1], [], []>} : vector<528x512xbf16>, vector<512x128xbf16>, vector<528x128xf32> -> vector<528x128xf32>
    %c0_10 = arith.constant 0 : index
    %c2 = arith.constant 2 : index
    %c0_11 = arith.constant 0 : index
    %c0_12 = arith.constant 0 : index
    %10 = vector.load %arg3[%c0_10, %c2, %c0_11, %c0_12] : memref<1x4x512x128xbf16, #tpu.memory_space<vmem>>, vector<1x1x512x128xbf16>
    %11 = vector.shape_cast %10 : vector<1x1x512x128xbf16> to vector<512x128xbf16>
    %cst_13 = arith.constant dense<0.000000e+00> : vector<528x128xf32>
    %12 = tpu.matmul %3, %11, %cst_13 {dimension_numbers = #tpu.dot_dimension_numbers<[1], [0], [0], [1], [0, 0, 1, 1], [], []>} : vector<528x512xbf16>, vector<512x128xbf16>, vector<528x128xf32> -> vector<528x128xf32>
    %c0_14 = arith.constant 0 : index
    %c3 = arith.constant 3 : index
    %c0_15 = arith.constant 0 : index
    %c0_16 = arith.constant 0 : index
    %13 = vector.load %arg3[%c0_14, %c3, %c0_15, %c0_16] : memref<1x4x512x128xbf16, #tpu.memory_space<vmem>>, vector<1x1x512x128xbf16>
    %14 = vector.shape_cast %13 : vector<1x1x512x128xbf16> to vector<512x128xbf16>
    %cst_17 = arith.constant dense<0.000000e+00> : vector<528x128xf32>
    %15 = tpu.matmul %3, %14, %cst_17 {dimension_numbers = #tpu.dot_dimension_numbers<[1], [0], [0], [1], [0, 0, 1, 1], [], []>} : vector<528x512xbf16>, vector<512x128xbf16>, vector<528x128xf32> -> vector<528x128xf32>
    %16 = vector.extract_strided_slice %6 {offsets = [0, 0], sizes = [264, 128], strides = [1, 1]} : vector<528x128xf32> to vector<264x128xf32>
    %17 = vector.extract_strided_slice %9 {offsets = [0, 0], sizes = [264, 128], strides = [1, 1]} : vector<528x128xf32> to vector<264x128xf32>
    %18 = vector.extract_strided_slice %12 {offsets = [0, 0], sizes = [264, 128], strides = [1, 1]} : vector<528x128xf32> to vector<264x128xf32>
    %19 = vector.extract_strided_slice %15 {offsets = [0, 0], sizes = [264, 128], strides = [1, 1]} : vector<528x128xf32> to vector<264x128xf32>
    %20 = vector.extract_strided_slice %6 {offsets = [264, 0], sizes = [264, 128], strides = [1, 1]} : vector<528x128xf32> to vector<264x128xf32>
    %21 = vector.extract_strided_slice %9 {offsets = [264, 0], sizes = [264, 128], strides = [1, 1]} : vector<528x128xf32> to vector<264x128xf32>
    %22 = vector.extract_strided_slice %12 {offsets = [264, 0], sizes = [264, 128], strides = [1, 1]} : vector<528x128xf32> to vector<264x128xf32>
    %23 = vector.extract_strided_slice %15 {offsets = [264, 0], sizes = [264, 128], strides = [1, 1]} : vector<528x128xf32> to vector<264x128xf32>
    %24 = arith.mulf %16, %16 : vector<264x128xf32>
    %25 = arith.mulf %20, %20 : vector<264x128xf32>
    %26 = arith.addf %24, %25 : vector<264x128xf32>
    %cst_18 = arith.constant 9.99999993E-9 : f32
    %27 = vector.broadcast %cst_18 : f32 to vector<264x128xf32>
    %28 = arith.addf %26, %27 : vector<264x128xf32>
    %29 = math.log %28 : vector<264x128xf32>
    %30 = arith.mulf %17, %17 : vector<264x128xf32>
    %31 = arith.mulf %21, %21 : vector<264x128xf32>
    %32 = arith.addf %30, %31 : vector<264x128xf32>
    %cst_19 = arith.constant 9.99999993E-9 : f32
    %33 = vector.broadcast %cst_19 : f32 to vector<264x128xf32>
    %34 = arith.addf %32, %33 : vector<264x128xf32>
    %35 = math.log %34 : vector<264x128xf32>
    %36 = arith.mulf %18, %18 : vector<264x128xf32>
    %37 = arith.mulf %22, %22 : vector<264x128xf32>
    %38 = arith.addf %36, %37 : vector<264x128xf32>
    %cst_20 = arith.constant 9.99999993E-9 : f32
    %39 = vector.broadcast %cst_20 : f32 to vector<264x128xf32>
    %40 = arith.addf %38, %39 : vector<264x128xf32>
    %41 = math.log %40 : vector<264x128xf32>
    %42 = arith.mulf %19, %19 : vector<264x128xf32>
    %43 = arith.mulf %23, %23 : vector<264x128xf32>
    %44 = arith.addf %42, %43 : vector<264x128xf32>
    %cst_21 = arith.constant 9.99999993E-9 : f32
    %45 = vector.broadcast %cst_21 : f32 to vector<264x128xf32>
    %46 = arith.addf %44, %45 : vector<264x128xf32>
    %47 = math.log %46 : vector<264x128xf32>
    %48 = arith.subf %29, %35 : vector<264x128xf32>
    %49 = arith.subf %41, %47 : vector<264x128xf32>
    %50 = arith.subf %48, %49 : vector<264x128xf32>
    %51 = math.absf %50 : vector<264x128xf32>
    %cst_22 = arith.constant 4.34294462 : f32
    %52 = vector.broadcast %cst_22 : f32 to vector<264x128xf32>
    %53 = arith.mulf %52, %51 : vector<264x128xf32>
    %54 = arith.mulf %16, %17 : vector<264x128xf32>
    %55 = arith.mulf %20, %21 : vector<264x128xf32>
    %56 = arith.addf %54, %55 : vector<264x128xf32>
    %57 = arith.mulf %20, %17 : vector<264x128xf32>
    %58 = arith.mulf %16, %21 : vector<264x128xf32>
    %59 = arith.subf %57, %58 : vector<264x128xf32>
    %60 = arith.mulf %18, %19 : vector<264x128xf32>
    %61 = arith.mulf %22, %23 : vector<264x128xf32>
    %62 = arith.addf %60, %61 : vector<264x128xf32>
    %63 = arith.mulf %22, %19 : vector<264x128xf32>
    %64 = arith.mulf %18, %23 : vector<264x128xf32>
    %65 = arith.subf %63, %64 : vector<264x128xf32>
    %66 = math.atan2 %59, %56 : vector<264x128xf32>
    %67 = math.atan2 %65, %62 : vector<264x128xf32>
    %68 = arith.subf %66, %67 : vector<264x128xf32>
    %69 = math.absf %68 : vector<264x128xf32>
    %c1_i32 = arith.constant 1 : i32
    %70 = arith.muli %arg1, %c1_i32 : i32
    %71 = arith.addi %70, %arg2 : i32
    %c128_i32 = arith.constant 128 : i32
    %72 = arith.muli %71, %c128_i32 : i32
    %73 = tpu.iota {dimensions = array<i32: 1>} : vector<1x128xi32>
    %74 = vector.broadcast %72 : i32 to vector<1x128xi32>
    %75 = arith.addi %73, %74 : vector<1x128xi32>
    %c17_i32 = arith.constant 17 : i32
    %76 = vector.broadcast %c17_i32 : i32 to vector<1x128xi32>
    %77 = arith.cmpi slt, %75, %76 : vector<1x128xi32>
    %cst_23 = arith.constant dense<0.000000e+00> : vector<128xf32>
    %78 = vector.multi_reduction <add>, %53, %cst_23 [0] : vector<264x128xf32> to vector<128xf32>
    %79 = vector.shape_cast %78 : vector<128xf32> to vector<1x128xf32>
    %cst_24 = arith.constant 0.000000e+00 : f32
    %80 = vector.broadcast %cst_24 : f32 to vector<1x128xf32>
    %81 = arith.select %77, %79, %80 : vector<1x128xi1>, vector<1x128xf32>
    %cst_25 = arith.constant dense<0.000000e+00> : vector<128xf32>
    %82 = vector.multi_reduction <add>, %69, %cst_25 [0] : vector<264x128xf32> to vector<128xf32>
    %83 = vector.shape_cast %82 : vector<128xf32> to vector<1x128xf32>
    %cst_26 = arith.constant 0.000000e+00 : f32
    %84 = vector.broadcast %cst_26 : f32 to vector<1x128xf32>
    %85 = arith.select %77, %83, %84 : vector<1x128xi1>, vector<1x128xf32>
    %c0_27 = arith.constant 0 : index
    %c0_28 = arith.constant 0 : index
    %c0_29 = arith.constant 0 : index
    %c0_30 = arith.constant 0 : index
    %86 = vector.load %arg5[%c0_27, %c0_28, %c0_29, %c0_30] : memref<1x1x2x128xf32, #tpu.memory_space<vmem>>, vector<1x1x2x128xf32>
    %87 = tpu.concatenate %81, %85 in 0 : vector<1x128xf32>, vector<1x128xf32> -> vector<2x128xf32>
    %88 = vector.shape_cast %87 : vector<2x128xf32> to vector<1x1x2x128xf32>
    %89 = arith.addf %86, %88 : vector<1x1x2x128xf32>
    %c0_31 = arith.constant 0 : index
    %c0_32 = arith.constant 0 : index
    %c0_33 = arith.constant 0 : index
    %c0_34 = arith.constant 0 : index
    %90 = vector.load %arg5[%c0_31, %c0_32, %c0_33, %c0_34] : memref<1x1x2x128xf32, #tpu.memory_space<vmem>>, vector<1x1x2x128xf32>
    tpu.vector_store %arg5[%c0_31, %c0_32, %c0_33, %c0_34], %89 {strides = array<i32>} : memref<1x1x2x128xf32, #tpu.memory_space<vmem>>, vector<1x1x2x128xf32>,
    return
  }
  func.func @transform_0(%arg0: i32, %arg1: i32, %arg2: i32) -> (i32, i32, i32, i32) {
    %c1_i32 = arith.constant 1 : i32
    %0 = arith.muli %arg1, %c1_i32 : i32
    %1 = arith.addi %0, %arg2 : i32
    %c0_i32 = arith.constant 0 : i32
    %c0_i32_0 = arith.constant 0 : i32
    %c0_i32_1 = arith.constant 0 : i32
    return %arg0, %c0_i32, %c0_i32_0, %1 : i32, i32, i32, i32
  }
  func.func @transform_1(%arg0: i32, %arg1: i32, %arg2: i32) -> (i32, i32) {
    %c0_i32 = arith.constant 0 : i32
    %c0_i32_0 = arith.constant 0 : i32
    %c0_i32_1 = arith.constant 0 : i32
    return %c0_i32, %c0_i32_0 : i32, i32
  }
  func.func @transform_2(%arg0: i32, %arg1: i32, %arg2: i32) -> (i32, i32, i32, i32) {
    %c0_i32 = arith.constant 0 : i32
    %c0_i32_0 = arith.constant 0 : i32
    %c0_i32_1 = arith.constant 0 : i32
    return %arg0, %arg1, %c0_i32, %c0_i32_0 : i32, i32, i32, i32
  }
}

</mosaic_0001>

<llo_original>
// kernel: binaural_loss.1
$region0: #{binaural_loss.1}
  #allocation0 [shape = 'u32[]', space=smem, size = 0x4, offset = 0x4, fixed_abs, tag = 'smem constant byte address 0x4 - core index']
  #allocation1 [shape = 'u32[72,128]{1,0:T(1,128)}', space=vmem, size = 0x9000, scoped, tag = 'internal scratch']
  %s0 = inlined_call_operand.vmem [shape: bf16[2,4,512,128], index: 0, kind: input, shape index: {}]
  %s1 = inlined_call_operand.vmem [shape: bf16[528,512], index: 1, kind: input, shape index: {}]
  %s2 = inlined_call_operand.vmem [shape: f32[2,1,2,128], index: 2, kind: output, shape index: {}]
  %s3 = sld [smem:[#allocation0]]
  $region45: #{binaural_loss.1} parent=0
    _
  %s5 = ssub.s32 1, %s3
  %s6 = scalar_select 0, %s5, %s3
  loop: start=0, step=1, limit=4
  $region2: #{binaural_loss.1} parent=0 // loop_pre_header
    _
  $region3: #{binaural_loss.1} parent=0 // loop_header
    %s8 = sphi 0, %s12
    %p9 = scmp.ge.s32.totalorder %s8, 4
    %s15 = sphi 0, %s34
    %s16 = sphi 0, %s30
    %s17 = sphi 0, %s26
    %s18 = sphi 0, %s15
    %s19 = sphi 0, %s16
    %s20 = sphi 0, %s17
    %s21 = sphi 0, %s18
    %s22 = sphi 0, %s19
    %s23 = sphi 0, %s20
    %s41 = sphi 0, %s43
    %s44 = sphi 0, %s41
    %s45 = sphi 0, %s44
    %s61 = sphi 0, %s45
    %s65 = sphi 0, %s65
    %s67 = sphi 0, %s65
    %s68 = sphi 0, %s67
    %s82 = sphi 0, %s68
    %s90 = sphi 0, %s92
    %s93 = sphi 0, %s90
    %s94 = sphi 0, %s93
    %s110 = sphi 0, %s94
  $region4: #{binaural_loss.1} parent=0 // loop_header_branch
    %11 = sbr.rel (%p9) target = $region8
  $region5: #{binaural_loss.1} parent=0 // loop_body
    %s13 = ssub.s32 %s8, 1
    %s14 = ssub.s32 %s8, 2
    %s24 = sadd.s32 1, %s17
    %p25 = scmp.ge.s32.totalorder %s24, 1
    %s26 = scalar_select %p25, 0, %s24
    %s27 = sadd.s32 1, %s16
    %s28 = scalar_select %p25, %s27, %s16
    %p29 = scmp.ge.s32.totalorder %s28, 1
    %s30 = scalar_select %p29, 0, %s28
    %s31 = sadd.s32 1, %s15
    %s32 = scalar_select %p29, %s31, %s15
    %p33 = scmp.ge.s32.totalorder %s32, 2
    %s34 = scalar_select %p33, 0, %s32
    %s35 = sadd.s32 %s16, %s17
    %s36 = sadd.s32 %s30, %s26
    %s37 = ssub.s32 %s15, %s34
    %s38 = ssub.s32 %s35, %s36
    %s39 = sor.u32 %s37, %s38
    %p40 = scmp.eq.s32.totalorder %s39, 0
    %s42 = sadd.s32 %s41, 1
    %s43 = scalar_select %p40, %s41, %s42
    %p46 = pneg %p40
    %p47 = scmp.eq.s32.totalorder %s8, 1
    %p48 = por %p46, %p47
    %p49 = scmp.ne.s32.totalorder %s41, %s44
    %p50 = scmp.eq.s32.totalorder %s8, 0
    %p51 = por %p49, %p50
    %p52 = scmp.ne.s32.totalorder %s41, %s44
    %p53 = scmp.eq.s32.totalorder %s13, 1
    %p54 = por %p52, %p53
    %p55 = scmp.ne.s32.totalorder %s44, %s45
    %p56 = scmp.eq.s32.totalorder %s13, 0
    %p57 = por %p55, %p56
    %p58 = scmp.ne.s32.totalorder %s44, %s45
    %p59 = scmp.eq.s32.totalorder %s14, 1
    %p60 = por %p58, %p59
    %p62 = scmp.ne.s32.totalorder %s45, %s61
    %p63 = scmp.eq.s32.totalorder %s14, 0
    %p64 = por %p62, %p63
    %s66 = sadd.s32 %s65, 1
    %p69 = scmp.eq.s32.totalorder %s8, 1
    %p70 = scmp.ne.s32.totalorder %s65, %s67
    %p71 = scmp.eq.s32.totalorder %s8, 0
    %p72 = por %p70, %p71
    %p73 = scmp.ne.s32.totalorder %s65, %s67
    %p74 = scmp.eq.s32.totalorder %s13, 1
    %p75 = por %p73, %p74
    %p76 = scmp.ne.s32.totalorder %s67, %s68
    %p77 = scmp.eq.s32.totalorder %s13, 0
    %p78 = por %p76, %p77
    %p79 = scmp.ne.s32.totalorder %s67, %s68
    %p80 = scmp.eq.s32.totalorder %s14, 1
    %p81 = por %p79, %p80
    %p83 = scmp.ne.s32.totalorder %s68, %s82
    %p84 = scmp.eq.s32.totalorder %s14, 0
    %p85 = por %p83, %p84
    %s86 = ssub.s32 %s15, %s34
    %s87 = ssub.s32 %s16, %s30
    %s88 = sor.u32 %s86, %s87
    %p89 = scmp.eq.s32.totalorder %s88, 0
    %s91 = sadd.s32 %s90, 1
    %s92 = scalar_select %p89, %s90, %s91
    %p95 = pneg %p89
    %p96 = scmp.eq.s32.totalorder %s8, 1
    %p97 = por %p95, %p96
    %p98 = scmp.ne.s32.totalorder %s90, %s93
    %p99 = scmp.eq.s32.totalorder %s8, 0
    %p100 = por %p98, %p99
    %p101 = scmp.ne.s32.totalorder %s90, %s93
    %p102 = scmp.eq.s32.totalorder %s13, 1
    %p103 = por %p101, %p102
    %p104 = scmp.ne.s32.totalorder %s93, %s94
    %p105 = scmp.eq.s32.totalorder %s13, 0
    %p106 = por %p104, %p105
    %p107 = scmp.ne.s32.totalorder %s93, %s94
    %p108 = scmp.eq.s32.totalorder %s14, 1
    %p109 = por %p107, %p108
    %p111 = scmp.ne.s32.totalorder %s94, %s110
    %p112 = scmp.eq.s32.totalorder %s14, 0
    %p113 = por %p111, %p112
    %p114 = scmp.le.s32.totalorder 1, %s8
    %p115 = scmp.lt.s32.totalorder %s8, 3
    %p116 = pnand %p114, %p115
    %p117 = pneg %p116
    // Predicated region
    $region9: #{binaural_loss.1} parent=5 // pred_check
      _
    $region10: #{binaural_loss.1} parent=5 // pred_check_branch
      %119 = sbr.rel (%p116) target = $region12
    $region11: #{binaural_loss.1} parent=5 // pred_region
      %s120 = ssub.s32 %s8, 1
      // Predicated region
      $region13: #{binaural_loss.1} parent=11 // pred_check
        %p121 = pneg %p78
      $region14: #{binaural_loss.1} parent=11 // pred_check_branch
        %123 = sbr.rel (%p121) target = $region16
      $region15: #{binaural_loss.1} parent=11 // pred_region
        _
      $region16: #{binaural_loss.1} parent=11 // pred_fallthru
        _
    $region12: #{binaural_loss.1} parent=5 // pred_fallthru
      _
    %p124 = scmp.lt.s32.totalorder %s8, 2
    // Predicated region
    $region17: #{binaural_loss.1} parent=5 // pred_check
      %p125 = pneg %p124
    $region18: #{binaural_loss.1} parent=5 // pred_check_branch
      %127 = sbr.rel (%p125) target = $region20
    $region19: #{binaural_loss.1} parent=5 // pred_region
      // Predicated region
      $region21: #{binaural_loss.1} parent=19 // pred_check
        %p128 = pneg %p51
      $region22: #{binaural_loss.1} parent=19 // pred_check_branch
        %130 = sbr.rel (%p128) target = $region24
      $region23: #{binaural_loss.1} parent=19 // pred_region
        %s131 = sadd.s32 %s16, %s17
        %p132 = scmp.lt.s32.totalorder %s15, 1
        %s133 = scalar_select %p132, %s15, 1
        %p134 = scmp.lt.s32.totalorder %s131, 0
        %s135 = scalar_select %p134, %s131, 0
        %s136 = smul.addr %s133, 256
        %s137 = sadd.s32 %s135, %s136
        %s138 = smul.addr %s137, 4
        %s139 = scalar_lea.vmem %s0, %s138
        %s140 = sadd.s32 %s16, %s17
      $region24: #{binaural_loss.1} parent=19 // pred_fallthru
        _
    $region20: #{binaural_loss.1} parent=5 // pred_fallthru
      _
    %p141 = scmp.le.s32.totalorder 1, %s8
    %p142 = scmp.lt.s32.totalorder %s8, 3
    %p143 = pnand %p141, %p142
    %p144 = pneg %p143
    // Predicated region
    $region25: #{binaural_loss.1} parent=5 // pred_check
      _
    $region26: #{binaural_loss.1} parent=5 // pred_check_branch
      %146 = sbr.rel (%p143) target = $region28
    $region27: #{binaural_loss.1} parent=5 // pred_region
      %s147 = ssub.s32 %s8, 1
      %s148 = sadd.s32 %s19, %s20
      %p149 = scmp.lt.s32.totalorder %s18, 1
      %s150 = scalar_select %p149, %s18, 1
      %p151 = scmp.lt.s32.totalorder %s148, 0
      %s152 = scalar_select %p151, %s148, 0
      %s153 = smul.addr %s150, 256
      %s154 = sadd.s32 %s152, %s153
      %s155 = smul.addr %s154, 4
      %s156 = scalar_lea.vmem %s0, %s155
      %p157 = pneg %p57
      %p158 = pneg %p54
      %p159 = pneg %p78
      %p160 = pneg %p75
      %p161 = pneg %p106
      %p162 = pneg %p103
      %p163 = scmp.lt.s32.totalorder %s18, 1
      %s164 = scalar_select %p163, %s18, 1
      %p165 = scmp.lt.s32.totalorder %s19, 0
      %s166 = scalar_select %p165, %s19, 0
      %s167 = sadd.s32 %s166, %s164
      %s168 = smul.addr %s167, 2
      %s169 = scalar_lea.vmem %s2, %s168
      %s170 = sadd.s32 %s19, %s20
      %p171 = scmp.lt.s32.totalorder %s18, 1
      %s172 = scalar_select %p171, %s18, 1
      %p173 = scmp.lt.s32.totalorder %s170, 0
      %s174 = scalar_select %p173, %s170, 0
      %s175 = smul.addr %s172, 256
      %s176 = sadd.s32 %s174, %s175
      %s177 = smul.addr %s176, 4
      %s178 = scalar_lea.vmem %s0, %s177
      %s179 = sadd.s32 %s19, %s20
      %p180 = scmp.lt.s32.totalorder %s18, 1
      %s181 = scalar_select %p180, %s18, 1
      %p182 = scmp.lt.s32.totalorder %s19, 0
      %s183 = scalar_select %p182, %s19, 0
      %s184 = sadd.s32 %s183, %s181
      %s185 = smul.addr %s184, 2
      %s186 = scalar_lea.vmem %s2, %s185
      %p187 = scmp.eq.s32.totalorder %s20, 0
      // Predicated region
      $region29: #{binaural_loss.1} parent=27 // pred_check
        %p188 = pneg %p187
      $region30: #{binaural_loss.1} parent=27 // pred_check_branch
        %190 = sbr.rel (%p188) target = $region32
      $region31: #{binaural_loss.1} parent=27 // pred_region
        %191 = vst [vmem:[%s186] sm:$0x3] 0.0
      $region32: #{binaural_loss.1} parent=27 // pred_fallthru
        _
      %v192 = vld [vmem:[%s1] sm:$0xff]
      %v193 = vld [vmem:[%s1 + $0x8] sm:$0xff]
      %v194 = vld [vmem:[%s1 + $0x10] sm:$0xff]
      %v195 = vld [vmem:[%s1 + $0x18] sm:$0xff]
      %v196 = vld [vmem:[%s1 + $0x20] sm:$0xff]
      %v197 = vld [vmem:[%s1 + $0x28] sm:$0xff]
      %v198 = vld [vmem:[%s1 + $0x30] sm:$0xff]
      %v199 = vld [vmem:[%s1 + $0x38] sm:$0xff]
      %v200 = vld [vmem:[%s1 + $0x40] sm:$0xff]
      %v201 = vld [vmem:[%s1 + $0x48] sm:$0xff]
      %v202 = vld [vmem:[%s1 + $0x50] sm:$0xff]
      %v203 = vld [vmem:[%s1 + $0x58] sm:$0xff]
      %v204 = vld [vmem:[%s1 + $0x60] sm:$0xff]
      %v205 = vld [vmem:[%s1 + $0x68] sm:$0xff]
      %v206 = vld [vmem:[%s1 + $0x70] sm:$0xff]
      %v207 = vld [vmem:[%s1 + $0x78] sm:$0xff]
      %v208 = vld [vmem:[%s1 + $0x80] sm:$0xff]
      %v209 = vld [vmem:[%s1 + $0x88] sm:$0xff]
      %v210 = vld [vmem:[%s1 + $0x90] sm:$0xff]
      %v211 = vld [vmem:[%s1 + $0x98] sm:$0xff]
      %v212 = vld [vmem:[%s1 + $0xa0] sm:$0xff]
      %v213 = vld [vmem:[%s1 + $0xa8] sm:$0xff]
      %v214 = vld [vmem:[%s1 + $0xb0] sm:$0xff]
      %v215 = vld [vmem:[%s1 + $0xb8] sm:$0xff]
      %v216 = vld [vmem:[%s1 + $0xc0] sm:$0xff]
      %v217 = vld [vmem:[%s1 + $0xc8] sm:$0xff]
      %v218 = vld [vmem:[%s1 + $0xd0] sm:$0xff]
      %v219 = vld [vmem:[%s1 + $0xd8] sm:$0xff]
      %v220 = vld [vmem:[%s1 + $0xe0] sm:$0xff]
      %v221 = vld [vmem:[%s1 + $0xe8] sm:$0xff]
      %v222 = vld [vmem:[%s1 + $0xf0] sm:$0xff]
      %v223 = vld [vmem:[%s1 + $0xf8] sm:$0xff]
      %v224 = vld [vmem:[%s1 + $0x100] sm:$0xff]
      %v225 = vld [vmem:[%s1 + $0x108] sm:$0xff]
      %v226 = vld [vmem:[%s1 + $0x110] sm:$0xff]
      %v227 = vld [vmem:[%s1 + $0x118] sm:$0xff]
      %v228 = vld [vmem:[%s1 + $0x120] sm:$0xff]
      %v229 = vld [vmem:[%s1 + $0x128] sm:$0xff]
      %v230 = vld [vmem:[%s1 + $0x130] sm:$0xff]
      %v231 = vld [vmem:[%s1 + $0x138] sm:$0xff]
      %v232 = vld [vmem:[%s1 + $0x140] sm:$0xff]
      %v233 = vld [vmem:[%s1 + $0x148] sm:$0xff]
      %v234 = vld [vmem:[%s1 + $0x150] sm:$0xff]
      %v235 = vld [vmem:[%s1 + $0x158] sm:$0xff]
      %v236 = vld [vmem:[%s1 + $0x160] sm:$0xff]
      %v237 = vld [vmem:[%s1 + $0x168] sm:$0xff]
      %v238 = vld [vmem:[%s1 + $0x170] sm:$0xff]
      %v239 = vld [vmem:[%s1 + $0x178] sm:$0xff]
      %v240 = vld [vmem:[%s1 + $0x180] sm:$0xff]
      %v241 = vld [vmem:[%s1 + $0x188] sm:$0xff]
      %v242 = vld [vmem:[%s1 + $0x190] sm:$0xff]
      %v243 = vld [vmem:[%s1 + $0x198] sm:$0xff]
      %v244 = vld [vmem:[%s1 + $0x1a0] sm:$0xff]
      %v245 = vld [vmem:[%s1 + $0x1a8] sm:$0xff]
      %v246 = vld [vmem:[%s1 + $0x1b0] sm:$0xff]
      %v247 = vld [vmem:[%s1 + $0x1b8] sm:$0xff]
      %v248 = vld [vmem:[%s1 + $0x1c0] sm:$0xff]
      %v249 = vld [vmem:[%s1 + $0x1c8] sm:$0xff]
      %v250 = vld [vmem:[%s1 + $0x1d0] sm:$0xff]
      %v251 = vld [vmem:[%s1 + $0x1d8] sm:$0xff]
      %v252 = vld [vmem:[%s1 + $0x1e0] sm:$0xff]
      %v253 = vld [vmem:[%s1 + $0x1e8] sm:$0xff]
      %v254 = vld [vmem:[%s1 + $0x1f0] sm:$0xff]
      %v255 = vld [vmem:[%s1 + $0x1f8] sm:$0xff]
      %v256 = vld [vmem:[%s1 + $0x200] sm:$0xff]
      %v257 = vld [vmem:[%s1 + $0x208] sm:$0xff]
      %v258 = vld [vmem:[%s1 + $0x210] sm:$0xff]
      %v259 = vld [vmem:[%s1 + $0x218] sm:$0xff]
      %v260 = vld [vmem:[%s1 + $0x220] sm:$0xff]
      %v261 = vld [vmem:[%s1 + $0x228] sm:$0xff]
      %v262 = vld [vmem:[%s1 + $0x230] sm:$0xff]
      %v263 = vld [vmem:[%s1 + $0x238] sm:$0xff]
      %v264 = vld [vmem:[%s1 + $0x240] sm:$0xff]
      %v265 = vld [vmem:[%s1 + $0x248] sm:$0xff]
      %v266 = vld [vmem:[%s1 + $0x250] sm:$0xff]
      %v267 = vld [vmem:[%s1 + $0x258] sm:$0xff]
      %v268 = vld [vmem:[%s1 + $0x260] sm:$0xff]
      %v269 = vld [vmem:[%s1 + $0x268] sm:$0xff]
      %v270 = vld [vmem:[%s1 + $0x270] sm:$0xff]
      %v271 = vld [vmem:[%s1 + $0x278] sm:$0xff]
      %v272 = vld [vmem:[%s1 + $0x280] sm:$0xff]
      %v273 = vld [vmem:[%s1 + $0x288] sm:$0xff]
      %v274 = vld [vmem:[%s1 + $0x290] sm:$0xff]
      %v275 = vld [vmem:[%s1 + $0x298] sm:$0xff]
      %v276 = vld [vmem:[%s1 + $0x2a0] sm:$0xff]
      %v277 = vld [vmem:[%s1 + $0x2a8] sm:$0xff]
      %v278 = vld [vmem:[%s1 + $0x2b0] sm:$0xff]
      %v279 = vld [vmem:[%s1 + $0x2b8] sm:$0xff]
      %v280 = vld [vmem:[%s1 + $0x2c0] sm:$0xff]
      %v281 = vld [vmem:[%s1 + $0x2c8] sm:$0xff]
      %v282 = vld [vmem:[%s1 + $0x2d0] sm:$0xff]
      %v283 = vld [vmem:[%s1 + $0x2d8] sm:$0xff]
      %v284 = vld [vmem:[%s1 + $0x2e0] sm:$0xff]
      %v285 = vld [vmem:[%s1 + $0x2e8] sm:$0xff]
      %v286 = vld [vmem:[%s1 + $0x2f0] sm:$0xff]
      %v287 = vld [vmem:[%s1 + $0x2f8] sm:$0xff]
      %v288 = vld [vmem:[%s1 + $0x300] sm:$0xff]
      %v289 = vld [vmem:[%s1 + $0x308] sm:$0xff]
      %v290 = vld [vmem:[%s1 + $0x310] sm:$0xff]
      %v291 = vld [vmem:[%s1 + $0x318] sm:$0xff]
      %v292 = vld [vmem:[%s1 + $0x320] sm:$0xff]
      %v293 = vld [vmem:[%s1 + $0x328] sm:$0xff]
      %v294 = vld [vmem:[%s1 + $0x330] sm:$0xff]
      %v295 = vld [vmem:[%s1 + $0x338] sm:$0xff]
      %v296 = vld [vmem:[%s1 + $0x340] sm:$0xff]
      %v297 = vld [vmem:[%s1 + $0x348] sm:$0xff]
      %v298 = vld [vmem:[%s1 + $0x350] sm:$0xff]
      %v299 = vld [vmem:[%s1 + $0x358] sm:$0xff]
      %v300 = vld [vmem:[%s1 + $0x360] sm:$0xff]
      %v301 = vld [vmem:[%s1 + $0x368] sm:$0xff]
      %v302 = vld [vmem:[%s1 + $0x370] sm:$0xff]
      %v303 = vld [vmem:[%s1 + $0x378] sm:$0xff]
      %v304 = vld [vmem:[%s1 + $0x380] sm:$0xff]
      %v305 = vld [vmem:[%s1 + $0x388] sm:$0xff]
      %v306 = vld [vmem:[%s1 + $0x390] sm:$0xff]
      %v307 = vld [vmem:[%s1 + $0x398] sm:$0xff]
      %v308 = vld [vmem:[%s1 + $0x3a0] sm:$0xff]
      %v309 = vld [vmem:[%s1 + $0x3a8] sm:$0xff]
      %v310 = vld [vmem:[%s1 + $0x3b0] sm:$0xff]
      %v311 = vld [vmem:[%s1 + $0x3b8] sm:$0xff]
      %v312 = vld [vmem:[%s1 + $0x3c0] sm:$0xff]
      %v313 = vld [vmem:[%s1 + $0x3c8] sm:$0xff]
      %v314 = vld [vmem:[%s1 + $0x3d0] sm:$0xff]
      %v315 = vld [vmem:[%s1 + $0x3d8] sm:$0xff]
      %v316 = vld [vmem:[%s1 + $0x3e0] sm:$0xff]
      %v317 = vld [vmem:[%s1 + $0x3e8] sm:$0xff]
      %v318 = vld [vmem:[%s1 + $0x3f0] sm:$0xff]
      %v319 = vld [vmem:[%s1 + $0x3f8] sm:$0xff]
      %v320 = vld [vmem:[%s1 + $0x400] sm:$0xff]
      %v321 = vld [vmem:[%s1 + $0x408] sm:$0xff]
      %v322 = vld [vmem:[%s1 + $0x410] sm:$0xff]
      %v323 = vld [vmem:[%s1 + $0x418] sm:$0xff]
      %v324 = vld [vmem:[%s178] sm:$0xf]
      %v325 = vld [vmem:[%s178 + $0x4] sm:$0xf]
      %v326 = vld [vmem:[%s178 + $0x8] sm:$0xf]
      %v327 = vld [vmem:[%s178 + $0xc] sm:$0xf]
      %v328 = vld [vmem:[%s178 + $0x10] sm:$0xf]
      %v329 = vld [vmem:[%s178 + $0x14] sm:$0xf]
      %v330 = vld [vmem:[%s178 + $0x18] sm:$0xf]
      %v331 = vld [vmem:[%s178 + $0x1c] sm:$0xf]
      %v332 = vld [vmem:[%s178 + $0x20] sm:$0xf]
      %v333 = vld [vmem:[%s178 + $0x24] sm:$0xf]
      %v334 = vld [vmem:[%s178 + $0x28] sm:$0xf]
      %v335 = vld [vmem:[%s178 + $0x2c] sm:$0xf]
      %v336 = vld [vmem:[%s178 + $0x30] sm:$0xf]
      %v337 = vld [vmem:[%s178 + $0x34] sm:$0xf]
      %v338 = vld [vmem:[%s178 + $0x38] sm:$0xf]
      %v339 = vld [vmem:[%s178 + $0x3c] sm:$0xf]
      %v340 = vld [vmem:[%s178 + $0x40] sm:$0xf]
      %v341 = vld [vmem:[%s178 + $0x44] sm:$0xf]
      %v342 = vld [vmem:[%s178 + $0x48] sm:$0xf]
      %v343 = vld [vmem:[%s178 + $0x4c] sm:$0xf]
      %v344 = vld [vmem:[%s178 + $0x50] sm:$0xf]
      %v345 = vld [vmem:[%s178 + $0x54] sm:$0xf]
      %v346 = vld [vmem:[%s178 + $0x58] sm:$0xf]
      %v347 = vld [vmem:[%s178 + $0x5c] sm:$0xf]
      %v348 = vld [vmem:[%s178 + $0x60] sm:$0xf]
      %v349 = vld [vmem:[%s178 + $0x64] sm:$0xf]
      %v350 = vld [vmem:[%s178 + $0x68] sm:$0xf]
      %v351 = vld [vmem:[%s178 + $0x6c] sm:$0xf]
      %v352 = vld [vmem:[%s178 + $0x70] sm:$0xf]
      %v353 = vld [vmem:[%s178 + $0x74] sm:$0xf]
      %v354 = vld [vmem:[%s178 + $0x78] sm:$0xf]
      %v355 = vld [vmem:[%s178 + $0x7c] sm:$0xf]
      %v356 = vld [vmem:[%s178 + $0x80] sm:$0xf]
      %v357 = vld [vmem:[%s178 + $0x84] sm:$0xf]
      %v358 = vld [vmem:[%s178 + $0x88] sm:$0xf]
      %v359 = vld [vmem:[%s178 + $0x8c] sm:$0xf]
      %v360 = vld [vmem:[%s178 + $0x90] sm:$0xf]
      %v361 = vld [vmem:[%s178 + $0x94] sm:$0xf]
      %v362 = vld [vmem:[%s178 + $0x98] sm:$0xf]
      %v363 = vld [vmem:[%s178 + $0x9c] sm:$0xf]
      %v364 = vld [vmem:[%s178 + $0xa0] sm:$0xf]
      %v365 = vld [vmem:[%s178 + $0xa4] sm:$0xf]
      %v366 = vld [vmem:[%s178 + $0xa8] sm:$0xf]
      %v367 = vld [vmem:[%s178 + $0xac] sm:$0xf]
      %v368 = vld [vmem:[%s178 + $0xb0] sm:$0xf]
      %v369 = vld [vmem:[%s178 + $0xb4] sm:$0xf]
      %v370 = vld [vmem:[%s178 + $0xb8] sm:$0xf]
      %v371 = vld [vmem:[%s178 + $0xbc] sm:$0xf]
      %v372 = vld [vmem:[%s178 + $0xc0] sm:$0xf]
      %v373 = vld [vmem:[%s178 + $0xc4] sm:$0xf]
      %v374 = vld [vmem:[%s178 + $0xc8] sm:$0xf]
      %v375 = vld [vmem:[%s178 + $0xcc] sm:$0xf]
      %v376 = vld [vmem:[%s178 + $0xd0] sm:$0xf]
      %v377 = vld [vmem:[%s178 + $0xd4] sm:$0xf]
      %v378 = vld [vmem:[%s178 + $0xd8] sm:$0xf]
      %v379 = vld [vmem:[%s178 + $0xdc] sm:$0xf]
      %v380 = vld [vmem:[%s178 + $0xe0] sm:$0xf]
      %v381 = vld [vmem:[%s178 + $0xe4] sm:$0xf]
      %v382 = vld [vmem:[%s178 + $0xe8] sm:$0xf]
      %v383 = vld [vmem:[%s178 + $0xec] sm:$0xf]
      %v384 = vld [vmem:[%s178 + $0xf0] sm:$0xf]
      %v385 = vld [vmem:[%s178 + $0xf4] sm:$0xf]
      %v386 = vld [vmem:[%s178 + $0xf8] sm:$0xf]
      %v387 = vld [vmem:[%s178 + $0xfc] sm:$0xf]
      %v520 = vunpack.c.l.b16 %v192
      %v521 = vunpack.c.h.b16 %v192
      %v522 = vunpack.c.l.b16 %v193
      %v523 = vunpack.c.h.b16 %v193
      %v524 = vunpack.c.l.b16 %v194
      %v525 = vunpack.c.h.b16 %v194
      %v526 = vunpack.c.l.b16 %v195
      %v527 = vunpack.c.h.b16 %v195
      %v528 = vunpack.c.l.b16 %v196
      %v529 = vunpack.c.h.b16 %v196
      %v530 = vunpack.c.l.b16 %v197
      %v531 = vunpack.c.h.b16 %v197
      %v532 = vunpack.c.l.b16 %v198
      %v533 = vunpack.c.h.b16 %v198
      %v534 = vunpack.c.l.b16 %v199
      %v535 = vunpack.c.h.b16 %v199
      %v536 = vunpack.c.l.b16 %v200
      %v537 = vunpack.c.h.b16 %v200
      %v538 = vunpack.c.l.b16 %v201
      %v539 = vunpack.c.h.b16 %v201
      %v540 = vunpack.c.l.b16 %v202
      %v541 = vunpack.c.h.b16 %v202
      %v542 = vunpack.c.l.b16 %v203
      %v543 = vunpack.c.h.b16 %v203
      %v544 = vunpack.c.l.b16 %v204
      %v545 = vunpack.c.h.b16 %v204
      %v546 = vunpack.c.l.b16 %v205
      %v547 = vunpack.c.h.b16 %v205
      %v548 = vunpack.c.l.b16 %v206
      %v549 = vunpack.c.h.b16 %v206
      %v550 = vunpack.c.l.b16 %v207
      %v551 = vunpack.c.h.b16 %v207
      %v552 = vunpack.c.l.b16 %v208
      %v553 = vunpack.c.h.b16 %v208
      %v554 = vunpack.c.l.b16 %v209
      %v555 = vunpack.c.h.b16 %v209
      %v556 = vunpack.c.l.b16 %v210
      %v557 = vunpack.c.h.b16 %v210
      %v558 = vunpack.c.l.b16 %v211
      %v559 = vunpack.c.h.b16 %v211
      %v560 = vunpack.c.l.b16 %v212
      %v561 = vunpack.c.h.b16 %v212
      %v562 = vunpack.c.l.b16 %v213
      %v563 = vunpack.c.h.b16 %v213
      %v564 = vunpack.c.l.b16 %v214
      %v565 = vunpack.c.h.b16 %v214
      %v566 = vunpack.c.l.b16 %v215
      %v567 = vunpack.c.h.b16 %v215
      %v568 = vunpack.c.l.b16 %v216
      %v569 = vunpack.c.h.b16 %v216
      %v570 = vunpack.c.l.b16 %v217
      %v571 = vunpack.c.h.b16 %v217
      %v572 = vunpack.c.l.b16 %v218
      %v573 = vunpack.c.h.b16 %v218
      %v574 = vunpack.c.l.b16 %v219
      %v575 = vunpack.c.h.b16 %v219
      %v576 = vunpack.c.l.b16 %v220
      %v577 = vunpack.c.h.b16 %v220
      %v578 = vunpack.c.l.b16 %v221
      %v579 = vunpack.c.h.b16 %v221
      %v580 = vunpack.c.l.b16 %v222
      %v581 = vunpack.c.h.b16 %v222
      %v582 = vunpack.c.l.b16 %v223
      %v583 = vunpack.c.h.b16 %v223
      %v584 = vunpack.c.l.b16 %v224
      %v585 = vunpack.c.h.b16 %v224
      %v586 = vunpack.c.l.b16 %v225
      %v587 = vunpack.c.h.b16 %v225
      %v588 = vunpack.c.l.b16 %v226
      %v589 = vunpack.c.h.b16 %v226
      %v590 = vunpack.c.l.b16 %v227
      %v591 = vunpack.c.h.b16 %v227
      %v592 = vunpack.c.l.b16 %v228
      %v593 = vunpack.c.h.b16 %v228
      %v594 = vunpack.c.l.b16 %v229
      %v595 = vunpack.c.h.b16 %v229
      %v596 = vunpack.c.l.b16 %v230
      %v597 = vunpack.c.h.b16 %v230
      %v598 = vunpack.c.l.b16 %v231
      %v599 = vunpack.c.h.b16 %v231
      %v600 = vunpack.c.l.b16 %v232
      %v601 = vunpack.c.h.b16 %v232
      %v602 = vunpack.c.l.b16 %v233
      %v603 = vunpack.c.h.b16 %v233
      %v604 = vunpack.c.l.b16 %v234
      %v605 = vunpack.c.h.b16 %v234
      %v606 = vunpack.c.l.b16 %v235
      %v607 = vunpack.c.h.b16 %v235
      %v608 = vunpack.c.l.b16 %v236
      %v609 = vunpack.c.h.b16 %v236
      %v610 = vunpack.c.l.b16 %v237
      %v611 = vunpack.c.h.b16 %v237
      %v612 = vunpack.c.l.b16 %v238
      %v613 = vunpack.c.h.b16 %v238
      %v614 = vunpack.c.l.b16 %v239
      %v615 = vunpack.c.h.b16 %v239
      %v616 = vunpack.c.l.b16 %v240
      %v617 = vunpack.c.h.b16 %v240
      %v618 = vunpack.c.l.b16 %v241
      %v619 = vunpack.c.h.b16 %v241
      %v620 = vunpack.c.l.b16 %v242
      %v621 = vunpack.c.h.b16 %v242
      %v622 = vunpack.c.l.b16 %v243
      %v623 = vunpack.c.h.b16 %v243
      %v624 = vunpack.c.l.b16 %v244
      %v625 = vunpack.c.h.b16 %v244
      %v626 = vunpack.c.l.b16 %v245
      %v627 = vunpack.c.h.b16 %v245
      %v628 = vunpack.c.l.b16 %v246
      %v629 = vunpack.c.h.b16 %v246
      %v630 = vunpack.c.l.b16 %v247
      %v631 = vunpack.c.h.b16 %v247
      %v632 = vunpack.c.l.b16 %v248
      %v633 = vunpack.c.h.b16 %v248
      %v634 = vunpack.c.l.b16 %v249
      %v635 = vunpack.c.h.b16 %v249
      %v636 = vunpack.c.l.b16 %v250
      %v637 = vunpack.c.h.b16 %v250
      %v638 = vunpack.c.l.b16 %v251
      %v639 = vunpack.c.h.b16 %v251
      %v640 = vunpack.c.l.b16 %v252
      %v641 = vunpack.c.h.b16 %v252
      %v642 = vunpack.c.l.b16 %v253
      %v643 = vunpack.c.h.b16 %v253
      %v644 = vunpack.c.l.b16 %v254
      %v645 = vunpack.c.h.b16 %v254
      %v646 = vunpack.c.l.b16 %v255
      %v647 = vunpack.c.h.b16 %v255
      %v648 = vunpack.c.l.b16 %v256
      %v649 = vunpack.c.h.b16 %v256
      %v650 = vunpack.c.l.b16 %v257
      %v651 = vunpack.c.h.b16 %v257
      %v652 = vunpack.c.l.b16 %v258
      %v653 = vunpack.c.h.b16 %v258
      %v654 = vunpack.c.l.b16 %v259
      %v655 = vunpack.c.h.b16 %v259
      %v656 = vunpack.c.l.b16 %v260
      %v657 = vunpack.c.h.b16 %v260
      %v658 = vunpack.c.l.b16 %v261
      %v659 = vunpack.c.h.b16 %v261
      %v660 = vunpack.c.l.b16 %v262
      %v661 = vunpack.c.h.b16 %v262
      %v662 = vunpack.c.l.b16 %v263
      %v663 = vunpack.c.h.b16 %v263
      %v664 = vunpack.c.l.b16 %v264
      %v665 = vunpack.c.h.b16 %v264
      %v666 = vunpack.c.l.b16 %v265
      %v667 = vunpack.c.h.b16 %v265
      %v668 = vunpack.c.l.b16 %v266
      %v669 = vunpack.c.h.b16 %v266
      %v670 = vunpack.c.l.b16 %v267
      %v671 = vunpack.c.h.b16 %v267
      %v672 = vunpack.c.l.b16 %v268
      %v673 = vunpack.c.h.b16 %v268
      %v674 = vunpack.c.l.b16 %v269
      %v675 = vunpack.c.h.b16 %v269
      %v676 = vunpack.c.l.b16 %v270
      %v677 = vunpack.c.h.b16 %v270
      %v678 = vunpack.c.l.b16 %v271
      %v679 = vunpack.c.h.b16 %v271
      %v680 = vunpack.c.l.b16 %v272
      %v681 = vunpack.c.h.b16 %v272
      %v682 = vunpack.c.l.b16 %v273
      %v683 = vunpack.c.h.b16 %v273
      %v684 = vunpack.c.l.b16 %v274
      %v685 = vunpack.c.h.b16 %v274
      %v686 = vunpack.c.l.b16 %v275
      %v687 = vunpack.c.h.b16 %v275
      %v688 = vunpack.c.l.b16 %v276
      %v689 = vunpack.c.h.b16 %v276
      %v690 = vunpack.c.l.b16 %v277
      %v691 = vunpack.c.h.b16 %v277
      %v692 = vunpack.c.l.b16 %v278
      %v693 = vunpack.c.h.b16 %v278
      %v694 = vunpack.c.l.b16 %v279
      %v695 = vunpack.c.h.b16 %v279
      %v696 = vunpack.c.l.b16 %v280
      %v697 = vunpack.c.h.b16 %v280
      %v698 = vunpack.c.l.b16 %v281
      %v699 = vunpack.c.h.b16 %v281
      %v700 = vunpack.c.l.b16 %v282
      %v701 = vunpack.c.h.b16 %v282
      %v702 = vunpack.c.l.b16 %v283
      %v703 = vunpack.c.h.b16 %v283
      %v704 = vunpack.c.l.b16 %v284
      %v705 = vunpack.c.h.b16 %v284
      %v706 = vunpack.c.l.b16 %v285
      %v707 = vunpack.c.h.b16 %v285
      %v708 = vunpack.c.l.b16 %v286
      %v709 = vunpack.c.h.b16 %v286
      %v710 = vunpack.c.l.b16 %v287
      %v711 = vunpack.c.h.b16 %v287
      %v712 = vunpack.c.l.b16 %v288
      %v713 = vunpack.c.h.b16 %v288
      %v714 = vunpack.c.l.b16 %v289
      %v715 = vunpack.c.h.b16 %v289
      %v716 = vunpack.c.l.b16 %v290
      %v717 = vunpack.c.h.b16 %v290
      %v718 = vunpack.c.l.b16 %v291
      %v719 = vunpack.c.h.b16 %v291
      %v720 = vunpack.c.l.b16 %v292
      %v721 = vunpack.c.h.b16 %v292
      %v722 = vunpack.c.l.b16 %v293
      %v723 = vunpack.c.h.b16 %v293
      %v724 = vunpack.c.l.b16 %v294
      %v725 = vunpack.c.h.b16 %v294
      %v726 = vunpack.c.l.b16 %v295
      %v727 = vunpack.c.h.b16 %v295
      %v728 = vunpack.c.l.b16 %v296
      %v729 = vunpack.c.h.b16 %v296
      %v730 = vunpack.c.l.b16 %v297
      %v731 = vunpack.c.h.b16 %v297
      %v732 = vunpack.c.l.b16 %v298
      %v733 = vunpack.c.h.b16 %v298
      %v734 = vunpack.c.l.b16 %v299
      %v735 = vunpack.c.h.b16 %v299
      %v736 = vunpack.c.l.b16 %v300
      %v737 = vunpack.c.h.b16 %v300
      %v738 = vunpack.c.l.b16 %v301
      %v739 = vunpack.c.h.b16 %v301
      %v740 = vunpack.c.l.b16 %v302
      %v741 = vunpack.c.h.b16 %v302
      %v742 = vunpack.c.l.b16 %v303
      %v743 = vunpack.c.h.b16 %v303
      %v744 = vunpack.c.l.b16 %v304
      %v745 = vunpack.c.h.b16 %v304
      %v746 = vunpack.c.l.b16 %v305
      %v747 = vunpack.c.h.b16 %v305
      %v748 = vunpack.c.l.b16 %v306
      %v749 = vunpack.c.h.b16 %v306
      %v750 = vunpack.c.l.b16 %v307
      %v751 = vunpack.c.h.b16 %v307
      %v752 = vunpack.c.l.b16 %v308
      %v753 = vunpack.c.h.b16 %v308
      %v754 = vunpack.c.l.b16 %v309
      %v755 = vunpack.c.h.b16 %v309
      %v756 = vunpack.c.l.b16 %v310
      %v757 = vunpack.c.h.b16 %v310
      %v758 = vunpack.c.l.b16 %v311
      %v759 = vunpack.c.h.b16 %v311
      %v760 = vunpack.c.l.b16 %v312
      %v761 = vunpack.c.h.b16 %v312
      %v762 = vunpack.c.l.b16 %v313
      %v763 = vunpack.c.h.b16 %v313
      %v764 = vunpack.c.l.b16 %v314
      %v765 = vunpack.c.h.b16 %v314
      %v766 = vunpack.c.l.b16 %v315
      %v767 = vunpack.c.h.b16 %v315
      %v768 = vunpack.c.l.b16 %v316
      %v769 = vunpack.c.h.b16 %v316
      %v770 = vunpack.c.l.b16 %v317
      %v771 = vunpack.c.h.b16 %v317
      %v772 = vunpack.c.l.b16 %v318
      %v773 = vunpack.c.h.b16 %v318
      %v774 = vunpack.c.l.b16 %v319
      %v775 = vunpack.c.h.b16 %v319
      %v776 = vunpack.c.l.b16 %v320
      %v777 = vunpack.c.h.b16 %v320
      %v778 = vunpack.c.l.b16 %v321
      %v779 = vunpack.c.h.b16 %v321
      %v780 = vunpack.c.l.b16 %v322
      %v781 = vunpack.c.h.b16 %v322
      %v782 = vunpack.c.l.b16 %v323
      %v783 = vunpack.c.h.b16 %v323
      %v784 = vpack.c.b16 %v524, %v520
      %v785 = vpack.c.b16 %v525, %v521
      %v786 = vpack.c.b16 %v526, %v522
      %v787 = vpack.c.b16 %v527, %v523
      %v788 = vpack.c.b16 %v532, %v528
      %v789 = vpack.c.b16 %v533, %v529
      %v790 = vpack.c.b16 %v534, %v530
      %v791 = vpack.c.b16 %v535, %v531
      %v792 = vpack.c.b16 %v540, %v536
      %v793 = vpack.c.b16 %v541, %v537
      %v794 = vpack.c.b16 %v542, %v538
      %v795 = vpack.c.b16 %v543, %v539
      %v796 = vpack.c.b16 %v548, %v544
      %v797 = vpack.c.b16 %v549, %v545
      %v798 = vpack.c.b16 %v550, %v546
      %v799 = vpack.c.b16 %v551, %v547
      %v800 = vpack.c.b16 %v556, %v552
      %v801 = vpack.c.b16 %v557, %v553
      %v802 = vpack.c.b16 %v558, %v554
      %v803 = vpack.c.b16 %v559, %v555
      %v804 = vpack.c.b16 %v564, %v560
      %v805 = vpack.c.b16 %v565, %v561
      %v806 = vpack.c.b16 %v566, %v562
      %v807 = vpack.c.b16 %v567, %v563
      %v808 = vpack.c.b16 %v572, %v568
      %v809 = vpack.c.b16 %v573, %v569
      %v810 = vpack.c.b16 %v574, %v570
      %v811 = vpack.c.b16 %v575, %v571
      %v812 = vpack.c.b16 %v580, %v576
      %v813 = vpack.c.b16 %v581, %v577
      %v814 = vpack.c.b16 %v582, %v578
      %v815 = vpack.c.b16 %v583, %v579
      %v816 = vpack.c.b16 %v588, %v584
      %v817 = vpack.c.b16 %v589, %v585
      %v818 = vpack.c.b16 %v590, %v586
      %v819 = vpack.c.b16 %v591, %v587
      %v820 = vpack.c.b16 %v596, %v592
      %v821 = vpack.c.b16 %v597, %v593
      %v822 = vpack.c.b16 %v598, %v594
      %v823 = vpack.c.b16 %v599, %v595
      %v824 = vpack.c.b16 %v604, %v600
      %v825 = vpack.c.b16 %v605, %v601
      %v826 = vpack.c.b16 %v606, %v602
      %v827 = vpack.c.b16 %v607, %v603
      %v828 = vpack.c.b16 %v612, %v608
      %v829 = vpack.c.b16 %v613, %v609
      %v830 = vpack.c.b16 %v614, %v610
      %v831 = vpack.c.b16 %v615, %v611
      %v832 = vpack.c.b16 %v620, %v616
      %v833 = vpack.c.b16 %v621, %v617
      %v834 = vpack.c.b16 %v622, %v618
      %v835 = vpack.c.b16 %v623, %v619
      %v836 = vpack.c.b16 %v628, %v624
      %v837 = vpack.c.b16 %v629, %v625
      %v838 = vpack.c.b16 %v630, %v626
      %v839 = vpack.c.b16 %v631, %v627
      %v840 = vpack.c.b16 %v636, %v632
      %v841 = vpack.c.b16 %v637, %v633
      %v842 = vpack.c.b16 %v638, %v634
      %v843 = vpack.c.b16 %v639, %v635
      %v844 = vpack.c.b16 %v644, %v640
      %v845 = vpack.c.b16 %v645, %v641
      %v846 = vpack.c.b16 %v646, %v642
      %v847 = vpack.c.b16 %v647, %v643
      %v848 = vpack.c.b16 %v652, %v648
      %v849 = vpack.c.b16 %v653, %v649
      %v850 = vpack.c.b16 %v654, %v650
      %v851 = vpack.c.b16 %v655, %v651
      %v852 = vpack.c.b16 %v660, %v656
      %v853 = vpack.c.b16 %v661, %v657
      %v854 = vpack.c.b16 %v662, %v658
      %v855 = vpack.c.b16 %v663, %v659
      %v856 = vpack.c.b16 %v668, %v664
      %v857 = vpack.c.b16 %v669, %v665
      %v858 = vpack.c.b16 %v670, %v666
      %v859 = vpack.c.b16 %v671, %v667
      %v860 = vpack.c.b16 %v676, %v672
      %v861 = vpack.c.b16 %v677, %v673
      %v862 = vpack.c.b16 %v678, %v674
      %v863 = vpack.c.b16 %v679, %v675
      %v864 = vpack.c.b16 %v684, %v680
      %v865 = vpack.c.b16 %v685, %v681
      %v866 = vpack.c.b16 %v686, %v682
      %v867 = vpack.c.b16 %v687, %v683
      %v868 = vpack.c.b16 %v692, %v688
      %v869 = vpack.c.b16 %v693, %v689
      %v870 = vpack.c.b16 %v694, %v690
      %v871 = vpack.c.b16 %v695, %v691
      %v872 = vpack.c.b16 %v700, %v696
      %v873 = vpack.c.b16 %v701, %v697
      %v874 = vpack.c.b16 %v702, %v698
      %v875 = vpack.c.b16 %v703, %v699
      %v876 = vpack.c.b16 %v708, %v704
      %v877 = vpack.c.b16 %v709, %v705
      %v878 = vpack.c.b16 %v710, %v706
      %v879 = vpack.c.b16 %v711, %v707
      %v880 = vpack.c.b16 %v716, %v712
      %v881 = vpack.c.b16 %v717, %v713
      %v882 = vpack.c.b16 %v718, %v714
      %v883 = vpack.c.b16 %v719, %v715
      %v884 = vpack.c.b16 %v724, %v720
      %v885 = vpack.c.b16 %v725, %v721
      %v886 = vpack.c.b16 %v726, %v722
      %v887 = vpack.c.b16 %v727, %v723
      %v888 = vpack.c.b16 %v732, %v728
      %v889 = vpack.c.b16 %v733, %v729
      %v890 = vpack.c.b16 %v734, %v730
      %v891 = vpack.c.b16 %v735, %v731
      %v892 = vpack.c.b16 %v740, %v736
      %v893 = vpack.c.b16 %v741, %v737
      %v894 = vpack.c.b16 %v742, %v738
      %v895 = vpack.c.b16 %v743, %v739
      %v896 = vpack.c.b16 %v748, %v744
      %v897 = vpack.c.b16 %v749, %v745
      %v898 = vpack.c.b16 %v750, %v746
      %v899 = vpack.c.b16 %v751, %v747
      %v900 = vpack.c.b16 %v756, %v752
      %v901 = vpack.c.b16 %v757, %v753
      %v902 = vpack.c.b16 %v758, %v754
      %v903 = vpack.c.b16 %v759, %v755
      %v904 = vpack.c.b16 %v764, %v760
      %v905 = vpack.c.b16 %v765, %v761
      %v906 = vpack.c.b16 %v766, %v762
      %v907 = vpack.c.b16 %v767, %v763
      %v908 = vpack.c.b16 %v772, %v768
      %v909 = vpack.c.b16 %v773, %v769
      %v910 = vpack.c.b16 %v774, %v770
      %v911 = vpack.c.b16 %v775, %v771
      %v912 = vpack.c.b16 %v780, %v776
      %v913 = vpack.c.b16 %v781, %v777
      %v914 = vpack.c.b16 %v782, %v778
      %v915 = vpack.c.b16 %v783, %v779
      %v1112 = vunpack.c.l.b16 %v324
      %v1113 = vunpack.c.l.b16 %v325
      %v1114 = vunpack.c.l.b16 %v326
      %v1115 = vunpack.c.l.b16 %v327
      %v1116 = vunpack.c.l.b16 %v328
      %v1117 = vunpack.c.l.b16 %v329
      %v1118 = vunpack.c.l.b16 %v330
      %v1119 = vunpack.c.l.b16 %v331
      %v1120 = vunpack.c.l.b16 %v332
      %v1121 = vunpack.c.l.b16 %v333
      %v1122 = vunpack.c.l.b16 %v334
      %v1123 = vunpack.c.l.b16 %v335
      %v1124 = vunpack.c.l.b16 %v336
      %v1125 = vunpack.c.l.b16 %v337
      %v1126 = vunpack.c.l.b16 %v338
      %v1127 = vunpack.c.l.b16 %v339
      %v1128 = vunpack.c.l.b16 %v340
      %v1129 = vunpack.c.l.b16 %v341
      %v1130 = vunpack.c.l.b16 %v342
      %v1131 = vunpack.c.l.b16 %v343
      %v1132 = vunpack.c.l.b16 %v344
      %v1133 = vunpack.c.l.b16 %v345
      %v1134 = vunpack.c.l.b16 %v346
      %v1135 = vunpack.c.l.b16 %v347
      %v1136 = vunpack.c.l.b16 %v348
      %v1137 = vunpack.c.l.b16 %v349
      %v1138 = vunpack.c.l.b16 %v350
      %v1139 = vunpack.c.l.b16 %v351
      %v1140 = vunpack.c.l.b16 %v352
      %v1141 = vunpack.c.l.b16 %v353
      %v1142 = vunpack.c.l.b16 %v354
      %v1143 = vunpack.c.l.b16 %v355
      %v1144 = vunpack.c.l.b16 %v356
      %v1145 = vunpack.c.l.b16 %v357
      %v1146 = vunpack.c.l.b16 %v358
      %v1147 = vunpack.c.l.b16 %v359
      %v1148 = vunpack.c.l.b16 %v360
      %v1149 = vunpack.c.l.b16 %v361
      %v1150 = vunpack.c.l.b16 %v362
      %v1151 = vunpack.c.l.b16 %v363
      %v1152 = vunpack.c.l.b16 %v364
      %v1153 = vunpack.c.l.b16 %v365
      %v1154 = vunpack.c.l.b16 %v366
      %v1155 = vunpack.c.l.b16 %v367
      %v1156 = vunpack.c.l.b16 %v368
      %v1157 = vunpack.c.l.b16 %v369
      %v1158 = vunpack.c.l.b16 %v370
      %v1159 = vunpack.c.l.b16 %v371
      %v1160 = vunpack.c.l.b16 %v372
      %v1161 = vunpack.c.l.b16 %v373
      %v1162 = vunpack.c.l.b16 %v374
      %v1163 = vunpack.c.l.b16 %v375
      %v1164 = vunpack.c.l.b16 %v376
      %v1165 = vunpack.c.l.b16 %v377
      %v1166 = vunpack.c.l.b16 %v378
      %v1167 = vunpack.c.l.b16 %v379
      %v1168 = vunpack.c.l.b16 %v380
      %v1169 = vunpack.c.l.b16 %v381
      %v1170 = vunpack.c.l.b16 %v382
      %v1171 = vunpack.c.l.b16 %v383
      %v1172 = vunpack.c.l.b16 %v384
      %v1173 = vunpack.c.l.b16 %v385
      %v1174 = vunpack.c.l.b16 %v386
      %v1175 = vunpack.c.l.b16 %v387
      %v1176 = vpack.c.b16 %v1113, %v1112
      %v1177 = vpack.c.b16 %v1115, %v1114
      %v1178 = vpack.c.b16 %v1117, %v1116
      %v1179 = vpack.c.b16 %v1119, %v1118
      %v1180 = vpack.c.b16 %v1121, %v1120
      %v1181 = vpack.c.b16 %v1123, %v1122
      %v1182 = vpack.c.b16 %v1125, %v1124
      %v1183 = vpack.c.b16 %v1127, %v1126
      %v1184 = vpack.c.b16 %v1129, %v1128
      %v1185 = vpack.c.b16 %v1131, %v1130
      %v1186 = vpack.c.b16 %v1133, %v1132
      %v1187 = vpack.c.b16 %v1135, %v1134
      %v1188 = vpack.c.b16 %v1137, %v1136
      %v1189 = vpack.c.b16 %v1139, %v1138
      %v1190 = vpack.c.b16 %v1141, %v1140
      %v1191 = vpack.c.b16 %v1143, %v1142
      %v1192 = vpack.c.b16 %v1145, %v1144
      %v1193 = vpack.c.b16 %v1147, %v1146
      %v1194 = vpack.c.b16 %v1149, %v1148
      %v1195 = vpack.c.b16 %v1151, %v1150
      %v1196 = vpack.c.b16 %v1153, %v1152
      %v1197 = vpack.c.b16 %v1155, %v1154
      %v1198 = vpack.c.b16 %v1157, %v1156
      %v1199 = vpack.c.b16 %v1159, %v1158
      %v1200 = vpack.c.b16 %v1161, %v1160
      %v1201 = vpack.c.b16 %v1163, %v1162
      %v1202 = vpack.c.b16 %v1165, %v1164
      %v1203 = vpack.c.b16 %v1167, %v1166
      %v1204 = vpack.c.b16 %v1169, %v1168
      %v1205 = vpack.c.b16 %v1171, %v1170
      %v1206 = vpack.c.b16 %v1173, %v1172
      %v1207 = vpack.c.b16 %v1175, %v1174
      %1240 = vmatpush.bf16.msra.mxu0 %v1183
      %1241 = vmatpush.bf16.msra.mxu0 %v1182
      %1242 = vmatpush.bf16.msra.mxu0 %v1181
      %1243 = vmatpush.bf16.msra.mxu0 %v1180
      %1244 = vmatpush.bf16.msra.mxu0 %v1179
      %1245 = vmatpush.bf16.msra.mxu0 %v1178
      %1246 = vmatpush.bf16.msra.mxu0 %v1177
      %1247 = vmatpush.bf16.msra.mxu0 %v1176
      %1248 = vmatmul.bf16.gmra.mxu0 %v784
      %v1249 = vpop.f32.mrf.mxu0
      %v1250 = vadd.f32 0.0, %v1249
      %v1251 = vpop.f32.mrf.mxu0
      %v1252 = vadd.f32 0.0, %v1251
      %1253 = vmatmul.bf16.gmra.mxu0 %v788
      %v1254 = vpop.f32.mrf.mxu0
      %v1255 = vadd.f32 0.0, %v1254
      %v1256 = vpop.f32.mrf.mxu0
      %v1257 = vadd.f32 0.0, %v1256
      %1258 = vmatmul.bf16.gmra.mxu0 %v792
      %v1259 = vpop.f32.mrf.mxu0
      %v1260 = vadd.f32 0.0, %v1259
      %v1261 = vpop.f32.mrf.mxu0
      %v1262 = vadd.f32 0.0, %v1261
      %1263 = vmatmul.bf16.gmra.mxu0 %v796
      %v1264 = vpop.f32.mrf.mxu0
      %v1265 = vadd.f32 0.0, %v1264
      %v1266 = vpop.f32.mrf.mxu0
      %v1267 = vadd.f32 0.0, %v1266
      %1268 = vmatmul.bf16.gmra.mxu0 %v800
      %v1269 = vpop.f32.mrf.mxu0
      %v1270 = vadd.f32 0.0, %v1269
      %v1271 = vpop.f32.mrf.mxu0
      %v1272 = vadd.f32 0.0, %v1271
      %1273 = vmatmul.bf16.gmra.mxu0 %v804
      %v1274 = vpop.f32.mrf.mxu0
      %v1275 = vadd.f32 0.0, %v1274
      %v1276 = vpop.f32.mrf.mxu0
      %v1277 = vadd.f32 0.0, %v1276
      %1278 = vmatmul.bf16.gmra.mxu0 %v808
      %v1279 = vpop.f32.mrf.mxu0
      %v1280 = vadd.f32 0.0, %v1279
      %v1281 = vpop.f32.mrf.mxu0
      %v1282 = vadd.f32 0.0, %v1281
      %1283 = vmatmul.bf16.gmra.mxu0 %v812
      %v1284 = vpop.f32.mrf.mxu0
      %v1285 = vadd.f32 0.0, %v1284
      %v1286 = vpop.f32.mrf.mxu0
      %v1287 = vadd.f32 0.0, %v1286
      %1288 = vmatmul.bf16.gmra.mxu0 %v816
      %v1289 = vpop.f32.mrf.mxu0
      %v1290 = vadd.f32 0.0, %v1289
      %v1291 = vpop.f32.mrf.mxu0
      %v1292 = vadd.f32 0.0, %v1291
      %1293 = vmatmul.bf16.gmra.mxu0 %v820
      %v1294 = vpop.f32.mrf.mxu0
      %v1295 = vadd.f32 0.0, %v1294
      %v1296 = vpop.f32.mrf.mxu0
      %v1297 = vadd.f32 0.0, %v1296
      %1298 = vmatmul.bf16.gmra.mxu0 %v824
      %v1299 = vpop.f32.mrf.mxu0
      %v1300 = vadd.f32 0.0, %v1299
      %v1301 = vpop.f32.mrf.mxu0
      %v1302 = vadd.f32 0.0, %v1301
      %1303 = vmatmul.bf16.gmra.mxu0 %v828
      %v1304 = vpop.f32.mrf.mxu0
      %v1305 = vadd.f32 0.0, %v1304
      %v1306 = vpop.f32.mrf.mxu0
      %v1307 = vadd.f32 0.0, %v1306
      %1308 = vmatmul.bf16.gmra.mxu0 %v832
      %v1309 = vpop.f32.mrf.mxu0
      %v1310 = vadd.f32 0.0, %v1309
      %v1311 = vpop.f32.mrf.mxu0
      %v1312 = vadd.f32 0.0, %v1311
      %1313 = vmatmul.bf16.gmra.mxu0 %v836
      %v1314 = vpop.f32.mrf.mxu0
      %v1315 = vadd.f32 0.0, %v1314
      %v1316 = vpop.f32.mrf.mxu0
      %v1317 = vadd.f32 0.0, %v1316
      %1318 = vmatmul.bf16.gmra.mxu0 %v840
      %v1319 = vpop.f32.mrf.mxu0
      %v1320 = vadd.f32 0.0, %v1319
      %v1321 = vpop.f32.mrf.mxu0
      %v1322 = vadd.f32 0.0, %v1321
      %1323 = vmatmul.bf16.gmra.mxu0 %v844
      %v1324 = vpop.f32.mrf.mxu0
      %v1325 = vadd.f32 0.0, %v1324
      %v1326 = vpop.f32.mrf.mxu0
      %v1327 = vadd.f32 0.0, %v1326
      %1328 = vmatmul.bf16.gmra.mxu0 %v848
      %v1329 = vpop.f32.mrf.mxu0
      %v1330 = vadd.f32 0.0, %v1329
      %v1331 = vpop.f32.mrf.mxu0
      %v1332 = vadd.f32 0.0, %v1331
      %1333 = vmatmul.bf16.gmra.mxu0 %v852
      %v1334 = vpop.f32.mrf.mxu0
      %v1335 = vadd.f32 0.0, %v1334
      %v1336 = vpop.f32.mrf.mxu0
      %v1337 = vadd.f32 0.0, %v1336
      %1338 = vmatmul.bf16.gmra.mxu0 %v856
      %v1339 = vpop.f32.mrf.mxu0
      %v1340 = vadd.f32 0.0, %v1339
      %v1341 = vpop.f32.mrf.mxu0
      %v1342 = vadd.f32 0.0, %v1341
      %1343 = vmatmul.bf16.gmra.mxu0 %v860
      %v1344 = vpop.f32.mrf.mxu0
      %v1345 = vadd.f32 0.0, %v1344
      %v1346 = vpop.f32.mrf.mxu0
      %v1347 = vadd.f32 0.0, %v1346
      %1348 = vmatmul.bf16.gmra.mxu0 %v864
      %v1349 = vpop.f32.mrf.mxu0
      %v1350 = vadd.f32 0.0, %v1349
      %v1351 = vpop.f32.mrf.mxu0
      %v1352 = vadd.f32 0.0, %v1351
      %1353 = vmatmul.bf16.gmra.mxu0 %v868
      %v1354 = vpop.f32.mrf.mxu0
      %v1355 = vadd.f32 0.0, %v1354
      %v1356 = vpop.f32.mrf.mxu0
      %v1357 = vadd.f32 0.0, %v1356
      %1358 = vmatmul.bf16.gmra.mxu0 %v872
      %v1359 = vpop.f32.mrf.mxu0
      %v1360 = vadd.f32 0.0, %v1359
      %v1361 = vpop.f32.mrf.mxu0
      %v1362 = vadd.f32 0.0, %v1361
      %1363 = vmatmul.bf16.gmra.mxu0 %v876
      %v1364 = vpop.f32.mrf.mxu0
      %v1365 = vadd.f32 0.0, %v1364
      %v1366 = vpop.f32.mrf.mxu0
      %v1367 = vadd.f32 0.0, %v1366
      %1368 = vmatmul.bf16.gmra.mxu0 %v880
      %v1369 = vpop.f32.mrf.mxu0
      %v1370 = vadd.f32 0.0, %v1369
      %v1371 = vpop.f32.mrf.mxu0
      %v1372 = vadd.f32 0.0, %v1371
      %1373 = vmatmul.bf16.gmra.mxu0 %v884
      %v1374 = vpop.f32.mrf.mxu0
      %v1375 = vadd.f32 0.0, %v1374
      %v1376 = vpop.f32.mrf.mxu0
      %v1377 = vadd.f32 0.0, %v1376
      %1378 = vmatmul.bf16.gmra.mxu0 %v888
      %v1379 = vpop.f32.mrf.mxu0
      %v1380 = vadd.f32 0.0, %v1379
      %v1381 = vpop.f32.mrf.mxu0
      %v1382 = vadd.f32 0.0, %v1381
      %1383 = vmatmul.bf16.gmra.mxu0 %v892
      %v1384 = vpop.f32.mrf.mxu0
      %v1385 = vadd.f32 0.0, %v1384
      %v1386 = vpop.f32.mrf.mxu0
      %v1387 = vadd.f32 0.0, %v1386
      %1388 = vmatmul.bf16.gmra.mxu0 %v896
      %v1389 = vpop.f32.mrf.mxu0
      %v1390 = vadd.f32 0.0, %v1389
      %v1391 = vpop.f32.mrf.mxu0
      %v1392 = vadd.f32 0.0, %v1391
      %1393 = vmatmul.bf16.gmra.mxu0 %v900
      %v1394 = vpop.f32.mrf.mxu0
      %v1395 = vadd.f32 0.0, %v1394
      %v1396 = vpop.f32.mrf.mxu0
      %v1397 = vadd.f32 0.0, %v1396
      %1398 = vmatmul.bf16.gmra.mxu0 %v904
      %v1399 = vpop.f32.mrf.mxu0
      %v1400 = vadd.f32 0.0, %v1399
      %v1401 = vpop.f32.mrf.mxu0
      %v1402 = vadd.f32 0.0, %v1401
      %1403 = vmatmul.bf16.gmra.mxu0 %v908
      %v1404 = vpop.f32.mrf.mxu0
      %v1405 = vadd.f32 0.0, %v1404
      %v1406 = vpop.f32.mrf.mxu0
      %v1407 = vadd.f32 0.0, %v1406
      %1408 = vmatmul.bf16.gmra.mxu0 %v912
      %v1409 = vpop.f32.mrf.mxu0
      %v1410 = vadd.f32 0.0, %v1409
      %v1411 = vpop.f32.mrf.mxu0
      %v1412 = vadd.f32 0.0, %v1411
      %1413 = vdwg.mxu0
      %1414 = vmatpush.bf16.msra.mxu0 %v1191
      %1415 = vmatpush.bf16.msra.mxu0 %v1190
      %1416 = vmatpush.bf16.msra.mxu0 %v1189
      %1417 = vmatpush.bf16.msra.mxu0 %v1188
      %1418 = vmatpush.bf16.msra.mxu0 %v1187
      %1419 = vmatpush.bf16.msra.mxu0 %v1186
      %1420 = vmatpush.bf16.msra.mxu0 %v1185
      %1421 = vmatpush.bf16.msra.mxu0 %v1184
      %1422 = vmatmul.bf16.gmra.mxu0 %v785
      %v1423 = vpop.f32.mrf.mxu0
      %v1424 = vadd.f32 %v1250, %v1423
      %v1425 = vpop.f32.mrf.mxu0
      %v1426 = vadd.f32 %v1252, %v1425
      %1427 = vmatmul.bf16.gmra.mxu0 %v789
      %v1428 = vpop.f32.mrf.mxu0
      %v1429 = vadd.f32 %v1255, %v1428
      %v1430 = vpop.f32.mrf.mxu0
      %v1431 = vadd.f32 %v1257, %v1430
      %1432 = vmatmul.bf16.gmra.mxu0 %v793
      %v1433 = vpop.f32.mrf.mxu0
      %v1434 = vadd.f32 %v1260, %v1433
      %v1435 = vpop.f32.mrf.mxu0
      %v1436 = vadd.f32 %v1262, %v1435
      %1437 = vmatmul.bf16.gmra.mxu0 %v797
      %v1438 = vpop.f32.mrf.mxu0
      %v1439 = vadd.f32 %v1265, %v1438
      %v1440 = vpop.f32.mrf.mxu0
      %v1441 = vadd.f32 %v1267, %v1440
      %1442 = vmatmul.bf16.gmra.mxu0 %v801
      %v1443 = vpop.f32.mrf.mxu0
      %v1444 = vadd.f32 %v1270, %v1443
      %v1445 = vpop.f32.mrf.mxu0
      %v1446 = vadd.f32 %v1272, %v1445
      %1447 = vmatmul.bf16.gmra.mxu0 %v805
      %v1448 = vpop.f32.mrf.mxu0
      %v1449 = vadd.f32 %v1275, %v1448
      %v1450 = vpop.f32.mrf.mxu0
      %v1451 = vadd.f32 %v1277, %v1450
      %1452 = vmatmul.bf16.gmra.mxu0 %v809
      %v1453 = vpop.f32.mrf.mxu0
      %v1454 = vadd.f32 %v1280, %v1453
      %v1455 = vpop.f32.mrf.mxu0
      %v1456 = vadd.f32 %v1282, %v1455
      %1457 = vmatmul.bf16.gmra.mxu0 %v813
      %v1458 = vpop.f32.mrf.mxu0
      %v1459 = vadd.f32 %v1285, %v1458
      %v1460 = vpop.f32.mrf.mxu0
      %v1461 = vadd.f32 %v1287, %v1460
      %1462 = vmatmul.bf16.gmra.mxu0 %v817
      %v1463 = vpop.f32.mrf.mxu0
      %v1464 = vadd.f32 %v1290, %v1463
      %v1465 = vpop.f32.mrf.mxu0
      %v1466 = vadd.f32 %v1292, %v1465
      %1467 = vmatmul.bf16.gmra.mxu0 %v821
      %v1468 = vpop.f32.mrf.mxu0
      %v1469 = vadd.f32 %v1295, %v1468
      %v1470 = vpop.f32.mrf.mxu0
      %v1471 = vadd.f32 %v1297, %v1470
      %1472 = vmatmul.bf16.gmra.mxu0 %v825
      %v1473 = vpop.f32.mrf.mxu0
      %v1474 = vadd.f32 %v1300, %v1473
      %v1475 = vpop.f32.mrf.mxu0
      %v1476 = vadd.f32 %v1302, %v1475
      %1477 = vmatmul.bf16.gmra.mxu0 %v829
      %v1478 = vpop.f32.mrf.mxu0
      %v1479 = vadd.f32 %v1305, %v1478
      %v1480 = vpop.f32.mrf.mxu0
      %v1481 = vadd.f32 %v1307, %v1480
      %1482 = vmatmul.bf16.gmra.mxu0 %v833
      %v1483 = vpop.f32.mrf.mxu0
      %v1484 = vadd.f32 %v1310, %v1483
      %v1485 = vpop.f32.mrf.mxu0
      %v1486 = vadd.f32 %v1312, %v1485
      %1487 = vmatmul.bf16.gmra.mxu0 %v837
      %v1488 = vpop.f32.mrf.mxu0
      %v1489 = vadd.f32 %v1315, %v1488
      %v1490 = vpop.f32.mrf.mxu0
      %v1491 = vadd.f32 %v1317, %v1490
      %1492 = vmatmul.bf16.gmra.mxu0 %v841
      %v1493 = vpop.f32.mrf.mxu0
      %v1494 = vadd.f32 %v1320, %v1493
      %v1495 = vpop.f32.mrf.mxu0
      %v1496 = vadd.f32 %v1322, %v1495
      %1497 = vmatmul.bf16.gmra.mxu0 %v845
      %v1498 = vpop.f32.mrf.mxu0
      %v1499 = vadd.f32 %v1325, %v1498
      %v1500 = vpop.f32.mrf.mxu0
      %v1501 = vadd.f32 %v1327, %v1500
      %1502 = vmatmul.bf16.gmra.mxu0 %v849
      %v1503 = vpop.f32.mrf.mxu0
      %v1504 = vadd.f32 %v1330, %v1503
      %v1505 = vpop.f32.mrf.mxu0
      %v1506 = vadd.f32 %v1332, %v1505
      %1507 = vmatmul.bf16.gmra.mxu0 %v853
      %v1508 = vpop.f32.mrf.mxu0
      %v1509 = vadd.f32 %v1335, %v1508
      %v1510 = vpop.f32.mrf.mxu0
      %v1511 = vadd.f32 %v1337, %v1510
      %1512 = vmatmul.bf16.gmra.mxu0 %v857
      %v1513 = vpop.f32.mrf.mxu0
      %v1514 = vadd.f32 %v1340, %v1513
      %v1515 = vpop.f32.mrf.mxu0
      %v1516 = vadd.f32 %v1342, %v1515
      %1517 = vmatmul.bf16.gmra.mxu0 %v861
      %v1518 = vpop.f32.mrf.mxu0
      %v1519 = vadd.f32 %v1345, %v1518
      %v1520 = vpop.f32.mrf.mxu0
      %v1521 = vadd.f32 %v1347, %v1520
      %1522 = vmatmul.bf16.gmra.mxu0 %v865
      %v1523 = vpop.f32.mrf.mxu0
      %v1524 = vadd.f32 %v1350, %v1523
      %v1525 = vpop.f32.mrf.mxu0
      %v1526 = vadd.f32 %v1352, %v1525
      %1527 = vmatmul.bf16.gmra.mxu0 %v869
      %v1528 = vpop.f32.mrf.mxu0
      %v1529 = vadd.f32 %v1355, %v1528
      %v1530 = vpop.f32.mrf.mxu0
      %v1531 = vadd.f32 %v1357, %v1530
      %1532 = vmatmul.bf16.gmra.mxu0 %v873
      %v1533 = vpop.f32.mrf.mxu0
      %v1534 = vadd.f32 %v1360, %v1533
      %v1535 = vpop.f32.mrf.mxu0
      %v1536 = vadd.f32 %v1362, %v1535
      %1537 = vmatmul.bf16.gmra.mxu0 %v877
      %v1538 = vpop.f32.mrf.mxu0
      %v1539 = vadd.f32 %v1365, %v1538
      %v1540 = vpop.f32.mrf.mxu0
      %v1541 = vadd.f32 %v1367, %v1540
      %1542 = vmatmul.bf16.gmra.mxu0 %v881
      %v1543 = vpop.f32.mrf.mxu0
      %v1544 = vadd.f32 %v1370, %v1543
      %v1545 = vpop.f32.mrf.mxu0
      %v1546 = vadd.f32 %v1372, %v1545
      %1547 = vmatmul.bf16.gmra.mxu0 %v885
      %v1548 = vpop.f32.mrf.mxu0
      %v1549 = vadd.f32 %v1375, %v1548
      %v1550 = vpop.f32.mrf.mxu0
      %v1551 = vadd.f32 %v1377, %v1550
      %1552 = vmatmul.bf16.gmra.mxu0 %v889
      %v1553 = vpop.f32.mrf.mxu0
      %v1554 = vadd.f32 %v1380, %v1553
      %v1555 = vpop.f32.mrf.mxu0
      %v1556 = vadd.f32 %v1382, %v1555
      %1557 = vmatmul.bf16.gmra.mxu0 %v893
      %v1558 = vpop.f32.mrf.mxu0
      %v1559 = vadd.f32 %v1385, %v1558
      %v1560 = vpop.f32.mrf.mxu0
      %v1561 = vadd.f32 %v1387, %v1560
      %1562 = vmatmul.bf16.gmra.mxu0 %v897
      %v1563 = vpop.f32.mrf.mxu0
      %v1564 = vadd.f32 %v1390, %v1563
      %v1565 = vpop.f32.mrf.mxu0
      %v1566 = vadd.f32 %v1392, %v1565
      %1567 = vmatmul.bf16.gmra.mxu0 %v901
      %v1568 = vpop.f32.mrf.mxu0
      %v1569 = vadd.f32 %v1395, %v1568
      %v1570 = vpop.f32.mrf.mxu0
      %v1571 = vadd.f32 %v1397, %v1570
      %1572 = vmatmul.bf16.gmra.mxu0 %v905
      %v1573 = vpop.f32.mrf.mxu0
      %v1574 = vadd.f32 %v1400, %v1573
      %v1575 = vpop.f32.mrf.mxu0
      %v1576 = vadd.f32 %v1402, %v1575
      %1577 = vmatmul.bf16.gmra.mxu0 %v909
      %v1578 = vpop.f32.mrf.mxu0
      %v1579 = vadd.f32 %v1405, %v1578
      %v1580 = vpop.f32.mrf.mxu0
      %v1581 = vadd.f32 %v1407, %v1580
      %1582 = vmatmul.bf16.gmra.mxu0 %v913
      %v1583 = vpop.f32.mrf.mxu0
      %v1584 = vadd.f32 %v1410, %v1583
      %v1585 = vpop.f32.mrf.mxu0
      %v1586 = vadd.f32 %v1412, %v1585
      %1587 = vdwg.mxu0
      %1588 = vmatpush.bf16.msra.mxu0 %v1199
      %1589 = vmatpush.bf16.msra.mxu0 %v1198
      %1590 = vmatpush.bf16.msra.mxu0 %v1197
      %1591 = vmatpush.bf16.msra.mxu0 %v1196
      %1592 = vmatpush.bf16.msra.mxu0 %v1195
      %1593 = vmatpush.bf16.msra.mxu0 %v1194
      %1594 = vmatpush.bf16.msra.mxu0 %v1193
      %1595 = vmatpush.bf16.msra.mxu0 %v1192
      %1596 = vmatmul.bf16.gmra.mxu0 %v786
      %v1597 = vpop.f32.mrf.mxu0
      %v1598 = vadd.f32 %v1424, %v1597
      %v1599 = vpop.f32.mrf.mxu0
      %v1600 = vadd.f32 %v1426, %v1599
      %1601 = vmatmul.bf16.gmra.mxu0 %v790
      %v1602 = vpop.f32.mrf.mxu0
      %v1603 = vadd.f32 %v1429, %v1602
      %v1604 = vpop.f32.mrf.mxu0
      %v1605 = vadd.f32 %v1431, %v1604
      %1606 = vmatmul.bf16.gmra.mxu0 %v794
      %v1607 = vpop.f32.mrf.mxu0
      %v1608 = vadd.f32 %v1434, %v1607
      %v1609 = vpop.f32.mrf.mxu0
      %v1610 = vadd.f32 %v1436, %v1609
      %1611 = vmatmul.bf16.gmra.mxu0 %v798
      %v1612 = vpop.f32.mrf.mxu0
      %v1613 = vadd.f32 %v1439, %v1612
      %v1614 = vpop.f32.mrf.mxu0
      %v1615 = vadd.f32 %v1441, %v1614
      %1616 = vmatmul.bf16.gmra.mxu0 %v802
      %v1617 = vpop.f32.mrf.mxu0
      %v1618 = vadd.f32 %v1444, %v1617
      %v1619 = vpop.f32.mrf.mxu0
      %v1620 = vadd.f32 %v1446, %v1619
      %1621 = vmatmul.bf16.gmra.mxu0 %v806
      %v1622 = vpop.f32.mrf.mxu0
      %v1623 = vadd.f32 %v1449, %v1622
      %v1624 = vpop.f32.mrf.mxu0
      %v1625 = vadd.f32 %v1451, %v1624
      %1626 = vmatmul.bf16.gmra.mxu0 %v810
      %v1627 = vpop.f32.mrf.mxu0
      %v1628 = vadd.f32 %v1454, %v1627
      %v1629 = vpop.f32.mrf.mxu0
      %v1630 = vadd.f32 %v1456, %v1629
      %1631 = vmatmul.bf16.gmra.mxu0 %v814
      %v1632 = vpop.f32.mrf.mxu0
      %v1633 = vadd.f32 %v1459, %v1632
      %v1634 = vpop.f32.mrf.mxu0
      %v1635 = vadd.f32 %v1461, %v1634
      %1636 = vmatmul.bf16.gmra.mxu0 %v818
      %v1637 = vpop.f32.mrf.mxu0
      %v1638 = vadd.f32 %v1464, %v1637
      %v1639 = vpop.f32.mrf.mxu0
      %v1640 = vadd.f32 %v1466, %v1639
      %1641 = vmatmul.bf16.gmra.mxu0 %v822
      %v1642 = vpop.f32.mrf.mxu0
      %v1643 = vadd.f32 %v1469, %v1642
      %v1644 = vpop.f32.mrf.mxu0
      %v1645 = vadd.f32 %v1471, %v1644
      %1646 = vmatmul.bf16.gmra.mxu0 %v826
      %v1647 = vpop.f32.mrf.mxu0
      %v1648 = vadd.f32 %v1474, %v1647
      %v1649 = vpop.f32.mrf.mxu0
      %v1650 = vadd.f32 %v1476, %v1649
      %1651 = vmatmul.bf16.gmra.mxu0 %v830
      %v1652 = vpop.f32.mrf.mxu0
      %v1653 = vadd.f32 %v1479, %v1652
      %v1654 = vpop.f32.mrf.mxu0
      %v1655 = vadd.f32 %v1481, %v1654
      %1656 = vmatmul.bf16.gmra.mxu0 %v834
      %v1657 = vpop.f32.mrf.mxu0
      %v1658 = vadd.f32 %v1484, %v1657
      %v1659 = vpop.f32.mrf.mxu0
      %v1660 = vadd.f32 %v1486, %v1659
      %1661 = vmatmul.bf16.gmra.mxu0 %v838
      %v1662 = vpop.f32.mrf.mxu0
      %v1663 = vadd.f32 %v1489, %v1662
      %v1664 = vpop.f32.mrf.mxu0
      %v1665 = vadd.f32 %v1491, %v1664
      %1666 = vmatmul.bf16.gmra.mxu0 %v842
      %v1667 = vpop.f32.mrf.mxu0
      %v1668 = vadd.f32 %v1494, %v1667
      %v1669 = vpop.f32.mrf.mxu0
      %v1670 = vadd.f32 %v1496, %v1669
      %1671 = vmatmul.bf16.gmra.mxu0 %v846
      %v1672 = vpop.f32.mrf.mxu0
      %v1673 = vadd.f32 %v1499, %v1672
      %v1674 = vpop.f32.mrf.mxu0
      %v1675 = vadd.f32 %v1501, %v1674
      %1676 = vmatmul.bf16.gmra.mxu0 %v850
      %v1677 = vpop.f32.mrf.mxu0
      %v1678 = vadd.f32 %v1504, %v1677
      %v1679 = vpop.f32.mrf.mxu0
      %v1680 = vadd.f32 %v1506, %v1679
      %1681 = vmatmul.bf16.gmra.mxu0 %v854
      %v1682 = vpop.f32.mrf.mxu0
      %v1683 = vadd.f32 %v1509, %v1682
      %v1684 = vpop.f32.mrf.mxu0
      %v1685 = vadd.f32 %v1511, %v1684
      %1686 = vmatmul.bf16.gmra.mxu0 %v858
      %v1687 = vpop.f32.mrf.mxu0
      %v1688 = vadd.f32 %v1514, %v1687
      %v1689 = vpop.f32.mrf.mxu0
      %v1690 = vadd.f32 %v1516, %v1689
      %1691 = vmatmul.bf16.gmra.mxu0 %v862
      %v1692 = vpop.f32.mrf.mxu0
      %v1693 = vadd.f32 %v1519, %v1692
      %v1694 = vpop.f32.mrf.mxu0
      %v1695 = vadd.f32 %v1521, %v1694
      %1696 = vmatmul.bf16.gmra.mxu0 %v866
      %v1697 = vpop.f32.mrf.mxu0
      %v1698 = vadd.f32 %v1524, %v1697
      %v1699 = vpop.f32.mrf.mxu0
      %v1700 = vadd.f32 %v1526, %v1699
      %1701 = vmatmul.bf16.gmra.mxu0 %v870
      %v1702 = vpop.f32.mrf.mxu0
      %v1703 = vadd.f32 %v1529, %v1702
      %v1704 = vpop.f32.mrf.mxu0
      %v1705 = vadd.f32 %v1531, %v1704
      %1706 = vmatmul.bf16.gmra.mxu0 %v874
      %v1707 = vpop.f32.mrf.mxu0
      %v1708 = vadd.f32 %v1534, %v1707
      %v1709 = vpop.f32.mrf.mxu0
      %v1710 = vadd.f32 %v1536, %v1709
      %1711 = vmatmul.bf16.gmra.mxu0 %v878
      %v1712 = vpop.f32.mrf.mxu0
      %v1713 = vadd.f32 %v1539, %v1712
      %v1714 = vpop.f32.mrf.mxu0
      %v1715 = vadd.f32 %v1541, %v1714
      %1716 = vmatmul.bf16.gmra.mxu0 %v882
      %v1717 = vpop.f32.mrf.mxu0
      %v1718 = vadd.f32 %v1544, %v1717
      %v1719 = vpop.f32.mrf.mxu0
      %v1720 = vadd.f32 %v1546, %v1719
      %1721 = vmatmul.bf16.gmra.mxu0 %v886
      %v1722 = vpop.f32.mrf.mxu0
      %v1723 = vadd.f32 %v1549, %v1722
      %v1724 = vpop.f32.mrf.mxu0
      %v1725 = vadd.f32 %v1551, %v1724
      %1726 = vmatmul.bf16.gmra.mxu0 %v890
      %v1727 = vpop.f32.mrf.mxu0
      %v1728 = vadd.f32 %v1554, %v1727
      %v1729 = vpop.f32.mrf.mxu0
      %v1730 = vadd.f32 %v1556, %v1729
      %1731 = vmatmul.bf16.gmra.mxu0 %v894
      %v1732 = vpop.f32.mrf.mxu0
      %v1733 = vadd.f32 %v1559, %v1732
      %v1734 = vpop.f32.mrf.mxu0
      %v1735 = vadd.f32 %v1561, %v1734
      %1736 = vmatmul.bf16.gmra.mxu0 %v898
      %v1737 = vpop.f32.mrf.mxu0
      %v1738 = vadd.f32 %v1564, %v1737
      %v1739 = vpop.f32.mrf.mxu0
      %v1740 = vadd.f32 %v1566, %v1739
      %1741 = vmatmul.bf16.gmra.mxu0 %v902
      %v1742 = vpop.f32.mrf.mxu0
      %v1743 = vadd.f32 %v1569, %v1742
      %v1744 = vpop.f32.mrf.mxu0
      %v1745 = vadd.f32 %v1571, %v1744
      %1746 = vmatmul.bf16.gmra.mxu0 %v906
      %v1747 = vpop.f32.mrf.mxu0
      %v1748 = vadd.f32 %v1574, %v1747
      %v1749 = vpop.f32.mrf.mxu0
      %v1750 = vadd.f32 %v1576, %v1749
      %1751 = vmatmul.bf16.gmra.mxu0 %v910
      %v1752 = vpop.f32.mrf.mxu0
      %v1753 = vadd.f32 %v1579, %v1752
      %v1754 = vpop.f32.mrf.mxu0
      %v1755 = vadd.f32 %v1581, %v1754
      %1756 = vmatmul.bf16.gmra.mxu0 %v914
      %v1757 = vpop.f32.mrf.mxu0
      %v1758 = vadd.f32 %v1584, %v1757
      %v1759 = vpop.f32.mrf.mxu0
      %v1760 = vadd.f32 %v1586, %v1759
      %1761 = vdwg.mxu0
      %1762 = vmatpush.bf16.msra.mxu0 %v1207
      %1763 = vmatpush.bf16.msra.mxu0 %v1206
      %1764 = vmatpush.bf16.msra.mxu0 %v1205
      %1765 = vmatpush.bf16.msra.mxu0 %v1204
      %1766 = vmatpush.bf16.msra.mxu0 %v1203
      %1767 = vmatpush.bf16.msra.mxu0 %v1202
      %1768 = vmatpush.bf16.msra.mxu0 %v1201
      %1769 = vmatpush.bf16.msra.mxu0 %v1200
      %1770 = vmatmul.bf16.gmra.mxu0 %v787
      %v1771 = vpop.f32.mrf.mxu0
      %v1772 = vadd.f32 %v1598, %v1771
      %v1773 = vpop.f32.mrf.mxu0
      %v1774 = vadd.f32 %v1600, %v1773
      %1775 = vmatmul.bf16.gmra.mxu0 %v791
      %v1776 = vpop.f32.mrf.mxu0
      %v1777 = vadd.f32 %v1603, %v1776
      %v1778 = vpop.f32.mrf.mxu0
      %v1779 = vadd.f32 %v1605, %v1778
      %1780 = vmatmul.bf16.gmra.mxu0 %v795
      %v1781 = vpop.f32.mrf.mxu0
      %v1782 = vadd.f32 %v1608, %v1781
      %v1783 = vpop.f32.mrf.mxu0
      %v1784 = vadd.f32 %v1610, %v1783
      %1785 = vmatmul.bf16.gmra.mxu0 %v799
      %v1786 = vpop.f32.mrf.mxu0
      %v1787 = vadd.f32 %v1613, %v1786
      %v1788 = vpop.f32.mrf.mxu0
      %v1789 = vadd.f32 %v1615, %v1788
      %1790 = vmatmul.bf16.gmra.mxu0 %v803
      %v1791 = vpop.f32.mrf.mxu0
      %v1792 = vadd.f32 %v1618, %v1791
      %v1793 = vpop.f32.mrf.mxu0
      %v1794 = vadd.f32 %v1620, %v1793
      %1795 = vmatmul.bf16.gmra.mxu0 %v807
      %v1796 = vpop.f32.mrf.mxu0
      %v1797 = vadd.f32 %v1623, %v1796
      %v1798 = vpop.f32.mrf.mxu0
      %v1799 = vadd.f32 %v1625, %v1798
      %1800 = vmatmul.bf16.gmra.mxu0 %v811
      %v1801 = vpop.f32.mrf.mxu0
      %v1802 = vadd.f32 %v1628, %v1801
      %v1803 = vpop.f32.mrf.mxu0
      %v1804 = vadd.f32 %v1630, %v1803
      %1805 = vmatmul.bf16.gmra.mxu0 %v815
      %v1806 = vpop.f32.mrf.mxu0
      %v1807 = vadd.f32 %v1633, %v1806
      %v1808 = vpop.f32.mrf.mxu0
      %v1809 = vadd.f32 %v1635, %v1808
      %1810 = vmatmul.bf16.gmra.mxu0 %v819
      %v1811 = vpop.f32.mrf.mxu0
      %v1812 = vadd.f32 %v1638, %v1811
      %v1813 = vpop.f32.mrf.mxu0
      %v1814 = vadd.f32 %v1640, %v1813
      %1815 = vmatmul.bf16.gmra.mxu0 %v823
      %v1816 = vpop.f32.mrf.mxu0
      %v1817 = vadd.f32 %v1643, %v1816
      %v1818 = vpop.f32.mrf.mxu0
      %v1819 = vadd.f32 %v1645, %v1818
      %1820 = vmatmul.bf16.gmra.mxu0 %v827
      %v1821 = vpop.f32.mrf.mxu0
      %v1822 = vadd.f32 %v1648, %v1821
      %v1823 = vpop.f32.mrf.mxu0
      %v1824 = vadd.f32 %v1650, %v1823
      %1825 = vmatmul.bf16.gmra.mxu0 %v831
      %v1826 = vpop.f32.mrf.mxu0
      %v1827 = vadd.f32 %v1653, %v1826
      %v1828 = vpop.f32.mrf.mxu0
      %v1829 = vadd.f32 %v1655, %v1828
      %1830 = vmatmul.bf16.gmra.mxu0 %v835
      %v1831 = vpop.f32.mrf.mxu0
      %v1832 = vadd.f32 %v1658, %v1831
      %v1833 = vpop.f32.mrf.mxu0
      %v1834 = vadd.f32 %v1660, %v1833
      %1835 = vmatmul.bf16.gmra.mxu0 %v839
      %v1836 = vpop.f32.mrf.mxu0
      %v1837 = vadd.f32 %v1663, %v1836
      %v1838 = vpop.f32.mrf.mxu0
      %v1839 = vadd.f32 %v1665, %v1838
      %1840 = vmatmul.bf16.gmra.mxu0 %v843
      %v1841 = vpop.f32.mrf.mxu0
      %v1842 = vadd.f32 %v1668, %v1841
      %v1843 = vpop.f32.mrf.mxu0
      %v1844 = vadd.f32 %v1670, %v1843
      %1845 = vmatmul.bf16.gmra.mxu0 %v847
      %v1846 = vpop.f32.mrf.mxu0
      %v1847 = vadd.f32 %v1673, %v1846
      %v1848 = vpop.f32.mrf.mxu0
      %v1849 = vadd.f32 %v1675, %v1848
      %1850 = vmatmul.bf16.gmra.mxu0 %v851
      %v1851 = vpop.f32.mrf.mxu0
      %v1852 = vadd.f32 %v1678, %v1851
      %v1853 = vpop.f32.mrf.mxu0
      %v1854 = vadd.f32 %v1680, %v1853
      %1855 = vmatmul.bf16.gmra.mxu0 %v855
      %v1856 = vpop.f32.mrf.mxu0
      %v1857 = vadd.f32 %v1683, %v1856
      %v1858 = vpop.f32.mrf.mxu0
      %v1859 = vadd.f32 %v1685, %v1858
      %1860 = vmatmul.bf16.gmra.mxu0 %v859
      %v1861 = vpop.f32.mrf.mxu0
      %v1862 = vadd.f32 %v1688, %v1861
      %v1863 = vpop.f32.mrf.mxu0
      %v1864 = vadd.f32 %v1690, %v1863
      %1865 = vmatmul.bf16.gmra.mxu0 %v863
      %v1866 = vpop.f32.mrf.mxu0
      %v1867 = vadd.f32 %v1693, %v1866
      %v1868 = vpop.f32.mrf.mxu0
      %v1869 = vadd.f32 %v1695, %v1868
      %1870 = vmatmul.bf16.gmra.mxu0 %v867
      %v1871 = vpop.f32.mrf.mxu0
      %v1872 = vadd.f32 %v1698, %v1871
      %v1873 = vpop.f32.mrf.mxu0
      %v1874 = vadd.f32 %v1700, %v1873
      %1875 = vmatmul.bf16.gmra.mxu0 %v871
      %v1876 = vpop.f32.mrf.mxu0
      %v1877 = vadd.f32 %v1703, %v1876
      %v1878 = vpop.f32.mrf.mxu0
      %v1879 = vadd.f32 %v1705, %v1878
      %1880 = vmatmul.bf16.gmra.mxu0 %v875
      %v1881 = vpop.f32.mrf.mxu0
      %v1882 = vadd.f32 %v1708, %v1881
      %v1883 = vpop.f32.mrf.mxu0
      %v1884 = vadd.f32 %v1710, %v1883
      %1885 = vmatmul.bf16.gmra.mxu0 %v879
      %v1886 = vpop.f32.mrf.mxu0
      %v1887 = vadd.f32 %v1713, %v1886
      %v1888 = vpop.f32.mrf.mxu0
      %v1889 = vadd.f32 %v1715, %v1888
      %1890 = vmatmul.bf16.gmra.mxu0 %v883
      %v1891 = vpop.f32.mrf.mxu0
      %v1892 = vadd.f32 %v1718, %v1891
      %v1893 = vpop.f32.mrf.mxu0
      %v1894 = vadd.f32 %v1720, %v1893
      %1895 = vmatmul.bf16.gmra.mxu0 %v887
      %v1896 = vpop.f32.mrf.mxu0
      %v1897 = vadd.f32 %v1723, %v1896
      %v1898 = vpop.f32.mrf.mxu0
      %v1899 = vadd.f32 %v1725, %v1898
      %1900 = vmatmul.bf16.gmra.mxu0 %v891
      %v1901 = vpop.f32.mrf.mxu0
      %v1902 = vadd.f32 %v1728, %v1901
      %v1903 = vpop.f32.mrf.mxu0
      %v1904 = vadd.f32 %v1730, %v1903
      %1905 = vmatmul.bf16.gmra.mxu0 %v895
      %v1906 = vpop.f32.mrf.mxu0
      %v1907 = vadd.f32 %v1733, %v1906
      %v1908 = vpop.f32.mrf.mxu0
      %v1909 = vadd.f32 %v1735, %v1908
      %1910 = vmatmul.bf16.gmra.mxu0 %v899
      %v1911 = vpop.f32.mrf.mxu0
      %v1912 = vadd.f32 %v1738, %v1911
      %v1913 = vpop.f32.mrf.mxu0
      %v1914 = vadd.f32 %v1740, %v1913
      %1915 = vmatmul.bf16.gmra.mxu0 %v903
      %v1916 = vpop.f32.mrf.mxu0
      %v1917 = vadd.f32 %v1743, %v1916
      %v1918 = vpop.f32.mrf.mxu0
      %v1919 = vadd.f32 %v1745, %v1918
      %1920 = vmatmul.bf16.gmra.mxu0 %v907
      %v1921 = vpop.f32.mrf.mxu0
      %v1922 = vadd.f32 %v1748, %v1921
      %v1923 = vpop.f32.mrf.mxu0
      %v1924 = vadd.f32 %v1750, %v1923
      %1925 = vmatmul.bf16.gmra.mxu0 %v911
      %v1926 = vpop.f32.mrf.mxu0
      %v1927 = vadd.f32 %v1753, %v1926
      %v1928 = vpop.f32.mrf.mxu0
      %v1929 = vadd.f32 %v1755, %v1928
      %1930 = vmatmul.bf16.gmra.mxu0 %v915
      %v1931 = vpop.f32.mrf.mxu0
      %v1932 = vadd.f32 %v1758, %v1931
      %v1933 = vpop.f32.mrf.mxu0
      %v1934 = vadd.f32 %v1760, %v1933
      %1935 = vdwg.mxu0
      %s1936 = scalar_lea.vmem %s178, 256
      %v1937 = vld [vmem:[%s1936] sm:$0xf]
      %v1938 = vld [vmem:[%s1936 + $0x4] sm:$0xf]
      %v1939 = vld [vmem:[%s1936 + $0x8] sm:$0xf]
      %v1940 = vld [vmem:[%s1936 + $0xc] sm:$0xf]
      %v1941 = vld [vmem:[%s1936 + $0x10] sm:$0xf]
      %v1942 = vld [vmem:[%s1936 + $0x14] sm:$0xf]
      %v1943 = vld [vmem:[%s1936 + $0x18] sm:$0xf]
      %v1944 = vld [vmem:[%s1936 + $0x1c] sm:$0xf]
      %v1945 = vld [vmem:[%s1936 + $0x20] sm:$0xf]
      %v1946 = vld [vmem:[%s1936 + $0x24] sm:$0xf]
      %v1947 = vld [vmem:[%s1936 + $0x28] sm:$0xf]
      %v1948 = vld [vmem:[%s1936 + $0x2c] sm:$0xf]
      %v1949 = vld [vmem:[%s1936 + $0x30] sm:$0xf]
      %v1950 = vld [vmem:[%s1936 + $0x34] sm:$0xf]
      %v1951 = vld [vmem:[%s1936 + $0x38] sm:$0xf]
      %v1952 = vld [vmem:[%s1936 + $0x3c] sm:$0xf]
      %v1953 = vld [vmem:[%s1936 + $0x40] sm:$0xf]
      %v1954 = vld [vmem:[%s1936 + $0x44] sm:$0xf]
      %v1955 = vld [vmem:[%s1936 + $0x48] sm:$0xf]
      %v1956 = vld [vmem:[%s1936 + $0x4c] sm:$0xf]
      %v1957 = vld [vmem:[%s1936 + $0x50] sm:$0xf]
      %v1958 = vld [vmem:[%s1936 + $0x54] sm:$0xf]
      %v1959 = vld [vmem:[%s1936 + $0x58] sm:$0xf]
      %v1960 = vld [vmem:[%s1936 + $0x5c] sm:$0xf]
      %v1961 = vld [vmem:[%s1936 + $0x60] sm:$0xf]
      %v1962 = vld [vmem:[%s1936 + $0x64] sm:$0xf]
      %v1963 = vld [vmem:[%s1936 + $0x68] sm:$0xf]
      %v1964 = vld [vmem:[%s1936 + $0x6c] sm:$0xf]
      %v1965 = vld [vmem:[%s1936 + $0x70] sm:$0xf]
      %v1966 = vld [vmem:[%s1936 + $0x74] sm:$0xf]
      %v1967 = vld [vmem:[%s1936 + $0x78] sm:$0xf]
      %v1968 = vld [vmem:[%s1936 + $0x7c] sm:$0xf]
      %v1969 = vld [vmem:[%s1936 + $0x80] sm:$0xf]
      %v1970 = vld [vmem:[%s1936 + $0x84] sm:$0xf]
      %v1971 = vld [vmem:[%s1936 + $0x88] sm:$0xf]
      %v1972 = vld [vmem:[%s1936 + $0x8c] sm:$0xf]
      %v1973 = vld [vmem:[%s1936 + $0x90] sm:$0xf]
      %v1974 = vld [vmem:[%s1936 + $0x94] sm:$0xf]
      %v1975 = vld [vmem:[%s1936 + $0x98] sm:$0xf]
      %v1976 = vld [vmem:[%s1936 + $0x9c] sm:$0xf]
      %v1977 = vld [vmem:[%s1936 + $0xa0] sm:$0xf]
      %v1978 = vld [vmem:[%s1936 + $0xa4] sm:$0xf]
      %v1979 = vld [vmem:[%s1936 + $0xa8] sm:$0xf]
      %v1980 = vld [vmem:[%s1936 + $0xac] sm:$0xf]
      %v1981 = vld [vmem:[%s1936 + $0xb0] sm:$0xf]
      %v1982 = vld [vmem:[%s1936 + $0xb4] sm:$0xf]
      %v1983 = vld [vmem:[%s1936 + $0xb8] sm:$0xf]
      %v1984 = vld [vmem:[%s1936 + $0xbc] sm:$0xf]
      %v1985 = vld [vmem:[%s1936 + $0xc0] sm:$0xf]
      %v1986 = vld [vmem:[%s1936 + $0xc4] sm:$0xf]
      %v1987 = vld [vmem:[%s1936 + $0xc8] sm:$0xf]
      %v1988 = vld [vmem:[%s1936 + $0xcc] sm:$0xf]
      %v1989 = vld [vmem:[%s1936 + $0xd0] sm:$0xf]
      %v1990 = vld [vmem:[%s1936 + $0xd4] sm:$0xf]
      %v1991 = vld [vmem:[%s1936 + $0xd8] sm:$0xf]
      %v1992 = vld [vmem:[%s1936 + $0xdc] sm:$0xf]
      %v1993 = vld [vmem:[%s1936 + $0xe0] sm:$0xf]
      %v1994 = vld [vmem:[%s1936 + $0xe4] sm:$0xf]
      %v1995 = vld [vmem:[%s1936 + $0xe8] sm:$0xf]
      %v1996 = vld [vmem:[%s1936 + $0xec] sm:$0xf]
      %v1997 = vld [vmem:[%s1936 + $0xf0] sm:$0xf]
      %v1998 = vld [vmem:[%s1936 + $0xf4] sm:$0xf]
      %v1999 = vld [vmem:[%s1936 + $0xf8] sm:$0xf]
      %v2000 = vld [vmem:[%s1936 + $0xfc] sm:$0xf]
      %v2065 = vunpack.c.l.b16 %v1937
      %v2066 = vunpack.c.l.b16 %v1938
      %v2067 = vunpack.c.l.b16 %v1939
      %v2068 = vunpack.c.l.b16 %v1940
      %v2069 = vunpack.c.l.b16 %v1941
      %v2070 = vunpack.c.l.b16 %v1942
      %v2071 = vunpack.c.l.b16 %v1943
      %v2072 = vunpack.c.l.b16 %v1944
      %v2073 = vunpack.c.l.b16 %v1945
      %v2074 = vunpack.c.l.b16 %v1946
      %v2075 = vunpack.c.l.b16 %v1947
      %v2076 = vunpack.c.l.b16 %v1948
      %v2077 = vunpack.c.l.b16 %v1949
      %v2078 = vunpack.c.l.b16 %v1950
      %v2079 = vunpack.c.l.b16 %v1951
      %v2080 = vunpack.c.l.b16 %v1952
      %v2081 = vunpack.c.l.b16 %v1953
      %v2082 = vunpack.c.l.b16 %v1954
      %v2083 = vunpack.c.l.b16 %v1955
      %v2084 = vunpack.c.l.b16 %v1956
      %v2085 = vunpack.c.l.b16 %v1957
      %v2086 = vunpack.c.l.b16 %v1958
      %v2087 = vunpack.c.l.b16 %v1959
      %v2088 = vunpack.c.l.b16 %v1960
      %v2089 = vunpack.c.l.b16 %v1961
      %v2090 = vunpack.c.l.b16 %v1962
      %v2091 = vunpack.c.l.b16 %v1963
      %v2092 = vunpack.c.l.b16 %v1964
      %v2093 = vunpack.c.l.b16 %v1965
      %v2094 = vunpack.c.l.b16 %v1966
      %v2095 = vunpack.c.l.b16 %v1967
      %v2096 = vunpack.c.l.b16 %v1968
      %v2097 = vunpack.c.l.b16 %v1969
      %v2098 = vunpack.c.l.b16 %v1970
      %v2099 = vunpack.c.l.b16 %v1971
      %v2100 = vunpack.c.l.b16 %v1972
      %v2101 = vunpack.c.l.b16 %v1973
      %v2102 = vunpack.c.l.b16 %v1974
      %v2103 = vunpack.c.l.b16 %v1975
      %v2104 = vunpack.c.l.b16 %v1976
      %v2105 = vunpack.c.l.b16 %v1977
      %v2106 = vunpack.c.l.b16 %v1978
      %v2107 = vunpack.c.l.b16 %v1979
      %v2108 = vunpack.c.l.b16 %v1980
      %v2109 = vunpack.c.l.b16 %v1981
      %v2110 = vunpack.c.l.b16 %v1982
      %v2111 = vunpack.c.l.b16 %v1983
      %v2112 = vunpack.c.l.b16 %v1984
      %v2113 = vunpack.c.l.b16 %v1985
      %v2114 = vunpack.c.l.b16 %v1986
      %v2115 = vunpack.c.l.b16 %v1987
      %v2116 = vunpack.c.l.b16 %v1988
      %v2117 = vunpack.c.l.b16 %v1989
      %v2118 = vunpack.c.l.b16 %v1990
      %v2119 = vunpack.c.l.b16 %v1991
      %v2120 = vunpack.c.l.b16 %v1992
      %v2121 = vunpack.c.l.b16 %v1993
      %v2122 = vunpack.c.l.b16 %v1994
      %v2123 = vunpack.c.l.b16 %v1995
      %v2124 = vunpack.c.l.b16 %v1996
      %v2125 = vunpack.c.l.b16 %v1997
      %v2126 = vunpack.c.l.b16 %v1998
      %v2127 = vunpack.c.l.b16 %v1999
      %v2128 = vunpack.c.l.b16 %v2000
      %v2129 = vpack.c.b16 %v2066, %v2065
      %v2130 = vpack.c.b16 %v2068, %v2067
      %v2131 = vpack.c.b16 %v2070, %v2069
      %v2132 = vpack.c.b16 %v2072, %v2071
      %v2133 = vpack.c.b16 %v2074, %v2073
      %v2134 = vpack.c.b16 %v2076, %v2075
      %v2135 = vpack.c.b16 %v2078, %v2077
      %v2136 = vpack.c.b16 %v2080, %v2079
      %v2137 = vpack.c.b16 %v2082, %v2081
      %v2138 = vpack.c.b16 %v2084, %v2083
      %v2139 = vpack.c.b16 %v2086, %v2085
      %v2140 = vpack.c.b16 %v2088, %v2087
      %v2141 = vpack.c.b16 %v2090, %v2089
      %v2142 = vpack.c.b16 %v2092, %v2091
      %v2143 = vpack.c.b16 %v2094, %v2093
      %v2144 = vpack.c.b16 %v2096, %v2095
      %v2145 = vpack.c.b16 %v2098, %v2097
      %v2146 = vpack.c.b16 %v2100, %v2099
      %v2147 = vpack.c.b16 %v2102, %v2101
      %v2148 = vpack.c.b16 %v2104, %v2103
      %v2149 = vpack.c.b16 %v2106, %v2105
      %v2150 = vpack.c.b16 %v2108, %v2107
      %v2151 = vpack.c.b16 %v2110, %v2109
      %v2152 = vpack.c.b16 %v2112, %v2111
      %v2153 = vpack.c.b16 %v2114, %v2113
      %v2154 = vpack.c.b16 %v2116, %v2115
      %v2155 = vpack.c.b16 %v2118, %v2117
      %v2156 = vpack.c.b16 %v2120, %v2119
      %v2157 = vpack.c.b16 %v2122, %v2121
      %v2158 = vpack.c.b16 %v2124, %v2123
      %v2159 = vpack.c.b16 %v2126, %v2125
      %v2160 = vpack.c.b16 %v2128, %v2127
      %2193 = vmatpush.bf16.msra.mxu0 %v2136
      %2194 = vmatpush.bf16.msra.mxu0 %v2135
      %2195 = vmatpush.bf16.msra.mxu0 %v2134
      %2196 = vmatpush.bf16.msra.mxu0 %v2133
      %2197 = vmatpush.bf16.msra.mxu0 %v2132
      %2198 = vmatpush.bf16.msra.mxu0 %v2131
      %2199 = vmatpush.bf16.msra.mxu0 %v2130
      %2200 = vmatpush.bf16.msra.mxu0 %v2129
      %2201 = vmatmul.bf16.gmra.mxu0 %v784
      %v2202 = vpop.f32.mrf.mxu0
      %v2203 = vadd.f32 0.0, %v2202
      %v2204 = vpop.f32.mrf.mxu0
      %v2205 = vadd.f32 0.0, %v2204
      %2206 = vmatmul.bf16.gmra.mxu0 %v788
      %v2207 = vpop.f32.mrf.mxu0
      %v2208 = vadd.f32 0.0, %v2207
      %v2209 = vpop.f32.mrf.mxu0
      %v2210 = vadd.f32 0.0, %v2209
      %2211 = vmatmul.bf16.gmra.mxu0 %v792
      %v2212 = vpop.f32.mrf.mxu0
      %v2213 = vadd.f32 0.0, %v2212
      %v2214 = vpop.f32.mrf.mxu0
      %v2215 = vadd.f32 0.0, %v2214
      %2216 = vmatmul.bf16.gmra.mxu0 %v796
      %v2217 = vpop.f32.mrf.mxu0
      %v2218 = vadd.f32 0.0, %v2217
      %v2219 = vpop.f32.mrf.mxu0
      %v2220 = vadd.f32 0.0, %v2219
      %2221 = vmatmul.bf16.gmra.mxu0 %v800
      %v2222 = vpop.f32.mrf.mxu0
      %v2223 = vadd.f32 0.0, %v2222
      %v2224 = vpop.f32.mrf.mxu0
      %v2225 = vadd.f32 0.0, %v2224
      %2226 = vmatmul.bf16.gmra.mxu0 %v804
      %v2227 = vpop.f32.mrf.mxu0
      %v2228 = vadd.f32 0.0, %v2227
      %v2229 = vpop.f32.mrf.mxu0
      %v2230 = vadd.f32 0.0, %v2229
      %2231 = vmatmul.bf16.gmra.mxu0 %v808
      %v2232 = vpop.f32.mrf.mxu0
      %v2233 = vadd.f32 0.0, %v2232
      %v2234 = vpop.f32.mrf.mxu0
      %v2235 = vadd.f32 0.0, %v2234
      %2236 = vmatmul.bf16.gmra.mxu0 %v812
      %v2237 = vpop.f32.mrf.mxu0
      %v2238 = vadd.f32 0.0, %v2237
      %v2239 = vpop.f32.mrf.mxu0
      %v2240 = vadd.f32 0.0, %v2239
      %2241 = vmatmul.bf16.gmra.mxu0 %v816
      %v2242 = vpop.f32.mrf.mxu0
      %v2243 = vadd.f32 0.0, %v2242
      %v2244 = vpop.f32.mrf.mxu0
      %v2245 = vadd.f32 0.0, %v2244
      %2246 = vmatmul.bf16.gmra.mxu0 %v820
      %v2247 = vpop.f32.mrf.mxu0
      %v2248 = vadd.f32 0.0, %v2247
      %v2249 = vpop.f32.mrf.mxu0
      %v2250 = vadd.f32 0.0, %v2249
      %2251 = vmatmul.bf16.gmra.mxu0 %v824
      %v2252 = vpop.f32.mrf.mxu0
      %v2253 = vadd.f32 0.0, %v2252
      %v2254 = vpop.f32.mrf.mxu0
      %v2255 = vadd.f32 0.0, %v2254
      %2256 = vmatmul.bf16.gmra.mxu0 %v828
      %v2257 = vpop.f32.mrf.mxu0
      %v2258 = vadd.f32 0.0, %v2257
      %v2259 = vpop.f32.mrf.mxu0
      %v2260 = vadd.f32 0.0, %v2259
      %2261 = vmatmul.bf16.gmra.mxu0 %v832
      %v2262 = vpop.f32.mrf.mxu0
      %v2263 = vadd.f32 0.0, %v2262
      %v2264 = vpop.f32.mrf.mxu0
      %v2265 = vadd.f32 0.0, %v2264
      %2266 = vmatmul.bf16.gmra.mxu0 %v836
      %v2267 = vpop.f32.mrf.mxu0
      %v2268 = vadd.f32 0.0, %v2267
      %v2269 = vpop.f32.mrf.mxu0
      %v2270 = vadd.f32 0.0, %v2269
      %2271 = vmatmul.bf16.gmra.mxu0 %v840
      %v2272 = vpop.f32.mrf.mxu0
      %v2273 = vadd.f32 0.0, %v2272
      %v2274 = vpop.f32.mrf.mxu0
      %v2275 = vadd.f32 0.0, %v2274
      %2276 = vmatmul.bf16.gmra.mxu0 %v844
      %v2277 = vpop.f32.mrf.mxu0
      %v2278 = vadd.f32 0.0, %v2277
      %v2279 = vpop.f32.mrf.mxu0
      %v2280 = vadd.f32 0.0, %v2279
      %2281 = vmatmul.bf16.gmra.mxu0 %v848
      %v2282 = vpop.f32.mrf.mxu0
      %v2283 = vadd.f32 0.0, %v2282
      %v2284 = vpop.f32.mrf.mxu0
      %v2285 = vadd.f32 0.0, %v2284
      %2286 = vmatmul.bf16.gmra.mxu0 %v852
      %v2287 = vpop.f32.mrf.mxu0
      %v2288 = vadd.f32 0.0, %v2287
      %v2289 = vpop.f32.mrf.mxu0
      %v2290 = vadd.f32 0.0, %v2289
      %2291 = vmatmul.bf16.gmra.mxu0 %v856
      %v2292 = vpop.f32.mrf.mxu0
      %v2293 = vadd.f32 0.0, %v2292
      %v2294 = vpop.f32.mrf.mxu0
      %v2295 = vadd.f32 0.0, %v2294
      %2296 = vmatmul.bf16.gmra.mxu0 %v860
      %v2297 = vpop.f32.mrf.mxu0
      %v2298 = vadd.f32 0.0, %v2297
      %v2299 = vpop.f32.mrf.mxu0
      %v2300 = vadd.f32 0.0, %v2299
      %2301 = vmatmul.bf16.gmra.mxu0 %v864
      %v2302 = vpop.f32.mrf.mxu0
      %v2303 = vadd.f32 0.0, %v2302
      %v2304 = vpop.f32.mrf.mxu0
      %v2305 = vadd.f32 0.0, %v2304
      %2306 = vmatmul.bf16.gmra.mxu0 %v868
      %v2307 = vpop.f32.mrf.mxu0
      %v2308 = vadd.f32 0.0, %v2307
      %v2309 = vpop.f32.mrf.mxu0
      %v2310 = vadd.f32 0.0, %v2309
      %2311 = vmatmul.bf16.gmra.mxu0 %v872
      %v2312 = vpop.f32.mrf.mxu0
      %v2313 = vadd.f32 0.0, %v2312
      %v2314 = vpop.f32.mrf.mxu0
      %v2315 = vadd.f32 0.0, %v2314
      %2316 = vmatmul.bf16.gmra.mxu0 %v876
      %v2317 = vpop.f32.mrf.mxu0
      %v2318 = vadd.f32 0.0, %v2317
      %v2319 = vpop.f32.mrf.mxu0
      %v2320 = vadd.f32 0.0, %v2319
      %2321 = vmatmul.bf16.gmra.mxu0 %v880
      %v2322 = vpop.f32.mrf.mxu0
      %v2323 = vadd.f32 0.0, %v2322
      %v2324 = vpop.f32.mrf.mxu0
      %v2325 = vadd.f32 0.0, %v2324
      %2326 = vmatmul.bf16.gmra.mxu0 %v884
      %v2327 = vpop.f32.mrf.mxu0
      %v2328 = vadd.f32 0.0, %v2327
      %v2329 = vpop.f32.mrf.mxu0
      %v2330 = vadd.f32 0.0, %v2329
      %2331 = vmatmul.bf16.gmra.mxu0 %v888
      %v2332 = vpop.f32.mrf.mxu0
      %v2333 = vadd.f32 0.0, %v2332
      %v2334 = vpop.f32.mrf.mxu0
      %v2335 = vadd.f32 0.0, %v2334
      %2336 = vmatmul.bf16.gmra.mxu0 %v892
      %v2337 = vpop.f32.mrf.mxu0
      %v2338 = vadd.f32 0.0, %v2337
      %v2339 = vpop.f32.mrf.mxu0
      %v2340 = vadd.f32 0.0, %v2339
      %2341 = vmatmul.bf16.gmra.mxu0 %v896
      %v2342 = vpop.f32.mrf.mxu0
      %v2343 = vadd.f32 0.0, %v2342
      %v2344 = vpop.f32.mrf.mxu0
      %v2345 = vadd.f32 0.0, %v2344
      %2346 = vmatmul.bf16.gmra.mxu0 %v900
      %v2347 = vpop.f32.mrf.mxu0
      %v2348 = vadd.f32 0.0, %v2347
      %v2349 = vpop.f32.mrf.mxu0
      %v2350 = vadd.f32 0.0, %v2349
      %2351 = vmatmul.bf16.gmra.mxu0 %v904
      %v2352 = vpop.f32.mrf.mxu0
      %v2353 = vadd.f32 0.0, %v2352
      %v2354 = vpop.f32.mrf.mxu0
      %v2355 = vadd.f32 0.0, %v2354
      %2356 = vmatmul.bf16.gmra.mxu0 %v908
      %v2357 = vpop.f32.mrf.mxu0
      %v2358 = vadd.f32 0.0, %v2357
      %v2359 = vpop.f32.mrf.mxu0
      %v2360 = vadd.f32 0.0, %v2359
      %2361 = vmatmul.bf16.gmra.mxu0 %v912
      %v2362 = vpop.f32.mrf.mxu0
      %v2363 = vadd.f32 0.0, %v2362
      %v2364 = vpop.f32.mrf.mxu0
      %v2365 = vadd.f32 0.0, %v2364
      %2366 = vdwg.mxu0
      %2367 = vmatpush.bf16.msra.mxu0 %v2144
      %2368 = vmatpush.bf16.msra.mxu0 %v2143
      %2369 = vmatpush.bf16.msra.mxu0 %v2142
      %2370 = vmatpush.bf16.msra.mxu0 %v2141
      %2371 = vmatpush.bf16.msra.mxu0 %v2140
      %2372 = vmatpush.bf16.msra.mxu0 %v2139
      %2373 = vmatpush.bf16.msra.mxu0 %v2138
      %2374 = vmatpush.bf16.msra.mxu0 %v2137
      %2375 = vmatmul.bf16.gmra.mxu0 %v785
      %v2376 = vpop.f32.mrf.mxu0
      %v2377 = vadd.f32 %v2203, %v2376
      %v2378 = vpop.f32.mrf.mxu0
      %v2379 = vadd.f32 %v2205, %v2378
      %2380 = vmatmul.bf16.gmra.mxu0 %v789
      %v2381 = vpop.f32.mrf.mxu0
      %v2382 = vadd.f32 %v2208, %v2381
      %v2383 = vpop.f32.mrf.mxu0
      %v2384 = vadd.f32 %v2210, %v2383
      %2385 = vmatmul.bf16.gmra.mxu0 %v793
      %v2386 = vpop.f32.mrf.mxu0
      %v2387 = vadd.f32 %v2213, %v2386
      %v2388 = vpop.f32.mrf.mxu0
      %v2389 = vadd.f32 %v2215, %v2388
      %2390 = vmatmul.bf16.gmra.mxu0 %v797
      %v2391 = vpop.f32.mrf.mxu0
      %v2392 = vadd.f32 %v2218, %v2391
      %v2393 = vpop.f32.mrf.mxu0
      %v2394 = vadd.f32 %v2220, %v2393
      %2395 = vmatmul.bf16.gmra.mxu0 %v801
      %v2396 = vpop.f32.mrf.mxu0
      %v2397 = vadd.f32 %v2223, %v2396
      %v2398 = vpop.f32.mrf.mxu0
      %v2399 = vadd.f32 %v2225, %v2398
      %2400 = vmatmul.bf16.gmra.mxu0 %v805
      %v2401 = vpop.f32.mrf.mxu0
      %v2402 = vadd.f32 %v2228, %v2401
      %v2403 = vpop.f32.mrf.mxu0
      %v2404 = vadd.f32 %v2230, %v2403
      %2405 = vmatmul.bf16.gmra.mxu0 %v809
      %v2406 = vpop.f32.mrf.mxu0
      %v2407 = vadd.f32 %v2233, %v2406
      %v2408 = vpop.f32.mrf.mxu0
      %v2409 = vadd.f32 %v2235, %v2408
      %2410 = vmatmul.bf16.gmra.mxu0 %v813
      %v2411 = vpop.f32.mrf.mxu0
      %v2412 = vadd.f32 %v2238, %v2411
      %v2413 = vpop.f32.mrf.mxu0
      %v2414 = vadd.f32 %v2240, %v2413
      %2415 = vmatmul.bf16.gmra.mxu0 %v817
      %v2416 = vpop.f32.mrf.mxu0
      %v2417 = vadd.f32 %v2243, %v2416
      %v2418 = vpop.f32.mrf.mxu0
      %v2419 = vadd.f32 %v2245, %v2418
      %2420 = vmatmul.bf16.gmra.mxu0 %v821
      %v2421 = vpop.f32.mrf.mxu0
      %v2422 = vadd.f32 %v2248, %v2421
      %v2423 = vpop.f32.mrf.mxu0
      %v2424 = vadd.f32 %v2250, %v2423
      %2425 = vmatmul.bf16.gmra.mxu0 %v825
      %v2426 = vpop.f32.mrf.mxu0
      %v2427 = vadd.f32 %v2253, %v2426
      %v2428 = vpop.f32.mrf.mxu0
      %v2429 = vadd.f32 %v2255, %v2428
      %2430 = vmatmul.bf16.gmra.mxu0 %v829
      %v2431 = vpop.f32.mrf.mxu0
      %v2432 = vadd.f32 %v2258, %v2431
      %v2433 = vpop.f32.mrf.mxu0
      %v2434 = vadd.f32 %v2260, %v2433
      %2435 = vmatmul.bf16.gmra.mxu0 %v833
      %v2436 = vpop.f32.mrf.mxu0
      %v2437 = vadd.f32 %v2263, %v2436
      %v2438 = vpop.f32.mrf.mxu0
      %v2439 = vadd.f32 %v2265, %v2438
      %2440 = vmatmul.bf16.gmra.mxu0 %v837
      %v2441 = vpop.f32.mrf.mxu0
      %v2442 = vadd.f32 %v2268, %v2441
      %v2443 = vpop.f32.mrf.mxu0
      %v2444 = vadd.f32 %v2270, %v2443
      %2445 = vmatmul.bf16.gmra.mxu0 %v841
      %v2446 = vpop.f32.mrf.mxu0
      %v2447 = vadd.f32 %v2273, %v2446
      %v2448 = vpop.f32.mrf.mxu0
      %v2449 = vadd.f32 %v2275, %v2448
      %2450 = vmatmul.bf16.gmra.mxu0 %v845
      %v2451 = vpop.f32.mrf.mxu0
      %v2452 = vadd.f32 %v2278, %v2451
      %v2453 = vpop.f32.mrf.mxu0
      %v2454 = vadd.f32 %v2280, %v2453
      %2455 = vmatmul.bf16.gmra.mxu0 %v849
      %v2456 = vpop.f32.mrf.mxu0
      %v2457 = vadd.f32 %v2283, %v2456
      %v2458 = vpop.f32.mrf.mxu0
      %v2459 = vadd.f32 %v2285, %v2458
      %2460 = vmatmul.bf16.gmra.mxu0 %v853
      %v2461 = vpop.f32.mrf.mxu0
      %v2462 = vadd.f32 %v2288, %v2461
      %v2463 = vpop.f32.mrf.mxu0
      %v2464 = vadd.f32 %v2290, %v2463
      %2465 = vmatmul.bf16.gmra.mxu0 %v857
      %v2466 = vpop.f32.mrf.mxu0
      %v2467 = vadd.f32 %v2293, %v2466
      %v2468 = vpop.f32.mrf.mxu0
      %v2469 = vadd.f32 %v2295, %v2468
      %2470 = vmatmul.bf16.gmra.mxu0 %v861
      %v2471 = vpop.f32.mrf.mxu0
      %v2472 = vadd.f32 %v2298, %v2471
      %v2473 = vpop.f32.mrf.mxu0
      %v2474 = vadd.f32 %v2300, %v2473
      %2475 = vmatmul.bf16.gmra.mxu0 %v865
      %v2476 = vpop.f32.mrf.mxu0
      %v2477 = vadd.f32 %v2303, %v2476
      %v2478 = vpop.f32.mrf.mxu0
      %v2479 = vadd.f32 %v2305, %v2478
      %2480 = vmatmul.bf16.gmra.mxu0 %v869
      %v2481 = vpop.f32.mrf.mxu0
      %v2482 = vadd.f32 %v2308, %v2481
      %v2483 = vpop.f32.mrf.mxu0
      %v2484 = vadd.f32 %v2310, %v2483
      %2485 = vmatmul.bf16.gmra.mxu0 %v873
      %v2486 = vpop.f32.mrf.mxu0
      %v2487 = vadd.f32 %v2313, %v2486
      %v2488 = vpop.f32.mrf.mxu0
      %v2489 = vadd.f32 %v2315, %v2488
      %2490 = vmatmul.bf16.gmra.mxu0 %v877
      %v2491 = vpop.f32.mrf.mxu0
      %v2492 = vadd.f32 %v2318, %v2491
      %v2493 = vpop.f32.mrf.mxu0
      %v2494 = vadd.f32 %v2320, %v2493
      %2495 = vmatmul.bf16.gmra.mxu0 %v881
      %v2496 = vpop.f32.mrf.mxu0
      %v2497 = vadd.f32 %v2323, %v2496
      %v2498 = vpop.f32.mrf.mxu0
      %v2499 = vadd.f32 %v2325, %v2498
      %2500 = vmatmul.bf16.gmra.mxu0 %v885
      %v2501 = vpop.f32.mrf.mxu0
      %v2502 = vadd.f32 %v2328, %v2501
      %v2503 = vpop.f32.mrf.mxu0
      %v2504 = vadd.f32 %v2330, %v2503
      %2505 = vmatmul.bf16.gmra.mxu0 %v889
      %v2506 = vpop.f32.mrf.mxu0
      %v2507 = vadd.f32 %v2333, %v2506
      %v2508 = vpop.f32.mrf.mxu0
      %v2509 = vadd.f32 %v2335, %v2508
      %2510 = vmatmul.bf16.gmra.mxu0 %v893
      %v2511 = vpop.f32.mrf.mxu0
      %v2512 = vadd.f32 %v2338, %v2511
      %v2513 = vpop.f32.mrf.mxu0
      %v2514 = vadd.f32 %v2340, %v2513
      %2515 = vmatmul.bf16.gmra.mxu0 %v897
      %v2516 = vpop.f32.mrf.mxu0
      %v2517 = vadd.f32 %v2343, %v2516
      %v2518 = vpop.f32.mrf.mxu0
      %v2519 = vadd.f32 %v2345, %v2518
      %2520 = vmatmul.bf16.gmra.mxu0 %v901
      %v2521 = vpop.f32.mrf.mxu0
      %v2522 = vadd.f32 %v2348, %v2521
      %v2523 = vpop.f32.mrf.mxu0
      %v2524 = vadd.f32 %v2350, %v2523
      %2525 = vmatmul.bf16.gmra.mxu0 %v905
      %v2526 = vpop.f32.mrf.mxu0
      %v2527 = vadd.f32 %v2353, %v2526
      %v2528 = vpop.f32.mrf.mxu0
      %v2529 = vadd.f32 %v2355, %v2528
      %2530 = vmatmul.bf16.gmra.mxu0 %v909
      %v2531 = vpop.f32.mrf.mxu0
      %v2532 = vadd.f32 %v2358, %v2531
      %v2533 = vpop.f32.mrf.mxu0
      %v2534 = vadd.f32 %v2360, %v2533
      %2535 = vmatmul.bf16.gmra.mxu0 %v913
      %v2536 = vpop.f32.mrf.mxu0
      %v2537 = vadd.f32 %v2363, %v2536
      %v2538 = vpop.f32.mrf.mxu0
      %v2539 = vadd.f32 %v2365, %v2538
      %2540 = vdwg.mxu0
      %2541 = vmatpush.bf16.msra.mxu0 %v2152
      %2542 = vmatpush.bf16.msra.mxu0 %v2151
      %2543 = vmatpush.bf16.msra.mxu0 %v2150
      %2544 = vmatpush.bf16.msra.mxu0 %v2149
      %2545 = vmatpush.bf16.msra.mxu0 %v2148
      %2546 = vmatpush.bf16.msra.mxu0 %v2147
      %2547 = vmatpush.bf16.msra.mxu0 %v2146
      %2548 = vmatpush.bf16.msra.mxu0 %v2145
      %2549 = vmatmul.bf16.gmra.mxu0 %v786
      %v2550 = vpop.f32.mrf.mxu0
      %v2551 = vadd.f32 %v2377, %v2550
      %v2552 = vpop.f32.mrf.mxu0
      %v2553 = vadd.f32 %v2379, %v2552
      %2554 = vmatmul.bf16.gmra.mxu0 %v790
      %v2555 = vpop.f32.mrf.mxu0
      %v2556 = vadd.f32 %v2382, %v2555
      %v2557 = vpop.f32.mrf.mxu0
      %v2558 = vadd.f32 %v2384, %v2557
      %2559 = vmatmul.bf16.gmra.mxu0 %v794
      %v2560 = vpop.f32.mrf.mxu0
      %v2561 = vadd.f32 %v2387, %v2560
      %v2562 = vpop.f32.mrf.mxu0
      %v2563 = vadd.f32 %v2389, %v2562
      %2564 = vmatmul.bf16.gmra.mxu0 %v798
      %v2565 = vpop.f32.mrf.mxu0
      %v2566 = vadd.f32 %v2392, %v2565
      %v2567 = vpop.f32.mrf.mxu0
      %v2568 = vadd.f32 %v2394, %v2567
      %2569 = vmatmul.bf16.gmra.mxu0 %v802
      %v2570 = vpop.f32.mrf.mxu0
      %v2571 = vadd.f32 %v2397, %v2570
      %v2572 = vpop.f32.mrf.mxu0
      %v2573 = vadd.f32 %v2399, %v2572
      %2574 = vmatmul.bf16.gmra.mxu0 %v806
      %v2575 = vpop.f32.mrf.mxu0
      %v2576 = vadd.f32 %v2402, %v2575
      %v2577 = vpop.f32.mrf.mxu0
      %v2578 = vadd.f32 %v2404, %v2577
      %2579 = vmatmul.bf16.gmra.mxu0 %v810
      %v2580 = vpop.f32.mrf.mxu0
      %v2581 = vadd.f32 %v2407, %v2580
      %v2582 = vpop.f32.mrf.mxu0
      %v2583 = vadd.f32 %v2409, %v2582
      %2584 = vmatmul.bf16.gmra.mxu0 %v814
      %v2585 = vpop.f32.mrf.mxu0
      %v2586 = vadd.f32 %v2412, %v2585
      %v2587 = vpop.f32.mrf.mxu0
      %v2588 = vadd.f32 %v2414, %v2587
      %2589 = vmatmul.bf16.gmra.mxu0 %v818
      %v2590 = vpop.f32.mrf.mxu0
      %v2591 = vadd.f32 %v2417, %v2590
      %v2592 = vpop.f32.mrf.mxu0
      %v2593 = vadd.f32 %v2419, %v2592
      %2594 = vmatmul.bf16.gmra.mxu0 %v822
      %v2595 = vpop.f32.mrf.mxu0
      %v2596 = vadd.f32 %v2422, %v2595
      %v2597 = vpop.f32.mrf.mxu0
      %v2598 = vadd.f32 %v2424, %v2597
      %2599 = vmatmul.bf16.gmra.mxu0 %v826
      %v2600 = vpop.f32.mrf.mxu0
      %v2601 = vadd.f32 %v2427, %v2600
      %v2602 = vpop.f32.mrf.mxu0
      %v2603 = vadd.f32 %v2429, %v2602
      %2604 = vmatmul.bf16.gmra.mxu0 %v830
      %v2605 = vpop.f32.mrf.mxu0
      %v2606 = vadd.f32 %v2432, %v2605
      %v2607 = vpop.f32.mrf.mxu0
      %v2608 = vadd.f32 %v2434, %v2607
      %2609 = vmatmul.bf16.gmra.mxu0 %v834
      %v2610 = vpop.f32.mrf.mxu0
      %v2611 = vadd.f32 %v2437, %v2610
      %v2612 = vpop.f32.mrf.mxu0
      %v2613 = vadd.f32 %v2439, %v2612
      %2614 = vmatmul.bf16.gmra.mxu0 %v838
      %v2615 = vpop.f32.mrf.mxu0
      %v2616 = vadd.f32 %v2442, %v2615
      %v2617 = vpop.f32.mrf.mxu0
      %v2618 = vadd.f32 %v2444, %v2617
      %2619 = vmatmul.bf16.gmra.mxu0 %v842
      %v2620 = vpop.f32.mrf.mxu0
      %v2621 = vadd.f32 %v2447, %v2620
      %v2622 = vpop.f32.mrf.mxu0
      %v2623 = vadd.f32 %v2449, %v2622
      %2624 = vmatmul.bf16.gmra.mxu0 %v846
      %v2625 = vpop.f32.mrf.mxu0
      %v2626 = vadd.f32 %v2452, %v2625
      %v2627 = vpop.f32.mrf.mxu0
      %v2628 = vadd.f32 %v2454, %v2627
      %2629 = vmatmul.bf16.gmra.mxu0 %v850
      %v2630 = vpop.f32.mrf.mxu0
      %v2631 = vadd.f32 %v2457, %v2630
      %v2632 = vpop.f32.mrf.mxu0
      %v2633 = vadd.f32 %v2459, %v2632
      %2634 = vmatmul.bf16.gmra.mxu0 %v854
      %v2635 = vpop.f32.mrf.mxu0
      %v2636 = vadd.f32 %v2462, %v2635
      %v2637 = vpop.f32.mrf.mxu0
      %v2638 = vadd.f32 %v2464, %v2637
      %2639 = vmatmul.bf16.gmra.mxu0 %v858
      %v2640 = vpop.f32.mrf.mxu0
      %v2641 = vadd.f32 %v2467, %v2640
      %v2642 = vpop.f32.mrf.mxu0
      %v2643 = vadd.f32 %v2469, %v2642
      %2644 = vmatmul.bf16.gmra.mxu0 %v862
      %v2645 = vpop.f32.mrf.mxu0
      %v2646 = vadd.f32 %v2472, %v2645
      %v2647 = vpop.f32.mrf.mxu0
      %v2648 = vadd.f32 %v2474, %v2647
      %2649 = vmatmul.bf16.gmra.mxu0 %v866
      %v2650 = vpop.f32.mrf.mxu0
      %v2651 = vadd.f32 %v2477, %v2650
      %v2652 = vpop.f32.mrf.mxu0
      %v2653 = vadd.f32 %v2479, %v2652
      %2654 = vmatmul.bf16.gmra.mxu0 %v870
      %v2655 = vpop.f32.mrf.mxu0
      %v2656 = vadd.f32 %v2482, %v2655
      %v2657 = vpop.f32.mrf.mxu0
      %v2658 = vadd.f32 %v2484, %v2657
      %2659 = vmatmul.bf16.gmra.mxu0 %v874
      %v2660 = vpop.f32.mrf.mxu0
      %v2661 = vadd.f32 %v2487, %v2660
      %v2662 = vpop.f32.mrf.mxu0
      %v2663 = vadd.f32 %v2489, %v2662
      %2664 = vmatmul.bf16.gmra.mxu0 %v878
      %v2665 = vpop.f32.mrf.mxu0
      %v2666 = vadd.f32 %v2492, %v2665
      %v2667 = vpop.f32.mrf.mxu0
      %v2668 = vadd.f32 %v2494, %v2667
      %2669 = vmatmul.bf16.gmra.mxu0 %v882
      %v2670 = vpop.f32.mrf.mxu0
      %v2671 = vadd.f32 %v2497, %v2670
      %v2672 = vpop.f32.mrf.mxu0
      %v2673 = vadd.f32 %v2499, %v2672
      %2674 = vmatmul.bf16.gmra.mxu0 %v886
      %v2675 = vpop.f32.mrf.mxu0
      %v2676 = vadd.f32 %v2502, %v2675
      %v2677 = vpop.f32.mrf.mxu0
      %v2678 = vadd.f32 %v2504, %v2677
      %2679 = vmatmul.bf16.gmra.mxu0 %v890
      %v2680 = vpop.f32.mrf.mxu0
      %v2681 = vadd.f32 %v2507, %v2680
      %v2682 = vpop.f32.mrf.mxu0
      %v2683 = vadd.f32 %v2509, %v2682
      %2684 = vmatmul.bf16.gmra.mxu0 %v894
      %v2685 = vpop.f32.mrf.mxu0
      %v2686 = vadd.f32 %v2512, %v2685
      %v2687 = vpop.f32.mrf.mxu0
      %v2688 = vadd.f32 %v2514, %v2687
      %2689 = vmatmul.bf16.gmra.mxu0 %v898
      %v2690 = vpop.f32.mrf.mxu0
      %v2691 = vadd.f32 %v2517, %v2690
      %v2692 = vpop.f32.mrf.mxu0
      %v2693 = vadd.f32 %v2519, %v2692
      %2694 = vmatmul.bf16.gmra.mxu0 %v902
      %v2695 = vpop.f32.mrf.mxu0
      %v2696 = vadd.f32 %v2522, %v2695
      %v2697 = vpop.f32.mrf.mxu0
      %v2698 = vadd.f32 %v2524, %v2697
      %2699 = vmatmul.bf16.gmra.mxu0 %v906
      %v2700 = vpop.f32.mrf.mxu0
      %v2701 = vadd.f32 %v2527, %v2700
      %v2702 = vpop.f32.mrf.mxu0
      %v2703 = vadd.f32 %v2529, %v2702
      %2704 = vmatmul.bf16.gmra.mxu0 %v910
      %v2705 = vpop.f32.mrf.mxu0
      %v2706 = vadd.f32 %v2532, %v2705
      %v2707 = vpop.f32.mrf.mxu0
      %v2708 = vadd.f32 %v2534, %v2707
      %2709 = vmatmul.bf16.gmra.mxu0 %v914
      %v2710 = vpop.f32.mrf.mxu0
      %v2711 = vadd.f32 %v2537, %v2710
      %v2712 = vpop.f32.mrf.mxu0
      %v2713 = vadd.f32 %v2539, %v2712
      %2714 = vdwg.mxu0
      %2715 = vmatpush.bf16.msra.mxu0 %v2160
      %2716 = vmatpush.bf16.msra.mxu0 %v2159
      %2717 = vmatpush.bf16.msra.mxu0 %v2158
      %2718 = vmatpush.bf16.msra.mxu0 %v2157
      %2719 = vmatpush.bf16.msra.mxu0 %v2156
      %2720 = vmatpush.bf16.msra.mxu0 %v2155
      %2721 = vmatpush.bf16.msra.mxu0 %v2154
      %2722 = vmatpush.bf16.msra.mxu0 %v2153
      %2723 = vmatmul.bf16.gmra.mxu0 %v787
      %v2724 = vpop.f32.mrf.mxu0
      %v2725 = vadd.f32 %v2551, %v2724
      %v2726 = vpop.f32.mrf.mxu0
      %v2727 = vadd.f32 %v2553, %v2726
      %2728 = vmatmul.bf16.gmra.mxu0 %v791
      %v2729 = vpop.f32.mrf.mxu0
      %v2730 = vadd.f32 %v2556, %v2729
      %v2731 = vpop.f32.mrf.mxu0
      %v2732 = vadd.f32 %v2558, %v2731
      %2733 = vmatmul.bf16.gmra.mxu0 %v795
      %v2734 = vpop.f32.mrf.mxu0
      %v2735 = vadd.f32 %v2561, %v2734
      %v2736 = vpop.f32.mrf.mxu0
      %v2737 = vadd.f32 %v2563, %v2736
      %2738 = vmatmul.bf16.gmra.mxu0 %v799
      %v2739 = vpop.f32.mrf.mxu0
      %v2740 = vadd.f32 %v2566, %v2739
      %v2741 = vpop.f32.mrf.mxu0
      %v2742 = vadd.f32 %v2568, %v2741
      %2743 = vmatmul.bf16.gmra.mxu0 %v803
      %v2744 = vpop.f32.mrf.mxu0
      %v2745 = vadd.f32 %v2571, %v2744
      %v2746 = vpop.f32.mrf.mxu0
      %v2747 = vadd.f32 %v2573, %v2746
      %2748 = vmatmul.bf16.gmra.mxu0 %v807
      %v2749 = vpop.f32.mrf.mxu0
      %v2750 = vadd.f32 %v2576, %v2749
      %v2751 = vpop.f32.mrf.mxu0
      %v2752 = vadd.f32 %v2578, %v2751
      %2753 = vmatmul.bf16.gmra.mxu0 %v811
      %v2754 = vpop.f32.mrf.mxu0
      %v2755 = vadd.f32 %v2581, %v2754
      %v2756 = vpop.f32.mrf.mxu0
      %v2757 = vadd.f32 %v2583, %v2756
      %2758 = vmatmul.bf16.gmra.mxu0 %v815
      %v2759 = vpop.f32.mrf.mxu0
      %v2760 = vadd.f32 %v2586, %v2759
      %v2761 = vpop.f32.mrf.mxu0
      %v2762 = vadd.f32 %v2588, %v2761
      %2763 = vmatmul.bf16.gmra.mxu0 %v819
      %v2764 = vpop.f32.mrf.mxu0
      %v2765 = vadd.f32 %v2591, %v2764
      %v2766 = vpop.f32.mrf.mxu0
      %v2767 = vadd.f32 %v2593, %v2766
      %2768 = vmatmul.bf16.gmra.mxu0 %v823
      %v2769 = vpop.f32.mrf.mxu0
      %v2770 = vadd.f32 %v2596, %v2769
      %v2771 = vpop.f32.mrf.mxu0
      %v2772 = vadd.f32 %v2598, %v2771
      %2773 = vmatmul.bf16.gmra.mxu0 %v827
      %v2774 = vpop.f32.mrf.mxu0
      %v2775 = vadd.f32 %v2601, %v2774
      %v2776 = vpop.f32.mrf.mxu0
      %v2777 = vadd.f32 %v2603, %v2776
      %2778 = vmatmul.bf16.gmra.mxu0 %v831
      %v2779 = vpop.f32.mrf.mxu0
      %v2780 = vadd.f32 %v2606, %v2779
      %v2781 = vpop.f32.mrf.mxu0
      %v2782 = vadd.f32 %v2608, %v2781
      %2783 = vmatmul.bf16.gmra.mxu0 %v835
      %v2784 = vpop.f32.mrf.mxu0
      %v2785 = vadd.f32 %v2611, %v2784
      %v2786 = vpop.f32.mrf.mxu0
      %v2787 = vadd.f32 %v2613, %v2786
      %2788 = vmatmul.bf16.gmra.mxu0 %v839
      %v2789 = vpop.f32.mrf.mxu0
      %v2790 = vadd.f32 %v2616, %v2789
      %v2791 = vpop.f32.mrf.mxu0
      %v2792 = vadd.f32 %v2618, %v2791
      %2793 = vmatmul.bf16.gmra.mxu0 %v843
      %v2794 = vpop.f32.mrf.mxu0
      %v2795 = vadd.f32 %v2621, %v2794
      %v2796 = vpop.f32.mrf.mxu0
      %v2797 = vadd.f32 %v2623, %v2796
      %2798 = vmatmul.bf16.gmra.mxu0 %v847
      %v2799 = vpop.f32.mrf.mxu0
      %v2800 = vadd.f32 %v2626, %v2799
      %v2801 = vpop.f32.mrf.mxu0
      %v2802 = vadd.f32 %v2628, %v2801
      %2803 = vmatmul.bf16.gmra.mxu0 %v851
      %v2804 = vpop.f32.mrf.mxu0
      %v2805 = vadd.f32 %v2631, %v2804
      %v2806 = vpop.f32.mrf.mxu0
      %v2807 = vadd.f32 %v2633, %v2806
      %2808 = vmatmul.bf16.gmra.mxu0 %v855
      %v2809 = vpop.f32.mrf.mxu0
      %v2810 = vadd.f32 %v2636, %v2809
      %v2811 = vpop.f32.mrf.mxu0
      %v2812 = vadd.f32 %v2638, %v2811
      %2813 = vmatmul.bf16.gmra.mxu0 %v859
      %v2814 = vpop.f32.mrf.mxu0
      %v2815 = vadd.f32 %v2641, %v2814
      %v2816 = vpop.f32.mrf.mxu0
      %v2817 = vadd.f32 %v2643, %v2816
      %2818 = vmatmul.bf16.gmra.mxu0 %v863
      %v2819 = vpop.f32.mrf.mxu0
      %v2820 = vadd.f32 %v2646, %v2819
      %v2821 = vpop.f32.mrf.mxu0
      %v2822 = vadd.f32 %v2648, %v2821
      %2823 = vmatmul.bf16.gmra.mxu0 %v867
      %v2824 = vpop.f32.mrf.mxu0
      %v2825 = vadd.f32 %v2651, %v2824
      %v2826 = vpop.f32.mrf.mxu0
      %v2827 = vadd.f32 %v2653, %v2826
      %2828 = vmatmul.bf16.gmra.mxu0 %v871
      %v2829 = vpop.f32.mrf.mxu0
      %v2830 = vadd.f32 %v2656, %v2829
      %v2831 = vpop.f32.mrf.mxu0
      %v2832 = vadd.f32 %v2658, %v2831
      %2833 = vmatmul.bf16.gmra.mxu0 %v875
      %v2834 = vpop.f32.mrf.mxu0
      %v2835 = vadd.f32 %v2661, %v2834
      %v2836 = vpop.f32.mrf.mxu0
      %v2837 = vadd.f32 %v2663, %v2836
      %2838 = vmatmul.bf16.gmra.mxu0 %v879
      %v2839 = vpop.f32.mrf.mxu0
      %v2840 = vadd.f32 %v2666, %v2839
      %v2841 = vpop.f32.mrf.mxu0
      %v2842 = vadd.f32 %v2668, %v2841
      %2843 = vmatmul.bf16.gmra.mxu0 %v883
      %v2844 = vpop.f32.mrf.mxu0
      %v2845 = vadd.f32 %v2671, %v2844
      %v2846 = vpop.f32.mrf.mxu0
      %v2847 = vadd.f32 %v2673, %v2846
      %2848 = vmatmul.bf16.gmra.mxu0 %v887
      %v2849 = vpop.f32.mrf.mxu0
      %v2850 = vadd.f32 %v2676, %v2849
      %v2851 = vpop.f32.mrf.mxu0
      %v2852 = vadd.f32 %v2678, %v2851
      %2853 = vmatmul.bf16.gmra.mxu0 %v891
      %v2854 = vpop.f32.mrf.mxu0
      %v2855 = vadd.f32 %v2681, %v2854
      %v2856 = vpop.f32.mrf.mxu0
      %v2857 = vadd.f32 %v2683, %v2856
      %2858 = vmatmul.bf16.gmra.mxu0 %v895
      %v2859 = vpop.f32.mrf.mxu0
      %v2860 = vadd.f32 %v2686, %v2859
      %v2861 = vpop.f32.mrf.mxu0
      %v2862 = vadd.f32 %v2688, %v2861
      %2863 = vmatmul.bf16.gmra.mxu0 %v899
      %v2864 = vpop.f32.mrf.mxu0
      %v2865 = vadd.f32 %v2691, %v2864
      %v2866 = vpop.f32.mrf.mxu0
      %v2867 = vadd.f32 %v2693, %v2866
      %2868 = vmatmul.bf16.gmra.mxu0 %v903
      %v2869 = vpop.f32.mrf.mxu0
      %v2870 = vadd.f32 %v2696, %v2869
      %v2871 = vpop.f32.mrf.mxu0
      %v2872 = vadd.f32 %v2698, %v2871
      %2873 = vmatmul.bf16.gmra.mxu0 %v907
      %v2874 = vpop.f32.mrf.mxu0
      %v2875 = vadd.f32 %v2701, %v2874
      %v2876 = vpop.f32.mrf.mxu0
      %v2877 = vadd.f32 %v2703, %v2876
      %2878 = vmatmul.bf16.gmra.mxu0 %v911
      %v2879 = vpop.f32.mrf.mxu0
      %v2880 = vadd.f32 %v2706, %v2879
      %v2881 = vpop.f32.mrf.mxu0
      %v2882 = vadd.f32 %v2708, %v2881
      %2883 = vmatmul.bf16.gmra.mxu0 %v915
      %v2884 = vpop.f32.mrf.mxu0
      %v2885 = vadd.f32 %v2711, %v2884
      %v2886 = vpop.f32.mrf.mxu0
      %v2887 = vadd.f32 %v2713, %v2886
      %2888 = vdwg.mxu0
      %s2889 = scalar_lea.vmem %s178, 512
      %v2890 = vld [vmem:[%s2889] sm:$0xf]
      %v2891 = vld [vmem:[%s2889 + $0x4] sm:$0xf]
      %v2892 = vld [vmem:[%s2889 + $0x8] sm:$0xf]
      %v2893 = vld [vmem:[%s2889 + $0xc] sm:$0xf]
      %v2894 = vld [vmem:[%s2889 + $0x10] sm:$0xf]
      %v2895 = vld [vmem:[%s2889 + $0x14] sm:$0xf]
      %v2896 = vld [vmem:[%s2889 + $0x18] sm:$0xf]
      %v2897 = vld [vmem:[%s2889 + $0x1c] sm:$0xf]
      %v2898 = vld [vmem:[%s2889 + $0x20] sm:$0xf]
      %v2899 = vld [vmem:[%s2889 + $0x24] sm:$0xf]
      %v2900 = vld [vmem:[%s2889 + $0x28] sm:$0xf]
      %v2901 = vld [vmem:[%s2889 + $0x2c] sm:$0xf]
      %v2902 = vld [vmem:[%s2889 + $0x30] sm:$0xf]
      %v2903 = vld [vmem:[%s2889 + $0x34] sm:$0xf]
      %v2904 = vld [vmem:[%s2889 + $0x38] sm:$0xf]
      %v2905 = vld [vmem:[%s2889 + $0x3c] sm:$0xf]
      %v2906 = vld [vmem:[%s2889 + $0x40] sm:$0xf]
      %v2907 = vld [vmem:[%s2889 + $0x44] sm:$0xf]
      %v2908 = vld [vmem:[%s2889 + $0x48] sm:$0xf]
      %v2909 = vld [vmem:[%s2889 + $0x4c] sm:$0xf]
      %v2910 = vld [vmem:[%s2889 + $0x50] sm:$0xf]
      %v2911 = vld [vmem:[%s2889 + $0x54] sm:$0xf]
      %v2912 = vld [vmem:[%s2889 + $0x58] sm:$0xf]
      %v2913 = vld [vmem:[%s2889 + $0x5c] sm:$0xf]
      %v2914 = vld [vmem:[%s2889 + $0x60] sm:$0xf]
      %v2915 = vld [vmem:[%s2889 + $0x64] sm:$0xf]
      %v2916 = vld [vmem:[%s2889 + $0x68] sm:$0xf]
      %v2917 = vld [vmem:[%s2889 + $0x6c] sm:$0xf]
      %v2918 = vld [vmem:[%s2889 + $0x70] sm:$0xf]
      %v2919 = vld [vmem:[%s2889 + $0x74] sm:$0xf]
      %v2920 = vld [vmem:[%s2889 + $0x78] sm:$0xf]
      %v2921 = vld [vmem:[%s2889 + $0x7c] sm:$0xf]
      %v2922 = vld [vmem:[%s2889 + $0x80] sm:$0xf]
      %v2923 = vld [vmem:[%s2889 + $0x84] sm:$0xf]
      %v2924 = vld [vmem:[%s2889 + $0x88] sm:$0xf]
      %v2925 = vld [vmem:[%s2889 + $0x8c] sm:$0xf]
      %v2926 = vld [vmem:[%s2889 + $0x90] sm:$0xf]
      %v2927 = vld [vmem:[%s2889 + $0x94] sm:$0xf]
      %v2928 = vld [vmem:[%s2889 + $0x98] sm:$0xf]
      %v2929 = vld [vmem:[%s2889 + $0x9c] sm:$0xf]
      %v2930 = vld [vmem:[%s2889 + $0xa0] sm:$0xf]
      %v2931 = vld [vmem:[%s2889 + $0xa4] sm:$0xf]
      %v2932 = vld [vmem:[%s2889 + $0xa8] sm:$0xf]
      %v2933 = vld [vmem:[%s2889 + $0xac] sm:$0xf]
      %v2934 = vld [vmem:[%s2889 + $0xb0] sm:$0xf]
      %v2935 = vld [vmem:[%s2889 + $0xb4] sm:$0xf]
      %v2936 = vld [vmem:[%s2889 + $0xb8] sm:$0xf]
      %v2937 = vld [vmem:[%s2889 + $0xbc] sm:$0xf]
      %v2938 = vld [vmem:[%s2889 + $0xc0] sm:$0xf]
      %v2939 = vld [vmem:[%s2889 + $0xc4] sm:$0xf]
      %v2940 = vld [vmem:[%s2889 + $0xc8] sm:$0xf]
      %v2941 = vld [vmem:[%s2889 + $0xcc] sm:$0xf]
      %v2942 = vld [vmem:[%s2889 + $0xd0] sm:$0xf]
      %v2943 = vld [vmem:[%s2889 + $0xd4] sm:$0xf]
      %v2944 = vld [vmem:[%s2889 + $0xd8] sm:$0xf]
      %v2945 = vld [vmem:[%s2889 + $0xdc] sm:$0xf]
      %v2946 = vld [vmem:[%s2889 + $0xe0] sm:$0xf]
      %v2947 = vld [vmem:[%s2889 + $0xe4] sm:$0xf]
      %v2948 = vld [vmem:[%s2889 + $0xe8] sm:$0xf]
      %v2949 = vld [vmem:[%s2889 + $0xec] sm:$0xf]
      %v2950 = vld [vmem:[%s2889 + $0xf0] sm:$0xf]
      %v2951 = vld [vmem:[%s2889 + $0xf4] sm:$0xf]
      %v2952 = vld [vmem:[%s2889 + $0xf8] sm:$0xf]
      %v2953 = vld [vmem:[%s2889 + $0xfc] sm:$0xf]
      %v3018 = vunpack.c.l.b16 %v2890
      %v3019 = vunpack.c.l.b16 %v2891
      %v3020 = vunpack.c.l.b16 %v2892
      %v3021 = vunpack.c.l.b16 %v2893
      %v3022 = vunpack.c.l.b16 %v2894
      %v3023 = vunpack.c.l.b16 %v2895
      %v3024 = vunpack.c.l.b16 %v2896
      %v3025 = vunpack.c.l.b16 %v2897
      %v3026 = vunpack.c.l.b16 %v2898
      %v3027 = vunpack.c.l.b16 %v2899
      %v3028 = vunpack.c.l.b16 %v2900
      %v3029 = vunpack.c.l.b16 %v2901
      %v3030 = vunpack.c.l.b16 %v2902
      %v3031 = vunpack.c.l.b16 %v2903
      %v3032 = vunpack.c.l.b16 %v2904
      %v3033 = vunpack.c.l.b16 %v2905
      %v3034 = vunpack.c.l.b16 %v2906
      %v3035 = vunpack.c.l.b16 %v2907
      %v3036 = vunpack.c.l.b16 %v2908
      %v3037 = vunpack.c.l.b16 %v2909
      %v3038 = vunpack.c.l.b16 %v2910
      %v3039 = vunpack.c.l.b16 %v2911
      %v3040 = vunpack.c.l.b16 %v2912
      %v3041 = vunpack.c.l.b16 %v2913
      %v3042 = vunpack.c.l.b16 %v2914
      %v3043 = vunpack.c.l.b16 %v2915
      %v3044 = vunpack.c.l.b16 %v2916
      %v3045 = vunpack.c.l.b16 %v2917
      %v3046 = vunpack.c.l.b16 %v2918
      %v3047 = vunpack.c.l.b16 %v2919
      %v3048 = vunpack.c.l.b16 %v2920
      %v3049 = vunpack.c.l.b16 %v2921
      %v3050 = vunpack.c.l.b16 %v2922
      %v3051 = vunpack.c.l.b16 %v2923
      %v3052 = vunpack.c.l.b16 %v2924
      %v3053 = vunpack.c.l.b16 %v2925
      %v3054 = vunpack.c.l.b16 %v2926
      %v3055 = vunpack.c.l.b16 %v2927
      %v3056 = vunpack.c.l.b16 %v2928
      %v3057 = vunpack.c.l.b16 %v2929
      %v3058 = vunpack.c.l.b16 %v2930
      %v3059 = vunpack.c.l.b16 %v2931
      %v3060 = vunpack.c.l.b16 %v2932
      %v3061 = vunpack.c.l.b16 %v2933
      %v3062 = vunpack.c.l.b16 %v2934
      %v3063 = vunpack.c.l.b16 %v2935
      %v3064 = vunpack.c.l.b16 %v2936
      %v3065 = vunpack.c.l.b16 %v2937
      %v3066 = vunpack.c.l.b16 %v2938
      %v3067 = vunpack.c.l.b16 %v2939
      %v3068 = vunpack.c.l.b16 %v2940
      %v3069 = vunpack.c.l.b16 %v2941
      %v3070 = vunpack.c.l.b16 %v2942
      %v3071 = vunpack.c.l.b16 %v2943
      %v3072 = vunpack.c.l.b16 %v2944
      %v3073 = vunpack.c.l.b16 %v2945
      %v3074 = vunpack.c.l.b16 %v2946
      %v3075 = vunpack.c.l.b16 %v2947
      %v3076 = vunpack.c.l.b16 %v2948
      %v3077 = vunpack.c.l.b16 %v2949
      %v3078 = vunpack.c.l.b16 %v2950
      %v3079 = vunpack.c.l.b16 %v2951
      %v3080 = vunpack.c.l.b16 %v2952
      %v3081 = vunpack.c.l.b16 %v2953
      %v3082 = vpack.c.b16 %v3019, %v3018
      %v3083 = vpack.c.b16 %v3021, %v3020
      %v3084 = vpack.c.b16 %v3023, %v3022
      %v3085 = vpack.c.b16 %v3025, %v3024
      %v3086 = vpack.c.b16 %v3027, %v3026
      %v3087 = vpack.c.b16 %v3029, %v3028
      %v3088 = vpack.c.b16 %v3031, %v3030
      %v3089 = vpack.c.b16 %v3033, %v3032
      %v3090 = vpack.c.b16 %v3035, %v3034
      %v3091 = vpack.c.b16 %v3037, %v3036
      %v3092 = vpack.c.b16 %v3039, %v3038
      %v3093 = vpack.c.b16 %v3041, %v3040
      %v3094 = vpack.c.b16 %v3043, %v3042
      %v3095 = vpack.c.b16 %v3045, %v3044
      %v3096 = vpack.c.b16 %v3047, %v3046
      %v3097 = vpack.c.b16 %v3049, %v3048
      %v3098 = vpack.c.b16 %v3051, %v3050
      %v3099 = vpack.c.b16 %v3053, %v3052
      %v3100 = vpack.c.b16 %v3055, %v3054
      %v3101 = vpack.c.b16 %v3057, %v3056
      %v3102 = vpack.c.b16 %v3059, %v3058
      %v3103 = vpack.c.b16 %v3061, %v3060
      %v3104 = vpack.c.b16 %v3063, %v3062
      %v3105 = vpack.c.b16 %v3065, %v3064
      %v3106 = vpack.c.b16 %v3067, %v3066
      %v3107 = vpack.c.b16 %v3069, %v3068
      %v3108 = vpack.c.b16 %v3071, %v3070
      %v3109 = vpack.c.b16 %v3073, %v3072
      %v3110 = vpack.c.b16 %v3075, %v3074
      %v3111 = vpack.c.b16 %v3077, %v3076
      %v3112 = vpack.c.b16 %v3079, %v3078
      %v3113 = vpack.c.b16 %v3081, %v3080
      %3146 = vmatpush.bf16.msra.mxu0 %v3089
      %3147 = vmatpush.bf16.msra.mxu0 %v3088
      %3148 = vmatpush.bf16.msra.mxu0 %v3087
      %3149 = vmatpush.bf16.msra.mxu0 %v3086
      %3150 = vmatpush.bf16.msra.mxu0 %v3085
      %3151 = vmatpush.bf16.msra.mxu0 %v3084
      %3152 = vmatpush.bf16.msra.mxu0 %v3083
      %3153 = vmatpush.bf16.msra.mxu0 %v3082
      %3154 = vmatmul.bf16.gmra.mxu0 %v784
      %v3155 = vpop.f32.mrf.mxu0
      %v3156 = vadd.f32 0.0, %v3155
      %v3157 = vpop.f32.mrf.mxu0
      %v3158 = vadd.f32 0.0, %v3157
      %3159 = vmatmul.bf16.gmra.mxu0 %v788
      %v3160 = vpop.f32.mrf.mxu0
      %v3161 = vadd.f32 0.0, %v3160
      %v3162 = vpop.f32.mrf.mxu0
      %v3163 = vadd.f32 0.0, %v3162
      %3164 = vmatmul.bf16.gmra.mxu0 %v792
      %v3165 = vpop.f32.mrf.mxu0
      %v3166 = vadd.f32 0.0, %v3165
      %v3167 = vpop.f32.mrf.mxu0
      %v3168 = vadd.f32 0.0, %v3167
      %3169 = vmatmul.bf16.gmra.mxu0 %v796
      %v3170 = vpop.f32.mrf.mxu0
      %v3171 = vadd.f32 0.0, %v3170
      %v3172 = vpop.f32.mrf.mxu0
      %v3173 = vadd.f32 0.0, %v3172
      %3174 = vmatmul.bf16.gmra.mxu0 %v800
      %v3175 = vpop.f32.mrf.mxu0
      %v3176 = vadd.f32 0.0, %v3175
      %v3177 = vpop.f32.mrf.mxu0
      %v3178 = vadd.f32 0.0, %v3177
      %3179 = vmatmul.bf16.gmra.mxu0 %v804
      %v3180 = vpop.f32.mrf.mxu0
      %v3181 = vadd.f32 0.0, %v3180
      %v3182 = vpop.f32.mrf.mxu0
      %v3183 = vadd.f32 0.0, %v3182
      %3184 = vmatmul.bf16.gmra.mxu0 %v808
      %v3185 = vpop.f32.mrf.mxu0
      %v3186 = vadd.f32 0.0, %v3185
      %v3187 = vpop.f32.mrf.mxu0
      %v3188 = vadd.f32 0.0, %v3187
      %3189 = vmatmul.bf16.gmra.mxu0 %v812
      %v3190 = vpop.f32.mrf.mxu0
      %v3191 = vadd.f32 0.0, %v3190
      %v3192 = vpop.f32.mrf.mxu0
      %v3193 = vadd.f32 0.0, %v3192
      %3194 = vmatmul.bf16.gmra.mxu0 %v816
      %v3195 = vpop.f32.mrf.mxu0
      %v3196 = vadd.f32 0.0, %v3195
      %v3197 = vpop.f32.mrf.mxu0
      %v3198 = vadd.f32 0.0, %v3197
      %3199 = vmatmul.bf16.gmra.mxu0 %v820
      %v3200 = vpop.f32.mrf.mxu0
      %v3201 = vadd.f32 0.0, %v3200
      %v3202 = vpop.f32.mrf.mxu0
      %v3203 = vadd.f32 0.0, %v3202
      %3204 = vmatmul.bf16.gmra.mxu0 %v824
      %v3205 = vpop.f32.mrf.mxu0
      %v3206 = vadd.f32 0.0, %v3205
      %v3207 = vpop.f32.mrf.mxu0
      %v3208 = vadd.f32 0.0, %v3207
      %3209 = vmatmul.bf16.gmra.mxu0 %v828
      %v3210 = vpop.f32.mrf.mxu0
      %v3211 = vadd.f32 0.0, %v3210
      %v3212 = vpop.f32.mrf.mxu0
      %v3213 = vadd.f32 0.0, %v3212
      %3214 = vmatmul.bf16.gmra.mxu0 %v832
      %v3215 = vpop.f32.mrf.mxu0
      %v3216 = vadd.f32 0.0, %v3215
      %v3217 = vpop.f32.mrf.mxu0
      %v3218 = vadd.f32 0.0, %v3217
      %3219 = vmatmul.bf16.gmra.mxu0 %v836
      %v3220 = vpop.f32.mrf.mxu0
      %v3221 = vadd.f32 0.0, %v3220
      %v3222 = vpop.f32.mrf.mxu0
      %v3223 = vadd.f32 0.0, %v3222
      %3224 = vmatmul.bf16.gmra.mxu0 %v840
      %v3225 = vpop.f32.mrf.mxu0
      %v3226 = vadd.f32 0.0, %v3225
      %v3227 = vpop.f32.mrf.mxu0
      %v3228 = vadd.f32 0.0, %v3227
      %3229 = vmatmul.bf16.gmra.mxu0 %v844
      %v3230 = vpop.f32.mrf.mxu0
      %v3231 = vadd.f32 0.0, %v3230
      %v3232 = vpop.f32.mrf.mxu0
      %v3233 = vadd.f32 0.0, %v3232
      %3234 = vmatmul.bf16.gmra.mxu0 %v848
      %v3235 = vpop.f32.mrf.mxu0
      %v3236 = vadd.f32 0.0, %v3235
      %v3237 = vpop.f32.mrf.mxu0
      %v3238 = vadd.f32 0.0, %v3237
      %3239 = vmatmul.bf16.gmra.mxu0 %v852
      %v3240 = vpop.f32.mrf.mxu0
      %v3241 = vadd.f32 0.0, %v3240
      %v3242 = vpop.f32.mrf.mxu0
      %v3243 = vadd.f32 0.0, %v3242
      %3244 = vmatmul.bf16.gmra.mxu0 %v856
      %v3245 = vpop.f32.mrf.mxu0
      %v3246 = vadd.f32 0.0, %v3245
      %v3247 = vpop.f32.mrf.mxu0
      %v3248 = vadd.f32 0.0, %v3247
      %3249 = vmatmul.bf16.gmra.mxu0 %v860
      %v3250 = vpop.f32.mrf.mxu0
      %v3251 = vadd.f32 0.0, %v3250
      %v3252 = vpop.f32.mrf.mxu0
      %v3253 = vadd.f32 0.0, %v3252
      %3254 = vmatmul.bf16.gmra.mxu0 %v864
      %v3255 = vpop.f32.mrf.mxu0
      %v3256 = vadd.f32 0.0, %v3255
      %v3257 = vpop.f32.mrf.mxu0
      %v3258 = vadd.f32 0.0, %v3257
      %3259 = vmatmul.bf16.gmra.mxu0 %v868
      %v3260 = vpop.f32.mrf.mxu0
      %v3261 = vadd.f32 0.0, %v3260
      %v3262 = vpop.f32.mrf.mxu0
      %v3263 = vadd.f32 0.0, %v3262
      %3264 = vmatmul.bf16.gmra.mxu0 %v872
      %v3265 = vpop.f32.mrf.mxu0
      %v3266 = vadd.f32 0.0, %v3265
      %v3267 = vpop.f32.mrf.mxu0
      %v3268 = vadd.f32 0.0, %v3267
      %3269 = vmatmul.bf16.gmra.mxu0 %v876
      %v3270 = vpop.f32.mrf.mxu0
      %v3271 = vadd.f32 0.0, %v3270
      %v3272 = vpop.f32.mrf.mxu0
      %v3273 = vadd.f32 0.0, %v3272
      %3274 = vmatmul.bf16.gmra.mxu0 %v880
      %v3275 = vpop.f32.mrf.mxu0
      %v3276 = vadd.f32 0.0, %v3275
      %v3277 = vpop.f32.mrf.mxu0
      %v3278 = vadd.f32 0.0, %v3277
      %3279 = vmatmul.bf16.gmra.mxu0 %v884
      %v3280 = vpop.f32.mrf.mxu0
      %v3281 = vadd.f32 0.0, %v3280
      %v3282 = vpop.f32.mrf.mxu0
      %v3283 = vadd.f32 0.0, %v3282
      %3284 = vmatmul.bf16.gmra.mxu0 %v888
      %v3285 = vpop.f32.mrf.mxu0
      %v3286 = vadd.f32 0.0, %v3285
      %v3287 = vpop.f32.mrf.mxu0
      %v3288 = vadd.f32 0.0, %v3287
      %3289 = vmatmul.bf16.gmra.mxu0 %v892
      %v3290 = vpop.f32.mrf.mxu0
      %v3291 = vadd.f32 0.0, %v3290
      %v3292 = vpop.f32.mrf.mxu0
      %v3293 = vadd.f32 0.0, %v3292
      %3294 = vmatmul.bf16.gmra.mxu0 %v896
      %v3295 = vpop.f32.mrf.mxu0
      %v3296 = vadd.f32 0.0, %v3295
      %v3297 = vpop.f32.mrf.mxu0
      %v3298 = vadd.f32 0.0, %v3297
      %3299 = vmatmul.bf16.gmra.mxu0 %v900
      %v3300 = vpop.f32.mrf.mxu0
      %v3301 = vadd.f32 0.0, %v3300
      %v3302 = vpop.f32.mrf.mxu0
      %v3303 = vadd.f32 0.0, %v3302
      %3304 = vmatmul.bf16.gmra.mxu0 %v904
      %v3305 = vpop.f32.mrf.mxu0
      %v3306 = vadd.f32 0.0, %v3305
      %v3307 = vpop.f32.mrf.mxu0
      %v3308 = vadd.f32 0.0, %v3307
      %3309 = vmatmul.bf16.gmra.mxu0 %v908
      %v3310 = vpop.f32.mrf.mxu0
      %v3311 = vadd.f32 0.0, %v3310
      %v3312 = vpop.f32.mrf.mxu0
      %v3313 = vadd.f32 0.0, %v3312
      %3314 = vmatmul.bf16.gmra.mxu0 %v912
      %v3315 = vpop.f32.mrf.mxu0
      %v3316 = vadd.f32 0.0, %v3315
      %v3317 = vpop.f32.mrf.mxu0
      %v3318 = vadd.f32 0.0, %v3317
      %3319 = vdwg.mxu0
      %3320 = vmatpush.bf16.msra.mxu0 %v3097
      %3321 = vmatpush.bf16.msra.mxu0 %v3096
      %3322 = vmatpush.bf16.msra.mxu0 %v3095
      %3323 = vmatpush.bf16.msra.mxu0 %v3094
      %3324 = vmatpush.bf16.msra.mxu0 %v3093
      %3325 = vmatpush.bf16.msra.mxu0 %v3092
      %3326 = vmatpush.bf16.msra.mxu0 %v3091
      %3327 = vmatpush.bf16.msra.mxu0 %v3090
      %3328 = vmatmul.bf16.gmra.mxu0 %v785
      %v3329 = vpop.f32.mrf.mxu0
      %v3330 = vadd.f32 %v3156, %v3329
      %v3331 = vpop.f32.mrf.mxu0
      %v3332 = vadd.f32 %v3158, %v3331
      %3333 = vmatmul.bf16.gmra.mxu0 %v789
      %v3334 = vpop.f32.mrf.mxu0
      %v3335 = vadd.f32 %v3161, %v3334
      %v3336 = vpop.f32.mrf.mxu0
      %v3337 = vadd.f32 %v3163, %v3336
      %3338 = vmatmul.bf16.gmra.mxu0 %v793
      %v3339 = vpop.f32.mrf.mxu0
      %v3340 = vadd.f32 %v3166, %v3339
      %v3341 = vpop.f32.mrf.mxu0
      %v3342 = vadd.f32 %v3168, %v3341
      %3343 = vmatmul.bf16.gmra.mxu0 %v797
      %v3344 = vpop.f32.mrf.mxu0
      %v3345 = vadd.f32 %v3171, %v3344
      %v3346 = vpop.f32.mrf.mxu0
      %v3347 = vadd.f32 %v3173, %v3346
      %3348 = vmatmul.bf16.gmra.mxu0 %v801
      %v3349 = vpop.f32.mrf.mxu0
      %v3350 = vadd.f32 %v3176, %v3349
      %v3351 = vpop.f32.mrf.mxu0
      %v3352 = vadd.f32 %v3178, %v3351
      %3353 = vmatmul.bf16.gmra.mxu0 %v805
      %v3354 = vpop.f32.mrf.mxu0
      %v3355 = vadd.f32 %v3181, %v3354
      %v3356 = vpop.f32.mrf.mxu0
      %v3357 = vadd.f32 %v3183, %v3356
      %3358 = vmatmul.bf16.gmra.mxu0 %v809
      %v3359 = vpop.f32.mrf.mxu0
      %v3360 = vadd.f32 %v3186, %v3359
      %v3361 = vpop.f32.mrf.mxu0
      %v3362 = vadd.f32 %v3188, %v3361
      %3363 = vmatmul.bf16.gmra.mxu0 %v813
      %v3364 = vpop.f32.mrf.mxu0
      %v3365 = vadd.f32 %v3191, %v3364
      %v3366 = vpop.f32.mrf.mxu0
      %v3367 = vadd.f32 %v3193, %v3366
      %3368 = vmatmul.bf16.gmra.mxu0 %v817
      %v3369 = vpop.f32.mrf.mxu0
      %v3370 = vadd.f32 %v3196, %v3369
      %v3371 = vpop.f32.mrf.mxu0
      %v3372 = vadd.f32 %v3198, %v3371
      %3373 = vmatmul.bf16.gmra.mxu0 %v821
      %v3374 = vpop.f32.mrf.mxu0
      %v3375 = vadd.f32 %v3201, %v3374
      %v3376 = vpop.f32.mrf.mxu0
      %v3377 = vadd.f32 %v3203, %v3376
      %3378 = vmatmul.bf16.gmra.mxu0 %v825
      %v3379 = vpop.f32.mrf.mxu0
      %v3380 = vadd.f32 %v3206, %v3379
      %v3381 = vpop.f32.mrf.mxu0
      %v3382 = vadd.f32 %v3208, %v3381
      %3383 = vmatmul.bf16.gmra.mxu0 %v829
      %v3384 = vpop.f32.mrf.mxu0
      %v3385 = vadd.f32 %v3211, %v3384
      %v3386 = vpop.f32.mrf.mxu0
      %v3387 = vadd.f32 %v3213, %v3386
      %3388 = vmatmul.bf16.gmra.mxu0 %v833
      %v3389 = vpop.f32.mrf.mxu0
      %v3390 = vadd.f32 %v3216, %v3389
      %v3391 = vpop.f32.mrf.mxu0
      %v3392 = vadd.f32 %v3218, %v3391
      %3393 = vmatmul.bf16.gmra.mxu0 %v837
      %v3394 = vpop.f32.mrf.mxu0
      %v3395 = vadd.f32 %v3221, %v3394
      %v3396 = vpop.f32.mrf.mxu0
      %v3397 = vadd.f32 %v3223, %v3396
      %3398 = vmatmul.bf16.gmra.mxu0 %v841
      %v3399 = vpop.f32.mrf.mxu0
      %v3400 = vadd.f32 %v3226, %v3399
      %v3401 = vpop.f32.mrf.mxu0
      %v3402 = vadd.f32 %v3228, %v3401
      %3403 = vmatmul.bf16.gmra.mxu0 %v845
      %v3404 = vpop.f32.mrf.mxu0
      %v3405 = vadd.f32 %v3231, %v3404
      %v3406 = vpop.f32.mrf.mxu0
      %v3407 = vadd.f32 %v3233, %v3406
      %3408 = vmatmul.bf16.gmra.mxu0 %v849
      %v3409 = vpop.f32.mrf.mxu0
      %v3410 = vadd.f32 %v3236, %v3409
      %v3411 = vpop.f32.mrf.mxu0
      %v3412 = vadd.f32 %v3238, %v3411
      %3413 = vmatmul.bf16.gmra.mxu0 %v853
      %v3414 = vpop.f32.mrf.mxu0
      %v3415 = vadd.f32 %v3241, %v3414
      %v3416 = vpop.f32.mrf.mxu0
      %v3417 = vadd.f32 %v3243, %v3416
      %3418 = vmatmul.bf16.gmra.mxu0 %v857
      %v3419 = vpop.f32.mrf.mxu0
      %v3420 = vadd.f32 %v3246, %v3419
      %v3421 = vpop.f32.mrf.mxu0
      %v3422 = vadd.f32 %v3248, %v3421
      %3423 = vmatmul.bf16.gmra.mxu0 %v861
      %v3424 = vpop.f32.mrf.mxu0
      %v3425 = vadd.f32 %v3251, %v3424
      %v3426 = vpop.f32.mrf.mxu0
      %v3427 = vadd.f32 %v3253, %v3426
      %3428 = vmatmul.bf16.gmra.mxu0 %v865
      %v3429 = vpop.f32.mrf.mxu0
      %v3430 = vadd.f32 %v3256, %v3429
      %v3431 = vpop.f32.mrf.mxu0
      %v3432 = vadd.f32 %v3258, %v3431
      %3433 = vmatmul.bf16.gmra.mxu0 %v869
      %v3434 = vpop.f32.mrf.mxu0
      %v3435 = vadd.f32 %v3261, %v3434
      %v3436 = vpop.f32.mrf.mxu0
      %v3437 = vadd.f32 %v3263, %v3436
      %3438 = vmatmul.bf16.gmra.mxu0 %v873
      %v3439 = vpop.f32.mrf.mxu0
      %v3440 = vadd.f32 %v3266, %v3439
      %v3441 = vpop.f32.mrf.mxu0
      %v3442 = vadd.f32 %v3268, %v3441
      %3443 = vmatmul.bf16.gmra.mxu0 %v877
      %v3444 = vpop.f32.mrf.mxu0
      %v3445 = vadd.f32 %v3271, %v3444
      %v3446 = vpop.f32.mrf.mxu0
      %v3447 = vadd.f32 %v3273, %v3446
      %3448 = vmatmul.bf16.gmra.mxu0 %v881
      %v3449 = vpop.f32.mrf.mxu0
      %v3450 = vadd.f32 %v3276, %v3449
      %v3451 = vpop.f32.mrf.mxu0
      %v3452 = vadd.f32 %v3278, %v3451
      %3453 = vmatmul.bf16.gmra.mxu0 %v885
      %v3454 = vpop.f32.mrf.mxu0
      %v3455 = vadd.f32 %v3281, %v3454
      %v3456 = vpop.f32.mrf.mxu0
      %v3457 = vadd.f32 %v3283, %v3456
      %3458 = vmatmul.bf16.gmra.mxu0 %v889
      %v3459 = vpop.f32.mrf.mxu0
      %v3460 = vadd.f32 %v3286, %v3459
      %v3461 = vpop.f32.mrf.mxu0
      %v3462 = vadd.f32 %v3288, %v3461
      %3463 = vmatmul.bf16.gmra.mxu0 %v893
      %v3464 = vpop.f32.mrf.mxu0
      %v3465 = vadd.f32 %v3291, %v3464
      %v3466 = vpop.f32.mrf.mxu0
      %v3467 = vadd.f32 %v3293, %v3466
      %3468 = vmatmul.bf16.gmra.mxu0 %v897
      %v3469 = vpop.f32.mrf.mxu0
      %v3470 = vadd.f32 %v3296, %v3469
      %v3471 = vpop.f32.mrf.mxu0
      %v3472 = vadd.f32 %v3298, %v3471
      %3473 = vmatmul.bf16.gmra.mxu0 %v901
      %v3474 = vpop.f32.mrf.mxu0
      %v3475 = vadd.f32 %v3301, %v3474
      %v3476 = vpop.f32.mrf.mxu0
      %v3477 = vadd.f32 %v3303, %v3476
      %3478 = vmatmul.bf16.gmra.mxu0 %v905
      %v3479 = vpop.f32.mrf.mxu0
      %v3480 = vadd.f32 %v3306, %v3479
      %v3481 = vpop.f32.mrf.mxu0
      %v3482 = vadd.f32 %v3308, %v3481
      %3483 = vmatmul.bf16.gmra.mxu0 %v909
      %v3484 = vpop.f32.mrf.mxu0
      %v3485 = vadd.f32 %v3311, %v3484
      %v3486 = vpop.f32.mrf.mxu0
      %v3487 = vadd.f32 %v3313, %v3486
      %3488 = vmatmul.bf16.gmra.mxu0 %v913
      %v3489 = vpop.f32.mrf.mxu0
      %v3490 = vadd.f32 %v3316, %v3489
      %v3491 = vpop.f32.mrf.mxu0
      %v3492 = vadd.f32 %v3318, %v3491
      %3493 = vdwg.mxu0
      %3494 = vmatpush.bf16.msra.mxu0 %v3105
      %3495 = vmatpush.bf16.msra.mxu0 %v3104
      %3496 = vmatpush.bf16.msra.mxu0 %v3103
      %3497 = vmatpush.bf16.msra.mxu0 %v3102
      %3498 = vmatpush.bf16.msra.mxu0 %v3101
      %3499 = vmatpush.bf16.msra.mxu0 %v3100
      %3500 = vmatpush.bf16.msra.mxu0 %v3099
      %3501 = vmatpush.bf16.msra.mxu0 %v3098
      %3502 = vmatmul.bf16.gmra.mxu0 %v786
      %v3503 = vpop.f32.mrf.mxu0
      %v3504 = vadd.f32 %v3330, %v3503
      %v3505 = vpop.f32.mrf.mxu0
      %v3506 = vadd.f32 %v3332, %v3505
      %3507 = vmatmul.bf16.gmra.mxu0 %v790
      %v3508 = vpop.f32.mrf.mxu0
      %v3509 = vadd.f32 %v3335, %v3508
      %v3510 = vpop.f32.mrf.mxu0
      %v3511 = vadd.f32 %v3337, %v3510
      %3512 = vmatmul.bf16.gmra.mxu0 %v794
      %v3513 = vpop.f32.mrf.mxu0
      %v3514 = vadd.f32 %v3340, %v3513
      %v3515 = vpop.f32.mrf.mxu0
      %v3516 = vadd.f32 %v3342, %v3515
      %3517 = vmatmul.bf16.gmra.mxu0 %v798
      %v3518 = vpop.f32.mrf.mxu0
      %v3519 = vadd.f32 %v3345, %v3518
      %v3520 = vpop.f32.mrf.mxu0
      %v3521 = vadd.f32 %v3347, %v3520
      %3522 = vmatmul.bf16.gmra.mxu0 %v802
      %v3523 = vpop.f32.mrf.mxu0
      %v3524 = vadd.f32 %v3350, %v3523
      %v3525 = vpop.f32.mrf.mxu0
      %v3526 = vadd.f32 %v3352, %v3525
      %3527 = vmatmul.bf16.gmra.mxu0 %v806
      %v3528 = vpop.f32.mrf.mxu0
      %v3529 = vadd.f32 %v3355, %v3528
      %v3530 = vpop.f32.mrf.mxu0
      %v3531 = vadd.f32 %v3357, %v3530
      %3532 = vmatmul.bf16.gmra.mxu0 %v810
      %v3533 = vpop.f32.mrf.mxu0
      %v3534 = vadd.f32 %v3360, %v3533
      %v3535 = vpop.f32.mrf.mxu0
      %v3536 = vadd.f32 %v3362, %v3535
      %3537 = vmatmul.bf16.gmra.mxu0 %v814
      %v3538 = vpop.f32.mrf.mxu0
      %v3539 = vadd.f32 %v3365, %v3538
      %v3540 = vpop.f32.mrf.mxu0
      %v3541 = vadd.f32 %v3367, %v3540
      %3542 = vmatmul.bf16.gmra.mxu0 %v818
      %v3543 = vpop.f32.mrf.mxu0
      %v3544 = vadd.f32 %v3370, %v3543
      %v3545 = vpop.f32.mrf.mxu0
      %v3546 = vadd.f32 %v3372, %v3545
      %3547 = vmatmul.bf16.gmra.mxu0 %v822
      %v3548 = vpop.f32.mrf.mxu0
      %v3549 = vadd.f32 %v3375, %v3548
      %v3550 = vpop.f32.mrf.mxu0
      %v3551 = vadd.f32 %v3377, %v3550
      %3552 = vmatmul.bf16.gmra.mxu0 %v826
      %v3553 = vpop.f32.mrf.mxu0
      %v3554 = vadd.f32 %v3380, %v3553
      %v3555 = vpop.f32.mrf.mxu0
      %v3556 = vadd.f32 %v3382, %v3555
      %3557 = vmatmul.bf16.gmra.mxu0 %v830
      %v3558 = vpop.f32.mrf.mxu0
      %v3559 = vadd.f32 %v3385, %v3558
      %v3560 = vpop.f32.mrf.mxu0
      %v3561 = vadd.f32 %v3387, %v3560
      %3562 = vmatmul.bf16.gmra.mxu0 %v834
      %v3563 = vpop.f32.mrf.mxu0
      %v3564 = vadd.f32 %v3390, %v3563
      %v3565 = vpop.f32.mrf.mxu0
      %v3566 = vadd.f32 %v3392, %v3565
      %3567 = vmatmul.bf16.gmra.mxu0 %v838
      %v3568 = vpop.f32.mrf.mxu0
      %v3569 = vadd.f32 %v3395, %v3568
      %v3570 = vpop.f32.mrf.mxu0
      %v3571 = vadd.f32 %v3397, %v3570
      %3572 = vmatmul.bf16.gmra.mxu0 %v842
      %v3573 = vpop.f32.mrf.mxu0
      %v3574 = vadd.f32 %v3400, %v3573
      %v3575 = vpop.f32.mrf.mxu0
      %v3576 = vadd.f32 %v3402, %v3575
      %3577 = vmatmul.bf16.gmra.mxu0 %v846
      %v3578 = vpop.f32.mrf.mxu0
      %v3579 = vadd.f32 %v3405, %v3578
      %v3580 = vpop.f32.mrf.mxu0
      %v3581 = vadd.f32 %v3407, %v3580
      %3582 = vmatmul.bf16.gmra.mxu0 %v850
      %v3583 = vpop.f32.mrf.mxu0
      %v3584 = vadd.f32 %v3410, %v3583
      %v3585 = vpop.f32.mrf.mxu0
      %v3586 = vadd.f32 %v3412, %v3585
      %3587 = vmatmul.bf16.gmra.mxu0 %v854
      %v3588 = vpop.f32.mrf.mxu0
      %v3589 = vadd.f32 %v3415, %v3588
      %v3590 = vpop.f32.mrf.mxu0
      %v3591 = vadd.f32 %v3417, %v3590
      %3592 = vmatmul.bf16.gmra.mxu0 %v858
      %v3593 = vpop.f32.mrf.mxu0
      %v3594 = vadd.f32 %v3420, %v3593
      %v3595 = vpop.f32.mrf.mxu0
      %v3596 = vadd.f32 %v3422, %v3595
      %3597 = vmatmul.bf16.gmra.mxu0 %v862
      %v3598 = vpop.f32.mrf.mxu0
      %v3599 = vadd.f32 %v3425, %v3598
      %v3600 = vpop.f32.mrf.mxu0
      %v3601 = vadd.f32 %v3427, %v3600
      %3602 = vmatmul.bf16.gmra.mxu0 %v866
      %v3603 = vpop.f32.mrf.mxu0
      %v3604 = vadd.f32 %v3430, %v3603
      %v3605 = vpop.f32.mrf.mxu0
      %v3606 = vadd.f32 %v3432, %v3605
      %3607 = vmatmul.bf16.gmra.mxu0 %v870
      %v3608 = vpop.f32.mrf.mxu0
      %v3609 = vadd.f32 %v3435, %v3608
      %v3610 = vpop.f32.mrf.mxu0
      %v3611 = vadd.f32 %v3437, %v3610
      %3612 = vmatmul.bf16.gmra.mxu0 %v874
      %v3613 = vpop.f32.mrf.mxu0
      %v3614 = vadd.f32 %v3440, %v3613
      %v3615 = vpop.f32.mrf.mxu0
      %v3616 = vadd.f32 %v3442, %v3615
      %3617 = vmatmul.bf16.gmra.mxu0 %v878
      %v3618 = vpop.f32.mrf.mxu0
      %v3619 = vadd.f32 %v3445, %v3618
      %v3620 = vpop.f32.mrf.mxu0
      %v3621 = vadd.f32 %v3447, %v3620
      %3622 = vmatmul.bf16.gmra.mxu0 %v882
      %v3623 = vpop.f32.mrf.mxu0
      %v3624 = vadd.f32 %v3450, %v3623
      %v3625 = vpop.f32.mrf.mxu0
      %v3626 = vadd.f32 %v3452, %v3625
      %3627 = vmatmul.bf16.gmra.mxu0 %v886
      %v3628 = vpop.f32.mrf.mxu0
      %v3629 = vadd.f32 %v3455, %v3628
      %v3630 = vpop.f32.mrf.mxu0
      %v3631 = vadd.f32 %v3457, %v3630
      %3632 = vmatmul.bf16.gmra.mxu0 %v890
      %v3633 = vpop.f32.mrf.mxu0
      %v3634 = vadd.f32 %v3460, %v3633
      %v3635 = vpop.f32.mrf.mxu0
      %v3636 = vadd.f32 %v3462, %v3635
      %3637 = vmatmul.bf16.gmra.mxu0 %v894
      %v3638 = vpop.f32.mrf.mxu0
      %v3639 = vadd.f32 %v3465, %v3638
      %v3640 = vpop.f32.mrf.mxu0
      %v3641 = vadd.f32 %v3467, %v3640
      %3642 = vmatmul.bf16.gmra.mxu0 %v898
      %v3643 = vpop.f32.mrf.mxu0
      %v3644 = vadd.f32 %v3470, %v3643
      %v3645 = vpop.f32.mrf.mxu0
      %v3646 = vadd.f32 %v3472, %v3645
      %3647 = vmatmul.bf16.gmra.mxu0 %v902
      %v3648 = vpop.f32.mrf.mxu0
      %v3649 = vadd.f32 %v3475, %v3648
      %v3650 = vpop.f32.mrf.mxu0
      %v3651 = vadd.f32 %v3477, %v3650
      %3652 = vmatmul.bf16.gmra.mxu0 %v906
      %v3653 = vpop.f32.mrf.mxu0
      %v3654 = vadd.f32 %v3480, %v3653
      %v3655 = vpop.f32.mrf.mxu0
      %v3656 = vadd.f32 %v3482, %v3655
      %3657 = vmatmul.bf16.gmra.mxu0 %v910
      %v3658 = vpop.f32.mrf.mxu0
      %v3659 = vadd.f32 %v3485, %v3658
      %v3660 = vpop.f32.mrf.mxu0
      %v3661 = vadd.f32 %v3487, %v3660
      %3662 = vmatmul.bf16.gmra.mxu0 %v914
      %v3663 = vpop.f32.mrf.mxu0
      %v3664 = vadd.f32 %v3490, %v3663
      %v3665 = vpop.f32.mrf.mxu0
      %v3666 = vadd.f32 %v3492, %v3665
      %3667 = vdwg.mxu0
      %3668 = vmatpush.bf16.msra.mxu0 %v3113
      %3669 = vmatpush.bf16.msra.mxu0 %v3112
      %3670 = vmatpush.bf16.msra.mxu0 %v3111
      %3671 = vmatpush.bf16.msra.mxu0 %v3110
      %3672 = vmatpush.bf16.msra.mxu0 %v3109
      %3673 = vmatpush.bf16.msra.mxu0 %v3108
      %3674 = vmatpush.bf16.msra.mxu0 %v3107
      %3675 = vmatpush.bf16.msra.mxu0 %v3106
      %3676 = vmatmul.bf16.gmra.mxu0 %v787
      %v3677 = vpop.f32.mrf.mxu0
      %v3678 = vadd.f32 %v3504, %v3677
      %v3679 = vpop.f32.mrf.mxu0
      %v3680 = vadd.f32 %v3506, %v3679
      %3681 = vmatmul.bf16.gmra.mxu0 %v791
      %v3682 = vpop.f32.mrf.mxu0
      %v3683 = vadd.f32 %v3509, %v3682
      %v3684 = vpop.f32.mrf.mxu0
      %v3685 = vadd.f32 %v3511, %v3684
      %3686 = vmatmul.bf16.gmra.mxu0 %v795
      %v3687 = vpop.f32.mrf.mxu0
      %v3688 = vadd.f32 %v3514, %v3687
      %v3689 = vpop.f32.mrf.mxu0
      %v3690 = vadd.f32 %v3516, %v3689
      %3691 = vmatmul.bf16.gmra.mxu0 %v799
      %v3692 = vpop.f32.mrf.mxu0
      %v3693 = vadd.f32 %v3519, %v3692
      %v3694 = vpop.f32.mrf.mxu0
      %v3695 = vadd.f32 %v3521, %v3694
      %3696 = vmatmul.bf16.gmra.mxu0 %v803
      %v3697 = vpop.f32.mrf.mxu0
      %v3698 = vadd.f32 %v3524, %v3697
      %v3699 = vpop.f32.mrf.mxu0
      %v3700 = vadd.f32 %v3526, %v3699
      %3701 = vmatmul.bf16.gmra.mxu0 %v807
      %v3702 = vpop.f32.mrf.mxu0
      %v3703 = vadd.f32 %v3529, %v3702
      %v3704 = vpop.f32.mrf.mxu0
      %v3705 = vadd.f32 %v3531, %v3704
      %3706 = vmatmul.bf16.gmra.mxu0 %v811
      %v3707 = vpop.f32.mrf.mxu0
      %v3708 = vadd.f32 %v3534, %v3707
      %v3709 = vpop.f32.mrf.mxu0
      %v3710 = vadd.f32 %v3536, %v3709
      %3711 = vmatmul.bf16.gmra.mxu0 %v815
      %v3712 = vpop.f32.mrf.mxu0
      %v3713 = vadd.f32 %v3539, %v3712
      %v3714 = vpop.f32.mrf.mxu0
      %v3715 = vadd.f32 %v3541, %v3714
      %3716 = vmatmul.bf16.gmra.mxu0 %v819
      %v3717 = vpop.f32.mrf.mxu0
      %v3718 = vadd.f32 %v3544, %v3717
      %v3719 = vpop.f32.mrf.mxu0
      %v3720 = vadd.f32 %v3546, %v3719
      %3721 = vmatmul.bf16.gmra.mxu0 %v823
      %v3722 = vpop.f32.mrf.mxu0
      %v3723 = vadd.f32 %v3549, %v3722
      %v3724 = vpop.f32.mrf.mxu0
      %v3725 = vadd.f32 %v3551, %v3724
      %3726 = vmatmul.bf16.gmra.mxu0 %v827
      %v3727 = vpop.f32.mrf.mxu0
      %v3728 = vadd.f32 %v3554, %v3727
      %v3729 = vpop.f32.mrf.mxu0
      %v3730 = vadd.f32 %v3556, %v3729
      %3731 = vmatmul.bf16.gmra.mxu0 %v831
      %v3732 = vpop.f32.mrf.mxu0
      %v3733 = vadd.f32 %v3559, %v3732
      %v3734 = vpop.f32.mrf.mxu0
      %v3735 = vadd.f32 %v3561, %v3734
      %3736 = vmatmul.bf16.gmra.mxu0 %v835
      %v3737 = vpop.f32.mrf.mxu0
      %v3738 = vadd.f32 %v3564, %v3737
      %v3739 = vpop.f32.mrf.mxu0
      %v3740 = vadd.f32 %v3566, %v3739
      %3741 = vmatmul.bf16.gmra.mxu0 %v839
      %v3742 = vpop.f32.mrf.mxu0
      %v3743 = vadd.f32 %v3569, %v3742
      %v3744 = vpop.f32.mrf.mxu0
      %v3745 = vadd.f32 %v3571, %v3744
      %3746 = vmatmul.bf16.gmra.mxu0 %v843
      %v3747 = vpop.f32.mrf.mxu0
      %v3748 = vadd.f32 %v3574, %v3747
      %v3749 = vpop.f32.mrf.mxu0
      %v3750 = vadd.f32 %v3576, %v3749
      %3751 = vmatmul.bf16.gmra.mxu0 %v847
      %v3752 = vpop.f32.mrf.mxu0
      %v3753 = vadd.f32 %v3579, %v3752
      %v3754 = vpop.f32.mrf.mxu0
      %v3755 = vadd.f32 %v3581, %v3754
      %3756 = vmatmul.bf16.gmra.mxu0 %v851
      %v3757 = vpop.f32.mrf.mxu0
      %v3758 = vadd.f32 %v3584, %v3757
      %v3759 = vpop.f32.mrf.mxu0
      %v3760 = vadd.f32 %v3586, %v3759
      %3761 = vmatmul.bf16.gmra.mxu0 %v855
      %v3762 = vpop.f32.mrf.mxu0
      %v3763 = vadd.f32 %v3589, %v3762
      %v3764 = vpop.f32.mrf.mxu0
      %v3765 = vadd.f32 %v3591, %v3764
      %3766 = vmatmul.bf16.gmra.mxu0 %v859
      %v3767 = vpop.f32.mrf.mxu0
      %v3768 = vadd.f32 %v3594, %v3767
      %v3769 = vpop.f32.mrf.mxu0
      %v3770 = vadd.f32 %v3596, %v3769
      %3771 = vmatmul.bf16.gmra.mxu0 %v863
      %v3772 = vpop.f32.mrf.mxu0
      %v3773 = vadd.f32 %v3599, %v3772
      %v3774 = vpop.f32.mrf.mxu0
      %v3775 = vadd.f32 %v3601, %v3774
      %3776 = vmatmul.bf16.gmra.mxu0 %v867
      %v3777 = vpop.f32.mrf.mxu0
      %v3778 = vadd.f32 %v3604, %v3777
      %v3779 = vpop.f32.mrf.mxu0
      %v3780 = vadd.f32 %v3606, %v3779
      %3781 = vmatmul.bf16.gmra.mxu0 %v871
      %v3782 = vpop.f32.mrf.mxu0
      %v3783 = vadd.f32 %v3609, %v3782
      %v3784 = vpop.f32.mrf.mxu0
      %v3785 = vadd.f32 %v3611, %v3784
      %3786 = vmatmul.bf16.gmra.mxu0 %v875
      %v3787 = vpop.f32.mrf.mxu0
      %v3788 = vadd.f32 %v3614, %v3787
      %v3789 = vpop.f32.mrf.mxu0
      %v3790 = vadd.f32 %v3616, %v3789
      %3791 = vmatmul.bf16.gmra.mxu0 %v879
      %v3792 = vpop.f32.mrf.mxu0
      %v3793 = vadd.f32 %v3619, %v3792
      %v3794 = vpop.f32.mrf.mxu0
      %v3795 = vadd.f32 %v3621, %v3794
      %3796 = vmatmul.bf16.gmra.mxu0 %v883
      %v3797 = vpop.f32.mrf.mxu0
      %v3798 = vadd.f32 %v3624, %v3797
      %v3799 = vpop.f32.mrf.mxu0
      %v3800 = vadd.f32 %v3626, %v3799
      %3801 = vmatmul.bf16.gmra.mxu0 %v887
      %v3802 = vpop.f32.mrf.mxu0
      %v3803 = vadd.f32 %v3629, %v3802
      %v3804 = vpop.f32.mrf.mxu0
      %v3805 = vadd.f32 %v3631, %v3804
      %3806 = vmatmul.bf16.gmra.mxu0 %v891
      %v3807 = vpop.f32.mrf.mxu0
      %v3808 = vadd.f32 %v3634, %v3807
      %v3809 = vpop.f32.mrf.mxu0
      %v3810 = vadd.f32 %v3636, %v3809
      %3811 = vmatmul.bf16.gmra.mxu0 %v895
      %v3812 = vpop.f32.mrf.mxu0
      %v3813 = vadd.f32 %v3639, %v3812
      %v3814 = vpop.f32.mrf.mxu0
      %v3815 = vadd.f32 %v3641, %v3814
      %3816 = vmatmul.bf16.gmra.mxu0 %v899
      %v3817 = vpop.f32.mrf.mxu0
      %v3818 = vadd.f32 %v3644, %v3817
      %v3819 = vpop.f32.mrf.mxu0
      %v3820 = vadd.f32 %v3646, %v3819
      %3821 = vmatmul.bf16.gmra.mxu0 %v903
      %v3822 = vpop.f32.mrf.mxu0
      %v3823 = vadd.f32 %v3649, %v3822
      %v3824 = vpop.f32.mrf.mxu0
      %v3825 = vadd.f32 %v3651, %v3824
      %3826 = vmatmul.bf16.gmra.mxu0 %v907
      %v3827 = vpop.f32.mrf.mxu0
      %v3828 = vadd.f32 %v3654, %v3827
      %v3829 = vpop.f32.mrf.mxu0
      %v3830 = vadd.f32 %v3656, %v3829
      %3831 = vmatmul.bf16.gmra.mxu0 %v911
      %v3832 = vpop.f32.mrf.mxu0
      %v3833 = vadd.f32 %v3659, %v3832
      %v3834 = vpop.f32.mrf.mxu0
      %v3835 = vadd.f32 %v3661, %v3834
      %3836 = vmatmul.bf16.gmra.mxu0 %v915
      %v3837 = vpop.f32.mrf.mxu0
      %v3838 = vadd.f32 %v3664, %v3837
      %v3839 = vpop.f32.mrf.mxu0
      %v3840 = vadd.f32 %v3666, %v3839
      %3841 = vdwg.mxu0
      %s3842 = scalar_lea.vmem %s178, 768
      %v3843 = vld [vmem:[%s3842] sm:$0xf]
      %v3844 = vld [vmem:[%s3842 + $0x4] sm:$0xf]
      %v3845 = vld [vmem:[%s3842 + $0x8] sm:$0xf]
      %v3846 = vld [vmem:[%s3842 + $0xc] sm:$0xf]
      %v3847 = vld [vmem:[%s3842 + $0x10] sm:$0xf]
      %v3848 = vld [vmem:[%s3842 + $0x14] sm:$0xf]
      %v3849 = vld [vmem:[%s3842 + $0x18] sm:$0xf]
      %v3850 = vld [vmem:[%s3842 + $0x1c] sm:$0xf]
      %v3851 = vld [vmem:[%s3842 + $0x20] sm:$0xf]
      %v3852 = vld [vmem:[%s3842 + $0x24] sm:$0xf]
      %v3853 = vld [vmem:[%s3842 + $0x28] sm:$0xf]
      %v3854 = vld [vmem:[%s3842 + $0x2c] sm:$0xf]
      %v3855 = vld [vmem:[%s3842 + $0x30] sm:$0xf]
      %v3856 = vld [vmem:[%s3842 + $0x34] sm:$0xf]
      %v3857 = vld [vmem:[%s3842 + $0x38] sm:$0xf]
      %v3858 = vld [vmem:[%s3842 + $0x3c] sm:$0xf]
      %v3859 = vld [vmem:[%s3842 + $0x40] sm:$0xf]
      %v3860 = vld [vmem:[%s3842 + $0x44] sm:$0xf]
      %v3861 = vld [vmem:[%s3842 + $0x48] sm:$0xf]
      %v3862 = vld [vmem:[%s3842 + $0x4c] sm:$0xf]
      %v3863 = vld [vmem:[%s3842 + $0x50] sm:$0xf]
      %v3864 = vld [vmem:[%s3842 + $0x54] sm:$0xf]
      %v3865 = vld [vmem:[%s3842 + $0x58] sm:$0xf]
      %v3866 = vld [vmem:[%s3842 + $0x5c] sm:$0xf]
      %v3867 = vld [vmem:[%s3842 + $0x60] sm:$0xf]
      %v3868 = vld [vmem:[%s3842 + $0x64] sm:$0xf]
      %v3869 = vld [vmem:[%s3842 + $0x68] sm:$0xf]
      %v3870 = vld [vmem:[%s3842 + $0x6c] sm:$0xf]
      %v3871 = vld [vmem:[%s3842 + $0x70] sm:$0xf]
      %v3872 = vld [vmem:[%s3842 + $0x74] sm:$0xf]
      %v3873 = vld [vmem:[%s3842 + $0x78] sm:$0xf]
      %v3874 = vld [vmem:[%s3842 + $0x7c] sm:$0xf]
      %v3875 = vld [vmem:[%s3842 + $0x80] sm:$0xf]
      %v3876 = vld [vmem:[%s3842 + $0x84] sm:$0xf]
      %v3877 = vld [vmem:[%s3842 + $0x88] sm:$0xf]
      %v3878 = vld [vmem:[%s3842 + $0x8c] sm:$0xf]
      %v3879 = vld [vmem:[%s3842 + $0x90] sm:$0xf]
      %v3880 = vld [vmem:[%s3842 + $0x94] sm:$0xf]
      %v3881 = vld [vmem:[%s3842 + $0x98] sm:$0xf]
      %v3882 = vld [vmem:[%s3842 + $0x9c] sm:$0xf]
      %v3883 = vld [vmem:[%s3842 + $0xa0] sm:$0xf]
      %v3884 = vld [vmem:[%s3842 + $0xa4] sm:$0xf]
      %v3885 = vld [vmem:[%s3842 + $0xa8] sm:$0xf]
      %v3886 = vld [vmem:[%s3842 + $0xac] sm:$0xf]
      %v3887 = vld [vmem:[%s3842 + $0xb0] sm:$0xf]
      %v3888 = vld [vmem:[%s3842 + $0xb4] sm:$0xf]
      %v3889 = vld [vmem:[%s3842 + $0xb8] sm:$0xf]
      %v3890 = vld [vmem:[%s3842 + $0xbc] sm:$0xf]
      %v3891 = vld [vmem:[%s3842 + $0xc0] sm:$0xf]
      %v3892 = vld [vmem:[%s3842 + $0xc4] sm:$0xf]
      %v3893 = vld [vmem:[%s3842 + $0xc8] sm:$0xf]
      %v3894 = vld [vmem:[%s3842 + $0xcc] sm:$0xf]
      %v3895 = vld [vmem:[%s3842 + $0xd0] sm:$0xf]
      %v3896 = vld [vmem:[%s3842 + $0xd4] sm:$0xf]
      %v3897 = vld [vmem:[%s3842 + $0xd8] sm:$0xf]
      %v3898 = vld [vmem:[%s3842 + $0xdc] sm:$0xf]
      %v3899 = vld [vmem:[%s3842 + $0xe0] sm:$0xf]
      %v3900 = vld [vmem:[%s3842 + $0xe4] sm:$0xf]
      %v3901 = vld [vmem:[%s3842 + $0xe8] sm:$0xf]
      %v3902 = vld [vmem:[%s3842 + $0xec] sm:$0xf]
      %v3903 = vld [vmem:[%s3842 + $0xf0] sm:$0xf]
      %v3904 = vld [vmem:[%s3842 + $0xf4] sm:$0xf]
      %v3905 = vld [vmem:[%s3842 + $0xf8] sm:$0xf]
      %v3906 = vld [vmem:[%s3842 + $0xfc] sm:$0xf]
      %v3971 = vunpack.c.l.b16 %v3843
      %v3972 = vunpack.c.l.b16 %v3844
      %v3973 = vunpack.c.l.b16 %v3845
      %v3974 = vunpack.c.l.b16 %v3846
      %v3975 = vunpack.c.l.b16 %v3847
      %v3976 = vunpack.c.l.b16 %v3848
      %v3977 = vunpack.c.l.b16 %v3849
      %v3978 = vunpack.c.l.b16 %v3850
      %v3979 = vunpack.c.l.b16 %v3851
      %v3980 = vunpack.c.l.b16 %v3852
      %v3981 = vunpack.c.l.b16 %v3853
      %v3982 = vunpack.c.l.b16 %v3854
      %v3983 = vunpack.c.l.b16 %v3855
      %v3984 = vunpack.c.l.b16 %v3856
      %v3985 = vunpack.c.l.b16 %v3857
      %v3986 = vunpack.c.l.b16 %v3858
      %v3987 = vunpack.c.l.b16 %v3859
      %v3988 = vunpack.c.l.b16 %v3860
      %v3989 = vunpack.c.l.b16 %v3861
      %v3990 = vunpack.c.l.b16 %v3862
      %v3991 = vunpack.c.l.b16 %v3863
      %v3992 = vunpack.c.l.b16 %v3864
      %v3993 = vunpack.c.l.b16 %v3865
      %v3994 = vunpack.c.l.b16 %v3866
      %v3995 = vunpack.c.l.b16 %v3867
      %v3996 = vunpack.c.l.b16 %v3868
      %v3997 = vunpack.c.l.b16 %v3869
      %v3998 = vunpack.c.l.b16 %v3870
      %v3999 = vunpack.c.l.b16 %v3871
      %v4000 = vunpack.c.l.b16 %v3872
      %v4001 = vunpack.c.l.b16 %v3873
      %v4002 = vunpack.c.l.b16 %v3874
      %v4003 = vunpack.c.l.b16 %v3875
      %v4004 = vunpack.c.l.b16 %v3876
      %v4005 = vunpack.c.l.b16 %v3877
      %v4006 = vunpack.c.l.b16 %v3878
      %v4007 = vunpack.c.l.b16 %v3879
      %v4008 = vunpack.c.l.b16 %v3880
      %v4009 = vunpack.c.l.b16 %v3881
      %v4010 = vunpack.c.l.b16 %v3882
      %v4011 = vunpack.c.l.b16 %v3883
      %v4012 = vunpack.c.l.b16 %v3884
      %v4013 = vunpack.c.l.b16 %v3885
      %v4014 = vunpack.c.l.b16 %v3886
      %v4015 = vunpack.c.l.b16 %v3887
      %v4016 = vunpack.c.l.b16 %v3888
      %v4017 = vunpack.c.l.b16 %v3889
      %v4018 = vunpack.c.l.b16 %v3890
      %v4019 = vunpack.c.l.b16 %v3891
      %v4020 = vunpack.c.l.b16 %v3892
      %v4021 = vunpack.c.l.b16 %v3893
      %v4022 = vunpack.c.l.b16 %v3894
      %v4023 = vunpack.c.l.b16 %v3895
      %v4024 = vunpack.c.l.b16 %v3896
      %v4025 = vunpack.c.l.b16 %v3897
      %v4026 = vunpack.c.l.b16 %v3898
      %v4027 = vunpack.c.l.b16 %v3899
      %v4028 = vunpack.c.l.b16 %v3900
      %v4029 = vunpack.c.l.b16 %v3901
      %v4030 = vunpack.c.l.b16 %v3902
      %v4031 = vunpack.c.l.b16 %v3903
      %v4032 = vunpack.c.l.b16 %v3904
      %v4033 = vunpack.c.l.b16 %v3905
      %v4034 = vunpack.c.l.b16 %v3906
      %v4035 = vpack.c.b16 %v3972, %v3971
      %v4036 = vpack.c.b16 %v3974, %v3973
      %v4037 = vpack.c.b16 %v3976, %v3975
      %v4038 = vpack.c.b16 %v3978, %v3977
      %v4039 = vpack.c.b16 %v3980, %v3979
      %v4040 = vpack.c.b16 %v3982, %v3981
      %v4041 = vpack.c.b16 %v3984, %v3983
      %v4042 = vpack.c.b16 %v3986, %v3985
      %v4043 = vpack.c.b16 %v3988, %v3987
      %v4044 = vpack.c.b16 %v3990, %v3989
      %v4045 = vpack.c.b16 %v3992, %v3991
      %v4046 = vpack.c.b16 %v3994, %v3993
      %v4047 = vpack.c.b16 %v3996, %v3995
      %v4048 = vpack.c.b16 %v3998, %v3997
      %v4049 = vpack.c.b16 %v4000, %v3999
      %v4050 = vpack.c.b16 %v4002, %v4001
      %v4051 = vpack.c.b16 %v4004, %v4003
      %v4052 = vpack.c.b16 %v4006, %v4005
      %v4053 = vpack.c.b16 %v4008, %v4007
      %v4054 = vpack.c.b16 %v4010, %v4009
      %v4055 = vpack.c.b16 %v4012, %v4011
      %v4056 = vpack.c.b16 %v4014, %v4013
      %v4057 = vpack.c.b16 %v4016, %v4015
      %v4058 = vpack.c.b16 %v4018, %v4017
      %v4059 = vpack.c.b16 %v4020, %v4019
      %v4060 = vpack.c.b16 %v4022, %v4021
      %v4061 = vpack.c.b16 %v4024, %v4023
      %v4062 = vpack.c.b16 %v4026, %v4025
      %v4063 = vpack.c.b16 %v4028, %v4027
      %v4064 = vpack.c.b16 %v4030, %v4029
      %v4065 = vpack.c.b16 %v4032, %v4031
      %v4066 = vpack.c.b16 %v4034, %v4033
      %4099 = vmatpush.bf16.msra.mxu0 %v4042
      %4100 = vmatpush.bf16.msra.mxu0 %v4041
      %4101 = vmatpush.bf16.msra.mxu0 %v4040
      %4102 = vmatpush.bf16.msra.mxu0 %v4039
      %4103 = vmatpush.bf16.msra.mxu0 %v4038
      %4104 = vmatpush.bf16.msra.mxu0 %v4037
      %4105 = vmatpush.bf16.msra.mxu0 %v4036
      %4106 = vmatpush.bf16.msra.mxu0 %v4035
      %4107 = vmatmul.bf16.gmra.mxu0 %v784
      %v4108 = vpop.f32.mrf.mxu0
      %v4109 = vadd.f32 0.0, %v4108
      %v4110 = vpop.f32.mrf.mxu0
      %v4111 = vadd.f32 0.0, %v4110
      %4112 = vmatmul.bf16.gmra.mxu0 %v788
      %v4113 = vpop.f32.mrf.mxu0
      %v4114 = vadd.f32 0.0, %v4113
      %v4115 = vpop.f32.mrf.mxu0
      %v4116 = vadd.f32 0.0, %v4115
      %4117 = vmatmul.bf16.gmra.mxu0 %v792
      %v4118 = vpop.f32.mrf.mxu0
      %v4119 = vadd.f32 0.0, %v4118
      %v4120 = vpop.f32.mrf.mxu0
      %v4121 = vadd.f32 0.0, %v4120
      %4122 = vmatmul.bf16.gmra.mxu0 %v796
      %v4123 = vpop.f32.mrf.mxu0
      %v4124 = vadd.f32 0.0, %v4123
      %v4125 = vpop.f32.mrf.mxu0
      %v4126 = vadd.f32 0.0, %v4125
      %4127 = vmatmul.bf16.gmra.mxu0 %v800
      %v4128 = vpop.f32.mrf.mxu0
      %v4129 = vadd.f32 0.0, %v4128
      %v4130 = vpop.f32.mrf.mxu0
      %v4131 = vadd.f32 0.0, %v4130
      %4132 = vmatmul.bf16.gmra.mxu0 %v804
      %v4133 = vpop.f32.mrf.mxu0
      %v4134 = vadd.f32 0.0, %v4133
      %v4135 = vpop.f32.mrf.mxu0
      %v4136 = vadd.f32 0.0, %v4135
      %4137 = vmatmul.bf16.gmra.mxu0 %v808
      %v4138 = vpop.f32.mrf.mxu0
      %v4139 = vadd.f32 0.0, %v4138
      %v4140 = vpop.f32.mrf.mxu0
      %v4141 = vadd.f32 0.0, %v4140
      %4142 = vmatmul.bf16.gmra.mxu0 %v812
      %v4143 = vpop.f32.mrf.mxu0
      %v4144 = vadd.f32 0.0, %v4143
      %v4145 = vpop.f32.mrf.mxu0
      %v4146 = vadd.f32 0.0, %v4145
      %4147 = vmatmul.bf16.gmra.mxu0 %v816
      %v4148 = vpop.f32.mrf.mxu0
      %v4149 = vadd.f32 0.0, %v4148
      %v4150 = vpop.f32.mrf.mxu0
      %v4151 = vadd.f32 0.0, %v4150
      %4152 = vmatmul.bf16.gmra.mxu0 %v820
      %v4153 = vpop.f32.mrf.mxu0
      %v4154 = vadd.f32 0.0, %v4153
      %v4155 = vpop.f32.mrf.mxu0
      %v4156 = vadd.f32 0.0, %v4155
      %4157 = vmatmul.bf16.gmra.mxu0 %v824
      %v4158 = vpop.f32.mrf.mxu0
      %v4159 = vadd.f32 0.0, %v4158
      %v4160 = vpop.f32.mrf.mxu0
      %v4161 = vadd.f32 0.0, %v4160
      %4162 = vmatmul.bf16.gmra.mxu0 %v828
      %v4163 = vpop.f32.mrf.mxu0
      %v4164 = vadd.f32 0.0, %v4163
      %v4165 = vpop.f32.mrf.mxu0
      %v4166 = vadd.f32 0.0, %v4165
      %4167 = vmatmul.bf16.gmra.mxu0 %v832
      %v4168 = vpop.f32.mrf.mxu0
      %v4169 = vadd.f32 0.0, %v4168
      %v4170 = vpop.f32.mrf.mxu0
      %v4171 = vadd.f32 0.0, %v4170
      %4172 = vmatmul.bf16.gmra.mxu0 %v836
      %v4173 = vpop.f32.mrf.mxu0
      %v4174 = vadd.f32 0.0, %v4173
      %v4175 = vpop.f32.mrf.mxu0
      %v4176 = vadd.f32 0.0, %v4175
      %4177 = vmatmul.bf16.gmra.mxu0 %v840
      %v4178 = vpop.f32.mrf.mxu0
      %v4179 = vadd.f32 0.0, %v4178
      %v4180 = vpop.f32.mrf.mxu0
      %v4181 = vadd.f32 0.0, %v4180
      %4182 = vmatmul.bf16.gmra.mxu0 %v844
      %v4183 = vpop.f32.mrf.mxu0
      %v4184 = vadd.f32 0.0, %v4183
      %v4185 = vpop.f32.mrf.mxu0
      %v4186 = vadd.f32 0.0, %v4185
      %4187 = vmatmul.bf16.gmra.mxu0 %v848
      %v4188 = vpop.f32.mrf.mxu0
      %v4189 = vadd.f32 0.0, %v4188
      %v4190 = vpop.f32.mrf.mxu0
      %v4191 = vadd.f32 0.0, %v4190
      %4192 = vmatmul.bf16.gmra.mxu0 %v852
      %v4193 = vpop.f32.mrf.mxu0
      %v4194 = vadd.f32 0.0, %v4193
      %v4195 = vpop.f32.mrf.mxu0
      %v4196 = vadd.f32 0.0, %v4195
      %4197 = vmatmul.bf16.gmra.mxu0 %v856
      %v4198 = vpop.f32.mrf.mxu0
      %v4199 = vadd.f32 0.0, %v4198
      %v4200 = vpop.f32.mrf.mxu0
      %v4201 = vadd.f32 0.0, %v4200
      %4202 = vmatmul.bf16.gmra.mxu0 %v860
      %v4203 = vpop.f32.mrf.mxu0
      %v4204 = vadd.f32 0.0, %v4203
      %v4205 = vpop.f32.mrf.mxu0
      %v4206 = vadd.f32 0.0, %v4205
      %4207 = vmatmul.bf16.gmra.mxu0 %v864
      %v4208 = vpop.f32.mrf.mxu0
      %v4209 = vadd.f32 0.0, %v4208
      %v4210 = vpop.f32.mrf.mxu0
      %v4211 = vadd.f32 0.0, %v4210
      %4212 = vmatmul.bf16.gmra.mxu0 %v868
      %v4213 = vpop.f32.mrf.mxu0
      %v4214 = vadd.f32 0.0, %v4213
      %v4215 = vpop.f32.mrf.mxu0
      %v4216 = vadd.f32 0.0, %v4215
      %4217 = vmatmul.bf16.gmra.mxu0 %v872
      %v4218 = vpop.f32.mrf.mxu0
      %v4219 = vadd.f32 0.0, %v4218
      %v4220 = vpop.f32.mrf.mxu0
      %v4221 = vadd.f32 0.0, %v4220
      %4222 = vmatmul.bf16.gmra.mxu0 %v876
      %v4223 = vpop.f32.mrf.mxu0
      %v4224 = vadd.f32 0.0, %v4223
      %v4225 = vpop.f32.mrf.mxu0
      %v4226 = vadd.f32 0.0, %v4225
      %4227 = vmatmul.bf16.gmra.mxu0 %v880
      %v4228 = vpop.f32.mrf.mxu0
      %v4229 = vadd.f32 0.0, %v4228
      %v4230 = vpop.f32.mrf.mxu0
      %v4231 = vadd.f32 0.0, %v4230
      %4232 = vmatmul.bf16.gmra.mxu0 %v884
      %v4233 = vpop.f32.mrf.mxu0
      %v4234 = vadd.f32 0.0, %v4233
      %v4235 = vpop.f32.mrf.mxu0
      %v4236 = vadd.f32 0.0, %v4235
      %4237 = vmatmul.bf16.gmra.mxu0 %v888
      %v4238 = vpop.f32.mrf.mxu0
      %v4239 = vadd.f32 0.0, %v4238
      %v4240 = vpop.f32.mrf.mxu0
      %v4241 = vadd.f32 0.0, %v4240
      %4242 = vmatmul.bf16.gmra.mxu0 %v892
      %v4243 = vpop.f32.mrf.mxu0
      %v4244 = vadd.f32 0.0, %v4243
      %v4245 = vpop.f32.mrf.mxu0
      %v4246 = vadd.f32 0.0, %v4245
      %4247 = vmatmul.bf16.gmra.mxu0 %v896
      %v4248 = vpop.f32.mrf.mxu0
      %v4249 = vadd.f32 0.0, %v4248
      %v4250 = vpop.f32.mrf.mxu0
      %v4251 = vadd.f32 0.0, %v4250
      %4252 = vmatmul.bf16.gmra.mxu0 %v900
      %v4253 = vpop.f32.mrf.mxu0
      %v4254 = vadd.f32 0.0, %v4253
      %v4255 = vpop.f32.mrf.mxu0
      %v4256 = vadd.f32 0.0, %v4255
      %4257 = vmatmul.bf16.gmra.mxu0 %v904
      %v4258 = vpop.f32.mrf.mxu0
      %v4259 = vadd.f32 0.0, %v4258
      %v4260 = vpop.f32.mrf.mxu0
      %v4261 = vadd.f32 0.0, %v4260
      %4262 = vmatmul.bf16.gmra.mxu0 %v908
      %v4263 = vpop.f32.mrf.mxu0
      %v4264 = vadd.f32 0.0, %v4263
      %v4265 = vpop.f32.mrf.mxu0
      %v4266 = vadd.f32 0.0, %v4265
      %4267 = vmatmul.bf16.gmra.mxu0 %v912
      %v4268 = vpop.f32.mrf.mxu0
      %v4269 = vadd.f32 0.0, %v4268
      %v4270 = vpop.f32.mrf.mxu0
      %v4271 = vadd.f32 0.0, %v4270
      %4272 = vdwg.mxu0
      %4273 = vmatpush.bf16.msra.mxu0 %v4050
      %4274 = vmatpush.bf16.msra.mxu0 %v4049
      %4275 = vmatpush.bf16.msra.mxu0 %v4048
      %4276 = vmatpush.bf16.msra.mxu0 %v4047
      %4277 = vmatpush.bf16.msra.mxu0 %v4046
      %4278 = vmatpush.bf16.msra.mxu0 %v4045
      %4279 = vmatpush.bf16.msra.mxu0 %v4044
      %4280 = vmatpush.bf16.msra.mxu0 %v4043
      %4281 = vmatmul.bf16.gmra.mxu0 %v785
      %v4282 = vpop.f32.mrf.mxu0
      %v4283 = vadd.f32 %v4109, %v4282
      %v4284 = vpop.f32.mrf.mxu0
      %v4285 = vadd.f32 %v4111, %v4284
      %4286 = vmatmul.bf16.gmra.mxu0 %v789
      %v4287 = vpop.f32.mrf.mxu0
      %v4288 = vadd.f32 %v4114, %v4287
      %v4289 = vpop.f32.mrf.mxu0
      %v4290 = vadd.f32 %v4116, %v4289
      %4291 = vmatmul.bf16.gmra.mxu0 %v793
      %v4292 = vpop.f32.mrf.mxu0
      %v4293 = vadd.f32 %v4119, %v4292
      %v4294 = vpop.f32.mrf.mxu0
      %v4295 = vadd.f32 %v4121, %v4294
      %4296 = vmatmul.bf16.gmra.mxu0 %v797
      %v4297 = vpop.f32.mrf.mxu0
      %v4298 = vadd.f32 %v4124, %v4297
      %v4299 = vpop.f32.mrf.mxu0
      %v4300 = vadd.f32 %v4126, %v4299
      %4301 = vmatmul.bf16.gmra.mxu0 %v801
      %v4302 = vpop.f32.mrf.mxu0
      %v4303 = vadd.f32 %v4129, %v4302
      %v4304 = vpop.f32.mrf.mxu0
      %v4305 = vadd.f32 %v4131, %v4304
      %4306 = vmatmul.bf16.gmra.mxu0 %v805
      %v4307 = vpop.f32.mrf.mxu0
      %v4308 = vadd.f32 %v4134, %v4307
      %v4309 = vpop.f32.mrf.mxu0
      %v4310 = vadd.f32 %v4136, %v4309
      %4311 = vmatmul.bf16.gmra.mxu0 %v809
      %v4312 = vpop.f32.mrf.mxu0
      %v4313 = vadd.f32 %v4139, %v4312
      %v4314 = vpop.f32.mrf.mxu0
      %v4315 = vadd.f32 %v4141, %v4314
      %4316 = vmatmul.bf16.gmra.mxu0 %v813
      %v4317 = vpop.f32.mrf.mxu0
      %v4318 = vadd.f32 %v4144, %v4317
      %v4319 = vpop.f32.mrf.mxu0
      %v4320 = vadd.f32 %v4146, %v4319
      %4321 = vmatmul.bf16.gmra.mxu0 %v817
      %v4322 = vpop.f32.mrf.mxu0
      %v4323 = vadd.f32 %v4149, %v4322
      %v4324 = vpop.f32.mrf.mxu0
      %v4325 = vadd.f32 %v4151, %v4324
      %4326 = vmatmul.bf16.gmra.mxu0 %v821
      %v4327 = vpop.f32.mrf.mxu0
      %v4328 = vadd.f32 %v4154, %v4327
      %v4329 = vpop.f32.mrf.mxu0
      %v4330 = vadd.f32 %v4156, %v4329
      %4331 = vmatmul.bf16.gmra.mxu0 %v825
      %v4332 = vpop.f32.mrf.mxu0
      %v4333 = vadd.f32 %v4159, %v4332
      %v4334 = vpop.f32.mrf.mxu0
      %v4335 = vadd.f32 %v4161, %v4334
      %4336 = vmatmul.bf16.gmra.mxu0 %v829
      %v4337 = vpop.f32.mrf.mxu0
      %v4338 = vadd.f32 %v4164, %v4337
      %v4339 = vpop.f32.mrf.mxu0
      %v4340 = vadd.f32 %v4166, %v4339
      %4341 = vmatmul.bf16.gmra.mxu0 %v833
      %v4342 = vpop.f32.mrf.mxu0
      %v4343 = vadd.f32 %v4169, %v4342
      %v4344 = vpop.f32.mrf.mxu0
      %v4345 = vadd.f32 %v4171, %v4344
      %4346 = vmatmul.bf16.gmra.mxu0 %v837
      %v4347 = vpop.f32.mrf.mxu0
      %v4348 = vadd.f32 %v4174, %v4347
      %v4349 = vpop.f32.mrf.mxu0
      %v4350 = vadd.f32 %v4176, %v4349
      %4351 = vmatmul.bf16.gmra.mxu0 %v841
      %v4352 = vpop.f32.mrf.mxu0
      %v4353 = vadd.f32 %v4179, %v4352
      %v4354 = vpop.f32.mrf.mxu0
      %v4355 = vadd.f32 %v4181, %v4354
      %4356 = vmatmul.bf16.gmra.mxu0 %v845
      %v4357 = vpop.f32.mrf.mxu0
      %v4358 = vadd.f32 %v4184, %v4357
      %v4359 = vpop.f32.mrf.mxu0
      %v4360 = vadd.f32 %v4186, %v4359
      %4361 = vmatmul.bf16.gmra.mxu0 %v849
      %v4362 = vpop.f32.mrf.mxu0
      %v4363 = vadd.f32 %v4189, %v4362
      %v4364 = vpop.f32.mrf.mxu0
      %v4365 = vadd.f32 %v4191, %v4364
      %4366 = vmatmul.bf16.gmra.mxu0 %v853
      %v4367 = vpop.f32.mrf.mxu0
      %v4368 = vadd.f32 %v4194, %v4367
      %v4369 = vpop.f32.mrf.mxu0
      %v4370 = vadd.f32 %v4196, %v4369
      %4371 = vmatmul.bf16.gmra.mxu0 %v857
      %v4372 = vpop.f32.mrf.mxu0
      %v4373 = vadd.f32 %v4199, %v4372
      %v4374 = vpop.f32.mrf.mxu0
      %v4375 = vadd.f32 %v4201, %v4374
      %4376 = vmatmul.bf16.gmra.mxu0 %v861
      %v4377 = vpop.f32.mrf.mxu0
      %v4378 = vadd.f32 %v4204, %v4377
      %v4379 = vpop.f32.mrf.mxu0
      %v4380 = vadd.f32 %v4206, %v4379
      %4381 = vmatmul.bf16.gmra.mxu0 %v865
      %v4382 = vpop.f32.mrf.mxu0
      %v4383 = vadd.f32 %v4209, %v4382
      %v4384 = vpop.f32.mrf.mxu0
      %v4385 = vadd.f32 %v4211, %v4384
      %4386 = vmatmul.bf16.gmra.mxu0 %v869
      %v4387 = vpop.f32.mrf.mxu0
      %v4388 = vadd.f32 %v4214, %v4387
      %v4389 = vpop.f32.mrf.mxu0
      %v4390 = vadd.f32 %v4216, %v4389
      %4391 = vmatmul.bf16.gmra.mxu0 %v873
      %v4392 = vpop.f32.mrf.mxu0
      %v4393 = vadd.f32 %v4219, %v4392
      %v4394 = vpop.f32.mrf.mxu0
      %v4395 = vadd.f32 %v4221, %v4394
      %4396 = vmatmul.bf16.gmra.mxu0 %v877
      %v4397 = vpop.f32.mrf.mxu0
      %v4398 = vadd.f32 %v4224, %v4397
      %v4399 = vpop.f32.mrf.mxu0
      %v4400 = vadd.f32 %v4226, %v4399
      %4401 = vmatmul.bf16.gmra.mxu0 %v881
      %v4402 = vpop.f32.mrf.mxu0
      %v4403 = vadd.f32 %v4229, %v4402
      %v4404 = vpop.f32.mrf.mxu0
      %v4405 = vadd.f32 %v4231, %v4404
      %4406 = vmatmul.bf16.gmra.mxu0 %v885
      %v4407 = vpop.f32.mrf.mxu0
      %v4408 = vadd.f32 %v4234, %v4407
      %v4409 = vpop.f32.mrf.mxu0
      %v4410 = vadd.f32 %v4236, %v4409
      %4411 = vmatmul.bf16.gmra.mxu0 %v889
      %v4412 = vpop.f32.mrf.mxu0
      %v4413 = vadd.f32 %v4239, %v4412
      %v4414 = vpop.f32.mrf.mxu0
      %v4415 = vadd.f32 %v4241, %v4414
      %4416 = vmatmul.bf16.gmra.mxu0 %v893
      %v4417 = vpop.f32.mrf.mxu0
      %v4418 = vadd.f32 %v4244, %v4417
      %v4419 = vpop.f32.mrf.mxu0
      %v4420 = vadd.f32 %v4246, %v4419
      %4421 = vmatmul.bf16.gmra.mxu0 %v897
      %v4422 = vpop.f32.mrf.mxu0
      %v4423 = vadd.f32 %v4249, %v4422
      %v4424 = vpop.f32.mrf.mxu0
      %v4425 = vadd.f32 %v4251, %v4424
      %4426 = vmatmul.bf16.gmra.mxu0 %v901
      %v4427 = vpop.f32.mrf.mxu0
      %v4428 = vadd.f32 %v4254, %v4427
      %v4429 = vpop.f32.mrf.mxu0
      %v4430 = vadd.f32 %v4256, %v4429
      %4431 = vmatmul.bf16.gmra.mxu0 %v905
      %v4432 = vpop.f32.mrf.mxu0
      %v4433 = vadd.f32 %v4259, %v4432
      %v4434 = vpop.f32.mrf.mxu0
      %v4435 = vadd.f32 %v4261, %v4434
      %4436 = vmatmul.bf16.gmra.mxu0 %v909
      %v4437 = vpop.f32.mrf.mxu0
      %v4438 = vadd.f32 %v4264, %v4437
      %v4439 = vpop.f32.mrf.mxu0
      %v4440 = vadd.f32 %v4266, %v4439
      %4441 = vmatmul.bf16.gmra.mxu0 %v913
      %v4442 = vpop.f32.mrf.mxu0
      %v4443 = vadd.f32 %v4269, %v4442
      %v4444 = vpop.f32.mrf.mxu0
      %v4445 = vadd.f32 %v4271, %v4444
      %4446 = vdwg.mxu0
      %4447 = vmatpush.bf16.msra.mxu0 %v4058
      %4448 = vmatpush.bf16.msra.mxu0 %v4057
      %4449 = vmatpush.bf16.msra.mxu0 %v4056
      %4450 = vmatpush.bf16.msra.mxu0 %v4055
      %4451 = vmatpush.bf16.msra.mxu0 %v4054
      %4452 = vmatpush.bf16.msra.mxu0 %v4053
      %4453 = vmatpush.bf16.msra.mxu0 %v4052
      %4454 = vmatpush.bf16.msra.mxu0 %v4051
      %4455 = vmatmul.bf16.gmra.mxu0 %v786
      %v4456 = vpop.f32.mrf.mxu0
      %v4457 = vadd.f32 %v4283, %v4456
      %v4458 = vpop.f32.mrf.mxu0
      %v4459 = vadd.f32 %v4285, %v4458
      %4460 = vmatmul.bf16.gmra.mxu0 %v790
      %v4461 = vpop.f32.mrf.mxu0
      %v4462 = vadd.f32 %v4288, %v4461
      %v4463 = vpop.f32.mrf.mxu0
      %v4464 = vadd.f32 %v4290, %v4463
      %4465 = vmatmul.bf16.gmra.mxu0 %v794
      %v4466 = vpop.f32.mrf.mxu0
      %v4467 = vadd.f32 %v4293, %v4466
      %v4468 = vpop.f32.mrf.mxu0
      %v4469 = vadd.f32 %v4295, %v4468
      %4470 = vmatmul.bf16.gmra.mxu0 %v798
      %v4471 = vpop.f32.mrf.mxu0
      %v4472 = vadd.f32 %v4298, %v4471
      %v4473 = vpop.f32.mrf.mxu0
      %v4474 = vadd.f32 %v4300, %v4473
      %4475 = vmatmul.bf16.gmra.mxu0 %v802
      %v4476 = vpop.f32.mrf.mxu0
      %v4477 = vadd.f32 %v4303, %v4476
      %v4478 = vpop.f32.mrf.mxu0
      %v4479 = vadd.f32 %v4305, %v4478
      %4480 = vmatmul.bf16.gmra.mxu0 %v806
      %v4481 = vpop.f32.mrf.mxu0
      %v4482 = vadd.f32 %v4308, %v4481
      %v4483 = vpop.f32.mrf.mxu0
      %v4484 = vadd.f32 %v4310, %v4483
      %4485 = vmatmul.bf16.gmra.mxu0 %v810
      %v4486 = vpop.f32.mrf.mxu0
      %v4487 = vadd.f32 %v4313, %v4486
      %v4488 = vpop.f32.mrf.mxu0
      %v4489 = vadd.f32 %v4315, %v4488
      %4490 = vmatmul.bf16.gmra.mxu0 %v814
      %v4491 = vpop.f32.mrf.mxu0
      %v4492 = vadd.f32 %v4318, %v4491
      %v4493 = vpop.f32.mrf.mxu0
      %v4494 = vadd.f32 %v4320, %v4493
      %4495 = vmatmul.bf16.gmra.mxu0 %v818
      %v4496 = vpop.f32.mrf.mxu0
      %v4497 = vadd.f32 %v4323, %v4496
      %v4498 = vpop.f32.mrf.mxu0
      %v4499 = vadd.f32 %v4325, %v4498
      %4500 = vmatmul.bf16.gmra.mxu0 %v822
      %v4501 = vpop.f32.mrf.mxu0
      %v4502 = vadd.f32 %v4328, %v4501
      %v4503 = vpop.f32.mrf.mxu0
      %v4504 = vadd.f32 %v4330, %v4503
      %4505 = vmatmul.bf16.gmra.mxu0 %v826
      %v4506 = vpop.f32.mrf.mxu0
      %v4507 = vadd.f32 %v4333, %v4506
      %v4508 = vpop.f32.mrf.mxu0
      %v4509 = vadd.f32 %v4335, %v4508
      %4510 = vmatmul.bf16.gmra.mxu0 %v830
      %v4511 = vpop.f32.mrf.mxu0
      %v4512 = vadd.f32 %v4338, %v4511
      %v4513 = vpop.f32.mrf.mxu0
      %v4514 = vadd.f32 %v4340, %v4513
      %4515 = vmatmul.bf16.gmra.mxu0 %v834
      %v4516 = vpop.f32.mrf.mxu0
      %v4517 = vadd.f32 %v4343, %v4516
      %v4518 = vpop.f32.mrf.mxu0
      %v4519 = vadd.f32 %v4345, %v4518
      %4520 = vmatmul.bf16.gmra.mxu0 %v838
      %v4521 = vpop.f32.mrf.mxu0
      %v4522 = vadd.f32 %v4348, %v4521
      %v4523 = vpop.f32.mrf.mxu0
      %v4524 = vadd.f32 %v4350, %v4523
      %4525 = vmatmul.bf16.gmra.mxu0 %v842
      %v4526 = vpop.f32.mrf.mxu0
      %v4527 = vadd.f32 %v4353, %v4526
      %v4528 = vpop.f32.mrf.mxu0
      %v4529 = vadd.f32 %v4355, %v4528
      %4530 = vmatmul.bf16.gmra.mxu0 %v846
      %v4531 = vpop.f32.mrf.mxu0
      %v4532 = vadd.f32 %v4358, %v4531
      %v4533 = vpop.f32.mrf.mxu0
      %v4534 = vadd.f32 %v4360, %v4533
      %4535 = vmatmul.bf16.gmra.mxu0 %v850
      %v4536 = vpop.f32.mrf.mxu0
      %v4537 = vadd.f32 %v4363, %v4536
      %v4538 = vpop.f32.mrf.mxu0
      %v4539 = vadd.f32 %v4365, %v4538
      %4540 = vmatmul.bf16.gmra.mxu0 %v854
      %v4541 = vpop.f32.mrf.mxu0
      %v4542 = vadd.f32 %v4368, %v4541
      %v4543 = vpop.f32.mrf.mxu0
      %v4544 = vadd.f32 %v4370, %v4543
      %4545 = vmatmul.bf16.gmra.mxu0 %v858
      %v4546 = vpop.f32.mrf.mxu0
      %v4547 = vadd.f32 %v4373, %v4546
      %v4548 = vpop.f32.mrf.mxu0
      %v4549 = vadd.f32 %v4375, %v4548
      %4550 = vmatmul.bf16.gmra.mxu0 %v862
      %v4551 = vpop.f32.mrf.mxu0
      %v4552 = vadd.f32 %v4378, %v4551
      %v4553 = vpop.f32.mrf.mxu0
      %v4554 = vadd.f32 %v4380, %v4553
      %4555 = vmatmul.bf16.gmra.mxu0 %v866
      %v4556 = vpop.f32.mrf.mxu0
      %v4557 = vadd.f32 %v4383, %v4556
      %v4558 = vpop.f32.mrf.mxu0
      %v4559 = vadd.f32 %v4385, %v4558
      %4560 = vmatmul.bf16.gmra.mxu0 %v870
      %v4561 = vpop.f32.mrf.mxu0
      %v4562 = vadd.f32 %v4388, %v4561
      %v4563 = vpop.f32.mrf.mxu0
      %v4564 = vadd.f32 %v4390, %v4563
      %4565 = vmatmul.bf16.gmra.mxu0 %v874
      %v4566 = vpop.f32.mrf.mxu0
      %v4567 = vadd.f32 %v4393, %v4566
      %v4568 = vpop.f32.mrf.mxu0
      %v4569 = vadd.f32 %v4395, %v4568
      %4570 = vmatmul.bf16.gmra.mxu0 %v878
      %v4571 = vpop.f32.mrf.mxu0
      %v4572 = vadd.f32 %v4398, %v4571
      %v4573 = vpop.f32.mrf.mxu0
      %v4574 = vadd.f32 %v4400, %v4573
      %4575 = vmatmul.bf16.gmra.mxu0 %v882
      %v4576 = vpop.f32.mrf.mxu0
      %v4577 = vadd.f32 %v4403, %v4576
      %v4578 = vpop.f32.mrf.mxu0
      %v4579 = vadd.f32 %v4405, %v4578
      %4580 = vmatmul.bf16.gmra.mxu0 %v886
      %v4581 = vpop.f32.mrf.mxu0
      %v4582 = vadd.f32 %v4408, %v4581
      %v4583 = vpop.f32.mrf.mxu0
      %v4584 = vadd.f32 %v4410, %v4583
      %4585 = vmatmul.bf16.gmra.mxu0 %v890
      %v4586 = vpop.f32.mrf.mxu0
      %v4587 = vadd.f32 %v4413, %v4586
      %v4588 = vpop.f32.mrf.mxu0
      %v4589 = vadd.f32 %v4415, %v4588
      %4590 = vmatmul.bf16.gmra.mxu0 %v894
      %v4591 = vpop.f32.mrf.mxu0
      %v4592 = vadd.f32 %v4418, %v4591
      %v4593 = vpop.f32.mrf.mxu0
      %v4594 = vadd.f32 %v4420, %v4593
      %4595 = vmatmul.bf16.gmra.mxu0 %v898
      %v4596 = vpop.f32.mrf.mxu0
      %v4597 = vadd.f32 %v4423, %v4596
      %v4598 = vpop.f32.mrf.mxu0
      %v4599 = vadd.f32 %v4425, %v4598
      %4600 = vmatmul.bf16.gmra.mxu0 %v902
      %v4601 = vpop.f32.mrf.mxu0
      %v4602 = vadd.f32 %v4428, %v4601
      %v4603 = vpop.f32.mrf.mxu0
      %v4604 = vadd.f32 %v4430, %v4603
      %4605 = vmatmul.bf16.gmra.mxu0 %v906
      %v4606 = vpop.f32.mrf.mxu0
      %v4607 = vadd.f32 %v4433, %v4606
      %v4608 = vpop.f32.mrf.mxu0
      %v4609 = vadd.f32 %v4435, %v4608
      %4610 = vmatmul.bf16.gmra.mxu0 %v910
      %v4611 = vpop.f32.mrf.mxu0
      %v4612 = vadd.f32 %v4438, %v4611
      %v4613 = vpop.f32.mrf.mxu0
      %v4614 = vadd.f32 %v4440, %v4613
      %4615 = vmatmul.bf16.gmra.mxu0 %v914
      %v4616 = vpop.f32.mrf.mxu0
      %v4617 = vadd.f32 %v4443, %v4616
      %v4618 = vpop.f32.mrf.mxu0
      %v4619 = vadd.f32 %v4445, %v4618
      %4620 = vdwg.mxu0
      %4621 = vmatpush.bf16.msra.mxu0 %v4066
      %4622 = vmatpush.bf16.msra.mxu0 %v4065
      %4623 = vmatpush.bf16.msra.mxu0 %v4064
      %4624 = vmatpush.bf16.msra.mxu0 %v4063
      %4625 = vmatpush.bf16.msra.mxu0 %v4062
      %4626 = vmatpush.bf16.msra.mxu0 %v4061
      %4627 = vmatpush.bf16.msra.mxu0 %v4060
      %4628 = vmatpush.bf16.msra.mxu0 %v4059
      %4629 = vmatmul.bf16.gmra.mxu0 %v787
      %v4630 = vpop.f32.mrf.mxu0
      %v4631 = vadd.f32 %v4457, %v4630
      %v4632 = vpop.f32.mrf.mxu0
      %v4633 = vadd.f32 %v4459, %v4632
      %4634 = vmatmul.bf16.gmra.mxu0 %v791
      %v4635 = vpop.f32.mrf.mxu0
      %v4636 = vadd.f32 %v4462, %v4635
      %v4637 = vpop.f32.mrf.mxu0
      %v4638 = vadd.f32 %v4464, %v4637
      %4639 = vmatmul.bf16.gmra.mxu0 %v795
      %v4640 = vpop.f32.mrf.mxu0
      %v4641 = vadd.f32 %v4467, %v4640
      %v4642 = vpop.f32.mrf.mxu0
      %v4643 = vadd.f32 %v4469, %v4642
      %4644 = vmatmul.bf16.gmra.mxu0 %v799
      %v4645 = vpop.f32.mrf.mxu0
      %v4646 = vadd.f32 %v4472, %v4645
      %v4647 = vpop.f32.mrf.mxu0
      %v4648 = vadd.f32 %v4474, %v4647
      %4649 = vmatmul.bf16.gmra.mxu0 %v803
      %v4650 = vpop.f32.mrf.mxu0
      %v4651 = vadd.f32 %v4477, %v4650
      %v4652 = vpop.f32.mrf.mxu0
      %v4653 = vadd.f32 %v4479, %v4652
      %4654 = vmatmul.bf16.gmra.mxu0 %v807
      %v4655 = vpop.f32.mrf.mxu0
      %v4656 = vadd.f32 %v4482, %v4655
      %v4657 = vpop.f32.mrf.mxu0
      %v4658 = vadd.f32 %v4484, %v4657
      %4659 = vmatmul.bf16.gmra.mxu0 %v811
      %v4660 = vpop.f32.mrf.mxu0
      %v4661 = vadd.f32 %v4487, %v4660
      %v4662 = vpop.f32.mrf.mxu0
      %v4663 = vadd.f32 %v4489, %v4662
      %4664 = vmatmul.bf16.gmra.mxu0 %v815
      %v4665 = vpop.f32.mrf.mxu0
      %v4666 = vadd.f32 %v4492, %v4665
      %v4667 = vpop.f32.mrf.mxu0
      %v4668 = vadd.f32 %v4494, %v4667
      %4669 = vmatmul.bf16.gmra.mxu0 %v819
      %v4670 = vpop.f32.mrf.mxu0
      %v4671 = vadd.f32 %v4497, %v4670
      %v4672 = vpop.f32.mrf.mxu0
      %v4673 = vadd.f32 %v4499, %v4672
      %4674 = vmatmul.bf16.gmra.mxu0 %v823
      %v4675 = vpop.f32.mrf.mxu0
      %v4676 = vadd.f32 %v4502, %v4675
      %v4677 = vpop.f32.mrf.mxu0
      %v4678 = vadd.f32 %v4504, %v4677
      %4679 = vmatmul.bf16.gmra.mxu0 %v827
      %v4680 = vpop.f32.mrf.mxu0
      %v4681 = vadd.f32 %v4507, %v4680
      %v4682 = vpop.f32.mrf.mxu0
      %v4683 = vadd.f32 %v4509, %v4682
      %4684 = vmatmul.bf16.gmra.mxu0 %v831
      %v4685 = vpop.f32.mrf.mxu0
      %v4686 = vadd.f32 %v4512, %v4685
      %v4687 = vpop.f32.mrf.mxu0
      %v4688 = vadd.f32 %v4514, %v4687
      %4689 = vmatmul.bf16.gmra.mxu0 %v835
      %v4690 = vpop.f32.mrf.mxu0
      %v4691 = vadd.f32 %v4517, %v4690
      %v4692 = vpop.f32.mrf.mxu0
      %v4693 = vadd.f32 %v4519, %v4692
      %4694 = vmatmul.bf16.gmra.mxu0 %v839
      %v4695 = vpop.f32.mrf.mxu0
      %v4696 = vadd.f32 %v4522, %v4695
      %v4697 = vpop.f32.mrf.mxu0
      %v4698 = vadd.f32 %v4524, %v4697
      %4699 = vmatmul.bf16.gmra.mxu0 %v843
      %v4700 = vpop.f32.mrf.mxu0
      %v4701 = vadd.f32 %v4527, %v4700
      %v4702 = vpop.f32.mrf.mxu0
      %v4703 = vadd.f32 %v4529, %v4702
      %4704 = vmatmul.bf16.gmra.mxu0 %v847
      %v4705 = vpop.f32.mrf.mxu0
      %v4706 = vadd.f32 %v4532, %v4705
      %v4707 = vpop.f32.mrf.mxu0
      %v4708 = vadd.f32 %v4534, %v4707
      %4709 = vmatmul.bf16.gmra.mxu0 %v851
      %v4710 = vpop.f32.mrf.mxu0
      %v4711 = vadd.f32 %v4537, %v4710
      %v4712 = vpop.f32.mrf.mxu0
      %v4713 = vadd.f32 %v4539, %v4712
      %4714 = vmatmul.bf16.gmra.mxu0 %v855
      %v4715 = vpop.f32.mrf.mxu0
      %v4716 = vadd.f32 %v4542, %v4715
      %v4717 = vpop.f32.mrf.mxu0
      %v4718 = vadd.f32 %v4544, %v4717
      %4719 = vmatmul.bf16.gmra.mxu0 %v859
      %v4720 = vpop.f32.mrf.mxu0
      %v4721 = vadd.f32 %v4547, %v4720
      %v4722 = vpop.f32.mrf.mxu0
      %v4723 = vadd.f32 %v4549, %v4722
      %4724 = vmatmul.bf16.gmra.mxu0 %v863
      %v4725 = vpop.f32.mrf.mxu0
      %v4726 = vadd.f32 %v4552, %v4725
      %v4727 = vpop.f32.mrf.mxu0
      %v4728 = vadd.f32 %v4554, %v4727
      %4729 = vmatmul.bf16.gmra.mxu0 %v867
      %v4730 = vpop.f32.mrf.mxu0
      %v4731 = vadd.f32 %v4557, %v4730
      %v4732 = vpop.f32.mrf.mxu0
      %v4733 = vadd.f32 %v4559, %v4732
      %4734 = vmatmul.bf16.gmra.mxu0 %v871
      %v4735 = vpop.f32.mrf.mxu0
      %v4736 = vadd.f32 %v4562, %v4735
      %v4737 = vpop.f32.mrf.mxu0
      %v4738 = vadd.f32 %v4564, %v4737
      %4739 = vmatmul.bf16.gmra.mxu0 %v875
      %v4740 = vpop.f32.mrf.mxu0
      %v4741 = vadd.f32 %v4567, %v4740
      %v4742 = vpop.f32.mrf.mxu0
      %v4743 = vadd.f32 %v4569, %v4742
      %4744 = vmatmul.bf16.gmra.mxu0 %v879
      %v4745 = vpop.f32.mrf.mxu0
      %v4746 = vadd.f32 %v4572, %v4745
      %v4747 = vpop.f32.mrf.mxu0
      %v4748 = vadd.f32 %v4574, %v4747
      %4749 = vmatmul.bf16.gmra.mxu0 %v883
      %v4750 = vpop.f32.mrf.mxu0
      %v4751 = vadd.f32 %v4577, %v4750
      %v4752 = vpop.f32.mrf.mxu0
      %v4753 = vadd.f32 %v4579, %v4752
      %4754 = vmatmul.bf16.gmra.mxu0 %v887
      %v4755 = vpop.f32.mrf.mxu0
      %v4756 = vadd.f32 %v4582, %v4755
      %v4757 = vpop.f32.mrf.mxu0
      %v4758 = vadd.f32 %v4584, %v4757
      %4759 = vmatmul.bf16.gmra.mxu0 %v891
      %v4760 = vpop.f32.mrf.mxu0
      %v4761 = vadd.f32 %v4587, %v4760
      %v4762 = vpop.f32.mrf.mxu0
      %v4763 = vadd.f32 %v4589, %v4762
      %4764 = vmatmul.bf16.gmra.mxu0 %v895
      %v4765 = vpop.f32.mrf.mxu0
      %v4766 = vadd.f32 %v4592, %v4765
      %v4767 = vpop.f32.mrf.mxu0
      %v4768 = vadd.f32 %v4594, %v4767
      %4769 = vmatmul.bf16.gmra.mxu0 %v899
      %v4770 = vpop.f32.mrf.mxu0
      %v4771 = vadd.f32 %v4597, %v4770
      %v4772 = vpop.f32.mrf.mxu0
      %v4773 = vadd.f32 %v4599, %v4772
      %4774 = vmatmul.bf16.gmra.mxu0 %v903
      %v4775 = vpop.f32.mrf.mxu0
      %v4776 = vadd.f32 %v4602, %v4775
      %v4777 = vpop.f32.mrf.mxu0
      %v4778 = vadd.f32 %v4604, %v4777
      %4779 = vmatmul.bf16.gmra.mxu0 %v907
      %v4780 = vpop.f32.mrf.mxu0
      %v4781 = vadd.f32 %v4607, %v4780
      %v4782 = vpop.f32.mrf.mxu0
      %v4783 = vadd.f32 %v4609, %v4782
      %4784 = vmatmul.bf16.gmra.mxu0 %v911
      %v4785 = vpop.f32.mrf.mxu0
      %v4786 = vadd.f32 %v4612, %v4785
      %v4787 = vpop.f32.mrf.mxu0
      %v4788 = vadd.f32 %v4614, %v4787
      %4789 = vmatmul.bf16.gmra.mxu0 %v915
      %v4790 = vpop.f32.mrf.mxu0
      %v4791 = vadd.f32 %v4617, %v4790
      %v4792 = vpop.f32.mrf.mxu0
      %v4793 = vadd.f32 %v4619, %v4792
      %4794 = vdwg.mxu0
      %v4795 = vmul.f32 %v1772, %v1772
      %v4796 = vmul.f32 %v1774, %v1774
      %v4797 = vmul.f32 %v1777, %v1777
      %v4798 = vmul.f32 %v1779, %v1779
      %v4799 = vmul.f32 %v1782, %v1782
      %v4800 = vmul.f32 %v1784, %v1784
      %v4801 = vmul.f32 %v1787, %v1787
      %v4802 = vmul.f32 %v1789, %v1789
      %v4803 = vmul.f32 %v1792, %v1792
      %v4804 = vmul.f32 %v1794, %v1794
      %v4805 = vmul.f32 %v1797, %v1797
      %v4806 = vmul.f32 %v1799, %v1799
      %v4807 = vmul.f32 %v1802, %v1802
      %v4808 = vmul.f32 %v1804, %v1804
      %v4809 = vmul.f32 %v1807, %v1807
      %v4810 = vmul.f32 %v1809, %v1809
      %v4811 = vmul.f32 %v1812, %v1812
      %v4812 = vmul.f32 %v1814, %v1814
      %v4813 = vmul.f32 %v1817, %v1817
      %v4814 = vmul.f32 %v1819, %v1819
      %v4815 = vmul.f32 %v1822, %v1822
      %v4816 = vmul.f32 %v1824, %v1824
      %v4817 = vmul.f32 %v1827, %v1827
      %v4818 = vmul.f32 %v1829, %v1829
      %v4819 = vmul.f32 %v1832, %v1832
      %v4820 = vmul.f32 %v1834, %v1834
      %v4821 = vmul.f32 %v1837, %v1837
      %v4822 = vmul.f32 %v1839, %v1839
      %v4823 = vmul.f32 %v1842, %v1842
      %v4824 = vmul.f32 %v1844, %v1844
      %v4825 = vmul.f32 %v1847, %v1847
      %v4826 = vmul.f32 %v1849, %v1849
      %v4827 = vmul.f32 %v1852, %v1852
      %v4828 = vmul.f32 %v1854, %v1854
      %v4829 = vmul.f32 %v1857, %v1857
      %v4830 = vmul.f32 %v1859, %v1859
      %v4831 = vmul.f32 %v1862, %v1862
      %v4832 = vmul.f32 %v1864, %v1864
      %v4833 = vmul.f32 %v1867, %v1867
      %v4834 = vmul.f32 %v1869, %v1869
      %v4835 = vmul.f32 %v1872, %v1872
      %v4836 = vmul.f32 %v1874, %v1874
      %v4837 = vmul.f32 %v1877, %v1877
      %v4838 = vmul.f32 %v1879, %v1879
      %v4839 = vmul.f32 %v1882, %v1882
      %v4840 = vmul.f32 %v1884, %v1884
      %v4841 = vmul.f32 %v1887, %v1887
      %v4842 = vmul.f32 %v1889, %v1889
      %v4843 = vmul.f32 %v1892, %v1892
      %v4844 = vmul.f32 %v1894, %v1894
      %v4845 = vmul.f32 %v1897, %v1897
      %v4846 = vmul.f32 %v1899, %v1899
      %v4847 = vmul.f32 %v1902, %v1902
      %v4848 = vmul.f32 %v1904, %v1904
      %v4849 = vmul.f32 %v1907, %v1907
      %v4850 = vmul.f32 %v1909, %v1909
      %v4851 = vmul.f32 %v1912, %v1912
      %v4852 = vmul.f32 %v1914, %v1914
      %v4853 = vmul.f32 %v1917, %v1917
      %v4854 = vmul.f32 %v1919, %v1919
      %v4855 = vmul.f32 %v1922, %v1922
      %v4856 = vmul.f32 %v1924, %v1924
      %v4857 = vmul.f32 %v1927, %v1927
      %v4858 = vmul.f32 %v1929, %v1929
      %v4859 = vmul.f32 %v1932, %v1932
      %v4860 = vmul.f32 %v1934, %v1934
      %v4861 = vadd.f32 %v4795, %v4828
      %v4862 = vadd.f32 %v4796, %v4829
      %v4863 = vadd.f32 %v4797, %v4830
      %v4864 = vadd.f32 %v4798, %v4831
      %v4865 = vadd.f32 %v4799, %v4832
      %v4866 = vadd.f32 %v4800, %v4833
      %v4867 = vadd.f32 %v4801, %v4834
      %v4868 = vadd.f32 %v4802, %v4835
      %v4869 = vadd.f32 %v4803, %v4836
      %v4870 = vadd.f32 %v4804, %v4837
      %v4871 = vadd.f32 %v4805, %v4838
      %v4872 = vadd.f32 %v4806, %v4839
      %v4873 = vadd.f32 %v4807, %v4840
      %v4874 = vadd.f32 %v4808, %v4841
      %v4875 = vadd.f32 %v4809, %v4842
      %v4876 = vadd.f32 %v4810, %v4843
      %v4877 = vadd.f32 %v4811, %v4844
      %v4878 = vadd.f32 %v4812, %v4845
      %v4879 = vadd.f32 %v4813, %v4846
      %v4880 = vadd.f32 %v4814, %v4847
      %v4881 = vadd.f32 %v4815, %v4848
      %v4882 = vadd.f32 %v4816, %v4849
      %v4883 = vadd.f32 %v4817, %v4850
      %v4884 = vadd.f32 %v4818, %v4851
      %v4885 = vadd.f32 %v4819, %v4852
      %v4886 = vadd.f32 %v4820, %v4853
      %v4887 = vadd.f32 %v4821, %v4854
      %v4888 = vadd.f32 %v4822, %v4855
      %v4889 = vadd.f32 %v4823, %v4856
      %v4890 = vadd.f32 %v4824, %v4857
      %v4891 = vadd.f32 %v4825, %v4858
      %v4892 = vadd.f32 %v4826, %v4859
      %v4893 = vadd.f32 %v4827, %v4860
      %v4894 = vadd.f32 %v4861, 1e-08
      %v4895 = vadd.f32 %v4862, 1e-08
      %v4896 = vadd.f32 %v4863, 1e-08
      %v4897 = vadd.f32 %v4864, 1e-08
      %v4898 = vadd.f32 %v4865, 1e-08
      %v4899 = vadd.f32 %v4866, 1e-08
      %v4900 = vadd.f32 %v4867, 1e-08
      %v4901 = vadd.f32 %v4868, 1e-08
      %v4902 = vadd.f32 %v4869, 1e-08
      %v4903 = vadd.f32 %v4870, 1e-08
      %v4904 = vadd.f32 %v4871, 1e-08
      %v4905 = vadd.f32 %v4872, 1e-08
      %v4906 = vadd.f32 %v4873, 1e-08
      %v4907 = vadd.f32 %v4874, 1e-08
      %v4908 = vadd.f32 %v4875, 1e-08
      %v4909 = vadd.f32 %v4876, 1e-08
      %v4910 = vadd.f32 %v4877, 1e-08
      %v4911 = vadd.f32 %v4878, 1e-08
      %v4912 = vadd.f32 %v4879, 1e-08
      %v4913 = vadd.f32 %v4880, 1e-08
      %v4914 = vadd.f32 %v4881, 1e-08
      %v4915 = vadd.f32 %v4882, 1e-08
      %v4916 = vadd.f32 %v4883, 1e-08
      %v4917 = vadd.f32 %v4884, 1e-08
      %v4918 = vadd.f32 %v4885, 1e-08
      %v4919 = vadd.f32 %v4886, 1e-08
      %v4920 = vadd.f32 %v4887, 1e-08
      %v4921 = vadd.f32 %v4888, 1e-08
      %v4922 = vadd.f32 %v4889, 1e-08
      %v4923 = vadd.f32 %v4890, 1e-08
      %v4924 = vadd.f32 %v4891, 1e-08
      %v4925 = vadd.f32 %v4892, 1e-08
      %v4926 = vadd.f32 %v4893, 1e-08
      %v4927 = vlog2.pop %v4894
      %v4928 = vmul.f32 %v4927, 0.6931472
      %v4929 = vlog2.pop %v4895
      %v4930 = vmul.f32 %v4929, 0.6931472
      %v4931 = vlog2.pop %v4896
      %v4932 = vmul.f32 %v4931, 0.6931472
      %v4933 = vlog2.pop %v4897
      %v4934 = vmul.f32 %v4933, 0.6931472
      %v4935 = vlog2.pop %v4898
      %v4936 = vmul.f32 %v4935, 0.6931472
      %v4937 = vlog2.pop %v4899
      %v4938 = vmul.f32 %v4937, 0.6931472
      %v4939 = vlog2.pop %v4900
      %v4940 = vmul.f32 %v4939, 0.6931472
      %v4941 = vlog2.pop %v4901
      %v4942 = vmul.f32 %v4941, 0.6931472
      %v4943 = vlog2.pop %v4902
      %v4944 = vmul.f32 %v4943, 0.6931472
      %v4945 = vlog2.pop %v4903
      %v4946 = vmul.f32 %v4945, 0.6931472
      %v4947 = vlog2.pop %v4904
      %v4948 = vmul.f32 %v4947, 0.6931472
      %v4949 = vlog2.pop %v4905
      %v4950 = vmul.f32 %v4949, 0.6931472
      %v4951 = vlog2.pop %v4906
      %v4952 = vmul.f32 %v4951, 0.6931472
      %v4953 = vlog2.pop %v4907
      %v4954 = vmul.f32 %v4953, 0.6931472
      %v4955 = vlog2.pop %v4908
      %v4956 = vmul.f32 %v4955, 0.6931472
      %v4957 = vlog2.pop %v4909
      %v4958 = vmul.f32 %v4957, 0.6931472
      %v4959 = vlog2.pop %v4910
      %v4960 = vmul.f32 %v4959, 0.6931472
      %v4961 = vlog2.pop %v4911
      %v4962 = vmul.f32 %v4961, 0.6931472
      %v4963 = vlog2.pop %v4912
      %v4964 = vmul.f32 %v4963, 0.6931472
      %v4965 = vlog2.pop %v4913
      %v4966 = vmul.f32 %v4965, 0.6931472
      %v4967 = vlog2.pop %v4914
      %v4968 = vmul.f32 %v4967, 0.6931472
      %v4969 = vlog2.pop %v4915
      %v4970 = vmul.f32 %v4969, 0.6931472
      %v4971 = vlog2.pop %v4916
      %v4972 = vmul.f32 %v4971, 0.6931472
      %v4973 = vlog2.pop %v4917
      %v4974 = vmul.f32 %v4973, 0.6931472
      %v4975 = vlog2.pop %v4918
      %v4976 = vmul.f32 %v4975, 0.6931472
      %v4977 = vlog2.pop %v4919
      %v4978 = vmul.f32 %v4977, 0.6931472
      %v4979 = vlog2.pop %v4920
      %v4980 = vmul.f32 %v4979, 0.6931472
      %v4981 = vlog2.pop %v4921
      %v4982 = vmul.f32 %v4981, 0.6931472
      %v4983 = vlog2.pop %v4922
      %v4984 = vmul.f32 %v4983, 0.6931472
      %v4985 = vlog2.pop %v4923
      %v4986 = vmul.f32 %v4985, 0.6931472
      %v4987 = vlog2.pop %v4924
      %v4988 = vmul.f32 %v4987, 0.6931472
      %v4989 = vlog2.pop %v4925
      %v4990 = vmul.f32 %v4989, 0.6931472
      %v4991 = vlog2.pop %v4926
      %v4992 = vmul.f32 %v4991, 0.6931472
      %v4993 = vmul.f32 %v2725, %v2725
      %v4994 = vmul.f32 %v2727, %v2727
      %v4995 = vmul.f32 %v2730, %v2730
      %v4996 = vmul.f32 %v2732, %v2732
      %v4997 = vmul.f32 %v2735, %v2735
      %v4998 = vmul.f32 %v2737, %v2737
      %v4999 = vmul.f32 %v2740, %v2740
      %v5000 = vmul.f32 %v2742, %v2742
      %v5001 = vmul.f32 %v2745, %v2745
      %v5002 = vmul.f32 %v2747, %v2747
      %v5003 = vmul.f32 %v2750, %v2750
      %v5004 = vmul.f32 %v2752, %v2752
      %v5005 = vmul.f32 %v2755, %v2755
      %v5006 = vmul.f32 %v2757, %v2757
      %v5007 = vmul.f32 %v2760, %v2760
      %v5008 = vmul.f32 %v2762, %v2762
      %v5009 = vmul.f32 %v2765, %v2765
      %v5010 = vmul.f32 %v2767, %v2767
      %v5011 = vmul.f32 %v2770, %v2770
      %v5012 = vmul.f32 %v2772, %v2772
      %v5013 = vmul.f32 %v2775, %v2775
      %v5014 = vmul.f32 %v2777, %v2777
      %v5015 = vmul.f32 %v2780, %v2780
      %v5016 = vmul.f32 %v2782, %v2782
      %v5017 = vmul.f32 %v2785, %v2785
      %v5018 = vmul.f32 %v2787, %v2787
      %v5019 = vmul.f32 %v2790, %v2790
      %v5020 = vmul.f32 %v2792, %v2792
      %v5021 = vmul.f32 %v2795, %v2795
      %v5022 = vmul.f32 %v2797, %v2797
      %v5023 = vmul.f32 %v2800, %v2800
      %v5024 = vmul.f32 %v2802, %v2802
      %v5025 = vmul.f32 %v2805, %v2805
      %v5026 = vmul.f32 %v2807, %v2807
      %v5027 = vmul.f32 %v2810, %v2810
      %v5028 = vmul.f32 %v2812, %v2812
      %v5029 = vmul.f32 %v2815, %v2815
      %v5030 = vmul.f32 %v2817, %v2817
      %v5031 = vmul.f32 %v2820, %v2820
      %v5032 = vmul.f32 %v2822, %v2822
      %v5033 = vmul.f32 %v2825, %v2825
      %v5034 = vmul.f32 %v2827, %v2827
      %v5035 = vmul.f32 %v2830, %v2830
      %v5036 = vmul.f32 %v2832, %v2832
      %v5037 = vmul.f32 %v2835, %v2835
      %v5038 = vmul.f32 %v2837, %v2837
      %v5039 = vmul.f32 %v2840, %v2840
      %v5040 = vmul.f32 %v2842, %v2842
      %v5041 = vmul.f32 %v2845, %v2845
      %v5042 = vmul.f32 %v2847, %v2847
      %v5043 = vmul.f32 %v2850, %v2850
      %v5044 = vmul.f32 %v2852, %v2852
      %v5045 = vmul.f32 %v2855, %v2855
      %v5046 = vmul.f32 %v2857, %v2857
      %v5047 = vmul.f32 %v2860, %v2860
      %v5048 = vmul.f32 %v2862, %v2862
      %v5049 = vmul.f32 %v2865, %v2865
      %v5050 = vmul.f32 %v2867, %v2867
      %v5051 = vmul.f32 %v2870, %v2870
      %v5052 = vmul.f32 %v2872, %v2872
      %v5053 = vmul.f32 %v2875, %v2875
      %v5054 = vmul.f32 %v2877, %v2877
      %v5055 = vmul.f32 %v2880, %v2880
      %v5056 = vmul.f32 %v2882, %v2882
      %v5057 = vmul.f32 %v2885, %v2885
      %v5058 = vmul.f32 %v2887, %v2887
      %v5059 = vadd.f32 %v4993, %v5026
      %v5060 = vadd.f32 %v4994, %v5027
      %v5061 = vadd.f32 %v4995, %v5028
      %v5062 = vadd.f32 %v4996, %v5029
      %v5063 = vadd.f32 %v4997, %v5030
      %v5064 = vadd.f32 %v4998, %v5031
      %v5065 = vadd.f32 %v4999, %v5032
      %v5066 = vadd.f32 %v5000, %v5033
      %v5067 = vadd.f32 %v5001, %v5034
      %v5068 = vadd.f32 %v5002, %v5035
      %v5069 = vadd.f32 %v5003, %v5036
      %v5070 = vadd.f32 %v5004, %v5037
      %v5071 = vadd.f32 %v5005, %v5038
      %v5072 = vadd.f32 %v5006, %v5039
      %v5073 = vadd.f32 %v5007, %v5040
      %v5074 = vadd.f32 %v5008, %v5041
      %v5075 = vadd.f32 %v5009, %v5042
      %v5076 = vadd.f32 %v5010, %v5043
      %v5077 = vadd.f32 %v5011, %v5044
      %v5078 = vadd.f32 %v5012, %v5045
      %v5079 = vadd.f32 %v5013, %v5046
      %v5080 = vadd.f32 %v5014, %v5047
      %v5081 = vadd.f32 %v5015, %v5048
      %v5082 = vadd.f32 %v5016, %v5049
      %v5083 = vadd.f32 %v5017, %v5050
      %v5084 = vadd.f32 %v5018, %v5051
      %v5085 = vadd.f32 %v5019, %v5052
      %v5086 = vadd.f32 %v5020, %v5053
      %v5087 = vadd.f32 %v5021, %v5054
      %v5088 = vadd.f32 %v5022, %v5055
      %v5089 = vadd.f32 %v5023, %v5056
      %v5090 = vadd.f32 %v5024, %v5057
      %v5091 = vadd.f32 %v5025, %v5058
      %v5092 = vadd.f32 %v5059, 1e-08
      %v5093 = vadd.f32 %v5060, 1e-08
      %v5094 = vadd.f32 %v5061, 1e-08
      %v5095 = vadd.f32 %v5062, 1e-08
      %v5096 = vadd.f32 %v5063, 1e-08
      %v5097 = vadd.f32 %v5064, 1e-08
      %v5098 = vadd.f32 %v5065, 1e-08
      %v5099 = vadd.f32 %v5066, 1e-08
      %v5100 = vadd.f32 %v5067, 1e-08
      %v5101 = vadd.f32 %v5068, 1e-08
      %v5102 = vadd.f32 %v5069, 1e-08
      %v5103 = vadd.f32 %v5070, 1e-08
      %v5104 = vadd.f32 %v5071, 1e-08
      %v5105 = vadd.f32 %v5072, 1e-08
      %v5106 = vadd.f32 %v5073, 1e-08
      %v5107 = vadd.f32 %v5074, 1e-08
      %v5108 = vadd.f32 %v5075, 1e-08
      %v5109 = vadd.f32 %v5076, 1e-08
      %v5110 = vadd.f32 %v5077, 1e-08
      %v5111 = vadd.f32 %v5078, 1e-08
      %v5112 = vadd.f32 %v5079, 1e-08
      %v5113 = vadd.f32 %v5080, 1e-08
      %v5114 = vadd.f32 %v5081, 1e-08
      %v5115 = vadd.f32 %v5082, 1e-08
      %v5116 = vadd.f32 %v5083, 1e-08
      %v5117 = vadd.f32 %v5084, 1e-08
      %v5118 = vadd.f32 %v5085, 1e-08
      %v5119 = vadd.f32 %v5086, 1e-08
      %v5120 = vadd.f32 %v5087, 1e-08
      %v5121 = vadd.f32 %v5088, 1e-08
      %v5122 = vadd.f32 %v5089, 1e-08
      %v5123 = vadd.f32 %v5090, 1e-08
      %v5124 = vadd.f32 %v5091, 1e-08
      %v5125 = vlog2.pop %v5092
      %v5126 = vmul.f32 %v5125, 0.6931472
      %v5127 = vlog2.pop %v5093
      %v5128 = vmul.f32 %v5127, 0.6931472
      %v5129 = vlog2.pop %v5094
      %v5130 = vmul.f32 %v5129, 0.6931472
      %v5131 = vlog2.pop %v5095
      %v5132 = vmul.f32 %v5131, 0.6931472
      %v5133 = vlog2.pop %v5096
      %v5134 = vmul.f32 %v5133, 0.6931472
      %v5135 = vlog2.pop %v5097
      %v5136 = vmul.f32 %v5135, 0.6931472
      %v5137 = vlog2.pop %v5098
      %v5138 = vmul.f32 %v5137, 0.6931472
      %v5139 = vlog2.pop %v5099
      %v5140 = vmul.f32 %v5139, 0.6931472
      %v5141 = vlog2.pop %v5100
      %v5142 = vmul.f32 %v5141, 0.6931472
      %v5143 = vlog2.pop %v5101
      %v5144 = vmul.f32 %v5143, 0.6931472
      %v5145 = vlog2.pop %v5102
      %v5146 = vmul.f32 %v5145, 0.6931472
      %v5147 = vlog2.pop %v5103
      %v5148 = vmul.f32 %v5147, 0.6931472
      %v5149 = vlog2.pop %v5104
      %v5150 = vmul.f32 %v5149, 0.6931472
      %v5151 = vlog2.pop %v5105
      %v5152 = vmul.f32 %v5151, 0.6931472
      %v5153 = vlog2.pop %v5106
      %v5154 = vmul.f32 %v5153, 0.6931472
      %v5155 = vlog2.pop %v5107
      %v5156 = vmul.f32 %v5155, 0.6931472
      %v5157 = vlog2.pop %v5108
      %v5158 = vmul.f32 %v5157, 0.6931472
      %v5159 = vlog2.pop %v5109
      %v5160 = vmul.f32 %v5159, 0.6931472
      %v5161 = vlog2.pop %v5110
      %v5162 = vmul.f32 %v5161, 0.6931472
      %v5163 = vlog2.pop %v5111
      %v5164 = vmul.f32 %v5163, 0.6931472
      %v5165 = vlog2.pop %v5112
      %v5166 = vmul.f32 %v5165, 0.6931472
      %v5167 = vlog2.pop %v5113
      %v5168 = vmul.f32 %v5167, 0.6931472
      %v5169 = vlog2.pop %v5114
      %v5170 = vmul.f32 %v5169, 0.6931472
      %v5171 = vlog2.pop %v5115
      %v5172 = vmul.f32 %v5171, 0.6931472
      %v5173 = vlog2.pop %v5116
      %v5174 = vmul.f32 %v5173, 0.6931472
      %v5175 = vlog2.pop %v5117
      %v5176 = vmul.f32 %v5175, 0.6931472
      %v5177 = vlog2.pop %v5118
      %v5178 = vmul.f32 %v5177, 0.6931472
      %v5179 = vlog2.pop %v5119
      %v5180 = vmul.f32 %v5179, 0.6931472
      %v5181 = vlog2.pop %v5120
      %v5182 = vmul.f32 %v5181, 0.6931472
      %v5183 = vlog2.pop %v5121
      %v5184 = vmul.f32 %v5183, 0.6931472
      %v5185 = vlog2.pop %v5122
      %v5186 = vmul.f32 %v5185, 0.6931472
      %v5187 = vlog2.pop %v5123
      %v5188 = vmul.f32 %v5187, 0.6931472
      %v5189 = vlog2.pop %v5124
      %v5190 = vmul.f32 %v5189, 0.6931472
      %v5191 = vmul.f32 %v3678, %v3678
      %v5192 = vmul.f32 %v3680, %v3680
      %v5193 = vmul.f32 %v3683, %v3683
      %v5194 = vmul.f32 %v3685, %v3685
      %v5195 = vmul.f32 %v3688, %v3688
      %v5196 = vmul.f32 %v3690, %v3690
      %v5197 = vmul.f32 %v3693, %v3693
      %v5198 = vmul.f32 %v3695, %v3695
      %v5199 = vmul.f32 %v3698, %v3698
      %v5200 = vmul.f32 %v3700, %v3700
      %v5201 = vmul.f32 %v3703, %v3703
      %v5202 = vmul.f32 %v3705, %v3705
      %v5203 = vmul.f32 %v3708, %v3708
      %v5204 = vmul.f32 %v3710, %v3710
      %v5205 = vmul.f32 %v3713, %v3713
      %v5206 = vmul.f32 %v3715, %v3715
      %v5207 = vmul.f32 %v3718, %v3718
      %v5208 = vmul.f32 %v3720, %v3720
      %v5209 = vmul.f32 %v3723, %v3723
      %v5210 = vmul.f32 %v3725, %v3725
      %v5211 = vmul.f32 %v3728, %v3728
      %v5212 = vmul.f32 %v3730, %v3730
      %v5213 = vmul.f32 %v3733, %v3733
      %v5214 = vmul.f32 %v3735, %v3735
      %v5215 = vmul.f32 %v3738, %v3738
      %v5216 = vmul.f32 %v3740, %v3740
      %v5217 = vmul.f32 %v3743, %v3743
      %v5218 = vmul.f32 %v3745, %v3745
      %v5219 = vmul.f32 %v3748, %v3748
      %v5220 = vmul.f32 %v3750, %v3750
      %v5221 = vmul.f32 %v3753, %v3753
      %v5222 = vmul.f32 %v3755, %v3755
      %v5223 = vmul.f32 %v3758, %v3758
      %v5224 = vmul.f32 %v3760, %v3760
      %v5225 = vmul.f32 %v3763, %v3763
      %v5226 = vmul.f32 %v3765, %v3765
      %v5227 = vmul.f32 %v3768, %v3768
      %v5228 = vmul.f32 %v3770, %v3770
      %v5229 = vmul.f32 %v3773, %v3773
      %v5230 = vmul.f32 %v3775, %v3775
      %v5231 = vmul.f32 %v3778, %v3778
      %v5232 = vmul.f32 %v3780, %v3780
      %v5233 = vmul.f32 %v3783, %v3783
      %v5234 = vmul.f32 %v3785, %v3785
      %v5235 = vmul.f32 %v3788, %v3788
      %v5236 = vmul.f32 %v3790, %v3790
      %v5237 = vmul.f32 %v3793, %v3793
      %v5238 = vmul.f32 %v3795, %v3795
      %v5239 = vmul.f32 %v3798, %v3798
      %v5240 = vmul.f32 %v3800, %v3800
      %v5241 = vmul.f32 %v3803, %v3803
      %v5242 = vmul.f32 %v3805, %v3805
      %v5243 = vmul.f32 %v3808, %v3808
      %v5244 = vmul.f32 %v3810, %v3810
      %v5245 = vmul.f32 %v3813, %v3813
      %v5246 = vmul.f32 %v3815, %v3815
      %v5247 = vmul.f32 %v3818, %v3818
      %v5248 = vmul.f32 %v3820, %v3820
      %v5249 = vmul.f32 %v3823, %v3823
      %v5250 = vmul.f32 %v3825, %v3825
      %v5251 = vmul.f32 %v3828, %v3828
      %v5252 = vmul.f32 %v3830, %v3830
      %v5253 = vmul.f32 %v3833, %v3833
      %v5254 = vmul.f32 %v3835, %v3835
      %v5255 = vmul.f32 %v3838, %v3838
      %v5256 = vmul.f32 %v3840, %v3840
      %v5257 = vadd.f32 %v5191, %v5224
      %v5258 = vadd.f32 %v5192, %v5225
      %v5259 = vadd.f32 %v5193, %v5226
      %v5260 = vadd.f32 %v5194, %v5227
      %v5261 = vadd.f32 %v5195, %v5228
      %v5262 = vadd.f32 %v5196, %v5229
      %v5263 = vadd.f32 %v5197, %v5230
      %v5264 = vadd.f32 %v5198, %v5231
      %v5265 = vadd.f32 %v5199, %v5232
      %v5266 = vadd.f32 %v5200, %v5233
      %v5267 = vadd.f32 %v5201, %v5234
      %v5268 = vadd.f32 %v5202, %v5235
      %v5269 = vadd.f32 %v5203, %v5236
      %v5270 = vadd.f32 %v5204, %v5237
      %v5271 = vadd.f32 %v5205, %v5238
      %v5272 = vadd.f32 %v5206, %v5239
      %v5273 = vadd.f32 %v5207, %v5240
      %v5274 = vadd.f32 %v5208, %v5241
      %v5275 = vadd.f32 %v5209, %v5242
      %v5276 = vadd.f32 %v5210, %v5243
      %v5277 = vadd.f32 %v5211, %v5244
      %v5278 = vadd.f32 %v5212, %v5245
      %v5279 = vadd.f32 %v5213, %v5246
      %v5280 = vadd.f32 %v5214, %v5247
      %v5281 = vadd.f32 %v5215, %v5248
      %v5282 = vadd.f32 %v5216, %v5249
      %v5283 = vadd.f32 %v5217, %v5250
      %v5284 = vadd.f32 %v5218, %v5251
      %v5285 = vadd.f32 %v5219, %v5252
      %v5286 = vadd.f32 %v5220, %v5253
      %v5287 = vadd.f32 %v5221, %v5254
      %v5288 = vadd.f32 %v5222, %v5255
      %v5289 = vadd.f32 %v5223, %v5256
      %v5290 = vadd.f32 %v5257, 1e-08
      %v5291 = vadd.f32 %v5258, 1e-08
      %v5292 = vadd.f32 %v5259, 1e-08
      %v5293 = vadd.f32 %v5260, 1e-08
      %v5294 = vadd.f32 %v5261, 1e-08
      %v5295 = vadd.f32 %v5262, 1e-08
      %v5296 = vadd.f32 %v5263, 1e-08
      %v5297 = vadd.f32 %v5264, 1e-08
      %v5298 = vadd.f32 %v5265, 1e-08
      %v5299 = vadd.f32 %v5266, 1e-08
      %v5300 = vadd.f32 %v5267, 1e-08
      %v5301 = vadd.f32 %v5268, 1e-08
      %v5302 = vadd.f32 %v5269, 1e-08
      %v5303 = vadd.f32 %v5270, 1e-08
      %v5304 = vadd.f32 %v5271, 1e-08
      %v5305 = vadd.f32 %v5272, 1e-08
      %v5306 = vadd.f32 %v5273, 1e-08
      %v5307 = vadd.f32 %v5274, 1e-08
      %v5308 = vadd.f32 %v5275, 1e-08
      %v5309 = vadd.f32 %v5276, 1e-08
      %v5310 = vadd.f32 %v5277, 1e-08
      %v5311 = vadd.f32 %v5278, 1e-08
      %v5312 = vadd.f32 %v5279, 1e-08
      %v5313 = vadd.f32 %v5280, 1e-08
      %v5314 = vadd.f32 %v5281, 1e-08
      %v5315 = vadd.f32 %v5282, 1e-08
      %v5316 = vadd.f32 %v5283, 1e-08
      %v5317 = vadd.f32 %v5284, 1e-08
      %v5318 = vadd.f32 %v5285, 1e-08
      %v5319 = vadd.f32 %v5286, 1e-08
      %v5320 = vadd.f32 %v5287, 1e-08
      %v5321 = vadd.f32 %v5288, 1e-08
      %v5322 = vadd.f32 %v5289, 1e-08
      %v5323 = vlog2.pop %v5290
      %v5324 = vmul.f32 %v5323, 0.6931472
      %v5325 = vlog2.pop %v5291
      %v5326 = vmul.f32 %v5325, 0.6931472
      %v5327 = vlog2.pop %v5292
      %v5328 = vmul.f32 %v5327, 0.6931472
      %v5329 = vlog2.pop %v5293
      %v5330 = vmul.f32 %v5329, 0.6931472
      %v5331 = vlog2.pop %v5294
      %v5332 = vmul.f32 %v5331, 0.6931472
      %v5333 = vlog2.pop %v5295
      %v5334 = vmul.f32 %v5333, 0.6931472
      %v5335 = vlog2.pop %v5296
      %v5336 = vmul.f32 %v5335, 0.6931472
      %v5337 = vlog2.pop %v5297
      %v5338 = vmul.f32 %v5337, 0.6931472
      %v5339 = vlog2.pop %v5298
      %v5340 = vmul.f32 %v5339, 0.6931472
      %v5341 = vlog2.pop %v5299
      %v5342 = vmul.f32 %v5341, 0.6931472
      %v5343 = vlog2.pop %v5300
      %v5344 = vmul.f32 %v5343, 0.6931472
      %v5345 = vlog2.pop %v5301
      %v5346 = vmul.f32 %v5345, 0.6931472
      %v5347 = vlog2.pop %v5302
      %v5348 = vmul.f32 %v5347, 0.6931472
      %v5349 = vlog2.pop %v5303
      %v5350 = vmul.f32 %v5349, 0.6931472
      %v5351 = vlog2.pop %v5304
      %v5352 = vmul.f32 %v5351, 0.6931472
      %v5353 = vlog2.pop %v5305
      %v5354 = vmul.f32 %v5353, 0.6931472
      %v5355 = vlog2.pop %v5306
      %v5356 = vmul.f32 %v5355, 0.6931472
      %v5357 = vlog2.pop %v5307
      %v5358 = vmul.f32 %v5357, 0.6931472
      %v5359 = vlog2.pop %v5308
      %v5360 = vmul.f32 %v5359, 0.6931472
      %v5361 = vlog2.pop %v5309
      %v5362 = vmul.f32 %v5361, 0.6931472
      %v5363 = vlog2.pop %v5310
      %v5364 = vmul.f32 %v5363, 0.6931472
      %v5365 = vlog2.pop %v5311
      %v5366 = vmul.f32 %v5365, 0.6931472
      %v5367 = vlog2.pop %v5312
      %v5368 = vmul.f32 %v5367, 0.6931472
      %v5369 = vlog2.pop %v5313
      %v5370 = vmul.f32 %v5369, 0.6931472
      %v5371 = vlog2.pop %v5314
      %v5372 = vmul.f32 %v5371, 0.6931472
      %v5373 = vlog2.pop %v5315
      %v5374 = vmul.f32 %v5373, 0.6931472
      %v5375 = vlog2.pop %v5316
      %v5376 = vmul.f32 %v5375, 0.6931472
      %v5377 = vlog2.pop %v5317
      %v5378 = vmul.f32 %v5377, 0.6931472
      %v5379 = vlog2.pop %v5318
      %v5380 = vmul.f32 %v5379, 0.6931472
      %v5381 = vlog2.pop %v5319
      %v5382 = vmul.f32 %v5381, 0.6931472
      %v5383 = vlog2.pop %v5320
      %v5384 = vmul.f32 %v5383, 0.6931472
      %v5385 = vlog2.pop %v5321
      %v5386 = vmul.f32 %v5385, 0.6931472
      %v5387 = vlog2.pop %v5322
      %v5388 = vmul.f32 %v5387, 0.6931472
      %v5389 = vmul.f32 %v4631, %v4631
      %v5390 = vmul.f32 %v4633, %v4633
      %v5391 = vmul.f32 %v4636, %v4636
      %v5392 = vmul.f32 %v4638, %v4638
      %v5393 = vmul.f32 %v4641, %v4641
      %v5394 = vmul.f32 %v4643, %v4643
      %v5395 = vmul.f32 %v4646, %v4646
      %v5396 = vmul.f32 %v4648, %v4648
      %v5397 = vmul.f32 %v4651, %v4651
      %v5398 = vmul.f32 %v4653, %v4653
      %v5399 = vmul.f32 %v4656, %v4656
      %v5400 = vmul.f32 %v4658, %v4658
      %v5401 = vmul.f32 %v4661, %v4661
      %v5402 = vmul.f32 %v4663, %v4663
      %v5403 = vmul.f32 %v4666, %v4666
      %v5404 = vmul.f32 %v4668, %v4668
      %v5405 = vmul.f32 %v4671, %v4671
      %v5406 = vmul.f32 %v4673, %v4673
      %v5407 = vmul.f32 %v4676, %v4676
      %v5408 = vmul.f32 %v4678, %v4678
      %v5409 = vmul.f32 %v4681, %v4681
      %v5410 = vmul.f32 %v4683, %v4683
      %v5411 = vmul.f32 %v4686, %v4686
      %v5412 = vmul.f32 %v4688, %v4688
      %v5413 = vmul.f32 %v4691, %v4691
      %v5414 = vmul.f32 %v4693, %v4693
      %v5415 = vmul.f32 %v4696, %v4696
      %v5416 = vmul.f32 %v4698, %v4698
      %v5417 = vmul.f32 %v4701, %v4701
      %v5418 = vmul.f32 %v4703, %v4703
      %v5419 = vmul.f32 %v4706, %v4706
      %v5420 = vmul.f32 %v4708, %v4708
      %v5421 = vmul.f32 %v4711, %v4711
      %v5422 = vmul.f32 %v4713, %v4713
      %v5423 = vmul.f32 %v4716, %v4716
      %v5424 = vmul.f32 %v4718, %v4718
      %v5425 = vmul.f32 %v4721, %v4721
      %v5426 = vmul.f32 %v4723, %v4723
      %v5427 = vmul.f32 %v4726, %v4726
      %v5428 = vmul.f32 %v4728, %v4728
      %v5429 = vmul.f32 %v4731, %v4731
      %v5430 = vmul.f32 %v4733, %v4733
      %v5431 = vmul.f32 %v4736, %v4736
      %v5432 = vmul.f32 %v4738, %v4738
      %v5433 = vmul.f32 %v4741, %v4741
      %v5434 = vmul.f32 %v4743, %v4743
      %v5435 = vmul.f32 %v4746, %v4746
      %v5436 = vmul.f32 %v4748, %v4748
      %v5437 = vmul.f32 %v4751, %v4751
      %v5438 = vmul.f32 %v4753, %v4753
      %v5439 = vmul.f32 %v4756, %v4756
      %v5440 = vmul.f32 %v4758, %v4758
      %v5441 = vmul.f32 %v4761, %v4761
      %v5442 = vmul.f32 %v4763, %v4763
      %v5443 = vmul.f32 %v4766, %v4766
      %v5444 = vmul.f32 %v4768, %v4768
      %v5445 = vmul.f32 %v4771, %v4771
      %v5446 = vmul.f32 %v4773, %v4773
      %v5447 = vmul.f32 %v4776, %v4776
      %v5448 = vmul.f32 %v4778, %v4778
      %v5449 = vmul.f32 %v4781, %v4781
      %v5450 = vmul.f32 %v4783, %v4783
      %v5451 = vmul.f32 %v4786, %v4786
      %v5452 = vmul.f32 %v4788, %v4788
      %v5453 = vmul.f32 %v4791, %v4791
      %v5454 = vmul.f32 %v4793, %v4793
      %v5455 = vadd.f32 %v5389, %v5422
      %v5456 = vadd.f32 %v5390, %v5423
      %v5457 = vadd.f32 %v5391, %v5424
      %v5458 = vadd.f32 %v5392, %v5425
      %v5459 = vadd.f32 %v5393, %v5426
      %v5460 = vadd.f32 %v5394, %v5427
      %v5461 = vadd.f32 %v5395, %v5428
      %v5462 = vadd.f32 %v5396, %v5429
      %v5463 = vadd.f32 %v5397, %v5430
      %v5464 = vadd.f32 %v5398, %v5431
      %v5465 = vadd.f32 %v5399, %v5432
      %v5466 = vadd.f32 %v5400, %v5433
      %v5467 = vadd.f32 %v5401, %v5434
      %v5468 = vadd.f32 %v5402, %v5435
      %v5469 = vadd.f32 %v5403, %v5436
      %v5470 = vadd.f32 %v5404, %v5437
      %v5471 = vadd.f32 %v5405, %v5438
      %v5472 = vadd.f32 %v5406, %v5439
      %v5473 = vadd.f32 %v5407, %v5440
      %v5474 = vadd.f32 %v5408, %v5441
      %v5475 = vadd.f32 %v5409, %v5442
      %v5476 = vadd.f32 %v5410, %v5443
      %v5477 = vadd.f32 %v5411, %v5444
      %v5478 = vadd.f32 %v5412, %v5445
      %v5479 = vadd.f32 %v5413, %v5446
      %v5480 = vadd.f32 %v5414, %v5447
      %v5481 = vadd.f32 %v5415, %v5448
      %v5482 = vadd.f32 %v5416, %v5449
      %v5483 = vadd.f32 %v5417, %v5450
      %v5484 = vadd.f32 %v5418, %v5451
      %v5485 = vadd.f32 %v5419, %v5452
      %v5486 = vadd.f32 %v5420, %v5453
      %v5487 = vadd.f32 %v5421, %v5454
      %v5488 = vadd.f32 %v5455, 1e-08
      %v5489 = vadd.f32 %v5456, 1e-08
      %v5490 = vadd.f32 %v5457, 1e-08
      %v5491 = vadd.f32 %v5458, 1e-08
      %v5492 = vadd.f32 %v5459, 1e-08
      %v5493 = vadd.f32 %v5460, 1e-08
      %v5494 = vadd.f32 %v5461, 1e-08
      %v5495 = vadd.f32 %v5462, 1e-08
      %v5496 = vadd.f32 %v5463, 1e-08
      %v5497 = vadd.f32 %v5464, 1e-08
      %v5498 = vadd.f32 %v5465, 1e-08
      %v5499 = vadd.f32 %v5466, 1e-08
      %v5500 = vadd.f32 %v5467, 1e-08
      %v5501 = vadd.f32 %v5468, 1e-08
      %v5502 = vadd.f32 %v5469, 1e-08
      %v5503 = vadd.f32 %v5470, 1e-08
      %v5504 = vadd.f32 %v5471, 1e-08
      %v5505 = vadd.f32 %v5472, 1e-08
      %v5506 = vadd.f32 %v5473, 1e-08
      %v5507 = vadd.f32 %v5474, 1e-08
      %v5508 = vadd.f32 %v5475, 1e-08
      %v5509 = vadd.f32 %v5476, 1e-08
      %v5510 = vadd.f32 %v5477, 1e-08
      %v5511 = vadd.f32 %v5478, 1e-08
      %v5512 = vadd.f32 %v5479, 1e-08
      %v5513 = vadd.f32 %v5480, 1e-08
      %v5514 = vadd.f32 %v5481, 1e-08
      %v5515 = vadd.f32 %v5482, 1e-08
      %v5516 = vadd.f32 %v5483, 1e-08
      %v5517 = vadd.f32 %v5484, 1e-08
      %v5518 = vadd.f32 %v5485, 1e-08
      %v5519 = vadd.f32 %v5486, 1e-08
      %v5520 = vadd.f32 %v5487, 1e-08
      %v5521 = vlog2.pop %v5488
      %v5522 = vmul.f32 %v5521, 0.6931472
      %v5523 = vlog2.pop %v5489
      %v5524 = vmul.f32 %v5523, 0.6931472
      %v5525 = vlog2.pop %v5490
      %v5526 = vmul.f32 %v5525, 0.6931472
      %v5527 = vlog2.pop %v5491
      %v5528 = vmul.f32 %v5527, 0.6931472
      %v5529 = vlog2.pop %v5492
      %v5530 = vmul.f32 %v5529, 0.6931472
      %v5531 = vlog2.pop %v5493
      %v5532 = vmul.f32 %v5531, 0.6931472
      %v5533 = vlog2.pop %v5494
      %v5534 = vmul.f32 %v5533, 0.6931472
      %v5535 = vlog2.pop %v5495
      %v5536 = vmul.f32 %v5535, 0.6931472
      %v5537 = vlog2.pop %v5496
      %v5538 = vmul.f32 %v5537, 0.6931472
      %v5539 = vlog2.pop %v5497
      %v5540 = vmul.f32 %v5539, 0.6931472
      %v5541 = vlog2.pop %v5498
      %v5542 = vmul.f32 %v5541, 0.6931472
      %v5543 = vlog2.pop %v5499
      %v5544 = vmul.f32 %v5543, 0.6931472
      %v5545 = vlog2.pop %v5500
      %v5546 = vmul.f32 %v5545, 0.6931472
      %v5547 = vlog2.pop %v5501
      %v5548 = vmul.f32 %v5547, 0.6931472
      %v5549 = vlog2.pop %v5502
      %v5550 = vmul.f32 %v5549, 0.6931472
      %v5551 = vlog2.pop %v5503
      %v5552 = vmul.f32 %v5551, 0.6931472
      %v5553 = vlog2.pop %v5504
      %v5554 = vmul.f32 %v5553, 0.6931472
      %v5555 = vlog2.pop %v5505
      %v5556 = vmul.f32 %v5555, 0.6931472
      %v5557 = vlog2.pop %v5506
      %v5558 = vmul.f32 %v5557, 0.6931472
      %v5559 = vlog2.pop %v5507
      %v5560 = vmul.f32 %v5559, 0.6931472
      %v5561 = vlog2.pop %v5508
      %v5562 = vmul.f32 %v5561, 0.6931472
      %v5563 = vlog2.pop %v5509
      %v5564 = vmul.f32 %v5563, 0.6931472
      %v5565 = vlog2.pop %v5510
      %v5566 = vmul.f32 %v5565, 0.6931472
      %v5567 = vlog2.pop %v5511
      %v5568 = vmul.f32 %v5567, 0.6931472
      %v5569 = vlog2.pop %v5512
      %v5570 = vmul.f32 %v5569, 0.6931472
      %v5571 = vlog2.pop %v5513
      %v5572 = vmul.f32 %v5571, 0.6931472
      %v5573 = vlog2.pop %v5514
      %v5574 = vmul.f32 %v5573, 0.6931472
      %v5575 = vlog2.pop %v5515
      %v5576 = vmul.f32 %v5575, 0.6931472
      %v5577 = vlog2.pop %v5516
      %v5578 = vmul.f32 %v5577, 0.6931472
      %v5579 = vlog2.pop %v5517
      %v5580 = vmul.f32 %v5579, 0.6931472
      %v5581 = vlog2.pop %v5518
      %v5582 = vmul.f32 %v5581, 0.6931472
      %v5583 = vlog2.pop %v5519
      %v5584 = vmul.f32 %v5583, 0.6931472
      %v5585 = vlog2.pop %v5520
      %v5586 = vmul.f32 %v5585, 0.6931472
      %v5587 = vsub.f32 %v4928, %v5126
      %v5588 = vsub.f32 %v4930, %v5128
      %v5589 = vsub.f32 %v4932, %v5130
      %v5590 = vsub.f32 %v4934, %v5132
      %v5591 = vsub.f32 %v4936, %v5134
      %v5592 = vsub.f32 %v4938, %v5136
      %v5593 = vsub.f32 %v4940, %v5138
      %v5594 = vsub.f32 %v4942, %v5140
      %v5595 = vsub.f32 %v4944, %v5142
      %v5596 = vsub.f32 %v4946, %v5144
      %v5597 = vsub.f32 %v4948, %v5146
      %v5598 = vsub.f32 %v4950, %v5148
      %v5599 = vsub.f32 %v4952, %v5150
      %v5600 = vsub.f32 %v4954, %v5152
      %v5601 = vsub.f32 %v4956, %v5154
      %v5602 = vsub.f32 %v4958, %v5156
      %v5603 = vsub.f32 %v4960, %v5158
      %v5604 = vsub.f32 %v4962, %v5160
      %v5605 = vsub.f32 %v4964, %v5162
      %v5606 = vsub.f32 %v4966, %v5164
      %v5607 = vsub.f32 %v4968, %v5166
      %v5608 = vsub.f32 %v4970, %v5168
      %v5609 = vsub.f32 %v4972, %v5170
      %v5610 = vsub.f32 %v4974, %v5172
      %v5611 = vsub.f32 %v4976, %v5174
      %v5612 = vsub.f32 %v4978, %v5176
      %v5613 = vsub.f32 %v4980, %v5178
      %v5614 = vsub.f32 %v4982, %v5180
      %v5615 = vsub.f32 %v4984, %v5182
      %v5616 = vsub.f32 %v4986, %v5184
      %v5617 = vsub.f32 %v4988, %v5186
      %v5618 = vsub.f32 %v4990, %v5188
      %v5619 = vsub.f32 %v4992, %v5190
      %v5620 = vsub.f32 %v5324, %v5522
      %v5621 = vsub.f32 %v5326, %v5524
      %v5622 = vsub.f32 %v5328, %v5526
      %v5623 = vsub.f32 %v5330, %v5528
      %v5624 = vsub.f32 %v5332, %v5530
      %v5625 = vsub.f32 %v5334, %v5532
      %v5626 = vsub.f32 %v5336, %v5534
      %v5627 = vsub.f32 %v5338, %v5536
      %v5628 = vsub.f32 %v5340, %v5538
      %v5629 = vsub.f32 %v5342, %v5540
      %v5630 = vsub.f32 %v5344, %v5542
      %v5631 = vsub.f32 %v5346, %v5544
      %v5632 = vsub.f32 %v5348, %v5546
      %v5633 = vsub.f32 %v5350, %v5548
      %v5634 = vsub.f32 %v5352, %v5550
      %v5635 = vsub.f32 %v5354, %v5552
      %v5636 = vsub.f32 %v5356, %v5554
      %v5637 = vsub.f32 %v5358, %v5556
      %v5638 = vsub.f32 %v5360, %v5558
      %v5639 = vsub.f32 %v5362, %v5560
      %v5640 = vsub.f32 %v5364, %v5562
      %v5641 = vsub.f32 %v5366, %v5564
      %v5642 = vsub.f32 %v5368, %v5566
      %v5643 = vsub.f32 %v5370, %v5568
      %v5644 = vsub.f32 %v5372, %v5570
      %v5645 = vsub.f32 %v5374, %v5572
      %v5646 = vsub.f32 %v5376, %v5574
      %v5647 = vsub.f32 %v5378, %v5576
      %v5648 = vsub.f32 %v5380, %v5578
      %v5649 = vsub.f32 %v5382, %v5580
      %v5650 = vsub.f32 %v5384, %v5582
      %v5651 = vsub.f32 %v5386, %v5584
      %v5652 = vsub.f32 %v5388, %v5586
      %v5653 = vsub.f32 %v5587, %v5620
      %v5654 = vsub.f32 %v5588, %v5621
      %v5655 = vsub.f32 %v5589, %v5622
      %v5656 = vsub.f32 %v5590, %v5623
      %v5657 = vsub.f32 %v5591, %v5624
      %v5658 = vsub.f32 %v5592, %v5625
      %v5659 = vsub.f32 %v5593, %v5626
      %v5660 = vsub.f32 %v5594, %v5627
      %v5661 = vsub.f32 %v5595, %v5628
      %v5662 = vsub.f32 %v5596, %v5629
      %v5663 = vsub.f32 %v5597, %v5630
      %v5664 = vsub.f32 %v5598, %v5631
      %v5665 = vsub.f32 %v5599, %v5632
      %v5666 = vsub.f32 %v5600, %v5633
      %v5667 = vsub.f32 %v5601, %v5634
      %v5668 = vsub.f32 %v5602, %v5635
      %v5669 = vsub.f32 %v5603, %v5636
      %v5670 = vsub.f32 %v5604, %v5637
      %v5671 = vsub.f32 %v5605, %v5638
      %v5672 = vsub.f32 %v5606, %v5639
      %v5673 = vsub.f32 %v5607, %v5640
      %v5674 = vsub.f32 %v5608, %v5641
      %v5675 = vsub.f32 %v5609, %v5642
      %v5676 = vsub.f32 %v5610, %v5643
      %v5677 = vsub.f32 %v5611, %v5644
      %v5678 = vsub.f32 %v5612, %v5645
      %v5679 = vsub.f32 %v5613, %v5646
      %v5680 = vsub.f32 %v5614, %v5647
      %v5681 = vsub.f32 %v5615, %v5648
      %v5682 = vsub.f32 %v5616, %v5649
      %v5683 = vsub.f32 %v5617, %v5650
      %v5684 = vsub.f32 %v5618, %v5651
      %v5685 = vsub.f32 %v5619, %v5652
      %v5686 = vand.u32 2147483647, %v5653
      %v5687 = vand.u32 2147483647, %v5654
      %v5688 = vand.u32 2147483647, %v5655
      %v5689 = vand.u32 2147483647, %v5656
      %v5690 = vand.u32 2147483647, %v5657
      %v5691 = vand.u32 2147483647, %v5658
      %v5692 = vand.u32 2147483647, %v5659
      %v5693 = vand.u32 2147483647, %v5660
      %v5694 = vand.u32 2147483647, %v5661
      %v5695 = vand.u32 2147483647, %v5662
      %v5696 = vand.u32 2147483647, %v5663
      %v5697 = vand.u32 2147483647, %v5664
      %v5698 = vand.u32 2147483647, %v5665
      %v5699 = vand.u32 2147483647, %v5666
      %v5700 = vand.u32 2147483647, %v5667
      %v5701 = vand.u32 2147483647, %v5668
      %v5702 = vand.u32 2147483647, %v5669
      %v5703 = vand.u32 2147483647, %v5670
      %v5704 = vand.u32 2147483647, %v5671
      %v5705 = vand.u32 2147483647, %v5672
      %v5706 = vand.u32 2147483647, %v5673
      %v5707 = vand.u32 2147483647, %v5674
      %v5708 = vand.u32 2147483647, %v5675
      %v5709 = vand.u32 2147483647, %v5676
      %v5710 = vand.u32 2147483647, %v5677
      %v5711 = vand.u32 2147483647, %v5678
      %v5712 = vand.u32 2147483647, %v5679
      %v5713 = vand.u32 2147483647, %v5680
      %v5714 = vand.u32 2147483647, %v5681
      %v5715 = vand.u32 2147483647, %v5682
      %v5716 = vand.u32 2147483647, %v5683
      %v5717 = vand.u32 2147483647, %v5684
      %v5718 = vand.u32 2147483647, %v5685
      %v5719 = vmul.f32 %v5686, 4.3429446
      %v5720 = vmul.f32 %v5687, 4.3429446
      %v5721 = vmul.f32 %v5688, 4.3429446
      %v5722 = vmul.f32 %v5689, 4.3429446
      %v5723 = vmul.f32 %v5690, 4.3429446
      %v5724 = vmul.f32 %v5691, 4.3429446
      %v5725 = vmul.f32 %v5692, 4.3429446
      %v5726 = vmul.f32 %v5693, 4.3429446
      %v5727 = vmul.f32 %v5694, 4.3429446
      %v5728 = vmul.f32 %v5695, 4.3429446
      %v5729 = vmul.f32 %v5696, 4.3429446
      %v5730 = vmul.f32 %v5697, 4.3429446
      %v5731 = vmul.f32 %v5698, 4.3429446
      %v5732 = vmul.f32 %v5699, 4.3429446
      %v5733 = vmul.f32 %v5700, 4.3429446
      %v5734 = vmul.f32 %v5701, 4.3429446
      %v5735 = vmul.f32 %v5702, 4.3429446
      %v5736 = vmul.f32 %v5703, 4.3429446
      %v5737 = vmul.f32 %v5704, 4.3429446
      %v5738 = vmul.f32 %v5705, 4.3429446
      %v5739 = vmul.f32 %v5706, 4.3429446
      %v5740 = vmul.f32 %v5707, 4.3429446
      %v5741 = vmul.f32 %v5708, 4.3429446
      %v5742 = vmul.f32 %v5709, 4.3429446
      %v5743 = vmul.f32 %v5710, 4.3429446
      %v5744 = vmul.f32 %v5711, 4.3429446
      %v5745 = vmul.f32 %v5712, 4.3429446
      %v5746 = vmul.f32 %v5713, 4.3429446
      %v5747 = vmul.f32 %v5714, 4.3429446
      %v5748 = vmul.f32 %v5715, 4.3429446
      %v5749 = vmul.f32 %v5716, 4.3429446
      %v5750 = vmul.f32 %v5717, 4.3429446
      %v5751 = vmul.f32 %v5718, 4.3429446
      %v5752 = vmul.f32 %v1772, %v2725
      %v5753 = vmul.f32 %v1774, %v2727
      %v5754 = vmul.f32 %v1777, %v2730
      %v5755 = vmul.f32 %v1779, %v2732
      %v5756 = vmul.f32 %v1782, %v2735
      %v5757 = vmul.f32 %v1784, %v2737
      %v5758 = vmul.f32 %v1787, %v2740
      %v5759 = vmul.f32 %v1789, %v2742
      %v5760 = vmul.f32 %v1792, %v2745
      %v5761 = vmul.f32 %v1794, %v2747
      %v5762 = vmul.f32 %v1797, %v2750
      %v5763 = vmul.f32 %v1799, %v2752
      %v5764 = vmul.f32 %v1802, %v2755
      %v5765 = vmul.f32 %v1804, %v2757
      %v5766 = vmul.f32 %v1807, %v2760
      %v5767 = vmul.f32 %v1809, %v2762
      %v5768 = vmul.f32 %v1812, %v2765
      %v5769 = vmul.f32 %v1814, %v2767
      %v5770 = vmul.f32 %v1817, %v2770
      %v5771 = vmul.f32 %v1819, %v2772
      %v5772 = vmul.f32 %v1822, %v2775
      %v5773 = vmul.f32 %v1824, %v2777
      %v5774 = vmul.f32 %v1827, %v2780
      %v5775 = vmul.f32 %v1829, %v2782
      %v5776 = vmul.f32 %v1832, %v2785
      %v5777 = vmul.f32 %v1834, %v2787
      %v5778 = vmul.f32 %v1837, %v2790
      %v5779 = vmul.f32 %v1839, %v2792
      %v5780 = vmul.f32 %v1842, %v2795
      %v5781 = vmul.f32 %v1844, %v2797
      %v5782 = vmul.f32 %v1847, %v2800
      %v5783 = vmul.f32 %v1849, %v2802
      %v5784 = vmul.f32 %v1852, %v2805
      %v5785 = vmul.f32 %v1854, %v2807
      %v5786 = vmul.f32 %v1857, %v2810
      %v5787 = vmul.f32 %v1859, %v2812
      %v5788 = vmul.f32 %v1862, %v2815
      %v5789 = vmul.f32 %v1864, %v2817
      %v5790 = vmul.f32 %v1867, %v2820
      %v5791 = vmul.f32 %v1869, %v2822
      %v5792 = vmul.f32 %v1872, %v2825
      %v5793 = vmul.f32 %v1874, %v2827
      %v5794 = vmul.f32 %v1877, %v2830
      %v5795 = vmul.f32 %v1879, %v2832
      %v5796 = vmul.f32 %v1882, %v2835
      %v5797 = vmul.f32 %v1884, %v2837
      %v5798 = vmul.f32 %v1887, %v2840
      %v5799 = vmul.f32 %v1889, %v2842
      %v5800 = vmul.f32 %v1892, %v2845
      %v5801 = vmul.f32 %v1894, %v2847
      %v5802 = vmul.f32 %v1897, %v2850
      %v5803 = vmul.f32 %v1899, %v2852
      %v5804 = vmul.f32 %v1902, %v2855
      %v5805 = vmul.f32 %v1904, %v2857
      %v5806 = vmul.f32 %v1907, %v2860
      %v5807 = vmul.f32 %v1909, %v2862
      %v5808 = vmul.f32 %v1912, %v2865
      %v5809 = vmul.f32 %v1914, %v2867
      %v5810 = vmul.f32 %v1917, %v2870
      %v5811 = vmul.f32 %v1919, %v2872
      %v5812 = vmul.f32 %v1922, %v2875
      %v5813 = vmul.f32 %v1924, %v2877
      %v5814 = vmul.f32 %v1927, %v2880
      %v5815 = vmul.f32 %v1929, %v2882
      %v5816 = vmul.f32 %v1932, %v2885
      %v5817 = vmul.f32 %v1934, %v2887
      %v5818 = vadd.f32 %v5752, %v5785
      %v5819 = vadd.f32 %v5753, %v5786
      %v5820 = vadd.f32 %v5754, %v5787
      %v5821 = vadd.f32 %v5755, %v5788
      %v5822 = vadd.f32 %v5756, %v5789
      %v5823 = vadd.f32 %v5757, %v5790
      %v5824 = vadd.f32 %v5758, %v5791
      %v5825 = vadd.f32 %v5759, %v5792
      %v5826 = vadd.f32 %v5760, %v5793
      %v5827 = vadd.f32 %v5761, %v5794
      %v5828 = vadd.f32 %v5762, %v5795
      %v5829 = vadd.f32 %v5763, %v5796
      %v5830 = vadd.f32 %v5764, %v5797
      %v5831 = vadd.f32 %v5765, %v5798
      %v5832 = vadd.f32 %v5766, %v5799
      %v5833 = vadd.f32 %v5767, %v5800
      %v5834 = vadd.f32 %v5768, %v5801
      %v5835 = vadd.f32 %v5769, %v5802
      %v5836 = vadd.f32 %v5770, %v5803
      %v5837 = vadd.f32 %v5771, %v5804
      %v5838 = vadd.f32 %v5772, %v5805
      %v5839 = vadd.f32 %v5773, %v5806
      %v5840 = vadd.f32 %v5774, %v5807
      %v5841 = vadd.f32 %v5775, %v5808
      %v5842 = vadd.f32 %v5776, %v5809
      %v5843 = vadd.f32 %v5777, %v5810
      %v5844 = vadd.f32 %v5778, %v5811
      %v5845 = vadd.f32 %v5779, %v5812
      %v5846 = vadd.f32 %v5780, %v5813
      %v5847 = vadd.f32 %v5781, %v5814
      %v5848 = vadd.f32 %v5782, %v5815
      %v5849 = vadd.f32 %v5783, %v5816
      %v5850 = vadd.f32 %v5784, %v5817
      %v5851 = vmul.f32 %v1854, %v2725
      %v5852 = vmul.f32 %v1857, %v2727
      %v5853 = vmul.f32 %v1859, %v2730
      %v5854 = vmul.f32 %v1862, %v2732
      %v5855 = vmul.f32 %v1864, %v2735
      %v5856 = vmul.f32 %v1867, %v2737
      %v5857 = vmul.f32 %v1869, %v2740
      %v5858 = vmul.f32 %v1872, %v2742
      %v5859 = vmul.f32 %v1874, %v2745
      %v5860 = vmul.f32 %v1877, %v2747
      %v5861 = vmul.f32 %v1879, %v2750
      %v5862 = vmul.f32 %v1882, %v2752
      %v5863 = vmul.f32 %v1884, %v2755
      %v5864 = vmul.f32 %v1887, %v2757
      %v5865 = vmul.f32 %v1889, %v2760
      %v5866 = vmul.f32 %v1892, %v2762
      %v5867 = vmul.f32 %v1894, %v2765
      %v5868 = vmul.f32 %v1897, %v2767
      %v5869 = vmul.f32 %v1899, %v2770
      %v5870 = vmul.f32 %v1902, %v2772
      %v5871 = vmul.f32 %v1904, %v2775
      %v5872 = vmul.f32 %v1907, %v2777
      %v5873 = vmul.f32 %v1909, %v2780
      %v5874 = vmul.f32 %v1912, %v2782
      %v5875 = vmul.f32 %v1914, %v2785
      %v5876 = vmul.f32 %v1917, %v2787
      %v5877 = vmul.f32 %v1919, %v2790
      %v5878 = vmul.f32 %v1922, %v2792
      %v5879 = vmul.f32 %v1924, %v2795
      %v5880 = vmul.f32 %v1927, %v2797
      %v5881 = vmul.f32 %v1929, %v2800
      %v5882 = vmul.f32 %v1932, %v2802
      %v5883 = vmul.f32 %v1934, %v2805
      %v5884 = vmul.f32 %v1772, %v2807
      %v5885 = vmul.f32 %v1774, %v2810
      %v5886 = vmul.f32 %v1777, %v2812
      %v5887 = vmul.f32 %v1779, %v2815
      %v5888 = vmul.f32 %v1782, %v2817
      %v5889 = vmul.f32 %v1784, %v2820
      %v5890 = vmul.f32 %v1787, %v2822
      %v5891 = vmul.f32 %v1789, %v2825
      %v5892 = vmul.f32 %v1792, %v2827
      %v5893 = vmul.f32 %v1794, %v2830
      %v5894 = vmul.f32 %v1797, %v2832
      %v5895 = vmul.f32 %v1799, %v2835
      %v5896 = vmul.f32 %v1802, %v2837
      %v5897 = vmul.f32 %v1804, %v2840
      %v5898 = vmul.f32 %v1807, %v2842
      %v5899 = vmul.f32 %v1809, %v2845
      %v5900 = vmul.f32 %v1812, %v2847
      %v5901 = vmul.f32 %v1814, %v2850
      %v5902 = vmul.f32 %v1817, %v2852
      %v5903 = vmul.f32 %v1819, %v2855
      %v5904 = vmul.f32 %v1822, %v2857
      %v5905 = vmul.f32 %v1824, %v2860
      %v5906 = vmul.f32 %v1827, %v2862
      %v5907 = vmul.f32 %v1829, %v2865
      %v5908 = vmul.f32 %v1832, %v2867
      %v5909 = vmul.f32 %v1834, %v2870
      %v5910 = vmul.f32 %v1837, %v2872
      %v5911 = vmul.f32 %v1839, %v2875
      %v5912 = vmul.f32 %v1842, %v2877
      %v5913 = vmul.f32 %v1844, %v2880
      %v5914 = vmul.f32 %v1847, %v2882
      %v5915 = vmul.f32 %v1849, %v2885
      %v5916 = vmul.f32 %v1852, %v2887
      %v5917 = vsub.f32 %v5851, %v5884
      %v5918 = vsub.f32 %v5852, %v5885
      %v5919 = vsub.f32 %v5853, %v5886
      %v5920 = vsub.f32 %v5854, %v5887
      %v5921 = vsub.f32 %v5855, %v5888
      %v5922 = vsub.f32 %v5856, %v5889
      %v5923 = vsub.f32 %v5857, %v5890
      %v5924 = vsub.f32 %v5858, %v5891
      %v5925 = vsub.f32 %v5859, %v5892
      %v5926 = vsub.f32 %v5860, %v5893
      %v5927 = vsub.f32 %v5861, %v5894
      %v5928 = vsub.f32 %v5862, %v5895
      %v5929 = vsub.f32 %v5863, %v5896
      %v5930 = vsub.f32 %v5864, %v5897
      %v5931 = vsub.f32 %v5865, %v5898
      %v5932 = vsub.f32 %v5866, %v5899
      %v5933 = vsub.f32 %v5867, %v5900
      %v5934 = vsub.f32 %v5868, %v5901
      %v5935 = vsub.f32 %v5869, %v5902
      %v5936 = vsub.f32 %v5870, %v5903
      %v5937 = vsub.f32 %v5871, %v5904
      %v5938 = vsub.f32 %v5872, %v5905
      %v5939 = vsub.f32 %v5873, %v5906
      %v5940 = vsub.f32 %v5874, %v5907
      %v5941 = vsub.f32 %v5875, %v5908
      %v5942 = vsub.f32 %v5876, %v5909
      %v5943 = vsub.f32 %v5877, %v5910
      %v5944 = vsub.f32 %v5878, %v5911
      %v5945 = vsub.f32 %v5879, %v5912
      %v5946 = vsub.f32 %v5880, %v5913
      %v5947 = vsub.f32 %v5881, %v5914
      %v5948 = vsub.f32 %v5882, %v5915
      %v5949 = vsub.f32 %v5883, %v5916
      %v5950 = vmul.f32 %v3678, %v4631
      %v5951 = vmul.f32 %v3680, %v4633
      %v5952 = vmul.f32 %v3683, %v4636
      %v5953 = vmul.f32 %v3685, %v4638
      %v5954 = vmul.f32 %v3688, %v4641
      %v5955 = vmul.f32 %v3690, %v4643
      %v5956 = vmul.f32 %v3693, %v4646
      %v5957 = vmul.f32 %v3695, %v4648
      %v5958 = vmul.f32 %v3698, %v4651
      %v5959 = vmul.f32 %v3700, %v4653
      %v5960 = vmul.f32 %v3703, %v4656
      %v5961 = vmul.f32 %v3705, %v4658
      %v5962 = vmul.f32 %v3708, %v4661
      %v5963 = vmul.f32 %v3710, %v4663
      %v5964 = vmul.f32 %v3713, %v4666
      %v5965 = vmul.f32 %v3715, %v4668
      %v5966 = vmul.f32 %v3718, %v4671
      %v5967 = vmul.f32 %v3720, %v4673
      %v5968 = vmul.f32 %v3723, %v4676
      %v5969 = vmul.f32 %v3725, %v4678
      %v5970 = vmul.f32 %v3728, %v4681
      %v5971 = vmul.f32 %v3730, %v4683
      %v5972 = vmul.f32 %v3733, %v4686
      %v5973 = vmul.f32 %v3735, %v4688
      %v5974 = vmul.f32 %v3738, %v4691
      %v5975 = vmul.f32 %v3740, %v4693
      %v5976 = vmul.f32 %v3743, %v4696
      %v5977 = vmul.f32 %v3745, %v4698
      %v5978 = vmul.f32 %v3748, %v4701
      %v5979 = vmul.f32 %v3750, %v4703
      %v5980 = vmul.f32 %v3753, %v4706
      %v5981 = vmul.f32 %v3755, %v4708
      %v5982 = vmul.f32 %v3758, %v4711
      %v5983 = vmul.f32 %v3760, %v4713
      %v5984 = vmul.f32 %v3763, %v4716
      %v5985 = vmul.f32 %v3765, %v4718
      %v5986 = vmul.f32 %v3768, %v4721
      %v5987 = vmul.f32 %v3770, %v4723
      %v5988 = vmul.f32 %v3773, %v4726
      %v5989 = vmul.f32 %v3775, %v4728
      %v5990 = vmul.f32 %v3778, %v4731
      %v5991 = vmul.f32 %v3780, %v4733
      %v5992 = vmul.f32 %v3783, %v4736
      %v5993 = vmul.f32 %v3785, %v4738
      %v5994 = vmul.f32 %v3788, %v4741
      %v5995 = vmul.f32 %v3790, %v4743
      %v5996 = vmul.f32 %v3793, %v4746
      %v5997 = vmul.f32 %v3795, %v4748
      %v5998 = vmul.f32 %v3798, %v4751
      %v5999 = vmul.f32 %v3800, %v4753
      %v6000 = vmul.f32 %v3803, %v4756
      %v6001 = vmul.f32 %v3805, %v4758
      %v6002 = vmul.f32 %v3808, %v4761
      %v6003 = vmul.f32 %v3810, %v4763
      %v6004 = vmul.f32 %v3813, %v4766
      %v6005 = vmul.f32 %v3815, %v4768
      %v6006 = vmul.f32 %v3818, %v4771
      %v6007 = vmul.f32 %v3820, %v4773
      %v6008 = vmul.f32 %v3823, %v4776
      %v6009 = vmul.f32 %v3825, %v4778
      %v6010 = vmul.f32 %v3828, %v4781
      %v6011 = vmul.f32 %v3830, %v4783
      %v6012 = vmul.f32 %v3833, %v4786
      %v6013 = vmul.f32 %v3835, %v4788
      %v6014 = vmul.f32 %v3838, %v4791
      %v6015 = vmul.f32 %v3840, %v4793
      %v6016 = vadd.f32 %v5950, %v5983
      %v6017 = vadd.f32 %v5951, %v5984
      %v6018 = vadd.f32 %v5952, %v5985
      %v6019 = vadd.f32 %v5953, %v5986
      %v6020 = vadd.f32 %v5954, %v5987
      %v6021 = vadd.f32 %v5955, %v5988
      %v6022 = vadd.f32 %v5956, %v5989
      %v6023 = vadd.f32 %v5957, %v5990
      %v6024 = vadd.f32 %v5958, %v5991
      %v6025 = vadd.f32 %v5959, %v5992
      %v6026 = vadd.f32 %v5960, %v5993
      %v6027 = vadd.f32 %v5961, %v5994
      %v6028 = vadd.f32 %v5962, %v5995
      %v6029 = vadd.f32 %v5963, %v5996
      %v6030 = vadd.f32 %v5964, %v5997
      %v6031 = vadd.f32 %v5965, %v5998
      %v6032 = vadd.f32 %v5966, %v5999
      %v6033 = vadd.f32 %v5967, %v6000
      %v6034 = vadd.f32 %v5968, %v6001
      %v6035 = vadd.f32 %v5969, %v6002
      %v6036 = vadd.f32 %v5970, %v6003
      %v6037 = vadd.f32 %v5971, %v6004
      %v6038 = vadd.f32 %v5972, %v6005
      %v6039 = vadd.f32 %v5973, %v6006
      %v6040 = vadd.f32 %v5974, %v6007
      %v6041 = vadd.f32 %v5975, %v6008
      %v6042 = vadd.f32 %v5976, %v6009
      %v6043 = vadd.f32 %v5977, %v6010
      %v6044 = vadd.f32 %v5978, %v6011
      %v6045 = vadd.f32 %v5979, %v6012
      %v6046 = vadd.f32 %v5980, %v6013
      %v6047 = vadd.f32 %v5981, %v6014
      %v6048 = vadd.f32 %v5982, %v6015
      %v6049 = vmul.f32 %v3760, %v4631
      %v6050 = vmul.f32 %v3763, %v4633
      %v6051 = vmul.f32 %v3765, %v4636
      %v6052 = vmul.f32 %v3768, %v4638
      %v6053 = vmul.f32 %v3770, %v4641
      %v6054 = vmul.f32 %v3773, %v4643
      %v6055 = vmul.f32 %v3775, %v4646
      %v6056 = vmul.f32 %v3778, %v4648
      %v6057 = vmul.f32 %v3780, %v4651
      %v6058 = vmul.f32 %v3783, %v4653
      %v6059 = vmul.f32 %v3785, %v4656
      %v6060 = vmul.f32 %v3788, %v4658
      %v6061 = vmul.f32 %v3790, %v4661
      %v6062 = vmul.f32 %v3793, %v4663
      %v6063 = vmul.f32 %v3795, %v4666
      %v6064 = vmul.f32 %v3798, %v4668
      %v6065 = vmul.f32 %v3800, %v4671
      %v6066 = vmul.f32 %v3803, %v4673
      %v6067 = vmul.f32 %v3805, %v4676
      %v6068 = vmul.f32 %v3808, %v4678
      %v6069 = vmul.f32 %v3810, %v4681
      %v6070 = vmul.f32 %v3813, %v4683
      %v6071 = vmul.f32 %v3815, %v4686
      %v6072 = vmul.f32 %v3818, %v4688
      %v6073 = vmul.f32 %v3820, %v4691
      %v6074 = vmul.f32 %v3823, %v4693
      %v6075 = vmul.f32 %v3825, %v4696
      %v6076 = vmul.f32 %v3828, %v4698
      %v6077 = vmul.f32 %v3830, %v4701
      %v6078 = vmul.f32 %v3833, %v4703
      %v6079 = vmul.f32 %v3835, %v4706
      %v6080 = vmul.f32 %v3838, %v4708
      %v6081 = vmul.f32 %v3840, %v4711
      %v6082 = vmul.f32 %v3678, %v4713
      %v6083 = vmul.f32 %v3680, %v4716
      %v6084 = vmul.f32 %v3683, %v4718
      %v6085 = vmul.f32 %v3685, %v4721
      %v6086 = vmul.f32 %v3688, %v4723
      %v6087 = vmul.f32 %v3690, %v4726
      %v6088 = vmul.f32 %v3693, %v4728
      %v6089 = vmul.f32 %v3695, %v4731
      %v6090 = vmul.f32 %v3698, %v4733
      %v6091 = vmul.f32 %v3700, %v4736
      %v6092 = vmul.f32 %v3703, %v4738
      %v6093 = vmul.f32 %v3705, %v4741
      %v6094 = vmul.f32 %v3708, %v4743
      %v6095 = vmul.f32 %v3710, %v4746
      %v6096 = vmul.f32 %v3713, %v4748
      %v6097 = vmul.f32 %v3715, %v4751
      %v6098 = vmul.f32 %v3718, %v4753
      %v6099 = vmul.f32 %v3720, %v4756
      %v6100 = vmul.f32 %v3723, %v4758
      %v6101 = vmul.f32 %v3725, %v4761
      %v6102 = vmul.f32 %v3728, %v4763
      %v6103 = vmul.f32 %v3730, %v4766
      %v6104 = vmul.f32 %v3733, %v4768
      %v6105 = vmul.f32 %v3735, %v4771
      %v6106 = vmul.f32 %v3738, %v4773
      %v6107 = vmul.f32 %v3740, %v4776
      %v6108 = vmul.f32 %v3743, %v4778
      %v6109 = vmul.f32 %v3745, %v4781
      %v6110 = vmul.f32 %v3748, %v4783
      %v6111 = vmul.f32 %v3750, %v4786
      %v6112 = vmul.f32 %v3753, %v4788
      %v6113 = vmul.f32 %v3755, %v4791
      %v6114 = vmul.f32 %v3758, %v4793
      %v6115 = vsub.f32 %v6049, %v6082
      %v6116 = vsub.f32 %v6050, %v6083
      %v6117 = vsub.f32 %v6051, %v6084
      %v6118 = vsub.f32 %v6052, %v6085
      %v6119 = vsub.f32 %v6053, %v6086
      %v6120 = vsub.f32 %v6054, %v6087
      %v6121 = vsub.f32 %v6055, %v6088
      %v6122 = vsub.f32 %v6056, %v6089
      %v6123 = vsub.f32 %v6057, %v6090
      %v6124 = vsub.f32 %v6058, %v6091
      %v6125 = vsub.f32 %v6059, %v6092
      %v6126 = vsub.f32 %v6060, %v6093
      %v6127 = vsub.f32 %v6061, %v6094
      %v6128 = vsub.f32 %v6062, %v6095
      %v6129 = vsub.f32 %v6063, %v6096
      %v6130 = vsub.f32 %v6064, %v6097
      %v6131 = vsub.f32 %v6065, %v6098
      %v6132 = vsub.f32 %v6066, %v6099
      %v6133 = vsub.f32 %v6067, %v6100
      %v6134 = vsub.f32 %v6068, %v6101
      %v6135 = vsub.f32 %v6069, %v6102
      %v6136 = vsub.f32 %v6070, %v6103
      %v6137 = vsub.f32 %v6071, %v6104
      %v6138 = vsub.f32 %v6072, %v6105
      %v6139 = vsub.f32 %v6073, %v6106
      %v6140 = vsub.f32 %v6074, %v6107
      %v6141 = vsub.f32 %v6075, %v6108
      %v6142 = vsub.f32 %v6076, %v6109
      %v6143 = vsub.f32 %v6077, %v6110
      %v6144 = vsub.f32 %v6078, %v6111
      %v6145 = vsub.f32 %v6079, %v6112
      %v6146 = vsub.f32 %v6080, %v6113
      %v6147 = vsub.f32 %v6081, %v6114
      %v6148 = vand.u32 2147483647, %v5818
      %v6149 = vand.u32 2147483647, %v5917
      %v6150 = vmin.f32 %v6148, %v6149
      %v6151 = vmax.f32 %v6148, %v6149
      %v6152 = vrcp.pop %v6151
      %v6153 = vmul.f32 %v6151, %v6152
      %v6154 = vsub.f32 1.0, %v6153
      %v6155 = vmul.f32 %v6152, %v6154
      %v6156 = vadd.f32 %v6152, %v6155
      %vm6157 = vweird.f32 %v6151
      %vm6158 = vweird.f32 %v6152
      %vm6159 = vmor %vm6157, %vm6158
      %v6160 = vsel %vm6159, %v6152, %v6156
      %v6161 = vand.u32 2147483647, %v6151
      %vm6162 = vcmp.eq.f32.partialorder %v6161, 8.507059e+37
      %v6163 = vand.u32 %v6151, 2147483648
      %v6164 = vor.u32 1.1754944e-38, %v6163
      %v6165 = vsel %vm6162, %v6164, %v6160
      %v6166 = vmul.f32 %v6150, %v6165
      %v6167 = vmul.f32 %v6166, %v6166
      %v6168 = vmul.f32 0.002785687, %v6167
      %v6169 = vadd.f32 %v6168, -0.015866
      %v6170 = vmul.f32 %v6169, %v6167
      %v6171 = vadd.f32 %v6170, 0.04247222
      %v6172 = vmul.f32 %v6171, %v6167
      %v6173 = vadd.f32 %v6172, -0.074975304
      %v6174 = vmul.f32 %v6173, %v6167
      %v6175 = vadd.f32 %v6174, 0.1064488
      %v6176 = vmul.f32 %v6175, %v6167
      %v6177 = vadd.f32 %v6176, -0.14207031
      %v6178 = vmul.f32 %v6177, %v6167
      %v6179 = vadd.f32 %v6178, 0.19993454
      %v6180 = vmul.f32 %v6179, %v6167
      %v6181 = vadd.f32 %v6180, -0.33333147
      %v6182 = vmul.f32 %v6181, %v6167
      %v6183 = vmul.f32 %v6182, %v6166
      %v6184 = vadd.f32 %v6183, %v6166
      %vm6185 = vcmp.gt.f32.partialorder %v6149, %v6148
      %v6186 = vsub.f32 1.5707964, %v6184
      %v6187 = vsel %vm6185, %v6186, %v6184
      %vm6188 = vcmp.lt.f32.partialorder %v5818, 0.0
      %v6189 = vsub.f32 3.1415927, %v6187
      %v6190 = vsel %vm6188, %v6189, %v6187
      %vm6191 = vcmp.lt.s32.totalorder %v5818, 0
      %v6192 = vsel %vm6191, 3.1415927, 0.0
      %vm6193 = vcmp.eq.f32.partialorder %v5917, 0.0
      %v6194 = vsel %vm6193, %v6192, %v6190
      %vm6195 = vcmp.ne.f32.partialorder %v5818, %v5818
      %vm6196 = vcmp.ne.f32.partialorder %v5917, %v5917
      %vm6197 = vmor %vm6195, %vm6196
      %v6198 = vsel %vm6197, nan, %v6194
      %vm6199 = vcmp.lt.f32.partialorder %v5818, 0.0
      %v6200 = vsel %vm6199, 2.3561945, 0.7853982
      %vm6201 = vcmp.eq.s32.totalorder %v6148, inf
      %vm6202 = vcmp.eq.s32.totalorder %v6149, inf
      %vm6203 = vmand %vm6201, %vm6202
      %v6204 = vsel %vm6203, %v6200, %v6198
      %v6205 = vand.u32 2147483647, %v6204
      %v6206 = vand.u32 %v5917, 2147483648
      %v6207 = vor.u32 %v6205, %v6206
      %v6208 = vand.u32 2147483647, %v5819
      %v6209 = vand.u32 2147483647, %v5918
      %v6210 = vmin.f32 %v6208, %v6209
      %v6211 = vmax.f32 %v6208, %v6209
      %v6212 = vrcp.pop %v6211
      %v6213 = vmul.f32 %v6211, %v6212
      %v6214 = vsub.f32 1.0, %v6213
      %v6215 = vmul.f32 %v6212, %v6214
      %v6216 = vadd.f32 %v6212, %v6215
      %vm6217 = vweird.f32 %v6211
      %vm6218 = vweird.f32 %v6212
      %vm6219 = vmor %vm6217, %vm6218
      %v6220 = vsel %vm6219, %v6212, %v6216
      %v6221 = vand.u32 2147483647, %v6211
      %vm6222 = vcmp.eq.f32.partialorder %v6221, 8.507059e+37
      %v6223 = vand.u32 %v6211, 2147483648
      %v6224 = vor.u32 1.1754944e-38, %v6223
      %v6225 = vsel %vm6222, %v6224, %v6220
      %v6226 = vmul.f32 %v6210, %v6225
      %v6227 = vmul.f32 %v6226, %v6226
      %v6228 = vmul.f32 0.002785687, %v6227
      %v6229 = vadd.f32 %v6228, -0.015866
      %v6230 = vmul.f32 %v6229, %v6227
      %v6231 = vadd.f32 %v6230, 0.04247222
      %v6232 = vmul.f32 %v6231, %v6227
      %v6233 = vadd.f32 %v6232, -0.074975304
      %v6234 = vmul.f32 %v6233, %v6227
      %v6235 = vadd.f32 %v6234, 0.1064488
      %v6236 = vmul.f32 %v6235, %v6227
      %v6237 = vadd.f32 %v6236, -0.14207031
      %v6238 = vmul.f32 %v6237, %v6227
      %v6239 = vadd.f32 %v6238, 0.19993454
      %v6240 = vmul.f32 %v6239, %v6227
      %v6241 = vadd.f32 %v6240, -0.33333147
      %v6242 = vmul.f32 %v6241, %v6227
      %v6243 = vmul.f32 %v6242, %v6226
      %v6244 = vadd.f32 %v6243, %v6226
      %vm6245 = vcmp.gt.f32.partialorder %v6209, %v6208
      %v6246 = vsub.f32 1.5707964, %v6244
      %v6247 = vsel %vm6245, %v6246, %v6244
      %vm6248 = vcmp.lt.f32.partialorder %v5819, 0.0
      %v6249 = vsub.f32 3.1415927, %v6247
      %v6250 = vsel %vm6248, %v6249, %v6247
      %vm6251 = vcmp.lt.s32.totalorder %v5819, 0
      %v6252 = vsel %vm6251, 3.1415927, 0.0
      %vm6253 = vcmp.eq.f32.partialorder %v5918, 0.0
      %v6254 = vsel %vm6253, %v6252, %v6250
      %vm6255 = vcmp.ne.f32.partialorder %v5819, %v5819
      %vm6256 = vcmp.ne.f32.partialorder %v5918, %v5918
      %vm6257 = vmor %vm6255, %vm6256
      %v6258 = vsel %vm6257, nan, %v6254
      %vm6259 = vcmp.lt.f32.partialorder %v5819, 0.0
      %v6260 = vsel %vm6259, 2.3561945, 0.7853982
      %vm6261 = vcmp.eq.s32.totalorder %v6208, inf
      %vm6262 = vcmp.eq.s32.totalorder %v6209, inf
      %vm6263 = vmand %vm6261, %vm6262
      %v6264 = vsel %vm6263, %v6260, %v6258
      %v6265 = vand.u32 2147483647, %v6264
      %v6266 = vand.u32 %v5918, 2147483648
      %v6267 = vor.u32 %v6265, %v6266
      %v6268 = vand.u32 2147483647, %v5820
      %v6269 = vand.u32 2147483647, %v5919
      %v6270 = vmin.f32 %v6268, %v6269
      %v6271 = vmax.f32 %v6268, %v6269
      %v6272 = vrcp.pop %v6271
      %v6273 = vmul.f32 %v6271, %v6272
      %v6274 = vsub.f32 1.0, %v6273
      %v6275 = vmul.f32 %v6272, %v6274
      %v6276 = vadd.f32 %v6272, %v6275
      %vm6277 = vweird.f32 %v6271
      %vm6278 = vweird.f32 %v6272
      %vm6279 = vmor %vm6277, %vm6278
      %v6280 = vsel %vm6279, %v6272, %v6276
      %v6281 = vand.u32 2147483647, %v6271
      %vm6282 = vcmp.eq.f32.partialorder %v6281, 8.507059e+37
      %v6283 = vand.u32 %v6271, 2147483648
      %v6284 = vor.u32 1.1754944e-38, %v6283
      %v6285 = vsel %vm6282, %v6284, %v6280
      %v6286 = vmul.f32 %v6270, %v6285
      %v6287 = vmul.f32 %v6286, %v6286
      %v6288 = vmul.f32 0.002785687, %v6287
      %v6289 = vadd.f32 %v6288, -0.015866
      %v6290 = vmul.f32 %v6289, %v6287
      %v6291 = vadd.f32 %v6290, 0.04247222
      %v6292 = vmul.f32 %v6291, %v6287
      %v6293 = vadd.f32 %v6292, -0.074975304
      %v6294 = vmul.f32 %v6293, %v6287
      %v6295 = vadd.f32 %v6294, 0.1064488
      %v6296 = vmul.f32 %v6295, %v6287
      %v6297 = vadd.f32 %v6296, -0.14207031
      %v6298 = vmul.f32 %v6297, %v6287
      %v6299 = vadd.f32 %v6298, 0.19993454
      %v6300 = vmul.f32 %v6299, %v6287
      %v6301 = vadd.f32 %v6300, -0.33333147
      %v6302 = vmul.f32 %v6301, %v6287
      %v6303 = vmul.f32 %v6302, %v6286
      %v6304 = vadd.f32 %v6303, %v6286
      %vm6305 = vcmp.gt.f32.partialorder %v6269, %v6268
      %v6306 = vsub.f32 1.5707964, %v6304
      %v6307 = vsel %vm6305, %v6306, %v6304
      %vm6308 = vcmp.lt.f32.partialorder %v5820, 0.0
      %v6309 = vsub.f32 3.1415927, %v6307
      %v6310 = vsel %vm6308, %v6309, %v6307
      %vm6311 = vcmp.lt.s32.totalorder %v5820, 0
      %v6312 = vsel %vm6311, 3.1415927, 0.0
      %vm6313 = vcmp.eq.f32.partialorder %v5919, 0.0
      %v6314 = vsel %vm6313, %v6312, %v6310
      %vm6315 = vcmp.ne.f32.partialorder %v5820, %v5820
      %vm6316 = vcmp.ne.f32.partialorder %v5919, %v5919
      %vm6317 = vmor %vm6315, %vm6316
      %v6318 = vsel %vm6317, nan, %v6314
      %vm6319 = vcmp.lt.f32.partialorder %v5820, 0.0
      %v6320 = vsel %vm6319, 2.3561945, 0.7853982
      %vm6321 = vcmp.eq.s32.totalorder %v6268, inf
      %vm6322 = vcmp.eq.s32.totalorder %v6269, inf
      %vm6323 = vmand %vm6321, %vm6322
      %v6324 = vsel %vm6323, %v6320, %v6318
      %v6325 = vand.u32 2147483647, %v6324
      %v6326 = vand.u32 %v5919, 2147483648
      %v6327 = vor.u32 %v6325, %v6326
      %v6328 = vand.u32 2147483647, %v5821
      %v6329 = vand.u32 2147483647, %v5920
      %v6330 = vmin.f32 %v6328, %v6329
      %v6331 = vmax.f32 %v6328, %v6329
      %v6332 = vrcp.pop %v6331
      %v6333 = vmul.f32 %v6331, %v6332
      %v6334 = vsub.f32 1.0, %v6333
      %v6335 = vmul.f32 %v6332, %v6334
      %v6336 = vadd.f32 %v6332, %v6335
      %vm6337 = vweird.f32 %v6331
      %vm6338 = vweird.f32 %v6332
      %vm6339 = vmor %vm6337, %vm6338
      %v6340 = vsel %vm6339, %v6332, %v6336
      %v6341 = vand.u32 2147483647, %v6331
      %vm6342 = vcmp.eq.f32.partialorder %v6341, 8.507059e+37
      %v6343 = vand.u32 %v6331, 2147483648
      %v6344 = vor.u32 1.1754944e-38, %v6343
      %v6345 = vsel %vm6342, %v6344, %v6340
      %v6346 = vmul.f32 %v6330, %v6345
      %v6347 = vmul.f32 %v6346, %v6346
      %v6348 = vmul.f32 0.002785687, %v6347
      %v6349 = vadd.f32 %v6348, -0.015866
      %v6350 = vmul.f32 %v6349, %v6347
      %v6351 = vadd.f32 %v6350, 0.04247222
      %v6352 = vmul.f32 %v6351, %v6347
      %v6353 = vadd.f32 %v6352, -0.074975304
      %v6354 = vmul.f32 %v6353, %v6347
      %v6355 = vadd.f32 %v6354, 0.1064488
      %v6356 = vmul.f32 %v6355, %v6347
      %v6357 = vadd.f32 %v6356, -0.14207031
      %v6358 = vmul.f32 %v6357, %v6347
      %v6359 = vadd.f32 %v6358, 0.19993454
      %v6360 = vmul.f32 %v6359, %v6347
      %v6361 = vadd.f32 %v6360, -0.33333147
      %v6362 = vmul.f32 %v6361, %v6347
      %v6363 = vmul.f32 %v6362, %v6346
      %v6364 = vadd.f32 %v6363, %v6346
      %vm6365 = vcmp.gt.f32.partialorder %v6329, %v6328
      %v6366 = vsub.f32 1.5707964, %v6364
      %v6367 = vsel %vm6365, %v6366, %v6364
      %vm6368 = vcmp.lt.f32.partialorder %v5821, 0.0
      %v6369 = vsub.f32 3.1415927, %v6367
      %v6370 = vsel %vm6368, %v6369, %v6367
      %vm6371 = vcmp.lt.s32.totalorder %v5821, 0
      %v6372 = vsel %vm6371, 3.1415927, 0.0
      %vm6373 = vcmp.eq.f32.partialorder %v5920, 0.0
      %v6374 = vsel %vm6373, %v6372, %v6370
      %vm6375 = vcmp.ne.f32.partialorder %v5821, %v5821
      %vm6376 = vcmp.ne.f32.partialorder %v5920, %v5920
      %vm6377 = vmor %vm6375, %vm6376
      %v6378 = vsel %vm6377, nan, %v6374
      %vm6379 = vcmp.lt.f32.partialorder %v5821, 0.0
      %v6380 = vsel %vm6379, 2.3561945, 0.7853982
      %vm6381 = vcmp.eq.s32.totalorder %v6328, inf
      %vm6382 = vcmp.eq.s32.totalorder %v6329, inf
      %vm6383 = vmand %vm6381, %vm6382
      %v6384 = vsel %vm6383, %v6380, %v6378
      %v6385 = vand.u32 2147483647, %v6384
      %v6386 = vand.u32 %v5920, 2147483648
      %v6387 = vor.u32 %v6385, %v6386
      %v6388 = vand.u32 2147483647, %v5822
      %v6389 = vand.u32 2147483647, %v5921
      %v6390 = vmin.f32 %v6388, %v6389
      %v6391 = vmax.f32 %v6388, %v6389
      %v6392 = vrcp.pop %v6391
      %v6393 = vmul.f32 %v6391, %v6392
      %v6394 = vsub.f32 1.0, %v6393
      %v6395 = vmul.f32 %v6392, %v6394
      %v6396 = vadd.f32 %v6392, %v6395
      %vm6397 = vweird.f32 %v6391
      %vm6398 = vweird.f32 %v6392
      %vm6399 = vmor %vm6397, %vm6398
      %v6400 = vsel %vm6399, %v6392, %v6396
      %v6401 = vand.u32 2147483647, %v6391
      %vm6402 = vcmp.eq.f32.partialorder %v6401, 8.507059e+37
      %v6403 = vand.u32 %v6391, 2147483648
      %v6404 = vor.u32 1.1754944e-38, %v6403
      %v6405 = vsel %vm6402, %v6404, %v6400
      %v6406 = vmul.f32 %v6390, %v6405
      %v6407 = vmul.f32 %v6406, %v6406
      %v6408 = vmul.f32 0.002785687, %v6407
      %v6409 = vadd.f32 %v6408, -0.015866
      %v6410 = vmul.f32 %v6409, %v6407
      %v6411 = vadd.f32 %v6410, 0.04247222
      %v6412 = vmul.f32 %v6411, %v6407
      %v6413 = vadd.f32 %v6412, -0.074975304
      %v6414 = vmul.f32 %v6413, %v6407
      %v6415 = vadd.f32 %v6414, 0.1064488
      %v6416 = vmul.f32 %v6415, %v6407
      %v6417 = vadd.f32 %v6416, -0.14207031
      %v6418 = vmul.f32 %v6417, %v6407
      %v6419 = vadd.f32 %v6418, 0.19993454
      %v6420 = vmul.f32 %v6419, %v6407
      %v6421 = vadd.f32 %v6420, -0.33333147
      %v6422 = vmul.f32 %v6421, %v6407
      %v6423 = vmul.f32 %v6422, %v6406
      %v6424 = vadd.f32 %v6423, %v6406
      %vm6425 = vcmp.gt.f32.partialorder %v6389, %v6388
      %v6426 = vsub.f32 1.5707964, %v6424
      %v6427 = vsel %vm6425, %v6426, %v6424
      %vm6428 = vcmp.lt.f32.partialorder %v5822, 0.0
      %v6429 = vsub.f32 3.1415927, %v6427
      %v6430 = vsel %vm6428, %v6429, %v6427
      %vm6431 = vcmp.lt.s32.totalorder %v5822, 0
      %v6432 = vsel %vm6431, 3.1415927, 0.0
      %vm6433 = vcmp.eq.f32.partialorder %v5921, 0.0
      %v6434 = vsel %vm6433, %v6432, %v6430
      %vm6435 = vcmp.ne.f32.partialorder %v5822, %v5822
      %vm6436 = vcmp.ne.f32.partialorder %v5921, %v5921
      %vm6437 = vmor %vm6435, %vm6436
      %v6438 = vsel %vm6437, nan, %v6434
      %vm6439 = vcmp.lt.f32.partialorder %v5822, 0.0
      %v6440 = vsel %vm6439, 2.3561945, 0.7853982
      %vm6441 = vcmp.eq.s32.totalorder %v6388, inf
      %vm6442 = vcmp.eq.s32.totalorder %v6389, inf
      %vm6443 = vmand %vm6441, %vm6442
      %v6444 = vsel %vm6443, %v6440, %v6438
      %v6445 = vand.u32 2147483647, %v6444
      %v6446 = vand.u32 %v5921, 2147483648
      %v6447 = vor.u32 %v6445, %v6446
      %v6448 = vand.u32 2147483647, %v5823
      %v6449 = vand.u32 2147483647, %v5922
      %v6450 = vmin.f32 %v6448, %v6449
      %v6451 = vmax.f32 %v6448, %v6449
      %v6452 = vrcp.pop %v6451
      %v6453 = vmul.f32 %v6451, %v6452
      %v6454 = vsub.f32 1.0, %v6453
      %v6455 = vmul.f32 %v6452, %v6454
      %v6456 = vadd.f32 %v6452, %v6455
      %vm6457 = vweird.f32 %v6451
      %vm6458 = vweird.f32 %v6452
      %vm6459 = vmor %vm6457, %vm6458
      %v6460 = vsel %vm6459, %v6452, %v6456
      %v6461 = vand.u32 2147483647, %v6451
      %vm6462 = vcmp.eq.f32.partialorder %v6461, 8.507059e+37
      %v6463 = vand.u32 %v6451, 2147483648
      %v6464 = vor.u32 1.1754944e-38, %v6463
      %v6465 = vsel %vm6462, %v6464, %v6460
      %v6466 = vmul.f32 %v6450, %v6465
      %v6467 = vmul.f32 %v6466, %v6466
      %v6468 = vmul.f32 0.002785687, %v6467
      %v6469 = vadd.f32 %v6468, -0.015866
      %v6470 = vmul.f32 %v6469, %v6467
      %v6471 = vadd.f32 %v6470, 0.04247222
      %v6472 = vmul.f32 %v6471, %v6467
      %v6473 = vadd.f32 %v6472, -0.074975304
      %v6474 = vmul.f32 %v6473, %v6467
      %v6475 = vadd.f32 %v6474, 0.1064488
      %v6476 = vmul.f32 %v6475, %v6467
      %v6477 = vadd.f32 %v6476, -0.14207031
      %v6478 = vmul.f32 %v6477, %v6467
      %v6479 = vadd.f32 %v6478, 0.19993454
      %v6480 = vmul.f32 %v6479, %v6467
      %v6481 = vadd.f32 %v6480, -0.33333147
      %v6482 = vmul.f32 %v6481, %v6467
      %v6483 = vmul.f32 %v6482, %v6466
      %v6484 = vadd.f32 %v6483, %v6466
      %vm6485 = vcmp.gt.f32.partialorder %v6449, %v6448
      %v6486 = vsub.f32 1.5707964, %v6484
      %v6487 = vsel %vm6485, %v6486, %v6484
      %vm6488 = vcmp.lt.f32.partialorder %v5823, 0.0
      %v6489 = vsub.f32 3.1415927, %v6487
      %v6490 = vsel %vm6488, %v6489, %v6487
      %vm6491 = vcmp.lt.s32.totalorder %v5823, 0
      %v6492 = vsel %vm6491, 3.1415927, 0.0
      %vm6493 = vcmp.eq.f32.partialorder %v5922, 0.0
      %v6494 = vsel %vm6493, %v6492, %v6490
      %vm6495 = vcmp.ne.f32.partialorder %v5823, %v5823
      %vm6496 = vcmp.ne.f32.partialorder %v5922, %v5922
      %vm6497 = vmor %vm6495, %vm6496
      %v6498 = vsel %vm6497, nan, %v6494
      %vm6499 = vcmp.lt.f32.partialorder %v5823, 0.0
      %v6500 = vsel %vm6499, 2.3561945, 0.7853982
      %vm6501 = vcmp.eq.s32.totalorder %v6448, inf
      %vm6502 = vcmp.eq.s32.totalorder %v6449, inf
      %vm6503 = vmand %vm6501, %vm6502
      %v6504 = vsel %vm6503, %v6500, %v6498
      %v6505 = vand.u32 2147483647, %v6504
      %v6506 = vand.u32 %v5922, 2147483648
      %v6507 = vor.u32 %v6505, %v6506
      %v6508 = vand.u32 2147483647, %v5824
      %v6509 = vand.u32 2147483647, %v5923
      %v6510 = vmin.f32 %v6508, %v6509
      %v6511 = vmax.f32 %v6508, %v6509
      %v6512 = vrcp.pop %v6511
      %v6513 = vmul.f32 %v6511, %v6512
      %v6514 = vsub.f32 1.0, %v6513
      %v6515 = vmul.f32 %v6512, %v6514
      %v6516 = vadd.f32 %v6512, %v6515
      %vm6517 = vweird.f32 %v6511
      %vm6518 = vweird.f32 %v6512
      %vm6519 = vmor %vm6517, %vm6518
      %v6520 = vsel %vm6519, %v6512, %v6516
      %v6521 = vand.u32 2147483647, %v6511
      %vm6522 = vcmp.eq.f32.partialorder %v6521, 8.507059e+37
      %v6523 = vand.u32 %v6511, 2147483648
      %v6524 = vor.u32 1.1754944e-38, %v6523
      %v6525 = vsel %vm6522, %v6524, %v6520
      %v6526 = vmul.f32 %v6510, %v6525
      %v6527 = vmul.f32 %v6526, %v6526
      %v6528 = vmul.f32 0.002785687, %v6527
      %v6529 = vadd.f32 %v6528, -0.015866
      %v6530 = vmul.f32 %v6529, %v6527
      %v6531 = vadd.f32 %v6530, 0.04247222
      %v6532 = vmul.f32 %v6531, %v6527
      %v6533 = vadd.f32 %v6532, -0.074975304
      %v6534 = vmul.f32 %v6533, %v6527
      %v6535 = vadd.f32 %v6534, 0.1064488
      %v6536 = vmul.f32 %v6535, %v6527
      %v6537 = vadd.f32 %v6536, -0.14207031
      %v6538 = vmul.f32 %v6537, %v6527
      %v6539 = vadd.f32 %v6538, 0.19993454
      %v6540 = vmul.f32 %v6539, %v6527
      %v6541 = vadd.f32 %v6540, -0.33333147
      %v6542 = vmul.f32 %v6541, %v6527
      %v6543 = vmul.f32 %v6542, %v6526
      %v6544 = vadd.f32 %v6543, %v6526
      %vm6545 = vcmp.gt.f32.partialorder %v6509, %v6508
      %v6546 = vsub.f32 1.5707964, %v6544
      %v6547 = vsel %vm6545, %v6546, %v6544
      %vm6548 = vcmp.lt.f32.partialorder %v5824, 0.0
      %v6549 = vsub.f32 3.1415927, %v6547
      %v6550 = vsel %vm6548, %v6549, %v6547
      %vm6551 = vcmp.lt.s32.totalorder %v5824, 0
      %v6552 = vsel %vm6551, 3.1415927, 0.0
      %vm6553 = vcmp.eq.f32.partialorder %v5923, 0.0
      %v6554 = vsel %vm6553, %v6552, %v6550
      %vm6555 = vcmp.ne.f32.partialorder %v5824, %v5824
      %vm6556 = vcmp.ne.f32.partialorder %v5923, %v5923
      %vm6557 = vmor %vm6555, %vm6556
      %v6558 = vsel %vm6557, nan, %v6554
      %vm6559 = vcmp.lt.f32.partialorder %v5824, 0.0
      %v6560 = vsel %vm6559, 2.3561945, 0.7853982
      %vm6561 = vcmp.eq.s32.totalorder %v6508, inf
      %vm6562 = vcmp.eq.s32.totalorder %v6509, inf
      %vm6563 = vmand %vm6561, %vm6562
      %v6564 = vsel %vm6563, %v6560, %v6558
      %v6565 = vand.u32 2147483647, %v6564
      %v6566 = vand.u32 %v5923, 2147483648
      %v6567 = vor.u32 %v6565, %v6566
      %v6568 = vand.u32 2147483647, %v5825
      %v6569 = vand.u32 2147483647, %v5924
      %v6570 = vmin.f32 %v6568, %v6569
      %v6571 = vmax.f32 %v6568, %v6569
      %v6572 = vrcp.pop %v6571
      %v6573 = vmul.f32 %v6571, %v6572
      %v6574 = vsub.f32 1.0, %v6573
      %v6575 = vmul.f32 %v6572, %v6574
      %v6576 = vadd.f32 %v6572, %v6575
      %vm6577 = vweird.f32 %v6571
      %vm6578 = vweird.f32 %v6572
      %vm6579 = vmor %vm6577, %vm6578
      %v6580 = vsel %vm6579, %v6572, %v6576
      %v6581 = vand.u32 2147483647, %v6571
      %vm6582 = vcmp.eq.f32.partialorder %v6581, 8.507059e+37
      %v6583 = vand.u32 %v6571, 2147483648
      %v6584 = vor.u32 1.1754944e-38, %v6583
      %v6585 = vsel %vm6582, %v6584, %v6580
      %v6586 = vmul.f32 %v6570, %v6585
      %v6587 = vmul.f32 %v6586, %v6586
      %v6588 = vmul.f32 0.002785687, %v6587
      %v6589 = vadd.f32 %v6588, -0.015866
      %v6590 = vmul.f32 %v6589, %v6587
      %v6591 = vadd.f32 %v6590, 0.04247222
      %v6592 = vmul.f32 %v6591, %v6587
      %v6593 = vadd.f32 %v6592, -0.074975304
      %v6594 = vmul.f32 %v6593, %v6587
      %v6595 = vadd.f32 %v6594, 0.1064488
      %v6596 = vmul.f32 %v6595, %v6587
      %v6597 = vadd.f32 %v6596, -0.14207031
      %v6598 = vmul.f32 %v6597, %v6587
      %v6599 = vadd.f32 %v6598, 0.19993454
      %v6600 = vmul.f32 %v6599, %v6587
      %v6601 = vadd.f32 %v6600, -0.33333147
      %v6602 = vmul.f32 %v6601, %v6587
      %v6603 = vmul.f32 %v6602, %v6586
      %v6604 = vadd.f32 %v6603, %v6586
      %vm6605 = vcmp.gt.f32.partialorder %v6569, %v6568
      %v6606 = vsub.f32 1.5707964, %v6604
      %v6607 = vsel %vm6605, %v6606, %v6604
      %vm6608 = vcmp.lt.f32.partialorder %v5825, 0.0
      %v6609 = vsub.f32 3.1415927, %v6607
      %v6610 = vsel %vm6608, %v6609, %v6607
      %vm6611 = vcmp.lt.s32.totalorder %v5825, 0
      %v6612 = vsel %vm6611, 3.1415927, 0.0
      %vm6613 = vcmp.eq.f32.partialorder %v5924, 0.0
      %v6614 = vsel %vm6613, %v6612, %v6610
      %vm6615 = vcmp.ne.f32.partialorder %v5825, %v5825
      %vm6616 = vcmp.ne.f32.partialorder %v5924, %v5924
      %vm6617 = vmor %vm6615, %vm6616
      %v6618 = vsel %vm6617, nan, %v6614
      %vm6619 = vcmp.lt.f32.partialorder %v5825, 0.0
      %v6620 = vsel %vm6619, 2.3561945, 0.7853982
      %vm6621 = vcmp.eq.s32.totalorder %v6568, inf
      %vm6622 = vcmp.eq.s32.totalorder %v6569, inf
      %vm6623 = vmand %vm6621, %vm6622
      %v6624 = vsel %vm6623, %v6620, %v6618
      %v6625 = vand.u32 2147483647, %v6624
      %v6626 = vand.u32 %v5924, 2147483648
      %v6627 = vor.u32 %v6625, %v6626
      %v6628 = vand.u32 2147483647, %v5826
      %v6629 = vand.u32 2147483647, %v5925
      %v6630 = vmin.f32 %v6628, %v6629
      %v6631 = vmax.f32 %v6628, %v6629
      %v6632 = vrcp.pop %v6631
      %v6633 = vmul.f32 %v6631, %v6632
      %v6634 = vsub.f32 1.0, %v6633
      %v6635 = vmul.f32 %v6632, %v6634
      %v6636 = vadd.f32 %v6632, %v6635
      %vm6637 = vweird.f32 %v6631
      %vm6638 = vweird.f32 %v6632
      %vm6639 = vmor %vm6637, %vm6638
      %v6640 = vsel %vm6639, %v6632, %v6636
      %v6641 = vand.u32 2147483647, %v6631
      %vm6642 = vcmp.eq.f32.partialorder %v6641, 8.507059e+37
      %v6643 = vand.u32 %v6631, 2147483648
      %v6644 = vor.u32 1.1754944e-38, %v6643
      %v6645 = vsel %vm6642, %v6644, %v6640
      %v6646 = vmul.f32 %v6630, %v6645
      %v6647 = vmul.f32 %v6646, %v6646
      %v6648 = vmul.f32 0.002785687, %v6647
      %v6649 = vadd.f32 %v6648, -0.015866
      %v6650 = vmul.f32 %v6649, %v6647
      %v6651 = vadd.f32 %v6650, 0.04247222
      %v6652 = vmul.f32 %v6651, %v6647
      %v6653 = vadd.f32 %v6652, -0.074975304
      %v6654 = vmul.f32 %v6653, %v6647
      %v6655 = vadd.f32 %v6654, 0.1064488
      %v6656 = vmul.f32 %v6655, %v6647
      %v6657 = vadd.f32 %v6656, -0.14207031
      %v6658 = vmul.f32 %v6657, %v6647
      %v6659 = vadd.f32 %v6658, 0.19993454
      %v6660 = vmul.f32 %v6659, %v6647
      %v6661 = vadd.f32 %v6660, -0.33333147
      %v6662 = vmul.f32 %v6661, %v6647
      %v6663 = vmul.f32 %v6662, %v6646
      %v6664 = vadd.f32 %v6663, %v6646
      %vm6665 = vcmp.gt.f32.partialorder %v6629, %v6628
      %v6666 = vsub.f32 1.5707964, %v6664
      %v6667 = vsel %vm6665, %v6666, %v6664
      %vm6668 = vcmp.lt.f32.partialorder %v5826, 0.0
      %v6669 = vsub.f32 3.1415927, %v6667
      %v6670 = vsel %vm6668, %v6669, %v6667
      %vm6671 = vcmp.lt.s32.totalorder %v5826, 0
      %v6672 = vsel %vm6671, 3.1415927, 0.0
      %vm6673 = vcmp.eq.f32.partialorder %v5925, 0.0
      %v6674 = vsel %vm6673, %v6672, %v6670
      %vm6675 = vcmp.ne.f32.partialorder %v5826, %v5826
      %vm6676 = vcmp.ne.f32.partialorder %v5925, %v5925
      %vm6677 = vmor %vm6675, %vm6676
      %v6678 = vsel %vm6677, nan, %v6674
      %vm6679 = vcmp.lt.f32.partialorder %v5826, 0.0
      %v6680 = vsel %vm6679, 2.3561945, 0.7853982
      %vm6681 = vcmp.eq.s32.totalorder %v6628, inf
      %vm6682 = vcmp.eq.s32.totalorder %v6629, inf
      %vm6683 = vmand %vm6681, %vm6682
      %v6684 = vsel %vm6683, %v6680, %v6678
      %v6685 = vand.u32 2147483647, %v6684
      %v6686 = vand.u32 %v5925, 2147483648
      %v6687 = vor.u32 %v6685, %v6686
      %v6688 = vand.u32 2147483647, %v5827
      %v6689 = vand.u32 2147483647, %v5926
      %v6690 = vmin.f32 %v6688, %v6689
      %v6691 = vmax.f32 %v6688, %v6689
      %v6692 = vrcp.pop %v6691
      %v6693 = vmul.f32 %v6691, %v6692
      %v6694 = vsub.f32 1.0, %v6693
      %v6695 = vmul.f32 %v6692, %v6694
      %v6696 = vadd.f32 %v6692, %v6695
      %vm6697 = vweird.f32 %v6691
      %vm6698 = vweird.f32 %v6692
      %vm6699 = vmor %vm6697, %vm6698
      %v6700 = vsel %vm6699, %v6692, %v6696
      %v6701 = vand.u32 2147483647, %v6691
      %vm6702 = vcmp.eq.f32.partialorder %v6701, 8.507059e+37
      %v6703 = vand.u32 %v6691, 2147483648
      %v6704 = vor.u32 1.1754944e-38, %v6703
      %v6705 = vsel %vm6702, %v6704, %v6700
      %v6706 = vmul.f32 %v6690, %v6705
      %v6707 = vmul.f32 %v6706, %v6706
      %v6708 = vmul.f32 0.002785687, %v6707
      %v6709 = vadd.f32 %v6708, -0.015866
      %v6710 = vmul.f32 %v6709, %v6707
      %v6711 = vadd.f32 %v6710, 0.04247222
      %v6712 = vmul.f32 %v6711, %v6707
      %v6713 = vadd.f32 %v6712, -0.074975304
      %v6714 = vmul.f32 %v6713, %v6707
      %v6715 = vadd.f32 %v6714, 0.1064488
      %v6716 = vmul.f32 %v6715, %v6707
      %v6717 = vadd.f32 %v6716, -0.14207031
      %v6718 = vmul.f32 %v6717, %v6707
      %v6719 = vadd.f32 %v6718, 0.19993454
      %v6720 = vmul.f32 %v6719, %v6707
      %v6721 = vadd.f32 %v6720, -0.33333147
      %v6722 = vmul.f32 %v6721, %v6707
      %v6723 = vmul.f32 %v6722, %v6706
      %v6724 = vadd.f32 %v6723, %v6706
      %vm6725 = vcmp.gt.f32.partialorder %v6689, %v6688
      %v6726 = vsub.f32 1.5707964, %v6724
      %v6727 = vsel %vm6725, %v6726, %v6724
      %vm6728 = vcmp.lt.f32.partialorder %v5827, 0.0
      %v6729 = vsub.f32 3.1415927, %v6727
      %v6730 = vsel %vm6728, %v6729, %v6727
      %vm6731 = vcmp.lt.s32.totalorder %v5827, 0
      %v6732 = vsel %vm6731, 3.1415927, 0.0
      %vm6733 = vcmp.eq.f32.partialorder %v5926, 0.0
      %v6734 = vsel %vm6733, %v6732, %v6730
      %vm6735 = vcmp.ne.f32.partialorder %v5827, %v5827
      %vm6736 = vcmp.ne.f32.partialorder %v5926, %v5926
      %vm6737 = vmor %vm6735, %vm6736
      %v6738 = vsel %vm6737, nan, %v6734
      %vm6739 = vcmp.lt.f32.partialorder %v5827, 0.0
      %v6740 = vsel %vm6739, 2.3561945, 0.7853982
      %vm6741 = vcmp.eq.s32.totalorder %v6688, inf
      %vm6742 = vcmp.eq.s32.totalorder %v6689, inf
      %vm6743 = vmand %vm6741, %vm6742
      %v6744 = vsel %vm6743, %v6740, %v6738
      %v6745 = vand.u32 2147483647, %v6744
      %v6746 = vand.u32 %v5926, 2147483648
      %v6747 = vor.u32 %v6745, %v6746
      %v6748 = vand.u32 2147483647, %v5828
      %v6749 = vand.u32 2147483647, %v5927
      %v6750 = vmin.f32 %v6748, %v6749
      %v6751 = vmax.f32 %v6748, %v6749
      %v6752 = vrcp.pop %v6751
      %v6753 = vmul.f32 %v6751, %v6752
      %v6754 = vsub.f32 1.0, %v6753
      %v6755 = vmul.f32 %v6752, %v6754
      %v6756 = vadd.f32 %v6752, %v6755
      %vm6757 = vweird.f32 %v6751
      %vm6758 = vweird.f32 %v6752
      %vm6759 = vmor %vm6757, %vm6758
      %v6760 = vsel %vm6759, %v6752, %v6756
      %v6761 = vand.u32 2147483647, %v6751
      %vm6762 = vcmp.eq.f32.partialorder %v6761, 8.507059e+37
      %v6763 = vand.u32 %v6751, 2147483648
      %v6764 = vor.u32 1.1754944e-38, %v6763
      %v6765 = vsel %vm6762, %v6764, %v6760
      %v6766 = vmul.f32 %v6750, %v6765
      %v6767 = vmul.f32 %v6766, %v6766
      %v6768 = vmul.f32 0.002785687, %v6767
      %v6769 = vadd.f32 %v6768, -0.015866
      %v6770 = vmul.f32 %v6769, %v6767
      %v6771 = vadd.f32 %v6770, 0.04247222
      %v6772 = vmul.f32 %v6771, %v6767
      %v6773 = vadd.f32 %v6772, -0.074975304
      %v6774 = vmul.f32 %v6773, %v6767
      %v6775 = vadd.f32 %v6774, 0.1064488
      %v6776 = vmul.f32 %v6775, %v6767
      %v6777 = vadd.f32 %v6776, -0.14207031
      %v6778 = vmul.f32 %v6777, %v6767
      %v6779 = vadd.f32 %v6778, 0.19993454
      %v6780 = vmul.f32 %v6779, %v6767
      %v6781 = vadd.f32 %v6780, -0.33333147
      %v6782 = vmul.f32 %v6781, %v6767
      %v6783 = vmul.f32 %v6782, %v6766
      %v6784 = vadd.f32 %v6783, %v6766
      %vm6785 = vcmp.gt.f32.partialorder %v6749, %v6748
      %v6786 = vsub.f32 1.5707964, %v6784
      %v6787 = vsel %vm6785, %v6786, %v6784
      %vm6788 = vcmp.lt.f32.partialorder %v5828, 0.0
      %v6789 = vsub.f32 3.1415927, %v6787
      %v6790 = vsel %vm6788, %v6789, %v6787
      %vm6791 = vcmp.lt.s32.totalorder %v5828, 0
      %v6792 = vsel %vm6791, 3.1415927, 0.0
      %vm6793 = vcmp.eq.f32.partialorder %v5927, 0.0
      %v6794 = vsel %vm6793, %v6792, %v6790
      %vm6795 = vcmp.ne.f32.partialorder %v5828, %v5828
      %vm6796 = vcmp.ne.f32.partialorder %v5927, %v5927
      %vm6797 = vmor %vm6795, %vm6796
      %v6798 = vsel %vm6797, nan, %v6794
      %vm6799 = vcmp.lt.f32.partialorder %v5828, 0.0
      %v6800 = vsel %vm6799, 2.3561945, 0.7853982
      %vm6801 = vcmp.eq.s32.totalorder %v6748, inf
      %vm6802 = vcmp.eq.s32.totalorder %v6749, inf
      %vm6803 = vmand %vm6801, %vm6802
      %v6804 = vsel %vm6803, %v6800, %v6798
      %v6805 = vand.u32 2147483647, %v6804
      %v6806 = vand.u32 %v5927, 2147483648
      %v6807 = vor.u32 %v6805, %v6806
      %v6808 = vand.u32 2147483647, %v5829
      %v6809 = vand.u32 2147483647, %v5928
      %v6810 = vmin.f32 %v6808, %v6809
      %v6811 = vmax.f32 %v6808, %v6809
      %v6812 = vrcp.pop %v6811
      %v6813 = vmul.f32 %v6811, %v6812
      %v6814 = vsub.f32 1.0, %v6813
      %v6815 = vmul.f32 %v6812, %v6814
      %v6816 = vadd.f32 %v6812, %v6815
      %vm6817 = vweird.f32 %v6811
      %vm6818 = vweird.f32 %v6812
      %vm6819 = vmor %vm6817, %vm6818
      %v6820 = vsel %vm6819, %v6812, %v6816
      %v6821 = vand.u32 2147483647, %v6811
      %vm6822 = vcmp.eq.f32.partialorder %v6821, 8.507059e+37
      %v6823 = vand.u32 %v6811, 2147483648
      %v6824 = vor.u32 1.1754944e-38, %v6823
      %v6825 = vsel %vm6822, %v6824, %v6820
      %v6826 = vmul.f32 %v6810, %v6825
      %v6827 = vmul.f32 %v6826, %v6826
      %v6828 = vmul.f32 0.002785687, %v6827
      %v6829 = vadd.f32 %v6828, -0.015866
      %v6830 = vmul.f32 %v6829, %v6827
      %v6831 = vadd.f32 %v6830, 0.04247222
      %v6832 = vmul.f32 %v6831, %v6827
      %v6833 = vadd.f32 %v6832, -0.074975304
      %v6834 = vmul.f32 %v6833, %v6827
      %v6835 = vadd.f32 %v6834, 0.1064488
      %v6836 = vmul.f32 %v6835, %v6827
      %v6837 = vadd.f32 %v6836, -0.14207031
      %v6838 = vmul.f32 %v6837, %v6827
      %v6839 = vadd.f32 %v6838, 0.19993454
      %v6840 = vmul.f32 %v6839, %v6827
      %v6841 = vadd.f32 %v6840, -0.33333147
      %v6842 = vmul.f32 %v6841, %v6827
      %v6843 = vmul.f32 %v6842, %v6826
      %v6844 = vadd.f32 %v6843, %v6826
      %vm6845 = vcmp.gt.f32.partialorder %v6809, %v6808
      %v6846 = vsub.f32 1.5707964, %v6844
      %v6847 = vsel %vm6845, %v6846, %v6844
      %vm6848 = vcmp.lt.f32.partialorder %v5829, 0.0
      %v6849 = vsub.f32 3.1415927, %v6847
      %v6850 = vsel %vm6848, %v6849, %v6847
      %vm6851 = vcmp.lt.s32.totalorder %v5829, 0
      %v6852 = vsel %vm6851, 3.1415927, 0.0
      %vm6853 = vcmp.eq.f32.partialorder %v5928, 0.0
      %v6854 = vsel %vm6853, %v6852, %v6850
      %vm6855 = vcmp.ne.f32.partialorder %v5829, %v5829
      %vm6856 = vcmp.ne.f32.partialorder %v5928, %v5928
      %vm6857 = vmor %vm6855, %vm6856
      %v6858 = vsel %vm6857, nan, %v6854
      %vm6859 = vcmp.lt.f32.partialorder %v5829, 0.0
      %v6860 = vsel %vm6859, 2.3561945, 0.7853982
      %vm6861 = vcmp.eq.s32.totalorder %v6808, inf
      %vm6862 = vcmp.eq.s32.totalorder %v6809, inf
      %vm6863 = vmand %vm6861, %vm6862
      %v6864 = vsel %vm6863, %v6860, %v6858
      %v6865 = vand.u32 2147483647, %v6864
      %v6866 = vand.u32 %v5928, 2147483648
      %v6867 = vor.u32 %v6865, %v6866
      %v6868 = vand.u32 2147483647, %v5830
      %v6869 = vand.u32 2147483647, %v5929
      %v6870 = vmin.f32 %v6868, %v6869
      %v6871 = vmax.f32 %v6868, %v6869
      %v6872 = vrcp.pop %v6871
      %v6873 = vmul.f32 %v6871, %v6872
      %v6874 = vsub.f32 1.0, %v6873
      %v6875 = vmul.f32 %v6872, %v6874
      %v6876 = vadd.f32 %v6872, %v6875
      %vm6877 = vweird.f32 %v6871
      %vm6878 = vweird.f32 %v6872
      %vm6879 = vmor %vm6877, %vm6878
      %v6880 = vsel %vm6879, %v6872, %v6876
      %v6881 = vand.u32 2147483647, %v6871
      %vm6882 = vcmp.eq.f32.partialorder %v6881, 8.507059e+37
      %v6883 = vand.u32 %v6871, 2147483648
      %v6884 = vor.u32 1.1754944e-38, %v6883
      %v6885 = vsel %vm6882, %v6884, %v6880
      %v6886 = vmul.f32 %v6870, %v6885
      %v6887 = vmul.f32 %v6886, %v6886
      %v6888 = vmul.f32 0.002785687, %v6887
      %v6889 = vadd.f32 %v6888, -0.015866
      %v6890 = vmul.f32 %v6889, %v6887
      %v6891 = vadd.f32 %v6890, 0.04247222
      %v6892 = vmul.f32 %v6891, %v6887
      %v6893 = vadd.f32 %v6892, -0.074975304
      %v6894 = vmul.f32 %v6893, %v6887
      %v6895 = vadd.f32 %v6894, 0.1064488
      %v6896 = vmul.f32 %v6895, %v6887
      %v6897 = vadd.f32 %v6896, -0.14207031
      %v6898 = vmul.f32 %v6897, %v6887
      %v6899 = vadd.f32 %v6898, 0.19993454
      %v6900 = vmul.f32 %v6899, %v6887
      %v6901 = vadd.f32 %v6900, -0.33333147
      %v6902 = vmul.f32 %v6901, %v6887
      %v6903 = vmul.f32 %v6902, %v6886
      %v6904 = vadd.f32 %v6903, %v6886
      %vm6905 = vcmp.gt.f32.partialorder %v6869, %v6868
      %v6906 = vsub.f32 1.5707964, %v6904
      %v6907 = vsel %vm6905, %v6906, %v6904
      %vm6908 = vcmp.lt.f32.partialorder %v5830, 0.0
      %v6909 = vsub.f32 3.1415927, %v6907
      %v6910 = vsel %vm6908, %v6909, %v6907
      %vm6911 = vcmp.lt.s32.totalorder %v5830, 0
      %v6912 = vsel %vm6911, 3.1415927, 0.0
      %vm6913 = vcmp.eq.f32.partialorder %v5929, 0.0
      %v6914 = vsel %vm6913, %v6912, %v6910
      %vm6915 = vcmp.ne.f32.partialorder %v5830, %v5830
      %vm6916 = vcmp.ne.f32.partialorder %v5929, %v5929
      %vm6917 = vmor %vm6915, %vm6916
      %v6918 = vsel %vm6917, nan, %v6914
      %vm6919 = vcmp.lt.f32.partialorder %v5830, 0.0
      %v6920 = vsel %vm6919, 2.3561945, 0.7853982
      %vm6921 = vcmp.eq.s32.totalorder %v6868, inf
      %vm6922 = vcmp.eq.s32.totalorder %v6869, inf
      %vm6923 = vmand %vm6921, %vm6922
      %v6924 = vsel %vm6923, %v6920, %v6918
      %v6925 = vand.u32 2147483647, %v6924
      %v6926 = vand.u32 %v5929, 2147483648
      %v6927 = vor.u32 %v6925, %v6926
      %v6928 = vand.u32 2147483647, %v5831
      %v6929 = vand.u32 2147483647, %v5930
      %v6930 = vmin.f32 %v6928, %v6929
      %v6931 = vmax.f32 %v6928, %v6929
      %v6932 = vrcp.pop %v6931
      %v6933 = vmul.f32 %v6931, %v6932
      %v6934 = vsub.f32 1.0, %v6933
      %v6935 = vmul.f32 %v6932, %v6934
      %v6936 = vadd.f32 %v6932, %v6935
      %vm6937 = vweird.f32 %v6931
      %vm6938 = vweird.f32 %v6932
      %vm6939 = vmor %vm6937, %vm6938
      %v6940 = vsel %vm6939, %v6932, %v6936
      %v6941 = vand.u32 2147483647, %v6931
      %vm6942 = vcmp.eq.f32.partialorder %v6941, 8.507059e+37
      %v6943 = vand.u32 %v6931, 2147483648
      %v6944 = vor.u32 1.1754944e-38, %v6943
      %v6945 = vsel %vm6942, %v6944, %v6940
      %v6946 = vmul.f32 %v6930, %v6945
      %v6947 = vmul.f32 %v6946, %v6946
      %v6948 = vmul.f32 0.002785687, %v6947
      %v6949 = vadd.f32 %v6948, -0.015866
      %v6950 = vmul.f32 %v6949, %v6947
      %v6951 = vadd.f32 %v6950, 0.04247222
      %v6952 = vmul.f32 %v6951, %v6947
      %v6953 = vadd.f32 %v6952, -0.074975304
      %v6954 = vmul.f32 %v6953, %v6947
      %v6955 = vadd.f32 %v6954, 0.1064488
      %v6956 = vmul.f32 %v6955, %v6947
      %v6957 = vadd.f32 %v6956, -0.14207031
      %v6958 = vmul.f32 %v6957, %v6947
      %v6959 = vadd.f32 %v6958, 0.19993454
      %v6960 = vmul.f32 %v6959, %v6947
      %v6961 = vadd.f32 %v6960, -0.33333147
      %v6962 = vmul.f32 %v6961, %v6947
      %v6963 = vmul.f32 %v6962, %v6946
      %v6964 = vadd.f32 %v6963, %v6946
      %vm6965 = vcmp.gt.f32.partialorder %v6929, %v6928
      %v6966 = vsub.f32 1.5707964, %v6964
      %v6967 = vsel %vm6965, %v6966, %v6964
      %vm6968 = vcmp.lt.f32.partialorder %v5831, 0.0
      %v6969 = vsub.f32 3.1415927, %v6967
      %v6970 = vsel %vm6968, %v6969, %v6967
      %vm6971 = vcmp.lt.s32.totalorder %v5831, 0
      %v6972 = vsel %vm6971, 3.1415927, 0.0
      %vm6973 = vcmp.eq.f32.partialorder %v5930, 0.0
      %v6974 = vsel %vm6973, %v6972, %v6970
      %vm6975 = vcmp.ne.f32.partialorder %v5831, %v5831
      %vm6976 = vcmp.ne.f32.partialorder %v5930, %v5930
      %vm6977 = vmor %vm6975, %vm6976
      %v6978 = vsel %vm6977, nan, %v6974
      %vm6979 = vcmp.lt.f32.partialorder %v5831, 0.0
      %v6980 = vsel %vm6979, 2.3561945, 0.7853982
      %vm6981 = vcmp.eq.s32.totalorder %v6928, inf
      %vm6982 = vcmp.eq.s32.totalorder %v6929, inf
      %vm6983 = vmand %vm6981, %vm6982
      %v6984 = vsel %vm6983, %v6980, %v6978
      %v6985 = vand.u32 2147483647, %v6984
      %v6986 = vand.u32 %v5930, 2147483648
      %v6987 = vor.u32 %v6985, %v6986
      %v6988 = vand.u32 2147483647, %v5832
      %v6989 = vand.u32 2147483647, %v5931
      %v6990 = vmin.f32 %v6988, %v6989
      %v6991 = vmax.f32 %v6988, %v6989
      %v6992 = vrcp.pop %v6991
      %v6993 = vmul.f32 %v6991, %v6992
      %v6994 = vsub.f32 1.0, %v6993
      %v6995 = vmul.f32 %v6992, %v6994
      %v6996 = vadd.f32 %v6992, %v6995
      %vm6997 = vweird.f32 %v6991
      %vm6998 = vweird.f32 %v6992
      %vm6999 = vmor %vm6997, %vm6998
      %v7000 = vsel %vm6999, %v6992, %v6996
      %v7001 = vand.u32 2147483647, %v6991
      %vm7002 = vcmp.eq.f32.partialorder %v7001, 8.507059e+37
      %v7003 = vand.u32 %v6991, 2147483648
      %v7004 = vor.u32 1.1754944e-38, %v7003
      %v7005 = vsel %vm7002, %v7004, %v7000
      %v7006 = vmul.f32 %v6990, %v7005
      %v7007 = vmul.f32 %v7006, %v7006
      %v7008 = vmul.f32 0.002785687, %v7007
      %v7009 = vadd.f32 %v7008, -0.015866
      %v7010 = vmul.f32 %v7009, %v7007
      %v7011 = vadd.f32 %v7010, 0.04247222
      %v7012 = vmul.f32 %v7011, %v7007
      %v7013 = vadd.f32 %v7012, -0.074975304
      %v7014 = vmul.f32 %v7013, %v7007
      %v7015 = vadd.f32 %v7014, 0.1064488
      %v7016 = vmul.f32 %v7015, %v7007
      %v7017 = vadd.f32 %v7016, -0.14207031
      %v7018 = vmul.f32 %v7017, %v7007
      %v7019 = vadd.f32 %v7018, 0.19993454
      %v7020 = vmul.f32 %v7019, %v7007
      %v7021 = vadd.f32 %v7020, -0.33333147
      %v7022 = vmul.f32 %v7021, %v7007
      %v7023 = vmul.f32 %v7022, %v7006
      %v7024 = vadd.f32 %v7023, %v7006
      %vm7025 = vcmp.gt.f32.partialorder %v6989, %v6988
      %v7026 = vsub.f32 1.5707964, %v7024
      %v7027 = vsel %vm7025, %v7026, %v7024
      %vm7028 = vcmp.lt.f32.partialorder %v5832, 0.0
      %v7029 = vsub.f32 3.1415927, %v7027
      %v7030 = vsel %vm7028, %v7029, %v7027
      %vm7031 = vcmp.lt.s32.totalorder %v5832, 0
      %v7032 = vsel %vm7031, 3.1415927, 0.0
      %vm7033 = vcmp.eq.f32.partialorder %v5931, 0.0
      %v7034 = vsel %vm7033, %v7032, %v7030
      %vm7035 = vcmp.ne.f32.partialorder %v5832, %v5832
      %vm7036 = vcmp.ne.f32.partialorder %v5931, %v5931
      %vm7037 = vmor %vm7035, %vm7036
      %v7038 = vsel %vm7037, nan, %v7034
      %vm7039 = vcmp.lt.f32.partialorder %v5832, 0.0
      %v7040 = vsel %vm7039, 2.3561945, 0.7853982
      %vm7041 = vcmp.eq.s32.totalorder %v6988, inf
      %vm7042 = vcmp.eq.s32.totalorder %v6989, inf
      %vm7043 = vmand %vm7041, %vm7042
      %v7044 = vsel %vm7043, %v7040, %v7038
      %v7045 = vand.u32 2147483647, %v7044
      %v7046 = vand.u32 %v5931, 2147483648
      %v7047 = vor.u32 %v7045, %v7046
      %v7048 = vand.u32 2147483647, %v5833
      %v7049 = vand.u32 2147483647, %v5932
      %v7050 = vmin.f32 %v7048, %v7049
      %v7051 = vmax.f32 %v7048, %v7049
      %v7052 = vrcp.pop %v7051
      %v7053 = vmul.f32 %v7051, %v7052
      %v7054 = vsub.f32 1.0, %v7053
      %v7055 = vmul.f32 %v7052, %v7054
      %v7056 = vadd.f32 %v7052, %v7055
      %vm7057 = vweird.f32 %v7051
      %vm7058 = vweird.f32 %v7052
      %vm7059 = vmor %vm7057, %vm7058
      %v7060 = vsel %vm7059, %v7052, %v7056
      %v7061 = vand.u32 2147483647, %v7051
      %vm7062 = vcmp.eq.f32.partialorder %v7061, 8.507059e+37
      %v7063 = vand.u32 %v7051, 2147483648
      %v7064 = vor.u32 1.1754944e-38, %v7063
      %v7065 = vsel %vm7062, %v7064, %v7060
      %v7066 = vmul.f32 %v7050, %v7065
      %v7067 = vmul.f32 %v7066, %v7066
      %v7068 = vmul.f32 0.002785687, %v7067
      %v7069 = vadd.f32 %v7068, -0.015866
      %v7070 = vmul.f32 %v7069, %v7067
      %v7071 = vadd.f32 %v7070, 0.04247222
      %v7072 = vmul.f32 %v7071, %v7067
      %v7073 = vadd.f32 %v7072, -0.074975304
      %v7074 = vmul.f32 %v7073, %v7067
      %v7075 = vadd.f32 %v7074, 0.1064488
      %v7076 = vmul.f32 %v7075, %v7067
      %v7077 = vadd.f32 %v7076, -0.14207031
      %v7078 = vmul.f32 %v7077, %v7067
      %v7079 = vadd.f32 %v7078, 0.19993454
      %v7080 = vmul.f32 %v7079, %v7067
      %v7081 = vadd.f32 %v7080, -0.33333147
      %v7082 = vmul.f32 %v7081, %v7067
      %v7083 = vmul.f32 %v7082, %v7066
      %v7084 = vadd.f32 %v7083, %v7066
      %vm7085 = vcmp.gt.f32.partialorder %v7049, %v7048
      %v7086 = vsub.f32 1.5707964, %v7084
      %v7087 = vsel %vm7085, %v7086, %v7084
      %vm7088 = vcmp.lt.f32.partialorder %v5833, 0.0
      %v7089 = vsub.f32 3.1415927, %v7087
      %v7090 = vsel %vm7088, %v7089, %v7087
      %vm7091 = vcmp.lt.s32.totalorder %v5833, 0
      %v7092 = vsel %vm7091, 3.1415927, 0.0
      %vm7093 = vcmp.eq.f32.partialorder %v5932, 0.0
      %v7094 = vsel %vm7093, %v7092, %v7090
      %vm7095 = vcmp.ne.f32.partialorder %v5833, %v5833
      %vm7096 = vcmp.ne.f32.partialorder %v5932, %v5932
      %vm7097 = vmor %vm7095, %vm7096
      %v7098 = vsel %vm7097, nan, %v7094
      %vm7099 = vcmp.lt.f32.partialorder %v5833, 0.0
      %v7100 = vsel %vm7099, 2.3561945, 0.7853982
      %vm7101 = vcmp.eq.s32.totalorder %v7048, inf
      %vm7102 = vcmp.eq.s32.totalorder %v7049, inf
      %vm7103 = vmand %vm7101, %vm7102
      %v7104 = vsel %vm7103, %v7100, %v7098
      %v7105 = vand.u32 2147483647, %v7104
      %v7106 = vand.u32 %v5932, 2147483648
      %v7107 = vor.u32 %v7105, %v7106
      %v7108 = vand.u32 2147483647, %v5834
      %v7109 = vand.u32 2147483647, %v5933
      %v7110 = vmin.f32 %v7108, %v7109
      %v7111 = vmax.f32 %v7108, %v7109
      %v7112 = vrcp.pop %v7111
      %v7113 = vmul.f32 %v7111, %v7112
      %v7114 = vsub.f32 1.0, %v7113
      %v7115 = vmul.f32 %v7112, %v7114
      %v7116 = vadd.f32 %v7112, %v7115
      %vm7117 = vweird.f32 %v7111
      %vm7118 = vweird.f32 %v7112
      %vm7119 = vmor %vm7117, %vm7118
      %v7120 = vsel %vm7119, %v7112, %v7116
      %v7121 = vand.u32 2147483647, %v7111
      %vm7122 = vcmp.eq.f32.partialorder %v7121, 8.507059e+37
      %v7123 = vand.u32 %v7111, 2147483648
      %v7124 = vor.u32 1.1754944e-38, %v7123
      %v7125 = vsel %vm7122, %v7124, %v7120
      %v7126 = vmul.f32 %v7110, %v7125
      %v7127 = vmul.f32 %v7126, %v7126
      %v7128 = vmul.f32 0.002785687, %v7127
      %v7129 = vadd.f32 %v7128, -0.015866
      %v7130 = vmul.f32 %v7129, %v7127
      %v7131 = vadd.f32 %v7130, 0.04247222
      %v7132 = vmul.f32 %v7131, %v7127
      %v7133 = vadd.f32 %v7132, -0.074975304
      %v7134 = vmul.f32 %v7133, %v7127
      %v7135 = vadd.f32 %v7134, 0.1064488
      %v7136 = vmul.f32 %v7135, %v7127
      %v7137 = vadd.f32 %v7136, -0.14207031
      %v7138 = vmul.f32 %v7137, %v7127
      %v7139 = vadd.f32 %v7138, 0.19993454
      %v7140 = vmul.f32 %v7139, %v7127
      %v7141 = vadd.f32 %v7140, -0.33333147
      %v7142 = vmul.f32 %v7141, %v7127
      %v7143 = vmul.f32 %v7142, %v7126
      %v7144 = vadd.f32 %v7143, %v7126
      %vm7145 = vcmp.gt.f32.partialorder %v7109, %v7108
      %v7146 = vsub.f32 1.5707964, %v7144
      %v7147 = vsel %vm7145, %v7146, %v7144
      %vm7148 = vcmp.lt.f32.partialorder %v5834, 0.0
      %v7149 = vsub.f32 3.1415927, %v7147
      %v7150 = vsel %vm7148, %v7149, %v7147
      %vm7151 = vcmp.lt.s32.totalorder %v5834, 0
      %v7152 = vsel %vm7151, 3.1415927, 0.0
      %vm7153 = vcmp.eq.f32.partialorder %v5933, 0.0
      %v7154 = vsel %vm7153, %v7152, %v7150
      %vm7155 = vcmp.ne.f32.partialorder %v5834, %v5834
      %vm7156 = vcmp.ne.f32.partialorder %v5933, %v5933
      %vm7157 = vmor %vm7155, %vm7156
      %v7158 = vsel %vm7157, nan, %v7154
      %vm7159 = vcmp.lt.f32.partialorder %v5834, 0.0
      %v7160 = vsel %vm7159, 2.3561945, 0.7853982
      %vm7161 = vcmp.eq.s32.totalorder %v7108, inf
      %vm7162 = vcmp.eq.s32.totalorder %v7109, inf
      %vm7163 = vmand %vm7161, %vm7162
      %v7164 = vsel %vm7163, %v7160, %v7158
      %v7165 = vand.u32 2147483647, %v7164
      %v7166 = vand.u32 %v5933, 2147483648
      %v7167 = vor.u32 %v7165, %v7166
      %v7168 = vand.u32 2147483647, %v5835
      %v7169 = vand.u32 2147483647, %v5934
      %v7170 = vmin.f32 %v7168, %v7169
      %v7171 = vmax.f32 %v7168, %v7169
      %v7172 = vrcp.pop %v7171
      %v7173 = vmul.f32 %v7171, %v7172
      %v7174 = vsub.f32 1.0, %v7173
      %v7175 = vmul.f32 %v7172, %v7174
      %v7176 = vadd.f32 %v7172, %v7175
      %vm7177 = vweird.f32 %v7171
      %vm7178 = vweird.f32 %v7172
      %vm7179 = vmor %vm7177, %vm7178
      %v7180 = vsel %vm7179, %v7172, %v7176
      %v7181 = vand.u32 2147483647, %v7171
      %vm7182 = vcmp.eq.f32.partialorder %v7181, 8.507059e+37
      %v7183 = vand.u32 %v7171, 2147483648
      %v7184 = vor.u32 1.1754944e-38, %v7183
      %v7185 = vsel %vm7182, %v7184, %v7180
      %v7186 = vmul.f32 %v7170, %v7185
      %v7187 = vmul.f32 %v7186, %v7186
      %v7188 = vmul.f32 0.002785687, %v7187
      %v7189 = vadd.f32 %v7188, -0.015866
      %v7190 = vmul.f32 %v7189, %v7187
      %v7191 = vadd.f32 %v7190, 0.04247222
      %v7192 = vmul.f32 %v7191, %v7187
      %v7193 = vadd.f32 %v7192, -0.074975304
      %v7194 = vmul.f32 %v7193, %v7187
      %v7195 = vadd.f32 %v7194, 0.1064488
      %v7196 = vmul.f32 %v7195, %v7187
      %v7197 = vadd.f32 %v7196, -0.14207031
      %v7198 = vmul.f32 %v7197, %v7187
      %v7199 = vadd.f32 %v7198, 0.19993454
      %v7200 = vmul.f32 %v7199, %v7187
      %v7201 = vadd.f32 %v7200, -0.33333147
      %v7202 = vmul.f32 %v7201, %v7187
      %v7203 = vmul.f32 %v7202, %v7186
      %v7204 = vadd.f32 %v7203, %v7186
      %vm7205 = vcmp.gt.f32.partialorder %v7169, %v7168
      %v7206 = vsub.f32 1.5707964, %v7204
      %v7207 = vsel %vm7205, %v7206, %v7204
      %vm7208 = vcmp.lt.f32.partialorder %v5835, 0.0
      %v7209 = vsub.f32 3.1415927, %v7207
      %v7210 = vsel %vm7208, %v7209, %v7207
      %vm7211 = vcmp.lt.s32.totalorder %v5835, 0
      %v7212 = vsel %vm7211, 3.1415927, 0.0
      %vm7213 = vcmp.eq.f32.partialorder %v5934, 0.0
      %v7214 = vsel %vm7213, %v7212, %v7210
      %vm7215 = vcmp.ne.f32.partialorder %v5835, %v5835
      %vm7216 = vcmp.ne.f32.partialorder %v5934, %v5934
      %vm7217 = vmor %vm7215, %vm7216
      %v7218 = vsel %vm7217, nan, %v7214
      %vm7219 = vcmp.lt.f32.partialorder %v5835, 0.0
      %v7220 = vsel %vm7219, 2.3561945, 0.7853982
      %vm7221 = vcmp.eq.s32.totalorder %v7168, inf
      %vm7222 = vcmp.eq.s32.totalorder %v7169, inf
      %vm7223 = vmand %vm7221, %vm7222
      %v7224 = vsel %vm7223, %v7220, %v7218
      %v7225 = vand.u32 2147483647, %v7224
      %v7226 = vand.u32 %v5934, 2147483648
      %v7227 = vor.u32 %v7225, %v7226
      %v7228 = vand.u32 2147483647, %v5836
      %v7229 = vand.u32 2147483647, %v5935
      %v7230 = vmin.f32 %v7228, %v7229
      %v7231 = vmax.f32 %v7228, %v7229
      %v7232 = vrcp.pop %v7231
      %v7233 = vmul.f32 %v7231, %v7232
      %v7234 = vsub.f32 1.0, %v7233
      %v7235 = vmul.f32 %v7232, %v7234
      %v7236 = vadd.f32 %v7232, %v7235
      %vm7237 = vweird.f32 %v7231
      %vm7238 = vweird.f32 %v7232
      %vm7239 = vmor %vm7237, %vm7238
      %v7240 = vsel %vm7239, %v7232, %v7236
      %v7241 = vand.u32 2147483647, %v7231
      %vm7242 = vcmp.eq.f32.partialorder %v7241, 8.507059e+37
      %v7243 = vand.u32 %v7231, 2147483648
      %v7244 = vor.u32 1.1754944e-38, %v7243
      %v7245 = vsel %vm7242, %v7244, %v7240
      %v7246 = vmul.f32 %v7230, %v7245
      %v7247 = vmul.f32 %v7246, %v7246
      %v7248 = vmul.f32 0.002785687, %v7247
      %v7249 = vadd.f32 %v7248, -0.015866
      %v7250 = vmul.f32 %v7249, %v7247
      %v7251 = vadd.f32 %v7250, 0.04247222
      %v7252 = vmul.f32 %v7251, %v7247
      %v7253 = vadd.f32 %v7252, -0.074975304
      %v7254 = vmul.f32 %v7253, %v7247
      %v7255 = vadd.f32 %v7254, 0.1064488
      %v7256 = vmul.f32 %v7255, %v7247
      %v7257 = vadd.f32 %v7256, -0.14207031
      %v7258 = vmul.f32 %v7257, %v7247
      %v7259 = vadd.f32 %v7258, 0.19993454
      %v7260 = vmul.f32 %v7259, %v7247
      %v7261 = vadd.f32 %v7260, -0.33333147
      %v7262 = vmul.f32 %v7261, %v7247
      %v7263 = vmul.f32 %v7262, %v7246
      %v7264 = vadd.f32 %v7263, %v7246
      %vm7265 = vcmp.gt.f32.partialorder %v7229, %v7228
      %v7266 = vsub.f32 1.5707964, %v7264
      %v7267 = vsel %vm7265, %v7266, %v7264
      %vm7268 = vcmp.lt.f32.partialorder %v5836, 0.0
      %v7269 = vsub.f32 3.1415927, %v7267
      %v7270 = vsel %vm7268, %v7269, %v7267
      %vm7271 = vcmp.lt.s32.totalorder %v5836, 0
      %v7272 = vsel %vm7271, 3.1415927, 0.0
      %vm7273 = vcmp.eq.f32.partialorder %v5935, 0.0
      %v7274 = vsel %vm7273, %v7272, %v7270
      %vm7275 = vcmp.ne.f32.partialorder %v5836, %v5836
      %vm7276 = vcmp.ne.f32.partialorder %v5935, %v5935
      %vm7277 = vmor %vm7275, %vm7276
      %v7278 = vsel %vm7277, nan, %v7274
      %vm7279 = vcmp.lt.f32.partialorder %v5836, 0.0
      %v7280 = vsel %vm7279, 2.3561945, 0.7853982
      %vm7281 = vcmp.eq.s32.totalorder %v7228, inf
      %vm7282 = vcmp.eq.s32.totalorder %v7229, inf
      %vm7283 = vmand %vm7281, %vm7282
      %v7284 = vsel %vm7283, %v7280, %v7278
      %v7285 = vand.u32 2147483647, %v7284
      %v7286 = vand.u32 %v5935, 2147483648
      %v7287 = vor.u32 %v7285, %v7286
      %v7288 = vand.u32 2147483647, %v5837
      %v7289 = vand.u32 2147483647, %v5936
      %v7290 = vmin.f32 %v7288, %v7289
      %v7291 = vmax.f32 %v7288, %v7289
      %v7292 = vrcp.pop %v7291
      %v7293 = vmul.f32 %v7291, %v7292
      %v7294 = vsub.f32 1.0, %v7293
      %v7295 = vmul.f32 %v7292, %v7294
      %v7296 = vadd.f32 %v7292, %v7295
      %vm7297 = vweird.f32 %v7291
      %vm7298 = vweird.f32 %v7292
      %vm7299 = vmor %vm7297, %vm7298
      %v7300 = vsel %vm7299, %v7292, %v7296
      %v7301 = vand.u32 2147483647, %v7291
      %vm7302 = vcmp.eq.f32.partialorder %v7301, 8.507059e+37
      %v7303 = vand.u32 %v7291, 2147483648
      %v7304 = vor.u32 1.1754944e-38, %v7303
      %v7305 = vsel %vm7302, %v7304, %v7300
      %v7306 = vmul.f32 %v7290, %v7305
      %v7307 = vmul.f32 %v7306, %v7306
      %v7308 = vmul.f32 0.002785687, %v7307
      %v7309 = vadd.f32 %v7308, -0.015866
      %v7310 = vmul.f32 %v7309, %v7307
      %v7311 = vadd.f32 %v7310, 0.04247222
      %v7312 = vmul.f32 %v7311, %v7307
      %v7313 = vadd.f32 %v7312, -0.074975304
      %v7314 = vmul.f32 %v7313, %v7307
      %v7315 = vadd.f32 %v7314, 0.1064488
      %v7316 = vmul.f32 %v7315, %v7307
      %v7317 = vadd.f32 %v7316, -0.14207031
      %v7318 = vmul.f32 %v7317, %v7307
      %v7319 = vadd.f32 %v7318, 0.19993454
      %v7320 = vmul.f32 %v7319, %v7307
      %v7321 = vadd.f32 %v7320, -0.33333147
      %v7322 = vmul.f32 %v7321, %v7307
      %v7323 = vmul.f32 %v7322, %v7306
      %v7324 = vadd.f32 %v7323, %v7306
      %vm7325 = vcmp.gt.f32.partialorder %v7289, %v7288
      %v7326 = vsub.f32 1.5707964, %v7324
      %v7327 = vsel %vm7325, %v7326, %v7324
      %vm7328 = vcmp.lt.f32.partialorder %v5837, 0.0
      %v7329 = vsub.f32 3.1415927, %v7327
      %v7330 = vsel %vm7328, %v7329, %v7327
      %vm7331 = vcmp.lt.s32.totalorder %v5837, 0
      %v7332 = vsel %vm7331, 3.1415927, 0.0
      %vm7333 = vcmp.eq.f32.partialorder %v5936, 0.0
      %v7334 = vsel %vm7333, %v7332, %v7330
      %vm7335 = vcmp.ne.f32.partialorder %v5837, %v5837
      %vm7336 = vcmp.ne.f32.partialorder %v5936, %v5936
      %vm7337 = vmor %vm7335, %vm7336
      %v7338 = vsel %vm7337, nan, %v7334
      %vm7339 = vcmp.lt.f32.partialorder %v5837, 0.0
      %v7340 = vsel %vm7339, 2.3561945, 0.7853982
      %vm7341 = vcmp.eq.s32.totalorder %v7288, inf
      %vm7342 = vcmp.eq.s32.totalorder %v7289, inf
      %vm7343 = vmand %vm7341, %vm7342
      %v7344 = vsel %vm7343, %v7340, %v7338
      %v7345 = vand.u32 2147483647, %v7344
      %v7346 = vand.u32 %v5936, 2147483648
      %v7347 = vor.u32 %v7345, %v7346
      %v7348 = vand.u32 2147483647, %v5838
      %v7349 = vand.u32 2147483647, %v5937
      %v7350 = vmin.f32 %v7348, %v7349
      %v7351 = vmax.f32 %v7348, %v7349
      %v7352 = vrcp.pop %v7351
      %v7353 = vmul.f32 %v7351, %v7352
      %v7354 = vsub.f32 1.0, %v7353
      %v7355 = vmul.f32 %v7352, %v7354
      %v7356 = vadd.f32 %v7352, %v7355
      %vm7357 = vweird.f32 %v7351
      %vm7358 = vweird.f32 %v7352
      %vm7359 = vmor %vm7357, %vm7358
      %v7360 = vsel %vm7359, %v7352, %v7356
      %v7361 = vand.u32 2147483647, %v7351
      %vm7362 = vcmp.eq.f32.partialorder %v7361, 8.507059e+37
      %v7363 = vand.u32 %v7351, 2147483648
      %v7364 = vor.u32 1.1754944e-38, %v7363
      %v7365 = vsel %vm7362, %v7364, %v7360
      %v7366 = vmul.f32 %v7350, %v7365
      %v7367 = vmul.f32 %v7366, %v7366
      %v7368 = vmul.f32 0.002785687, %v7367
      %v7369 = vadd.f32 %v7368, -0.015866
      %v7370 = vmul.f32 %v7369, %v7367
      %v7371 = vadd.f32 %v7370, 0.04247222
      %v7372 = vmul.f32 %v7371, %v7367
      %v7373 = vadd.f32 %v7372, -0.074975304
      %v7374 = vmul.f32 %v7373, %v7367
      %v7375 = vadd.f32 %v7374, 0.1064488
      %v7376 = vmul.f32 %v7375, %v7367
      %v7377 = vadd.f32 %v7376, -0.14207031
      %v7378 = vmul.f32 %v7377, %v7367
      %v7379 = vadd.f32 %v7378, 0.19993454
      %v7380 = vmul.f32 %v7379, %v7367
      %v7381 = vadd.f32 %v7380, -0.33333147
      %v7382 = vmul.f32 %v7381, %v7367
      %v7383 = vmul.f32 %v7382, %v7366
      %v7384 = vadd.f32 %v7383, %v7366
      %vm7385 = vcmp.gt.f32.partialorder %v7349, %v7348
      %v7386 = vsub.f32 1.5707964, %v7384
      %v7387 = vsel %vm7385, %v7386, %v7384
      %vm7388 = vcmp.lt.f32.partialorder %v5838, 0.0
      %v7389 = vsub.f32 3.1415927, %v7387
      %v7390 = vsel %vm7388, %v7389, %v7387
      %vm7391 = vcmp.lt.s32.totalorder %v5838, 0
      %v7392 = vsel %vm7391, 3.1415927, 0.0
      %vm7393 = vcmp.eq.f32.partialorder %v5937, 0.0
      %v7394 = vsel %vm7393, %v7392, %v7390
      %vm7395 = vcmp.ne.f32.partialorder %v5838, %v5838
      %vm7396 = vcmp.ne.f32.partialorder %v5937, %v5937
      %vm7397 = vmor %vm7395, %vm7396
      %v7398 = vsel %vm7397, nan, %v7394
      %vm7399 = vcmp.lt.f32.partialorder %v5838, 0.0
      %v7400 = vsel %vm7399, 2.3561945, 0.7853982
      %vm7401 = vcmp.eq.s32.totalorder %v7348, inf
      %vm7402 = vcmp.eq.s32.totalorder %v7349, inf
      %vm7403 = vmand %vm7401, %vm7402
      %v7404 = vsel %vm7403, %v7400, %v7398
      %v7405 = vand.u32 2147483647, %v7404
      %v7406 = vand.u32 %v5937, 2147483648
      %v7407 = vor.u32 %v7405, %v7406
      %v7408 = vand.u32 2147483647, %v5839
      %v7409 = vand.u32 2147483647, %v5938
      %v7410 = vmin.f32 %v7408, %v7409
      %v7411 = vmax.f32 %v7408, %v7409
      %v7412 = vrcp.pop %v7411
      %v7413 = vmul.f32 %v7411, %v7412
      %v7414 = vsub.f32 1.0, %v7413
      %v7415 = vmul.f32 %v7412, %v7414
      %v7416 = vadd.f32 %v7412, %v7415
      %vm7417 = vweird.f32 %v7411
      %vm7418 = vweird.f32 %v7412
      %vm7419 = vmor %vm7417, %vm7418
      %v7420 = vsel %vm7419, %v7412, %v7416
      %v7421 = vand.u32 2147483647, %v7411
      %vm7422 = vcmp.eq.f32.partialorder %v7421, 8.507059e+37
      %v7423 = vand.u32 %v7411, 2147483648
      %v7424 = vor.u32 1.1754944e-38, %v7423
      %v7425 = vsel %vm7422, %v7424, %v7420
      %v7426 = vmul.f32 %v7410, %v7425
      %v7427 = vmul.f32 %v7426, %v7426
      %v7428 = vmul.f32 0.002785687, %v7427
      %v7429 = vadd.f32 %v7428, -0.015866
      %v7430 = vmul.f32 %v7429, %v7427
      %v7431 = vadd.f32 %v7430, 0.04247222
      %v7432 = vmul.f32 %v7431, %v7427
      %v7433 = vadd.f32 %v7432, -0.074975304
      %v7434 = vmul.f32 %v7433, %v7427
      %v7435 = vadd.f32 %v7434, 0.1064488
      %v7436 = vmul.f32 %v7435, %v7427
      %v7437 = vadd.f32 %v7436, -0.14207031
      %v7438 = vmul.f32 %v7437, %v7427
      %v7439 = vadd.f32 %v7438, 0.19993454
      %v7440 = vmul.f32 %v7439, %v7427
      %v7441 = vadd.f32 %v7440, -0.33333147
      %v7442 = vmul.f32 %v7441, %v7427
      %v7443 = vmul.f32 %v7442, %v7426
      %v7444 = vadd.f32 %v7443, %v7426
      %vm7445 = vcmp.gt.f32.partialorder %v7409, %v7408
      %v7446 = vsub.f32 1.5707964, %v7444
      %v7447 = vsel %vm7445, %v7446, %v7444
      %vm7448 = vcmp.lt.f32.partialorder %v5839, 0.0
      %v7449 = vsub.f32 3.1415927, %v7447
      %v7450 = vsel %vm7448, %v7449, %v7447
      %vm7451 = vcmp.lt.s32.totalorder %v5839, 0
      %v7452 = vsel %vm7451, 3.1415927, 0.0
      %vm7453 = vcmp.eq.f32.partialorder %v5938, 0.0
      %v7454 = vsel %vm7453, %v7452, %v7450
      %vm7455 = vcmp.ne.f32.partialorder %v5839, %v5839
      %vm7456 = vcmp.ne.f32.partialorder %v5938, %v5938
      %vm7457 = vmor %vm7455, %vm7456
      %v7458 = vsel %vm7457, nan, %v7454
      %vm7459 = vcmp.lt.f32.partialorder %v5839, 0.0
      %v7460 = vsel %vm7459, 2.3561945, 0.7853982
      %vm7461 = vcmp.eq.s32.totalorder %v7408, inf
      %vm7462 = vcmp.eq.s32.totalorder %v7409, inf
      %vm7463 = vmand %vm7461, %vm7462
      %v7464 = vsel %vm7463, %v7460, %v7458
      %v7465 = vand.u32 2147483647, %v7464
      %v7466 = vand.u32 %v5938, 2147483648
      %v7467 = vor.u32 %v7465, %v7466
      %v7468 = vand.u32 2147483647, %v5840
      %v7469 = vand.u32 2147483647, %v5939
      %v7470 = vmin.f32 %v7468, %v7469
      %v7471 = vmax.f32 %v7468, %v7469
      %v7472 = vrcp.pop %v7471
      %v7473 = vmul.f32 %v7471, %v7472
      %v7474 = vsub.f32 1.0, %v7473
      %v7475 = vmul.f32 %v7472, %v7474
      %v7476 = vadd.f32 %v7472, %v7475
      %vm7477 = vweird.f32 %v7471
      %vm7478 = vweird.f32 %v7472
      %vm7479 = vmor %vm7477, %vm7478
      %v7480 = vsel %vm7479, %v7472, %v7476
      %v7481 = vand.u32 2147483647, %v7471
      %vm7482 = vcmp.eq.f32.partialorder %v7481, 8.507059e+37
      %v7483 = vand.u32 %v7471, 2147483648
      %v7484 = vor.u32 1.1754944e-38, %v7483
      %v7485 = vsel %vm7482, %v7484, %v7480
      %v7486 = vmul.f32 %v7470, %v7485
      %v7487 = vmul.f32 %v7486, %v7486
      %v7488 = vmul.f32 0.002785687, %v7487
      %v7489 = vadd.f32 %v7488, -0.015866
      %v7490 = vmul.f32 %v7489, %v7487
      %v7491 = vadd.f32 %v7490, 0.04247222
      %v7492 = vmul.f32 %v7491, %v7487
      %v7493 = vadd.f32 %v7492, -0.074975304
      %v7494 = vmul.f32 %v7493, %v7487
      %v7495 = vadd.f32 %v7494, 0.1064488
      %v7496 = vmul.f32 %v7495, %v7487
      %v7497 = vadd.f32 %v7496, -0.14207031
      %v7498 = vmul.f32 %v7497, %v7487
      %v7499 = vadd.f32 %v7498, 0.19993454
      %v7500 = vmul.f32 %v7499, %v7487
      %v7501 = vadd.f32 %v7500, -0.33333147
      %v7502 = vmul.f32 %v7501, %v7487
      %v7503 = vmul.f32 %v7502, %v7486
      %v7504 = vadd.f32 %v7503, %v7486
      %vm7505 = vcmp.gt.f32.partialorder %v7469, %v7468
      %v7506 = vsub.f32 1.5707964, %v7504
      %v7507 = vsel %vm7505, %v7506, %v7504
      %vm7508 = vcmp.lt.f32.partialorder %v5840, 0.0
      %v7509 = vsub.f32 3.1415927, %v7507
      %v7510 = vsel %vm7508, %v7509, %v7507
      %vm7511 = vcmp.lt.s32.totalorder %v5840, 0
      %v7512 = vsel %vm7511, 3.1415927, 0.0
      %vm7513 = vcmp.eq.f32.partialorder %v5939, 0.0
      %v7514 = vsel %vm7513, %v7512, %v7510
      %vm7515 = vcmp.ne.f32.partialorder %v5840, %v5840
      %vm7516 = vcmp.ne.f32.partialorder %v5939, %v5939
      %vm7517 = vmor %vm7515, %vm7516
      %v7518 = vsel %vm7517, nan, %v7514
      %vm7519 = vcmp.lt.f32.partialorder %v5840, 0.0
      %v7520 = vsel %vm7519, 2.3561945, 0.7853982
      %vm7521 = vcmp.eq.s32.totalorder %v7468, inf
      %vm7522 = vcmp.eq.s32.totalorder %v7469, inf
      %vm7523 = vmand %vm7521, %vm7522
      %v7524 = vsel %vm7523, %v7520, %v7518
      %v7525 = vand.u32 2147483647, %v7524
      %v7526 = vand.u32 %v5939, 2147483648
      %v7527 = vor.u32 %v7525, %v7526
      %v7528 = vand.u32 2147483647, %v5841
      %v7529 = vand.u32 2147483647, %v5940
      %v7530 = vmin.f32 %v7528, %v7529
      %v7531 = vmax.f32 %v7528, %v7529
      %v7532 = vrcp.pop %v7531
      %v7533 = vmul.f32 %v7531, %v7532
      %v7534 = vsub.f32 1.0, %v7533
      %v7535 = vmul.f32 %v7532, %v7534
      %v7536 = vadd.f32 %v7532, %v7535
      %vm7537 = vweird.f32 %v7531
      %vm7538 = vweird.f32 %v7532
      %vm7539 = vmor %vm7537, %vm7538
      %v7540 = vsel %vm7539, %v7532, %v7536
      %v7541 = vand.u32 2147483647, %v7531
      %vm7542 = vcmp.eq.f32.partialorder %v7541, 8.507059e+37
      %v7543 = vand.u32 %v7531, 2147483648
      %v7544 = vor.u32 1.1754944e-38, %v7543
      %v7545 = vsel %vm7542, %v7544, %v7540
      %v7546 = vmul.f32 %v7530, %v7545
      %v7547 = vmul.f32 %v7546, %v7546
      %v7548 = vmul.f32 0.002785687, %v7547
      %v7549 = vadd.f32 %v7548, -0.015866
      %v7550 = vmul.f32 %v7549, %v7547
      %v7551 = vadd.f32 %v7550, 0.04247222
      %v7552 = vmul.f32 %v7551, %v7547
      %v7553 = vadd.f32 %v7552, -0.074975304
      %v7554 = vmul.f32 %v7553, %v7547
      %v7555 = vadd.f32 %v7554, 0.1064488
      %v7556 = vmul.f32 %v7555, %v7547
      %v7557 = vadd.f32 %v7556, -0.14207031
      %v7558 = vmul.f32 %v7557, %v7547
      %v7559 = vadd.f32 %v7558, 0.19993454
      %v7560 = vmul.f32 %v7559, %v7547
      %v7561 = vadd.f32 %v7560, -0.33333147
      %v7562 = vmul.f32 %v7561, %v7547
      %v7563 = vmul.f32 %v7562, %v7546
      %v7564 = vadd.f32 %v7563, %v7546
      %vm7565 = vcmp.gt.f32.partialorder %v7529, %v7528
      %v7566 = vsub.f32 1.5707964, %v7564
      %v7567 = vsel %vm7565, %v7566, %v7564
      %vm7568 = vcmp.lt.f32.partialorder %v5841, 0.0
      %v7569 = vsub.f32 3.1415927, %v7567
      %v7570 = vsel %vm7568, %v7569, %v7567
      %vm7571 = vcmp.lt.s32.totalorder %v5841, 0
      %v7572 = vsel %vm7571, 3.1415927, 0.0
      %vm7573 = vcmp.eq.f32.partialorder %v5940, 0.0
      %v7574 = vsel %vm7573, %v7572, %v7570
      %vm7575 = vcmp.ne.f32.partialorder %v5841, %v5841
      %vm7576 = vcmp.ne.f32.partialorder %v5940, %v5940
      %vm7577 = vmor %vm7575, %vm7576
      %v7578 = vsel %vm7577, nan, %v7574
      %vm7579 = vcmp.lt.f32.partialorder %v5841, 0.0
      %v7580 = vsel %vm7579, 2.3561945, 0.7853982
      %vm7581 = vcmp.eq.s32.totalorder %v7528, inf
      %vm7582 = vcmp.eq.s32.totalorder %v7529, inf
      %vm7583 = vmand %vm7581, %vm7582
      %v7584 = vsel %vm7583, %v7580, %v7578
      %v7585 = vand.u32 2147483647, %v7584
      %v7586 = vand.u32 %v5940, 2147483648
      %v7587 = vor.u32 %v7585, %v7586
      %v7588 = vand.u32 2147483647, %v5842
      %v7589 = vand.u32 2147483647, %v5941
      %v7590 = vmin.f32 %v7588, %v7589
      %v7591 = vmax.f32 %v7588, %v7589
      %v7592 = vrcp.pop %v7591
      %v7593 = vmul.f32 %v7591, %v7592
      %v7594 = vsub.f32 1.0, %v7593
      %v7595 = vmul.f32 %v7592, %v7594
      %v7596 = vadd.f32 %v7592, %v7595
      %vm7597 = vweird.f32 %v7591
      %vm7598 = vweird.f32 %v7592
      %vm7599 = vmor %vm7597, %vm7598
      %v7600 = vsel %vm7599, %v7592, %v7596
      %v7601 = vand.u32 2147483647, %v7591
      %vm7602 = vcmp.eq.f32.partialorder %v7601, 8.507059e+37
      %v7603 = vand.u32 %v7591, 2147483648
      %v7604 = vor.u32 1.1754944e-38, %v7603
      %v7605 = vsel %vm7602, %v7604, %v7600
      %v7606 = vmul.f32 %v7590, %v7605
      %v7607 = vmul.f32 %v7606, %v7606
      %v7608 = vmul.f32 0.002785687, %v7607
      %v7609 = vadd.f32 %v7608, -0.015866
      %v7610 = vmul.f32 %v7609, %v7607
      %v7611 = vadd.f32 %v7610, 0.04247222
      %v7612 = vmul.f32 %v7611, %v7607
      %v7613 = vadd.f32 %v7612, -0.074975304
      %v7614 = vmul.f32 %v7613, %v7607
      %v7615 = vadd.f32 %v7614, 0.1064488
      %v7616 = vmul.f32 %v7615, %v7607
      %v7617 = vadd.f32 %v7616, -0.14207031
      %v7618 = vmul.f32 %v7617, %v7607
      %v7619 = vadd.f32 %v7618, 0.19993454
      %v7620 = vmul.f32 %v7619, %v7607
      %v7621 = vadd.f32 %v7620, -0.33333147
      %v7622 = vmul.f32 %v7621, %v7607
      %v7623 = vmul.f32 %v7622, %v7606
      %v7624 = vadd.f32 %v7623, %v7606
      %vm7625 = vcmp.gt.f32.partialorder %v7589, %v7588
      %v7626 = vsub.f32 1.5707964, %v7624
      %v7627 = vsel %vm7625, %v7626, %v7624
      %vm7628 = vcmp.lt.f32.partialorder %v5842, 0.0
      %v7629 = vsub.f32 3.1415927, %v7627
      %v7630 = vsel %vm7628, %v7629, %v7627
      %vm7631 = vcmp.lt.s32.totalorder %v5842, 0
      %v7632 = vsel %vm7631, 3.1415927, 0.0
      %vm7633 = vcmp.eq.f32.partialorder %v5941, 0.0
      %v7634 = vsel %vm7633, %v7632, %v7630
      %vm7635 = vcmp.ne.f32.partialorder %v5842, %v5842
      %vm7636 = vcmp.ne.f32.partialorder %v5941, %v5941
      %vm7637 = vmor %vm7635, %vm7636
      %v7638 = vsel %vm7637, nan, %v7634
      %vm7639 = vcmp.lt.f32.partialorder %v5842, 0.0
      %v7640 = vsel %vm7639, 2.3561945, 0.7853982
      %vm7641 = vcmp.eq.s32.totalorder %v7588, inf
      %vm7642 = vcmp.eq.s32.totalorder %v7589, inf
      %vm7643 = vmand %vm7641, %vm7642
      %v7644 = vsel %vm7643, %v7640, %v7638
      %v7645 = vand.u32 2147483647, %v7644
      %v7646 = vand.u32 %v5941, 2147483648
      %v7647 = vor.u32 %v7645, %v7646
      %v7648 = vand.u32 2147483647, %v5843
      %v7649 = vand.u32 2147483647, %v5942
      %v7650 = vmin.f32 %v7648, %v7649
      %v7651 = vmax.f32 %v7648, %v7649
      %v7652 = vrcp.pop %v7651
      %v7653 = vmul.f32 %v7651, %v7652
      %v7654 = vsub.f32 1.0, %v7653
      %v7655 = vmul.f32 %v7652, %v7654
      %v7656 = vadd.f32 %v7652, %v7655
      %vm7657 = vweird.f32 %v7651
      %vm7658 = vweird.f32 %v7652
      %vm7659 = vmor %vm7657, %vm7658
      %v7660 = vsel %vm7659, %v7652, %v7656
      %v7661 = vand.u32 2147483647, %v7651
      %vm7662 = vcmp.eq.f32.partialorder %v7661, 8.507059e+37
      %v7663 = vand.u32 %v7651, 2147483648
      %v7664 = vor.u32 1.1754944e-38, %v7663
      %v7665 = vsel %vm7662, %v7664, %v7660
      %v7666 = vmul.f32 %v7650, %v7665
      %v7667 = vmul.f32 %v7666, %v7666
      %v7668 = vmul.f32 0.002785687, %v7667
      %v7669 = vadd.f32 %v7668, -0.015866
      %v7670 = vmul.f32 %v7669, %v7667
      %v7671 = vadd.f32 %v7670, 0.04247222
      %v7672 = vmul.f32 %v7671, %v7667
      %v7673 = vadd.f32 %v7672, -0.074975304
      %v7674 = vmul.f32 %v7673, %v7667
      %v7675 = vadd.f32 %v7674, 0.1064488
      %v7676 = vmul.f32 %v7675, %v7667
      %v7677 = vadd.f32 %v7676, -0.14207031
      %v7678 = vmul.f32 %v7677, %v7667
      %v7679 = vadd.f32 %v7678, 0.19993454
      %v7680 = vmul.f32 %v7679, %v7667
      %v7681 = vadd.f32 %v7680, -0.33333147
      %v7682 = vmul.f32 %v7681, %v7667
      %v7683 = vmul.f32 %v7682, %v7666
      %v7684 = vadd.f32 %v7683, %v7666
      %vm7685 = vcmp.gt.f32.partialorder %v7649, %v7648
      %v7686 = vsub.f32 1.5707964, %v7684
      %v7687 = vsel %vm7685, %v7686, %v7684
      %vm7688 = vcmp.lt.f32.partialorder %v5843, 0.0
      %v7689 = vsub.f32 3.1415927, %v7687
      %v7690 = vsel %vm7688, %v7689, %v7687
      %vm7691 = vcmp.lt.s32.totalorder %v5843, 0
      %v7692 = vsel %vm7691, 3.1415927, 0.0
      %vm7693 = vcmp.eq.f32.partialorder %v5942, 0.0
      %v7694 = vsel %vm7693, %v7692, %v7690
      %vm7695 = vcmp.ne.f32.partialorder %v5843, %v5843
      %vm7696 = vcmp.ne.f32.partialorder %v5942, %v5942
      %vm7697 = vmor %vm7695, %vm7696
      %v7698 = vsel %vm7697, nan, %v7694
      %vm7699 = vcmp.lt.f32.partialorder %v5843, 0.0
      %v7700 = vsel %vm7699, 2.3561945, 0.7853982
      %vm7701 = vcmp.eq.s32.totalorder %v7648, inf
      %vm7702 = vcmp.eq.s32.totalorder %v7649, inf
      %vm7703 = vmand %vm7701, %vm7702
      %v7704 = vsel %vm7703, %v7700, %v7698
      %v7705 = vand.u32 2147483647, %v7704
      %v7706 = vand.u32 %v5942, 2147483648
      %v7707 = vor.u32 %v7705, %v7706
      %v7708 = vand.u32 2147483647, %v5844
      %v7709 = vand.u32 2147483647, %v5943
      %v7710 = vmin.f32 %v7708, %v7709
      %v7711 = vmax.f32 %v7708, %v7709
      %v7712 = vrcp.pop %v7711
      %v7713 = vmul.f32 %v7711, %v7712
      %v7714 = vsub.f32 1.0, %v7713
      %v7715 = vmul.f32 %v7712, %v7714
      %v7716 = vadd.f32 %v7712, %v7715
      %vm7717 = vweird.f32 %v7711
      %vm7718 = vweird.f32 %v7712
      %vm7719 = vmor %vm7717, %vm7718
      %v7720 = vsel %vm7719, %v7712, %v7716
      %v7721 = vand.u32 2147483647, %v7711
      %vm7722 = vcmp.eq.f32.partialorder %v7721, 8.507059e+37
      %v7723 = vand.u32 %v7711, 2147483648
      %v7724 = vor.u32 1.1754944e-38, %v7723
      %v7725 = vsel %vm7722, %v7724, %v7720
      %v7726 = vmul.f32 %v7710, %v7725
      %v7727 = vmul.f32 %v7726, %v7726
      %v7728 = vmul.f32 0.002785687, %v7727
      %v7729 = vadd.f32 %v7728, -0.015866
      %v7730 = vmul.f32 %v7729, %v7727
      %v7731 = vadd.f32 %v7730, 0.04247222
      %v7732 = vmul.f32 %v7731, %v7727
      %v7733 = vadd.f32 %v7732, -0.074975304
      %v7734 = vmul.f32 %v7733, %v7727
      %v7735 = vadd.f32 %v7734, 0.1064488
      %v7736 = vmul.f32 %v7735, %v7727
      %v7737 = vadd.f32 %v7736, -0.14207031
      %v7738 = vmul.f32 %v7737, %v7727
      %v7739 = vadd.f32 %v7738, 0.19993454
      %v7740 = vmul.f32 %v7739, %v7727
      %v7741 = vadd.f32 %v7740, -0.33333147
      %v7742 = vmul.f32 %v7741, %v7727
      %v7743 = vmul.f32 %v7742, %v7726
      %v7744 = vadd.f32 %v7743, %v7726
      %vm7745 = vcmp.gt.f32.partialorder %v7709, %v7708
      %v7746 = vsub.f32 1.5707964, %v7744
      %v7747 = vsel %vm7745, %v7746, %v7744
      %vm7748 = vcmp.lt.f32.partialorder %v5844, 0.0
      %v7749 = vsub.f32 3.1415927, %v7747
      %v7750 = vsel %vm7748, %v7749, %v7747
      %vm7751 = vcmp.lt.s32.totalorder %v5844, 0
      %v7752 = vsel %vm7751, 3.1415927, 0.0
      %vm7753 = vcmp.eq.f32.partialorder %v5943, 0.0
      %v7754 = vsel %vm7753, %v7752, %v7750
      %vm7755 = vcmp.ne.f32.partialorder %v5844, %v5844
      %vm7756 = vcmp.ne.f32.partialorder %v5943, %v5943
      %vm7757 = vmor %vm7755, %vm7756
      %v7758 = vsel %vm7757, nan, %v7754
      %vm7759 = vcmp.lt.f32.partialorder %v5844, 0.0
      %v7760 = vsel %vm7759, 2.3561945, 0.7853982
      %vm7761 = vcmp.eq.s32.totalorder %v7708, inf
      %vm7762 = vcmp.eq.s32.totalorder %v7709, inf
      %vm7763 = vmand %vm7761, %vm7762
      %v7764 = vsel %vm7763, %v7760, %v7758
      %v7765 = vand.u32 2147483647, %v7764
      %v7766 = vand.u32 %v5943, 2147483648
      %v7767 = vor.u32 %v7765, %v7766
      %v7768 = vand.u32 2147483647, %v5845
      %v7769 = vand.u32 2147483647, %v5944
      %v7770 = vmin.f32 %v7768, %v7769
      %v7771 = vmax.f32 %v7768, %v7769
      %v7772 = vrcp.pop %v7771
      %v7773 = vmul.f32 %v7771, %v7772
      %v7774 = vsub.f32 1.0, %v7773
      %v7775 = vmul.f32 %v7772, %v7774
      %v7776 = vadd.f32 %v7772, %v7775
      %vm7777 = vweird.f32 %v7771
      %vm7778 = vweird.f32 %v7772
      %vm7779 = vmor %vm7777, %vm7778
      %v7780 = vsel %vm7779, %v7772, %v7776
      %v7781 = vand.u32 2147483647, %v7771
      %vm7782 = vcmp.eq.f32.partialorder %v7781, 8.507059e+37
      %v7783 = vand.u32 %v7771, 2147483648
      %v7784 = vor.u32 1.1754944e-38, %v7783
      %v7785 = vsel %vm7782, %v7784, %v7780
      %v7786 = vmul.f32 %v7770, %v7785
      %v7787 = vmul.f32 %v7786, %v7786
      %v7788 = vmul.f32 0.002785687, %v7787
      %v7789 = vadd.f32 %v7788, -0.015866
      %v7790 = vmul.f32 %v7789, %v7787
      %v7791 = vadd.f32 %v7790, 0.04247222
      %v7792 = vmul.f32 %v7791, %v7787
      %v7793 = vadd.f32 %v7792, -0.074975304
      %v7794 = vmul.f32 %v7793, %v7787
      %v7795 = vadd.f32 %v7794, 0.1064488
      %v7796 = vmul.f32 %v7795, %v7787
      %v7797 = vadd.f32 %v7796, -0.14207031
      %v7798 = vmul.f32 %v7797, %v7787
      %v7799 = vadd.f32 %v7798, 0.19993454
      %v7800 = vmul.f32 %v7799, %v7787
      %v7801 = vadd.f32 %v7800, -0.33333147
      %v7802 = vmul.f32 %v7801, %v7787
      %v7803 = vmul.f32 %v7802, %v7786
      %v7804 = vadd.f32 %v7803, %v7786
      %vm7805 = vcmp.gt.f32.partialorder %v7769, %v7768
      %v7806 = vsub.f32 1.5707964, %v7804
      %v7807 = vsel %vm7805, %v7806, %v7804
      %vm7808 = vcmp.lt.f32.partialorder %v5845, 0.0
      %v7809 = vsub.f32 3.1415927, %v7807
      %v7810 = vsel %vm7808, %v7809, %v7807
      %vm7811 = vcmp.lt.s32.totalorder %v5845, 0
      %v7812 = vsel %vm7811, 3.1415927, 0.0
      %vm7813 = vcmp.eq.f32.partialorder %v5944, 0.0
      %v7814 = vsel %vm7813, %v7812, %v7810
      %vm7815 = vcmp.ne.f32.partialorder %v5845, %v5845
      %vm7816 = vcmp.ne.f32.partialorder %v5944, %v5944
      %vm7817 = vmor %vm7815, %vm7816
      %v7818 = vsel %vm7817, nan, %v7814
      %vm7819 = vcmp.lt.f32.partialorder %v5845, 0.0
      %v7820 = vsel %vm7819, 2.3561945, 0.7853982
      %vm7821 = vcmp.eq.s32.totalorder %v7768, inf
      %vm7822 = vcmp.eq.s32.totalorder %v7769, inf
      %vm7823 = vmand %vm7821, %vm7822
      %v7824 = vsel %vm7823, %v7820, %v7818
      %v7825 = vand.u32 2147483647, %v7824
      %v7826 = vand.u32 %v5944, 2147483648
      %v7827 = vor.u32 %v7825, %v7826
      %v7828 = vand.u32 2147483647, %v5846
      %v7829 = vand.u32 2147483647, %v5945
      %v7830 = vmin.f32 %v7828, %v7829
      %v7831 = vmax.f32 %v7828, %v7829
      %v7832 = vrcp.pop %v7831
      %v7833 = vmul.f32 %v7831, %v7832
      %v7834 = vsub.f32 1.0, %v7833
      %v7835 = vmul.f32 %v7832, %v7834
      %v7836 = vadd.f32 %v7832, %v7835
      %vm7837 = vweird.f32 %v7831
      %vm7838 = vweird.f32 %v7832
      %vm7839 = vmor %vm7837, %vm7838
      %v7840 = vsel %vm7839, %v7832, %v7836
      %v7841 = vand.u32 2147483647, %v7831
      %vm7842 = vcmp.eq.f32.partialorder %v7841, 8.507059e+37
      %v7843 = vand.u32 %v7831, 2147483648
      %v7844 = vor.u32 1.1754944e-38, %v7843
      %v7845 = vsel %vm7842, %v7844, %v7840
      %v7846 = vmul.f32 %v7830, %v7845
      %v7847 = vmul.f32 %v7846, %v7846
      %v7848 = vmul.f32 0.002785687, %v7847
      %v7849 = vadd.f32 %v7848, -0.015866
      %v7850 = vmul.f32 %v7849, %v7847
      %v7851 = vadd.f32 %v7850, 0.04247222
      %v7852 = vmul.f32 %v7851, %v7847
      %v7853 = vadd.f32 %v7852, -0.074975304
      %v7854 = vmul.f32 %v7853, %v7847
      %v7855 = vadd.f32 %v7854, 0.1064488
      %v7856 = vmul.f32 %v7855, %v7847
      %v7857 = vadd.f32 %v7856, -0.14207031
      %v7858 = vmul.f32 %v7857, %v7847
      %v7859 = vadd.f32 %v7858, 0.19993454
      %v7860 = vmul.f32 %v7859, %v7847
      %v7861 = vadd.f32 %v7860, -0.33333147
      %v7862 = vmul.f32 %v7861, %v7847
      %v7863 = vmul.f32 %v7862, %v7846
      %v7864 = vadd.f32 %v7863, %v7846
      %vm7865 = vcmp.gt.f32.partialorder %v7829, %v7828
      %v7866 = vsub.f32 1.5707964, %v7864
      %v7867 = vsel %vm7865, %v7866, %v7864
      %vm7868 = vcmp.lt.f32.partialorder %v5846, 0.0
      %v7869 = vsub.f32 3.1415927, %v7867
      %v7870 = vsel %vm7868, %v7869, %v7867
      %vm7871 = vcmp.lt.s32.totalorder %v5846, 0
      %v7872 = vsel %vm7871, 3.1415927, 0.0
      %vm7873 = vcmp.eq.f32.partialorder %v5945, 0.0
      %v7874 = vsel %vm7873, %v7872, %v7870
      %vm7875 = vcmp.ne.f32.partialorder %v5846, %v5846
      %vm7876 = vcmp.ne.f32.partialorder %v5945, %v5945
      %vm7877 = vmor %vm7875, %vm7876
      %v7878 = vsel %vm7877, nan, %v7874
      %vm7879 = vcmp.lt.f32.partialorder %v5846, 0.0
      %v7880 = vsel %vm7879, 2.3561945, 0.7853982
      %vm7881 = vcmp.eq.s32.totalorder %v7828, inf
      %vm7882 = vcmp.eq.s32.totalorder %v7829, inf
      %vm7883 = vmand %vm7881, %vm7882
      %v7884 = vsel %vm7883, %v7880, %v7878
      %v7885 = vand.u32 2147483647, %v7884
      %v7886 = vand.u32 %v5945, 2147483648
      %v7887 = vor.u32 %v7885, %v7886
      %v7888 = vand.u32 2147483647, %v5847
      %v7889 = vand.u32 2147483647, %v5946
      %v7890 = vmin.f32 %v7888, %v7889
      %v7891 = vmax.f32 %v7888, %v7889
      %v7892 = vrcp.pop %v7891
      %v7893 = vmul.f32 %v7891, %v7892
      %v7894 = vsub.f32 1.0, %v7893
      %v7895 = vmul.f32 %v7892, %v7894
      %v7896 = vadd.f32 %v7892, %v7895
      %vm7897 = vweird.f32 %v7891
      %vm7898 = vweird.f32 %v7892
      %vm7899 = vmor %vm7897, %vm7898
      %v7900 = vsel %vm7899, %v7892, %v7896
      %v7901 = vand.u32 2147483647, %v7891
      %vm7902 = vcmp.eq.f32.partialorder %v7901, 8.507059e+37
      %v7903 = vand.u32 %v7891, 2147483648
      %v7904 = vor.u32 1.1754944e-38, %v7903
      %v7905 = vsel %vm7902, %v7904, %v7900
      %v7906 = vmul.f32 %v7890, %v7905
      %v7907 = vmul.f32 %v7906, %v7906
      %v7908 = vmul.f32 0.002785687, %v7907
      %v7909 = vadd.f32 %v7908, -0.015866
      %v7910 = vmul.f32 %v7909, %v7907
      %v7911 = vadd.f32 %v7910, 0.04247222
      %v7912 = vmul.f32 %v7911, %v7907
      %v7913 = vadd.f32 %v7912, -0.074975304
      %v7914 = vmul.f32 %v7913, %v7907
      %v7915 = vadd.f32 %v7914, 0.1064488
      %v7916 = vmul.f32 %v7915, %v7907
      %v7917 = vadd.f32 %v7916, -0.14207031
      %v7918 = vmul.f32 %v7917, %v7907
      %v7919 = vadd.f32 %v7918, 0.19993454
      %v7920 = vmul.f32 %v7919, %v7907
      %v7921 = vadd.f32 %v7920, -0.33333147
      %v7922 = vmul.f32 %v7921, %v7907
      %v7923 = vmul.f32 %v7922, %v7906
      %v7924 = vadd.f32 %v7923, %v7906
      %vm7925 = vcmp.gt.f32.partialorder %v7889, %v7888
      %v7926 = vsub.f32 1.5707964, %v7924
      %v7927 = vsel %vm7925, %v7926, %v7924
      %vm7928 = vcmp.lt.f32.partialorder %v5847, 0.0
      %v7929 = vsub.f32 3.1415927, %v7927
      %v7930 = vsel %vm7928, %v7929, %v7927
      %vm7931 = vcmp.lt.s32.totalorder %v5847, 0
      %v7932 = vsel %vm7931, 3.1415927, 0.0
      %vm7933 = vcmp.eq.f32.partialorder %v5946, 0.0
      %v7934 = vsel %vm7933, %v7932, %v7930
      %vm7935 = vcmp.ne.f32.partialorder %v5847, %v5847
      %vm7936 = vcmp.ne.f32.partialorder %v5946, %v5946
      %vm7937 = vmor %vm7935, %vm7936
      %v7938 = vsel %vm7937, nan, %v7934
      %vm7939 = vcmp.lt.f32.partialorder %v5847, 0.0
      %v7940 = vsel %vm7939, 2.3561945, 0.7853982
      %vm7941 = vcmp.eq.s32.totalorder %v7888, inf
      %vm7942 = vcmp.eq.s32.totalorder %v7889, inf
      %vm7943 = vmand %vm7941, %vm7942
      %v7944 = vsel %vm7943, %v7940, %v7938
      %v7945 = vand.u32 2147483647, %v7944
      %v7946 = vand.u32 %v5946, 2147483648
      %v7947 = vor.u32 %v7945, %v7946
      %v7948 = vand.u32 2147483647, %v5848
      %v7949 = vand.u32 2147483647, %v5947
      %v7950 = vmin.f32 %v7948, %v7949
      %v7951 = vmax.f32 %v7948, %v7949
      %v7952 = vrcp.pop %v7951
      %v7953 = vmul.f32 %v7951, %v7952
      %v7954 = vsub.f32 1.0, %v7953
      %v7955 = vmul.f32 %v7952, %v7954
      %v7956 = vadd.f32 %v7952, %v7955
      %vm7957 = vweird.f32 %v7951
      %vm7958 = vweird.f32 %v7952
      %vm7959 = vmor %vm7957, %vm7958
      %v7960 = vsel %vm7959, %v7952, %v7956
      %v7961 = vand.u32 2147483647, %v7951
      %vm7962 = vcmp.eq.f32.partialorder %v7961, 8.507059e+37
      %v7963 = vand.u32 %v7951, 2147483648
      %v7964 = vor.u32 1.1754944e-38, %v7963
      %v7965 = vsel %vm7962, %v7964, %v7960
      %v7966 = vmul.f32 %v7950, %v7965
      %v7967 = vmul.f32 %v7966, %v7966
      %v7968 = vmul.f32 0.002785687, %v7967
      %v7969 = vadd.f32 %v7968, -0.015866
      %v7970 = vmul.f32 %v7969, %v7967
      %v7971 = vadd.f32 %v7970, 0.04247222
      %v7972 = vmul.f32 %v7971, %v7967
      %v7973 = vadd.f32 %v7972, -0.074975304
      %v7974 = vmul.f32 %v7973, %v7967
      %v7975 = vadd.f32 %v7974, 0.1064488
      %v7976 = vmul.f32 %v7975, %v7967
      %v7977 = vadd.f32 %v7976, -0.14207031
      %v7978 = vmul.f32 %v7977, %v7967
      %v7979 = vadd.f32 %v7978, 0.19993454
      %v7980 = vmul.f32 %v7979, %v7967
      %v7981 = vadd.f32 %v7980, -0.33333147
      %v7982 = vmul.f32 %v7981, %v7967
      %v7983 = vmul.f32 %v7982, %v7966
      %v7984 = vadd.f32 %v7983, %v7966
      %vm7985 = vcmp.gt.f32.partialorder %v7949, %v7948
      %v7986 = vsub.f32 1.5707964, %v7984
      %v7987 = vsel %vm7985, %v7986, %v7984
      %vm7988 = vcmp.lt.f32.partialorder %v5848, 0.0
      %v7989 = vsub.f32 3.1415927, %v7987
      %v7990 = vsel %vm7988, %v7989, %v7987
      %vm7991 = vcmp.lt.s32.totalorder %v5848, 0
      %v7992 = vsel %vm7991, 3.1415927, 0.0
      %vm7993 = vcmp.eq.f32.partialorder %v5947, 0.0
      %v7994 = vsel %vm7993, %v7992, %v7990
      %vm7995 = vcmp.ne.f32.partialorder %v5848, %v5848
      %vm7996 = vcmp.ne.f32.partialorder %v5947, %v5947
      %vm7997 = vmor %vm7995, %vm7996
      %v7998 = vsel %vm7997, nan, %v7994
      %vm7999 = vcmp.lt.f32.partialorder %v5848, 0.0
      %v8000 = vsel %vm7999, 2.3561945, 0.7853982
      %vm8001 = vcmp.eq.s32.totalorder %v7948, inf
      %vm8002 = vcmp.eq.s32.totalorder %v7949, inf
      %vm8003 = vmand %vm8001, %vm8002
      %v8004 = vsel %vm8003, %v8000, %v7998
      %v8005 = vand.u32 2147483647, %v8004
      %v8006 = vand.u32 %v5947, 2147483648
      %v8007 = vor.u32 %v8005, %v8006
      %v8008 = vand.u32 2147483647, %v5849
      %v8009 = vand.u32 2147483647, %v5948
      %v8010 = vmin.f32 %v8008, %v8009
      %v8011 = vmax.f32 %v8008, %v8009
      %v8012 = vrcp.pop %v8011
      %v8013 = vmul.f32 %v8011, %v8012
      %v8014 = vsub.f32 1.0, %v8013
      %v8015 = vmul.f32 %v8012, %v8014
      %v8016 = vadd.f32 %v8012, %v8015
      %vm8017 = vweird.f32 %v8011
      %vm8018 = vweird.f32 %v8012
      %vm8019 = vmor %vm8017, %vm8018
      %v8020 = vsel %vm8019, %v8012, %v8016
      %v8021 = vand.u32 2147483647, %v8011
      %vm8022 = vcmp.eq.f32.partialorder %v8021, 8.507059e+37
      %v8023 = vand.u32 %v8011, 2147483648
      %v8024 = vor.u32 1.1754944e-38, %v8023
      %v8025 = vsel %vm8022, %v8024, %v8020
      %v8026 = vmul.f32 %v8010, %v8025
      %v8027 = vmul.f32 %v8026, %v8026
      %v8028 = vmul.f32 0.002785687, %v8027
      %v8029 = vadd.f32 %v8028, -0.015866
      %v8030 = vmul.f32 %v8029, %v8027
      %v8031 = vadd.f32 %v8030, 0.04247222
      %v8032 = vmul.f32 %v8031, %v8027
      %v8033 = vadd.f32 %v8032, -0.074975304
      %v8034 = vmul.f32 %v8033, %v8027
      %v8035 = vadd.f32 %v8034, 0.1064488
      %v8036 = vmul.f32 %v8035, %v8027
      %v8037 = vadd.f32 %v8036, -0.14207031
      %v8038 = vmul.f32 %v8037, %v8027
      %v8039 = vadd.f32 %v8038, 0.19993454
      %v8040 = vmul.f32 %v8039, %v8027
      %v8041 = vadd.f32 %v8040, -0.33333147
      %v8042 = vmul.f32 %v8041, %v8027
      %v8043 = vmul.f32 %v8042, %v8026
      %v8044 = vadd.f32 %v8043, %v8026
      %vm8045 = vcmp.gt.f32.partialorder %v8009, %v8008
      %v8046 = vsub.f32 1.5707964, %v8044
      %v8047 = vsel %vm8045, %v8046, %v8044
      %vm8048 = vcmp.lt.f32.partialorder %v5849, 0.0
      %v8049 = vsub.f32 3.1415927, %v8047
      %v8050 = vsel %vm8048, %v8049, %v8047
      %vm8051 = vcmp.lt.s32.totalorder %v5849, 0
      %v8052 = vsel %vm8051, 3.1415927, 0.0
      %vm8053 = vcmp.eq.f32.partialorder %v5948, 0.0
      %v8054 = vsel %vm8053, %v8052, %v8050
      %vm8055 = vcmp.ne.f32.partialorder %v5849, %v5849
      %vm8056 = vcmp.ne.f32.partialorder %v5948, %v5948
      %vm8057 = vmor %vm8055, %vm8056
      %v8058 = vsel %vm8057, nan, %v8054
      %vm8059 = vcmp.lt.f32.partialorder %v5849, 0.0
      %v8060 = vsel %vm8059, 2.3561945, 0.7853982
      %vm8061 = vcmp.eq.s32.totalorder %v8008, inf
      %vm8062 = vcmp.eq.s32.totalorder %v8009, inf
      %vm8063 = vmand %vm8061, %vm8062
      %v8064 = vsel %vm8063, %v8060, %v8058
      %v8065 = vand.u32 2147483647, %v8064
      %v8066 = vand.u32 %v5948, 2147483648
      %v8067 = vor.u32 %v8065, %v8066
      %v8068 = vand.u32 2147483647, %v5850
      %v8069 = vand.u32 2147483647, %v5949
      %v8070 = vmin.f32 %v8068, %v8069
      %v8071 = vmax.f32 %v8068, %v8069
      %v8072 = vrcp.pop %v8071
      %v8073 = vmul.f32 %v8071, %v8072
      %v8074 = vsub.f32 1.0, %v8073
      %v8075 = vmul.f32 %v8072, %v8074
      %v8076 = vadd.f32 %v8072, %v8075
      %vm8077 = vweird.f32 %v8071
      %vm8078 = vweird.f32 %v8072
      %vm8079 = vmor %vm8077, %vm8078
      %v8080 = vsel %vm8079, %v8072, %v8076
      %v8081 = vand.u32 2147483647, %v8071
      %vm8082 = vcmp.eq.f32.partialorder %v8081, 8.507059e+37
      %v8083 = vand.u32 %v8071, 2147483648
      %v8084 = vor.u32 1.1754944e-38, %v8083
      %v8085 = vsel %vm8082, %v8084, %v8080
      %v8086 = vmul.f32 %v8070, %v8085
      %v8087 = vmul.f32 %v8086, %v8086
      %v8088 = vmul.f32 0.002785687, %v8087
      %v8089 = vadd.f32 %v8088, -0.015866
      %v8090 = vmul.f32 %v8089, %v8087
      %v8091 = vadd.f32 %v8090, 0.04247222
      %v8092 = vmul.f32 %v8091, %v8087
      %v8093 = vadd.f32 %v8092, -0.074975304
      %v8094 = vmul.f32 %v8093, %v8087
      %v8095 = vadd.f32 %v8094, 0.1064488
      %v8096 = vmul.f32 %v8095, %v8087
      %v8097 = vadd.f32 %v8096, -0.14207031
      %v8098 = vmul.f32 %v8097, %v8087
      %v8099 = vadd.f32 %v8098, 0.19993454
      %v8100 = vmul.f32 %v8099, %v8087
      %v8101 = vadd.f32 %v8100, -0.33333147
      %v8102 = vmul.f32 %v8101, %v8087
      %v8103 = vmul.f32 %v8102, %v8086
      %v8104 = vadd.f32 %v8103, %v8086
      %vm8105 = vcmp.gt.f32.partialorder %v8069, %v8068
      %v8106 = vsub.f32 1.5707964, %v8104
      %v8107 = vsel %vm8105, %v8106, %v8104
      %vm8108 = vcmp.lt.f32.partialorder %v5850, 0.0
      %v8109 = vsub.f32 3.1415927, %v8107
      %v8110 = vsel %vm8108, %v8109, %v8107
      %vm8111 = vcmp.lt.s32.totalorder %v5850, 0
      %v8112 = vsel %vm8111, 3.1415927, 0.0
      %vm8113 = vcmp.eq.f32.partialorder %v5949, 0.0
      %v8114 = vsel %vm8113, %v8112, %v8110
      %vm8115 = vcmp.ne.f32.partialorder %v5850, %v5850
      %vm8116 = vcmp.ne.f32.partialorder %v5949, %v5949
      %vm8117 = vmor %vm8115, %vm8116
      %v8118 = vsel %vm8117, nan, %v8114
      %vm8119 = vcmp.lt.f32.partialorder %v5850, 0.0
      %v8120 = vsel %vm8119, 2.3561945, 0.7853982
      %vm8121 = vcmp.eq.s32.totalorder %v8068, inf
      %vm8122 = vcmp.eq.s32.totalorder %v8069, inf
      %vm8123 = vmand %vm8121, %vm8122
      %v8124 = vsel %vm8123, %v8120, %v8118
      %v8125 = vand.u32 2147483647, %v8124
      %v8126 = vand.u32 %v5949, 2147483648
      %v8127 = vor.u32 %v8125, %v8126
      %v8128 = vand.u32 2147483647, %v6016
      %v8129 = vand.u32 2147483647, %v6115
      %v8130 = vmin.f32 %v8128, %v8129
      %v8131 = vmax.f32 %v8128, %v8129
      %v8132 = vrcp.pop %v8131
      %v8133 = vmul.f32 %v8131, %v8132
      %v8134 = vsub.f32 1.0, %v8133
      %v8135 = vmul.f32 %v8132, %v8134
      %v8136 = vadd.f32 %v8132, %v8135
      %vm8137 = vweird.f32 %v8131
      %vm8138 = vweird.f32 %v8132
      %vm8139 = vmor %vm8137, %vm8138
      %v8140 = vsel %vm8139, %v8132, %v8136
      %v8141 = vand.u32 2147483647, %v8131
      %vm8142 = vcmp.eq.f32.partialorder %v8141, 8.507059e+37
      %v8143 = vand.u32 %v8131, 2147483648
      %v8144 = vor.u32 1.1754944e-38, %v8143
      %v8145 = vsel %vm8142, %v8144, %v8140
      %v8146 = vmul.f32 %v8130, %v8145
      %v8147 = vmul.f32 %v8146, %v8146
      %v8148 = vmul.f32 0.002785687, %v8147
      %v8149 = vadd.f32 %v8148, -0.015866
      %v8150 = vmul.f32 %v8149, %v8147
      %v8151 = vadd.f32 %v8150, 0.04247222
      %v8152 = vmul.f32 %v8151, %v8147
      %v8153 = vadd.f32 %v8152, -0.074975304
      %v8154 = vmul.f32 %v8153, %v8147
      %v8155 = vadd.f32 %v8154, 0.1064488
      %v8156 = vmul.f32 %v8155, %v8147
      %v8157 = vadd.f32 %v8156, -0.14207031
      %v8158 = vmul.f32 %v8157, %v8147
      %v8159 = vadd.f32 %v8158, 0.19993454
      %v8160 = vmul.f32 %v8159, %v8147
      %v8161 = vadd.f32 %v8160, -0.33333147
      %v8162 = vmul.f32 %v8161, %v8147
      %v8163 = vmul.f32 %v8162, %v8146
      %v8164 = vadd.f32 %v8163, %v8146
      %vm8165 = vcmp.gt.f32.partialorder %v8129, %v8128
      %v8166 = vsub.f32 1.5707964, %v8164
      %v8167 = vsel %vm8165, %v8166, %v8164
      %vm8168 = vcmp.lt.f32.partialorder %v6016, 0.0
      %v8169 = vsub.f32 3.1415927, %v8167
      %v8170 = vsel %vm8168, %v8169, %v8167
      %vm8171 = vcmp.lt.s32.totalorder %v6016, 0
      %v8172 = vsel %vm8171, 3.1415927, 0.0
      %vm8173 = vcmp.eq.f32.partialorder %v6115, 0.0
      %v8174 = vsel %vm8173, %v8172, %v8170
      %vm8175 = vcmp.ne.f32.partialorder %v6016, %v6016
      %vm8176 = vcmp.ne.f32.partialorder %v6115, %v6115
      %vm8177 = vmor %vm8175, %vm8176
      %v8178 = vsel %vm8177, nan, %v8174
      %vm8179 = vcmp.lt.f32.partialorder %v6016, 0.0
      %v8180 = vsel %vm8179, 2.3561945, 0.7853982
      %vm8181 = vcmp.eq.s32.totalorder %v8128, inf
      %vm8182 = vcmp.eq.s32.totalorder %v8129, inf
      %vm8183 = vmand %vm8181, %vm8182
      %v8184 = vsel %vm8183, %v8180, %v8178
      %v8185 = vand.u32 2147483647, %v8184
      %v8186 = vand.u32 %v6115, 2147483648
      %v8187 = vor.u32 %v8185, %v8186
      %v8188 = vand.u32 2147483647, %v6017
      %v8189 = vand.u32 2147483647, %v6116
      %v8190 = vmin.f32 %v8188, %v8189
      %v8191 = vmax.f32 %v8188, %v8189
      %v8192 = vrcp.pop %v8191
      %v8193 = vmul.f32 %v8191, %v8192
      %v8194 = vsub.f32 1.0, %v8193
      %v8195 = vmul.f32 %v8192, %v8194
      %v8196 = vadd.f32 %v8192, %v8195
      %vm8197 = vweird.f32 %v8191
      %vm8198 = vweird.f32 %v8192
      %vm8199 = vmor %vm8197, %vm8198
      %v8200 = vsel %vm8199, %v8192, %v8196
      %v8201 = vand.u32 2147483647, %v8191
      %vm8202 = vcmp.eq.f32.partialorder %v8201, 8.507059e+37
      %v8203 = vand.u32 %v8191, 2147483648
      %v8204 = vor.u32 1.1754944e-38, %v8203
      %v8205 = vsel %vm8202, %v8204, %v8200
      %v8206 = vmul.f32 %v8190, %v8205
      %v8207 = vmul.f32 %v8206, %v8206
      %v8208 = vmul.f32 0.002785687, %v8207
      %v8209 = vadd.f32 %v8208, -0.015866
      %v8210 = vmul.f32 %v8209, %v8207
      %v8211 = vadd.f32 %v8210, 0.04247222
      %v8212 = vmul.f32 %v8211, %v8207
      %v8213 = vadd.f32 %v8212, -0.074975304
      %v8214 = vmul.f32 %v8213, %v8207
      %v8215 = vadd.f32 %v8214, 0.1064488
      %v8216 = vmul.f32 %v8215, %v8207
      %v8217 = vadd.f32 %v8216, -0.14207031
      %v8218 = vmul.f32 %v8217, %v8207
      %v8219 = vadd.f32 %v8218, 0.19993454
      %v8220 = vmul.f32 %v8219, %v8207
      %v8221 = vadd.f32 %v8220, -0.33333147
      %v8222 = vmul.f32 %v8221, %v8207
      %v8223 = vmul.f32 %v8222, %v8206
      %v8224 = vadd.f32 %v8223, %v8206
      %vm8225 = vcmp.gt.f32.partialorder %v8189, %v8188
      %v8226 = vsub.f32 1.5707964, %v8224
      %v8227 = vsel %vm8225, %v8226, %v8224
      %vm8228 = vcmp.lt.f32.partialorder %v6017, 0.0
      %v8229 = vsub.f32 3.1415927, %v8227
      %v8230 = vsel %vm8228, %v8229, %v8227
      %vm8231 = vcmp.lt.s32.totalorder %v6017, 0
      %v8232 = vsel %vm8231, 3.1415927, 0.0
      %vm8233 = vcmp.eq.f32.partialorder %v6116, 0.0
      %v8234 = vsel %vm8233, %v8232, %v8230
      %vm8235 = vcmp.ne.f32.partialorder %v6017, %v6017
      %vm8236 = vcmp.ne.f32.partialorder %v6116, %v6116
      %vm8237 = vmor %vm8235, %vm8236
      %v8238 = vsel %vm8237, nan, %v8234
      %vm8239 = vcmp.lt.f32.partialorder %v6017, 0.0
      %v8240 = vsel %vm8239, 2.3561945, 0.7853982
      %vm8241 = vcmp.eq.s32.totalorder %v8188, inf
      %vm8242 = vcmp.eq.s32.totalorder %v8189, inf
      %vm8243 = vmand %vm8241, %vm8242
      %v8244 = vsel %vm8243, %v8240, %v8238
      %v8245 = vand.u32 2147483647, %v8244
      %v8246 = vand.u32 %v6116, 2147483648
      %v8247 = vor.u32 %v8245, %v8246
      %v8248 = vand.u32 2147483647, %v6018
      %v8249 = vand.u32 2147483647, %v6117
      %v8250 = vmin.f32 %v8248, %v8249
      %v8251 = vmax.f32 %v8248, %v8249
      %v8252 = vrcp.pop %v8251
      %v8253 = vmul.f32 %v8251, %v8252
      %v8254 = vsub.f32 1.0, %v8253
      %v8255 = vmul.f32 %v8252, %v8254
      %v8256 = vadd.f32 %v8252, %v8255
      %vm8257 = vweird.f32 %v8251
      %vm8258 = vweird.f32 %v8252
      %vm8259 = vmor %vm8257, %vm8258
      %v8260 = vsel %vm8259, %v8252, %v8256
      %v8261 = vand.u32 2147483647, %v8251
      %vm8262 = vcmp.eq.f32.partialorder %v8261, 8.507059e+37
      %v8263 = vand.u32 %v8251, 2147483648
      %v8264 = vor.u32 1.1754944e-38, %v8263
      %v8265 = vsel %vm8262, %v8264, %v8260
      %v8266 = vmul.f32 %v8250, %v8265
      %v8267 = vmul.f32 %v8266, %v8266
      %v8268 = vmul.f32 0.002785687, %v8267
      %v8269 = vadd.f32 %v8268, -0.015866
      %v8270 = vmul.f32 %v8269, %v8267
      %v8271 = vadd.f32 %v8270, 0.04247222
      %v8272 = vmul.f32 %v8271, %v8267
      %v8273 = vadd.f32 %v8272, -0.074975304
      %v8274 = vmul.f32 %v8273, %v8267
      %v8275 = vadd.f32 %v8274, 0.1064488
      %v8276 = vmul.f32 %v8275, %v8267
      %v8277 = vadd.f32 %v8276, -0.14207031
      %v8278 = vmul.f32 %v8277, %v8267
      %v8279 = vadd.f32 %v8278, 0.19993454
      %v8280 = vmul.f32 %v8279, %v8267
      %v8281 = vadd.f32 %v8280, -0.33333147
      %v8282 = vmul.f32 %v8281, %v8267
      %v8283 = vmul.f32 %v8282, %v8266
      %v8284 = vadd.f32 %v8283, %v8266
      %vm8285 = vcmp.gt.f32.partialorder %v8249, %v8248
      %v8286 = vsub.f32 1.5707964, %v8284
      %v8287 = vsel %vm8285, %v8286, %v8284
      %vm8288 = vcmp.lt.f32.partialorder %v6018, 0.0
      %v8289 = vsub.f32 3.1415927, %v8287
      %v8290 = vsel %vm8288, %v8289, %v8287
      %vm8291 = vcmp.lt.s32.totalorder %v6018, 0
      %v8292 = vsel %vm8291, 3.1415927, 0.0
      %vm8293 = vcmp.eq.f32.partialorder %v6117, 0.0
      %v8294 = vsel %vm8293, %v8292, %v8290
      %vm8295 = vcmp.ne.f32.partialorder %v6018, %v6018
      %vm8296 = vcmp.ne.f32.partialorder %v6117, %v6117
      %vm8297 = vmor %vm8295, %vm8296
      %v8298 = vsel %vm8297, nan, %v8294
      %vm8299 = vcmp.lt.f32.partialorder %v6018, 0.0
      %v8300 = vsel %vm8299, 2.3561945, 0.7853982
      %vm8301 = vcmp.eq.s32.totalorder %v8248, inf
      %vm8302 = vcmp.eq.s32.totalorder %v8249, inf
      %vm8303 = vmand %vm8301, %vm8302
      %v8304 = vsel %vm8303, %v8300, %v8298
      %v8305 = vand.u32 2147483647, %v8304
      %v8306 = vand.u32 %v6117, 2147483648
      %v8307 = vor.u32 %v8305, %v8306
      %v8308 = vand.u32 2147483647, %v6019
      %v8309 = vand.u32 2147483647, %v6118
      %v8310 = vmin.f32 %v8308, %v8309
      %v8311 = vmax.f32 %v8308, %v8309
      %v8312 = vrcp.pop %v8311
      %v8313 = vmul.f32 %v8311, %v8312
      %v8314 = vsub.f32 1.0, %v8313
      %v8315 = vmul.f32 %v8312, %v8314
      %v8316 = vadd.f32 %v8312, %v8315
      %vm8317 = vweird.f32 %v8311
      %vm8318 = vweird.f32 %v8312
      %vm8319 = vmor %vm8317, %vm8318
      %v8320 = vsel %vm8319, %v8312, %v8316
      %v8321 = vand.u32 2147483647, %v8311
      %vm8322 = vcmp.eq.f32.partialorder %v8321, 8.507059e+37
      %v8323 = vand.u32 %v8311, 2147483648
      %v8324 = vor.u32 1.1754944e-38, %v8323
      %v8325 = vsel %vm8322, %v8324, %v8320
      %v8326 = vmul.f32 %v8310, %v8325
      %v8327 = vmul.f32 %v8326, %v8326
      %v8328 = vmul.f32 0.002785687, %v8327
      %v8329 = vadd.f32 %v8328, -0.015866
      %v8330 = vmul.f32 %v8329, %v8327
      %v8331 = vadd.f32 %v8330, 0.04247222
      %v8332 = vmul.f32 %v8331, %v8327
      %v8333 = vadd.f32 %v8332, -0.074975304
      %v8334 = vmul.f32 %v8333, %v8327
      %v8335 = vadd.f32 %v8334, 0.1064488
      %v8336 = vmul.f32 %v8335, %v8327
      %v8337 = vadd.f32 %v8336, -0.14207031
      %v8338 = vmul.f32 %v8337, %v8327
      %v8339 = vadd.f32 %v8338, 0.19993454
      %v8340 = vmul.f32 %v8339, %v8327
      %v8341 = vadd.f32 %v8340, -0.33333147
      %v8342 = vmul.f32 %v8341, %v8327
      %v8343 = vmul.f32 %v8342, %v8326
      %v8344 = vadd.f32 %v8343, %v8326
      %vm8345 = vcmp.gt.f32.partialorder %v8309, %v8308
      %v8346 = vsub.f32 1.5707964, %v8344
      %v8347 = vsel %vm8345, %v8346, %v8344
      %vm8348 = vcmp.lt.f32.partialorder %v6019, 0.0
      %v8349 = vsub.f32 3.1415927, %v8347
      %v8350 = vsel %vm8348, %v8349, %v8347
      %vm8351 = vcmp.lt.s32.totalorder %v6019, 0
      %v8352 = vsel %vm8351, 3.1415927, 0.0
      %vm8353 = vcmp.eq.f32.partialorder %v6118, 0.0
      %v8354 = vsel %vm8353, %v8352, %v8350
      %vm8355 = vcmp.ne.f32.partialorder %v6019, %v6019
      %vm8356 = vcmp.ne.f32.partialorder %v6118, %v6118
      %vm8357 = vmor %vm8355, %vm8356
      %v8358 = vsel %vm8357, nan, %v8354
      %vm8359 = vcmp.lt.f32.partialorder %v6019, 0.0
      %v8360 = vsel %vm8359, 2.3561945, 0.7853982
      %vm8361 = vcmp.eq.s32.totalorder %v8308, inf
      %vm8362 = vcmp.eq.s32.totalorder %v8309, inf
      %vm8363 = vmand %vm8361, %vm8362
      %v8364 = vsel %vm8363, %v8360, %v8358
      %v8365 = vand.u32 2147483647, %v8364
      %v8366 = vand.u32 %v6118, 2147483648
      %v8367 = vor.u32 %v8365, %v8366
      %v8368 = vand.u32 2147483647, %v6020
      %v8369 = vand.u32 2147483647, %v6119
      %v8370 = vmin.f32 %v8368, %v8369
      %v8371 = vmax.f32 %v8368, %v8369
      %v8372 = vrcp.pop %v8371
      %v8373 = vmul.f32 %v8371, %v8372
      %v8374 = vsub.f32 1.0, %v8373
      %v8375 = vmul.f32 %v8372, %v8374
      %v8376 = vadd.f32 %v8372, %v8375
      %vm8377 = vweird.f32 %v8371
      %vm8378 = vweird.f32 %v8372
      %vm8379 = vmor %vm8377, %vm8378
      %v8380 = vsel %vm8379, %v8372, %v8376
      %v8381 = vand.u32 2147483647, %v8371
      %vm8382 = vcmp.eq.f32.partialorder %v8381, 8.507059e+37
      %v8383 = vand.u32 %v8371, 2147483648
      %v8384 = vor.u32 1.1754944e-38, %v8383
      %v8385 = vsel %vm8382, %v8384, %v8380
      %v8386 = vmul.f32 %v8370, %v8385
      %v8387 = vmul.f32 %v8386, %v8386
      %v8388 = vmul.f32 0.002785687, %v8387
      %v8389 = vadd.f32 %v8388, -0.015866
      %v8390 = vmul.f32 %v8389, %v8387
      %v8391 = vadd.f32 %v8390, 0.04247222
      %v8392 = vmul.f32 %v8391, %v8387
      %v8393 = vadd.f32 %v8392, -0.074975304
      %v8394 = vmul.f32 %v8393, %v8387
      %v8395 = vadd.f32 %v8394, 0.1064488
      %v8396 = vmul.f32 %v8395, %v8387
      %v8397 = vadd.f32 %v8396, -0.14207031
      %v8398 = vmul.f32 %v8397, %v8387
      %v8399 = vadd.f32 %v8398, 0.19993454
      %v8400 = vmul.f32 %v8399, %v8387
      %v8401 = vadd.f32 %v8400, -0.33333147
      %v8402 = vmul.f32 %v8401, %v8387
      %v8403 = vmul.f32 %v8402, %v8386
      %v8404 = vadd.f32 %v8403, %v8386
      %vm8405 = vcmp.gt.f32.partialorder %v8369, %v8368
      %v8406 = vsub.f32 1.5707964, %v8404
      %v8407 = vsel %vm8405, %v8406, %v8404
      %vm8408 = vcmp.lt.f32.partialorder %v6020, 0.0
      %v8409 = vsub.f32 3.1415927, %v8407
      %v8410 = vsel %vm8408, %v8409, %v8407
      %vm8411 = vcmp.lt.s32.totalorder %v6020, 0
      %v8412 = vsel %vm8411, 3.1415927, 0.0
      %vm8413 = vcmp.eq.f32.partialorder %v6119, 0.0
      %v8414 = vsel %vm8413, %v8412, %v8410
      %vm8415 = vcmp.ne.f32.partialorder %v6020, %v6020
      %vm8416 = vcmp.ne.f32.partialorder %v6119, %v6119
      %vm8417 = vmor %vm8415, %vm8416
      %v8418 = vsel %vm8417, nan, %v8414
      %vm8419 = vcmp.lt.f32.partialorder %v6020, 0.0
      %v8420 = vsel %vm8419, 2.3561945, 0.7853982
      %vm8421 = vcmp.eq.s32.totalorder %v8368, inf
      %vm8422 = vcmp.eq.s32.totalorder %v8369, inf
      %vm8423 = vmand %vm8421, %vm8422
      %v8424 = vsel %vm8423, %v8420, %v8418
      %v8425 = vand.u32 2147483647, %v8424
      %v8426 = vand.u32 %v6119, 2147483648
      %v8427 = vor.u32 %v8425, %v8426
      %v8428 = vand.u32 2147483647, %v6021
      %v8429 = vand.u32 2147483647, %v6120
      %v8430 = vmin.f32 %v8428, %v8429
      %v8431 = vmax.f32 %v8428, %v8429
      %v8432 = vrcp.pop %v8431
      %v8433 = vmul.f32 %v8431, %v8432
      %v8434 = vsub.f32 1.0, %v8433
      %v8435 = vmul.f32 %v8432, %v8434
      %v8436 = vadd.f32 %v8432, %v8435
      %vm8437 = vweird.f32 %v8431
      %vm8438 = vweird.f32 %v8432
      %vm8439 = vmor %vm8437, %vm8438
      %v8440 = vsel %vm8439, %v8432, %v8436
      %v8441 = vand.u32 2147483647, %v8431
      %vm8442 = vcmp.eq.f32.partialorder %v8441, 8.507059e+37
      %v8443 = vand.u32 %v8431, 2147483648
      %v8444 = vor.u32 1.1754944e-38, %v8443
      %v8445 = vsel %vm8442, %v8444, %v8440
      %v8446 = vmul.f32 %v8430, %v8445
      %v8447 = vmul.f32 %v8446, %v8446
      %v8448 = vmul.f32 0.002785687, %v8447
      %v8449 = vadd.f32 %v8448, -0.015866
      %v8450 = vmul.f32 %v8449, %v8447
      %v8451 = vadd.f32 %v8450, 0.04247222
      %v8452 = vmul.f32 %v8451, %v8447
      %v8453 = vadd.f32 %v8452, -0.074975304
      %v8454 = vmul.f32 %v8453, %v8447
      %v8455 = vadd.f32 %v8454, 0.1064488
      %v8456 = vmul.f32 %v8455, %v8447
      %v8457 = vadd.f32 %v8456, -0.14207031
      %v8458 = vmul.f32 %v8457, %v8447
      %v8459 = vadd.f32 %v8458, 0.19993454
      %v8460 = vmul.f32 %v8459, %v8447
      %v8461 = vadd.f32 %v8460, -0.33333147
      %v8462 = vmul.f32 %v8461, %v8447
      %v8463 = vmul.f32 %v8462, %v8446
      %v8464 = vadd.f32 %v8463, %v8446
      %vm8465 = vcmp.gt.f32.partialorder %v8429, %v8428
      %v8466 = vsub.f32 1.5707964, %v8464
      %v8467 = vsel %vm8465, %v8466, %v8464
      %vm8468 = vcmp.lt.f32.partialorder %v6021, 0.0
      %v8469 = vsub.f32 3.1415927, %v8467
      %v8470 = vsel %vm8468, %v8469, %v8467
      %vm8471 = vcmp.lt.s32.totalorder %v6021, 0
      %v8472 = vsel %vm8471, 3.1415927, 0.0
      %vm8473 = vcmp.eq.f32.partialorder %v6120, 0.0
      %v8474 = vsel %vm8473, %v8472, %v8470
      %vm8475 = vcmp.ne.f32.partialorder %v6021, %v6021
      %vm8476 = vcmp.ne.f32.partialorder %v6120, %v6120
      %vm8477 = vmor %vm8475, %vm8476
      %v8478 = vsel %vm8477, nan, %v8474
      %vm8479 = vcmp.lt.f32.partialorder %v6021, 0.0
      %v8480 = vsel %vm8479, 2.3561945, 0.7853982
      %vm8481 = vcmp.eq.s32.totalorder %v8428, inf
      %vm8482 = vcmp.eq.s32.totalorder %v8429, inf
      %vm8483 = vmand %vm8481, %vm8482
      %v8484 = vsel %vm8483, %v8480, %v8478
      %v8485 = vand.u32 2147483647, %v8484
      %v8486 = vand.u32 %v6120, 2147483648
      %v8487 = vor.u32 %v8485, %v8486
      %v8488 = vand.u32 2147483647, %v6022
      %v8489 = vand.u32 2147483647, %v6121
      %v8490 = vmin.f32 %v8488, %v8489
      %v8491 = vmax.f32 %v8488, %v8489
      %v8492 = vrcp.pop %v8491
      %v8493 = vmul.f32 %v8491, %v8492
      %v8494 = vsub.f32 1.0, %v8493
      %v8495 = vmul.f32 %v8492, %v8494
      %v8496 = vadd.f32 %v8492, %v8495
      %vm8497 = vweird.f32 %v8491
      %vm8498 = vweird.f32 %v8492
      %vm8499 = vmor %vm8497, %vm8498
      %v8500 = vsel %vm8499, %v8492, %v8496
      %v8501 = vand.u32 2147483647, %v8491
      %vm8502 = vcmp.eq.f32.partialorder %v8501, 8.507059e+37
      %v8503 = vand.u32 %v8491, 2147483648
      %v8504 = vor.u32 1.1754944e-38, %v8503
      %v8505 = vsel %vm8502, %v8504, %v8500
      %v8506 = vmul.f32 %v8490, %v8505
      %v8507 = vmul.f32 %v8506, %v8506
      %v8508 = vmul.f32 0.002785687, %v8507
      %v8509 = vadd.f32 %v8508, -0.015866
      %v8510 = vmul.f32 %v8509, %v8507
      %v8511 = vadd.f32 %v8510, 0.04247222
      %v8512 = vmul.f32 %v8511, %v8507
      %v8513 = vadd.f32 %v8512, -0.074975304
      %v8514 = vmul.f32 %v8513, %v8507
      %v8515 = vadd.f32 %v8514, 0.1064488
      %v8516 = vmul.f32 %v8515, %v8507
      %v8517 = vadd.f32 %v8516, -0.14207031
      %v8518 = vmul.f32 %v8517, %v8507
      %v8519 = vadd.f32 %v8518, 0.19993454
      %v8520 = vmul.f32 %v8519, %v8507
      %v8521 = vadd.f32 %v8520, -0.33333147
      %v8522 = vmul.f32 %v8521, %v8507
      %v8523 = vmul.f32 %v8522, %v8506
      %v8524 = vadd.f32 %v8523, %v8506
      %vm8525 = vcmp.gt.f32.partialorder %v8489, %v8488
      %v8526 = vsub.f32 1.5707964, %v8524
      %v8527 = vsel %vm8525, %v8526, %v8524
      %vm8528 = vcmp.lt.f32.partialorder %v6022, 0.0
      %v8529 = vsub.f32 3.1415927, %v8527
      %v8530 = vsel %vm8528, %v8529, %v8527
      %vm8531 = vcmp.lt.s32.totalorder %v6022, 0
      %v8532 = vsel %vm8531, 3.1415927, 0.0
      %vm8533 = vcmp.eq.f32.partialorder %v6121, 0.0
      %v8534 = vsel %vm8533, %v8532, %v8530
      %vm8535 = vcmp.ne.f32.partialorder %v6022, %v6022
      %vm8536 = vcmp.ne.f32.partialorder %v6121, %v6121
      %vm8537 = vmor %vm8535, %vm8536
      %v8538 = vsel %vm8537, nan, %v8534
      %vm8539 = vcmp.lt.f32.partialorder %v6022, 0.0
      %v8540 = vsel %vm8539, 2.3561945, 0.7853982
      %vm8541 = vcmp.eq.s32.totalorder %v8488, inf
      %vm8542 = vcmp.eq.s32.totalorder %v8489, inf
      %vm8543 = vmand %vm8541, %vm8542
      %v8544 = vsel %vm8543, %v8540, %v8538
      %v8545 = vand.u32 2147483647, %v8544
      %v8546 = vand.u32 %v6121, 2147483648
      %v8547 = vor.u32 %v8545, %v8546
      %v8548 = vand.u32 2147483647, %v6023
      %v8549 = vand.u32 2147483647, %v6122
      %v8550 = vmin.f32 %v8548, %v8549
      %v8551 = vmax.f32 %v8548, %v8549
      %v8552 = vrcp.pop %v8551
      %v8553 = vmul.f32 %v8551, %v8552
      %v8554 = vsub.f32 1.0, %v8553
      %v8555 = vmul.f32 %v8552, %v8554
      %v8556 = vadd.f32 %v8552, %v8555
      %vm8557 = vweird.f32 %v8551
      %vm8558 = vweird.f32 %v8552
      %vm8559 = vmor %vm8557, %vm8558
      %v8560 = vsel %vm8559, %v8552, %v8556
      %v8561 = vand.u32 2147483647, %v8551
      %vm8562 = vcmp.eq.f32.partialorder %v8561, 8.507059e+37
      %v8563 = vand.u32 %v8551, 2147483648
      %v8564 = vor.u32 1.1754944e-38, %v8563
      %v8565 = vsel %vm8562, %v8564, %v8560
      %v8566 = vmul.f32 %v8550, %v8565
      %v8567 = vmul.f32 %v8566, %v8566
      %v8568 = vmul.f32 0.002785687, %v8567
      %v8569 = vadd.f32 %v8568, -0.015866
      %v8570 = vmul.f32 %v8569, %v8567
      %v8571 = vadd.f32 %v8570, 0.04247222
      %v8572 = vmul.f32 %v8571, %v8567
      %v8573 = vadd.f32 %v8572, -0.074975304
      %v8574 = vmul.f32 %v8573, %v8567
      %v8575 = vadd.f32 %v8574, 0.1064488
      %v8576 = vmul.f32 %v8575, %v8567
      %v8577 = vadd.f32 %v8576, -0.14207031
      %v8578 = vmul.f32 %v8577, %v8567
      %v8579 = vadd.f32 %v8578, 0.19993454
      %v8580 = vmul.f32 %v8579, %v8567
      %v8581 = vadd.f32 %v8580, -0.33333147
      %v8582 = vmul.f32 %v8581, %v8567
      %v8583 = vmul.f32 %v8582, %v8566
      %v8584 = vadd.f32 %v8583, %v8566
      %vm8585 = vcmp.gt.f32.partialorder %v8549, %v8548
      %v8586 = vsub.f32 1.5707964, %v8584
      %v8587 = vsel %vm8585, %v8586, %v8584
      %vm8588 = vcmp.lt.f32.partialorder %v6023, 0.0
      %v8589 = vsub.f32 3.1415927, %v8587
      %v8590 = vsel %vm8588, %v8589, %v8587
      %vm8591 = vcmp.lt.s32.totalorder %v6023, 0
      %v8592 = vsel %vm8591, 3.1415927, 0.0
      %vm8593 = vcmp.eq.f32.partialorder %v6122, 0.0
      %v8594 = vsel %vm8593, %v8592, %v8590
      %vm8595 = vcmp.ne.f32.partialorder %v6023, %v6023
      %vm8596 = vcmp.ne.f32.partialorder %v6122, %v6122
      %vm8597 = vmor %vm8595, %vm8596
      %v8598 = vsel %vm8597, nan, %v8594
      %vm8599 = vcmp.lt.f32.partialorder %v6023, 0.0
      %v8600 = vsel %vm8599, 2.3561945, 0.7853982
      %vm8601 = vcmp.eq.s32.totalorder %v8548, inf
      %vm8602 = vcmp.eq.s32.totalorder %v8549, inf
      %vm8603 = vmand %vm8601, %vm8602
      %v8604 = vsel %vm8603, %v8600, %v8598
      %v8605 = vand.u32 2147483647, %v8604
      %v8606 = vand.u32 %v6122, 2147483648
      %v8607 = vor.u32 %v8605, %v8606
      %v8608 = vand.u32 2147483647, %v6024
      %v8609 = vand.u32 2147483647, %v6123
      %v8610 = vmin.f32 %v8608, %v8609
      %v8611 = vmax.f32 %v8608, %v8609
      %v8612 = vrcp.pop %v8611
      %v8613 = vmul.f32 %v8611, %v8612
      %v8614 = vsub.f32 1.0, %v8613
      %v8615 = vmul.f32 %v8612, %v8614
      %v8616 = vadd.f32 %v8612, %v8615
      %vm8617 = vweird.f32 %v8611
      %vm8618 = vweird.f32 %v8612
      %vm8619 = vmor %vm8617, %vm8618
      %v8620 = vsel %vm8619, %v8612, %v8616
      %v8621 = vand.u32 2147483647, %v8611
      %vm8622 = vcmp.eq.f32.partialorder %v8621, 8.507059e+37
      %v8623 = vand.u32 %v8611, 2147483648
      %v8624 = vor.u32 1.1754944e-38, %v8623
      %v8625 = vsel %vm8622, %v8624, %v8620
      %v8626 = vmul.f32 %v8610, %v8625
      %v8627 = vmul.f32 %v8626, %v8626
      %v8628 = vmul.f32 0.002785687, %v8627
      %v8629 = vadd.f32 %v8628, -0.015866
      %v8630 = vmul.f32 %v8629, %v8627
      %v8631 = vadd.f32 %v8630, 0.04247222
      %v8632 = vmul.f32 %v8631, %v8627
      %v8633 = vadd.f32 %v8632, -0.074975304
      %v8634 = vmul.f32 %v8633, %v8627
      %v8635 = vadd.f32 %v8634, 0.1064488
      %v8636 = vmul.f32 %v8635, %v8627
      %v8637 = vadd.f32 %v8636, -0.14207031
      %v8638 = vmul.f32 %v8637, %v8627
      %v8639 = vadd.f32 %v8638, 0.19993454
      %v8640 = vmul.f32 %v8639, %v8627
      %v8641 = vadd.f32 %v8640, -0.33333147
      %v8642 = vmul.f32 %v8641, %v8627
      %v8643 = vmul.f32 %v8642, %v8626
      %v8644 = vadd.f32 %v8643, %v8626
      %vm8645 = vcmp.gt.f32.partialorder %v8609, %v8608
      %v8646 = vsub.f32 1.5707964, %v8644
      %v8647 = vsel %vm8645, %v8646, %v8644
      %vm8648 = vcmp.lt.f32.partialorder %v6024, 0.0
      %v8649 = vsub.f32 3.1415927, %v8647
      %v8650 = vsel %vm8648, %v8649, %v8647
      %vm8651 = vcmp.lt.s32.totalorder %v6024, 0
      %v8652 = vsel %vm8651, 3.1415927, 0.0
      %vm8653 = vcmp.eq.f32.partialorder %v6123, 0.0
      %v8654 = vsel %vm8653, %v8652, %v8650
      %vm8655 = vcmp.ne.f32.partialorder %v6024, %v6024
      %vm8656 = vcmp.ne.f32.partialorder %v6123, %v6123
      %vm8657 = vmor %vm8655, %vm8656
      %v8658 = vsel %vm8657, nan, %v8654
      %vm8659 = vcmp.lt.f32.partialorder %v6024, 0.0
      %v8660 = vsel %vm8659, 2.3561945, 0.7853982
      %vm8661 = vcmp.eq.s32.totalorder %v8608, inf
      %vm8662 = vcmp.eq.s32.totalorder %v8609, inf
      %vm8663 = vmand %vm8661, %vm8662
      %v8664 = vsel %vm8663, %v8660, %v8658
      %v8665 = vand.u32 2147483647, %v8664
      %v8666 = vand.u32 %v6123, 2147483648
      %v8667 = vor.u32 %v8665, %v8666
      %v8668 = vand.u32 2147483647, %v6025
      %v8669 = vand.u32 2147483647, %v6124
      %v8670 = vmin.f32 %v8668, %v8669
      %v8671 = vmax.f32 %v8668, %v8669
      %v8672 = vrcp.pop %v8671
      %v8673 = vmul.f32 %v8671, %v8672
      %v8674 = vsub.f32 1.0, %v8673
      %v8675 = vmul.f32 %v8672, %v8674
      %v8676 = vadd.f32 %v8672, %v8675
      %vm8677 = vweird.f32 %v8671
      %vm8678 = vweird.f32 %v8672
      %vm8679 = vmor %vm8677, %vm8678
      %v8680 = vsel %vm8679, %v8672, %v8676
      %v8681 = vand.u32 2147483647, %v8671
      %vm8682 = vcmp.eq.f32.partialorder %v8681, 8.507059e+37
      %v8683 = vand.u32 %v8671, 2147483648
      %v8684 = vor.u32 1.1754944e-38, %v8683
      %v8685 = vsel %vm8682, %v8684, %v8680
      %v8686 = vmul.f32 %v8670, %v8685
      %v8687 = vmul.f32 %v8686, %v8686
      %v8688 = vmul.f32 0.002785687, %v8687
      %v8689 = vadd.f32 %v8688, -0.015866
      %v8690 = vmul.f32 %v8689, %v8687
      %v8691 = vadd.f32 %v8690, 0.04247222
      %v8692 = vmul.f32 %v8691, %v8687
      %v8693 = vadd.f32 %v8692, -0.074975304
      %v8694 = vmul.f32 %v8693, %v8687
      %v8695 = vadd.f32 %v8694, 0.1064488
      %v8696 = vmul.f32 %v8695, %v8687
      %v8697 = vadd.f32 %v8696, -0.14207031
      %v8698 = vmul.f32 %v8697, %v8687
      %v8699 = vadd.f32 %v8698, 0.19993454
      %v8700 = vmul.f32 %v8699, %v8687
      %v8701 = vadd.f32 %v8700, -0.33333147
      %v8702 = vmul.f32 %v8701, %v8687
      %v8703 = vmul.f32 %v8702, %v8686
      %v8704 = vadd.f32 %v8703, %v8686
      %vm8705 = vcmp.gt.f32.partialorder %v8669, %v8668
      %v8706 = vsub.f32 1.5707964, %v8704
      %v8707 = vsel %vm8705, %v8706, %v8704
      %vm8708 = vcmp.lt.f32.partialorder %v6025, 0.0
      %v8709 = vsub.f32 3.1415927, %v8707
      %v8710 = vsel %vm8708, %v8709, %v8707
      %vm8711 = vcmp.lt.s32.totalorder %v6025, 0
      %v8712 = vsel %vm8711, 3.1415927, 0.0
      %vm8713 = vcmp.eq.f32.partialorder %v6124, 0.0
      %v8714 = vsel %vm8713, %v8712, %v8710
      %vm8715 = vcmp.ne.f32.partialorder %v6025, %v6025
      %vm8716 = vcmp.ne.f32.partialorder %v6124, %v6124
      %vm8717 = vmor %vm8715, %vm8716
      %v8718 = vsel %vm8717, nan, %v8714
      %vm8719 = vcmp.lt.f32.partialorder %v6025, 0.0
      %v8720 = vsel %vm8719, 2.3561945, 0.7853982
      %vm8721 = vcmp.eq.s32.totalorder %v8668, inf
      %vm8722 = vcmp.eq.s32.totalorder %v8669, inf
      %vm8723 = vmand %vm8721, %vm8722
      %v8724 = vsel %vm8723, %v8720, %v8718
      %v8725 = vand.u32 2147483647, %v8724
      %v8726 = vand.u32 %v6124, 2147483648
      %v8727 = vor.u32 %v8725, %v8726
      %v8728 = vand.u32 2147483647, %v6026
      %v8729 = vand.u32 2147483647, %v6125
      %v8730 = vmin.f32 %v8728, %v8729
      %v8731 = vmax.f32 %v8728, %v8729
      %v8732 = vrcp.pop %v8731
      %v8733 = vmul.f32 %v8731, %v8732
      %v8734 = vsub.f32 1.0, %v8733
      %v8735 = vmul.f32 %v8732, %v8734
      %v8736 = vadd.f32 %v8732, %v8735
      %vm8737 = vweird.f32 %v8731
      %vm8738 = vweird.f32 %v8732
      %vm8739 = vmor %vm8737, %vm8738
      %v8740 = vsel %vm8739, %v8732, %v8736
      %v8741 = vand.u32 2147483647, %v8731
      %vm8742 = vcmp.eq.f32.partialorder %v8741, 8.507059e+37
      %v8743 = vand.u32 %v8731, 2147483648
      %v8744 = vor.u32 1.1754944e-38, %v8743
      %v8745 = vsel %vm8742, %v8744, %v8740
      %v8746 = vmul.f32 %v8730, %v8745
      %v8747 = vmul.f32 %v8746, %v8746
      %v8748 = vmul.f32 0.002785687, %v8747
      %v8749 = vadd.f32 %v8748, -0.015866
      %v8750 = vmul.f32 %v8749, %v8747
      %v8751 = vadd.f32 %v8750, 0.04247222
      %v8752 = vmul.f32 %v8751, %v8747
      %v8753 = vadd.f32 %v8752, -0.074975304
      %v8754 = vmul.f32 %v8753, %v8747
      %v8755 = vadd.f32 %v8754, 0.1064488
      %v8756 = vmul.f32 %v8755, %v8747
      %v8757 = vadd.f32 %v8756, -0.14207031
      %v8758 = vmul.f32 %v8757, %v8747
      %v8759 = vadd.f32 %v8758, 0.19993454
      %v8760 = vmul.f32 %v8759, %v8747
      %v8761 = vadd.f32 %v8760, -0.33333147
      %v8762 = vmul.f32 %v8761, %v8747
      %v8763 = vmul.f32 %v8762, %v8746
      %v8764 = vadd.f32 %v8763, %v8746
      %vm8765 = vcmp.gt.f32.partialorder %v8729, %v8728
      %v8766 = vsub.f32 1.5707964, %v8764
      %v8767 = vsel %vm8765, %v8766, %v8764
      %vm8768 = vcmp.lt.f32.partialorder %v6026, 0.0
      %v8769 = vsub.f32 3.1415927, %v8767
      %v8770 = vsel %vm8768, %v8769, %v8767
      %vm8771 = vcmp.lt.s32.totalorder %v6026, 0
      %v8772 = vsel %vm8771, 3.1415927, 0.0
      %vm8773 = vcmp.eq.f32.partialorder %v6125, 0.0
      %v8774 = vsel %vm8773, %v8772, %v8770
      %vm8775 = vcmp.ne.f32.partialorder %v6026, %v6026
      %vm8776 = vcmp.ne.f32.partialorder %v6125, %v6125
      %vm8777 = vmor %vm8775, %vm8776
      %v8778 = vsel %vm8777, nan, %v8774
      %vm8779 = vcmp.lt.f32.partialorder %v6026, 0.0
      %v8780 = vsel %vm8779, 2.3561945, 0.7853982
      %vm8781 = vcmp.eq.s32.totalorder %v8728, inf
      %vm8782 = vcmp.eq.s32.totalorder %v8729, inf
      %vm8783 = vmand %vm8781, %vm8782
      %v8784 = vsel %vm8783, %v8780, %v8778
      %v8785 = vand.u32 2147483647, %v8784
      %v8786 = vand.u32 %v6125, 2147483648
      %v8787 = vor.u32 %v8785, %v8786
      %v8788 = vand.u32 2147483647, %v6027
      %v8789 = vand.u32 2147483647, %v6126
      %v8790 = vmin.f32 %v8788, %v8789
      %v8791 = vmax.f32 %v8788, %v8789
      %v8792 = vrcp.pop %v8791
      %v8793 = vmul.f32 %v8791, %v8792
      %v8794 = vsub.f32 1.0, %v8793
      %v8795 = vmul.f32 %v8792, %v8794
      %v8796 = vadd.f32 %v8792, %v8795
      %vm8797 = vweird.f32 %v8791
      %vm8798 = vweird.f32 %v8792
      %vm8799 = vmor %vm8797, %vm8798
      %v8800 = vsel %vm8799, %v8792, %v8796
      %v8801 = vand.u32 2147483647, %v8791
      %vm8802 = vcmp.eq.f32.partialorder %v8801, 8.507059e+37
      %v8803 = vand.u32 %v8791, 2147483648
      %v8804 = vor.u32 1.1754944e-38, %v8803
      %v8805 = vsel %vm8802, %v8804, %v8800
      %v8806 = vmul.f32 %v8790, %v8805
      %v8807 = vmul.f32 %v8806, %v8806
      %v8808 = vmul.f32 0.002785687, %v8807
      %v8809 = vadd.f32 %v8808, -0.015866
      %v8810 = vmul.f32 %v8809, %v8807
      %v8811 = vadd.f32 %v8810, 0.04247222
      %v8812 = vmul.f32 %v8811, %v8807
      %v8813 = vadd.f32 %v8812, -0.074975304
      %v8814 = vmul.f32 %v8813, %v8807
      %v8815 = vadd.f32 %v8814, 0.1064488
      %v8816 = vmul.f32 %v8815, %v8807
      %v8817 = vadd.f32 %v8816, -0.14207031
      %v8818 = vmul.f32 %v8817, %v8807
      %v8819 = vadd.f32 %v8818, 0.19993454
      %v8820 = vmul.f32 %v8819, %v8807
      %v8821 = vadd.f32 %v8820, -0.33333147
      %v8822 = vmul.f32 %v8821, %v8807
      %v8823 = vmul.f32 %v8822, %v8806
      %v8824 = vadd.f32 %v8823, %v8806
      %vm8825 = vcmp.gt.f32.partialorder %v8789, %v8788
      %v8826 = vsub.f32 1.5707964, %v8824
      %v8827 = vsel %vm8825, %v8826, %v8824
      %vm8828 = vcmp.lt.f32.partialorder %v6027, 0.0
      %v8829 = vsub.f32 3.1415927, %v8827
      %v8830 = vsel %vm8828, %v8829, %v8827
      %vm8831 = vcmp.lt.s32.totalorder %v6027, 0
      %v8832 = vsel %vm8831, 3.1415927, 0.0
      %vm8833 = vcmp.eq.f32.partialorder %v6126, 0.0
      %v8834 = vsel %vm8833, %v8832, %v8830
      %vm8835 = vcmp.ne.f32.partialorder %v6027, %v6027
      %vm8836 = vcmp.ne.f32.partialorder %v6126, %v6126
      %vm8837 = vmor %vm8835, %vm8836
      %v8838 = vsel %vm8837, nan, %v8834
      %vm8839 = vcmp.lt.f32.partialorder %v6027, 0.0
      %v8840 = vsel %vm8839, 2.3561945, 0.7853982
      %vm8841 = vcmp.eq.s32.totalorder %v8788, inf
      %vm8842 = vcmp.eq.s32.totalorder %v8789, inf
      %vm8843 = vmand %vm8841, %vm8842
      %v8844 = vsel %vm8843, %v8840, %v8838
      %v8845 = vand.u32 2147483647, %v8844
      %v8846 = vand.u32 %v6126, 2147483648
      %v8847 = vor.u32 %v8845, %v8846
      %v8848 = vand.u32 2147483647, %v6028
      %v8849 = vand.u32 2147483647, %v6127
      %v8850 = vmin.f32 %v8848, %v8849
      %v8851 = vmax.f32 %v8848, %v8849
      %v8852 = vrcp.pop %v8851
      %v8853 = vmul.f32 %v8851, %v8852
      %v8854 = vsub.f32 1.0, %v8853
      %v8855 = vmul.f32 %v8852, %v8854
      %v8856 = vadd.f32 %v8852, %v8855
      %vm8857 = vweird.f32 %v8851
      %vm8858 = vweird.f32 %v8852
      %vm8859 = vmor %vm8857, %vm8858
      %v8860 = vsel %vm8859, %v8852, %v8856
      %v8861 = vand.u32 2147483647, %v8851
      %vm8862 = vcmp.eq.f32.partialorder %v8861, 8.507059e+37
      %v8863 = vand.u32 %v8851, 2147483648
      %v8864 = vor.u32 1.1754944e-38, %v8863
      %v8865 = vsel %vm8862, %v8864, %v8860
      %v8866 = vmul.f32 %v8850, %v8865
      %v8867 = vmul.f32 %v8866, %v8866
      %v8868 = vmul.f32 0.002785687, %v8867
      %v8869 = vadd.f32 %v8868, -0.015866
      %v8870 = vmul.f32 %v8869, %v8867
      %v8871 = vadd.f32 %v8870, 0.04247222
      %v8872 = vmul.f32 %v8871, %v8867
      %v8873 = vadd.f32 %v8872, -0.074975304
      %v8874 = vmul.f32 %v8873, %v8867
      %v8875 = vadd.f32 %v8874, 0.1064488
      %v8876 = vmul.f32 %v8875, %v8867
      %v8877 = vadd.f32 %v8876, -0.14207031
      %v8878 = vmul.f32 %v8877, %v8867
      %v8879 = vadd.f32 %v8878, 0.19993454
      %v8880 = vmul.f32 %v8879, %v8867
      %v8881 = vadd.f32 %v8880, -0.33333147
      %v8882 = vmul.f32 %v8881, %v8867
      %v8883 = vmul.f32 %v8882, %v8866
      %v8884 = vadd.f32 %v8883, %v8866
      %vm8885 = vcmp.gt.f32.partialorder %v8849, %v8848
      %v8886 = vsub.f32 1.5707964, %v8884
      %v8887 = vsel %vm8885, %v8886, %v8884
      %vm8888 = vcmp.lt.f32.partialorder %v6028, 0.0
      %v8889 = vsub.f32 3.1415927, %v8887
      %v8890 = vsel %vm8888, %v8889, %v8887
      %vm8891 = vcmp.lt.s32.totalorder %v6028, 0
      %v8892 = vsel %vm8891, 3.1415927, 0.0
      %vm8893 = vcmp.eq.f32.partialorder %v6127, 0.0
      %v8894 = vsel %vm8893, %v8892, %v8890
      %vm8895 = vcmp.ne.f32.partialorder %v6028, %v6028
      %vm8896 = vcmp.ne.f32.partialorder %v6127, %v6127
      %vm8897 = vmor %vm8895, %vm8896
      %v8898 = vsel %vm8897, nan, %v8894
      %vm8899 = vcmp.lt.f32.partialorder %v6028, 0.0
      %v8900 = vsel %vm8899, 2.3561945, 0.7853982
      %vm8901 = vcmp.eq.s32.totalorder %v8848, inf
      %vm8902 = vcmp.eq.s32.totalorder %v8849, inf
      %vm8903 = vmand %vm8901, %vm8902
      %v8904 = vsel %vm8903, %v8900, %v8898
      %v8905 = vand.u32 2147483647, %v8904
      %v8906 = vand.u32 %v6127, 2147483648
      %v8907 = vor.u32 %v8905, %v8906
      %v8908 = vand.u32 2147483647, %v6029
      %v8909 = vand.u32 2147483647, %v6128
      %v8910 = vmin.f32 %v8908, %v8909
      %v8911 = vmax.f32 %v8908, %v8909
      %v8912 = vrcp.pop %v8911
      %v8913 = vmul.f32 %v8911, %v8912
      %v8914 = vsub.f32 1.0, %v8913
      %v8915 = vmul.f32 %v8912, %v8914
      %v8916 = vadd.f32 %v8912, %v8915
      %vm8917 = vweird.f32 %v8911
      %vm8918 = vweird.f32 %v8912
      %vm8919 = vmor %vm8917, %vm8918
      %v8920 = vsel %vm8919, %v8912, %v8916
      %v8921 = vand.u32 2147483647, %v8911
      %vm8922 = vcmp.eq.f32.partialorder %v8921, 8.507059e+37
      %v8923 = vand.u32 %v8911, 2147483648
      %v8924 = vor.u32 1.1754944e-38, %v8923
      %v8925 = vsel %vm8922, %v8924, %v8920
      %v8926 = vmul.f32 %v8910, %v8925
      %v8927 = vmul.f32 %v8926, %v8926
      %v8928 = vmul.f32 0.002785687, %v8927
      %v8929 = vadd.f32 %v8928, -0.015866
      %v8930 = vmul.f32 %v8929, %v8927
      %v8931 = vadd.f32 %v8930, 0.04247222
      %v8932 = vmul.f32 %v8931, %v8927
      %v8933 = vadd.f32 %v8932, -0.074975304
      %v8934 = vmul.f32 %v8933, %v8927
      %v8935 = vadd.f32 %v8934, 0.1064488
      %v8936 = vmul.f32 %v8935, %v8927
      %v8937 = vadd.f32 %v8936, -0.14207031
      %v8938 = vmul.f32 %v8937, %v8927
      %v8939 = vadd.f32 %v8938, 0.19993454
      %v8940 = vmul.f32 %v8939, %v8927
      %v8941 = vadd.f32 %v8940, -0.33333147
      %v8942 = vmul.f32 %v8941, %v8927
      %v8943 = vmul.f32 %v8942, %v8926
      %v8944 = vadd.f32 %v8943, %v8926
      %vm8945 = vcmp.gt.f32.partialorder %v8909, %v8908
      %v8946 = vsub.f32 1.5707964, %v8944
      %v8947 = vsel %vm8945, %v8946, %v8944
      %vm8948 = vcmp.lt.f32.partialorder %v6029, 0.0
      %v8949 = vsub.f32 3.1415927, %v8947
      %v8950 = vsel %vm8948, %v8949, %v8947
      %vm8951 = vcmp.lt.s32.totalorder %v6029, 0
      %v8952 = vsel %vm8951, 3.1415927, 0.0
      %vm8953 = vcmp.eq.f32.partialorder %v6128, 0.0
      %v8954 = vsel %vm8953, %v8952, %v8950
      %vm8955 = vcmp.ne.f32.partialorder %v6029, %v6029
      %vm8956 = vcmp.ne.f32.partialorder %v6128, %v6128
      %vm8957 = vmor %vm8955, %vm8956
      %v8958 = vsel %vm8957, nan, %v8954
      %vm8959 = vcmp.lt.f32.partialorder %v6029, 0.0
      %v8960 = vsel %vm8959, 2.3561945, 0.7853982
      %vm8961 = vcmp.eq.s32.totalorder %v8908, inf
      %vm8962 = vcmp.eq.s32.totalorder %v8909, inf
      %vm8963 = vmand %vm8961, %vm8962
      %v8964 = vsel %vm8963, %v8960, %v8958
      %v8965 = vand.u32 2147483647, %v8964
      %v8966 = vand.u32 %v6128, 2147483648
      %v8967 = vor.u32 %v8965, %v8966
      %v8968 = vand.u32 2147483647, %v6030
      %v8969 = vand.u32 2147483647, %v6129
      %v8970 = vmin.f32 %v8968, %v8969
      %v8971 = vmax.f32 %v8968, %v8969
      %v8972 = vrcp.pop %v8971
      %v8973 = vmul.f32 %v8971, %v8972
      %v8974 = vsub.f32 1.0, %v8973
      %v8975 = vmul.f32 %v8972, %v8974
      %v8976 = vadd.f32 %v8972, %v8975
      %vm8977 = vweird.f32 %v8971
      %vm8978 = vweird.f32 %v8972
      %vm8979 = vmor %vm8977, %vm8978
      %v8980 = vsel %vm8979, %v8972, %v8976
      %v8981 = vand.u32 2147483647, %v8971
      %vm8982 = vcmp.eq.f32.partialorder %v8981, 8.507059e+37
      %v8983 = vand.u32 %v8971, 2147483648
      %v8984 = vor.u32 1.1754944e-38, %v8983
      %v8985 = vsel %vm8982, %v8984, %v8980
      %v8986 = vmul.f32 %v8970, %v8985
      %v8987 = vmul.f32 %v8986, %v8986
      %v8988 = vmul.f32 0.002785687, %v8987
      %v8989 = vadd.f32 %v8988, -0.015866
      %v8990 = vmul.f32 %v8989, %v8987
      %v8991 = vadd.f32 %v8990, 0.04247222
      %v8992 = vmul.f32 %v8991, %v8987
      %v8993 = vadd.f32 %v8992, -0.074975304
      %v8994 = vmul.f32 %v8993, %v8987
      %v8995 = vadd.f32 %v8994, 0.1064488
      %v8996 = vmul.f32 %v8995, %v8987
      %v8997 = vadd.f32 %v8996, -0.14207031
      %v8998 = vmul.f32 %v8997, %v8987
      %v8999 = vadd.f32 %v8998, 0.19993454
      %v9000 = vmul.f32 %v8999, %v8987
      %v9001 = vadd.f32 %v9000, -0.33333147
      %v9002 = vmul.f32 %v9001, %v8987
      %v9003 = vmul.f32 %v9002, %v8986
      %v9004 = vadd.f32 %v9003, %v8986
      %vm9005 = vcmp.gt.f32.partialorder %v8969, %v8968
      %v9006 = vsub.f32 1.5707964, %v9004
      %v9007 = vsel %vm9005, %v9006, %v9004
      %vm9008 = vcmp.lt.f32.partialorder %v6030, 0.0
      %v9009 = vsub.f32 3.1415927, %v9007
      %v9010 = vsel %vm9008, %v9009, %v9007
      %vm9011 = vcmp.lt.s32.totalorder %v6030, 0
      %v9012 = vsel %vm9011, 3.1415927, 0.0
      %vm9013 = vcmp.eq.f32.partialorder %v6129, 0.0
      %v9014 = vsel %vm9013, %v9012, %v9010
      %vm9015 = vcmp.ne.f32.partialorder %v6030, %v6030
      %vm9016 = vcmp.ne.f32.partialorder %v6129, %v6129
      %vm9017 = vmor %vm9015, %vm9016
      %v9018 = vsel %vm9017, nan, %v9014
      %vm9019 = vcmp.lt.f32.partialorder %v6030, 0.0
      %v9020 = vsel %vm9019, 2.3561945, 0.7853982
      %vm9021 = vcmp.eq.s32.totalorder %v8968, inf
      %vm9022 = vcmp.eq.s32.totalorder %v8969, inf
      %vm9023 = vmand %vm9021, %vm9022
      %v9024 = vsel %vm9023, %v9020, %v9018
      %v9025 = vand.u32 2147483647, %v9024
      %v9026 = vand.u32 %v6129, 2147483648
      %v9027 = vor.u32 %v9025, %v9026
      %v9028 = vand.u32 2147483647, %v6031
      %v9029 = vand.u32 2147483647, %v6130
      %v9030 = vmin.f32 %v9028, %v9029
      %v9031 = vmax.f32 %v9028, %v9029
      %v9032 = vrcp.pop %v9031
      %v9033 = vmul.f32 %v9031, %v9032
      %v9034 = vsub.f32 1.0, %v9033
      %v9035 = vmul.f32 %v9032, %v9034
      %v9036 = vadd.f32 %v9032, %v9035
      %vm9037 = vweird.f32 %v9031
      %vm9038 = vweird.f32 %v9032
      %vm9039 = vmor %vm9037, %vm9038
      %v9040 = vsel %vm9039, %v9032, %v9036
      %v9041 = vand.u32 2147483647, %v9031
      %vm9042 = vcmp.eq.f32.partialorder %v9041, 8.507059e+37
      %v9043 = vand.u32 %v9031, 2147483648
      %v9044 = vor.u32 1.1754944e-38, %v9043
      %v9045 = vsel %vm9042, %v9044, %v9040
      %v9046 = vmul.f32 %v9030, %v9045
      %v9047 = vmul.f32 %v9046, %v9046
      %v9048 = vmul.f32 0.002785687, %v9047
      %v9049 = vadd.f32 %v9048, -0.015866
      %v9050 = vmul.f32 %v9049, %v9047
      %v9051 = vadd.f32 %v9050, 0.04247222
      %v9052 = vmul.f32 %v9051, %v9047
      %v9053 = vadd.f32 %v9052, -0.074975304
      %v9054 = vmul.f32 %v9053, %v9047
      %v9055 = vadd.f32 %v9054, 0.1064488
      %v9056 = vmul.f32 %v9055, %v9047
      %v9057 = vadd.f32 %v9056, -0.14207031
      %v9058 = vmul.f32 %v9057, %v9047
      %v9059 = vadd.f32 %v9058, 0.19993454
      %v9060 = vmul.f32 %v9059, %v9047
      %v9061 = vadd.f32 %v9060, -0.33333147
      %v9062 = vmul.f32 %v9061, %v9047
      %v9063 = vmul.f32 %v9062, %v9046
      %v9064 = vadd.f32 %v9063, %v9046
      %vm9065 = vcmp.gt.f32.partialorder %v9029, %v9028
      %v9066 = vsub.f32 1.5707964, %v9064
      %v9067 = vsel %vm9065, %v9066, %v9064
      %vm9068 = vcmp.lt.f32.partialorder %v6031, 0.0
      %v9069 = vsub.f32 3.1415927, %v9067
      %v9070 = vsel %vm9068, %v9069, %v9067
      %vm9071 = vcmp.lt.s32.totalorder %v6031, 0
      %v9072 = vsel %vm9071, 3.1415927, 0.0
      %vm9073 = vcmp.eq.f32.partialorder %v6130, 0.0
      %v9074 = vsel %vm9073, %v9072, %v9070
      %vm9075 = vcmp.ne.f32.partialorder %v6031, %v6031
      %vm9076 = vcmp.ne.f32.partialorder %v6130, %v6130
      %vm9077 = vmor %vm9075, %vm9076
      %v9078 = vsel %vm9077, nan, %v9074
      %vm9079 = vcmp.lt.f32.partialorder %v6031, 0.0
      %v9080 = vsel %vm9079, 2.3561945, 0.7853982
      %vm9081 = vcmp.eq.s32.totalorder %v9028, inf
      %vm9082 = vcmp.eq.s32.totalorder %v9029, inf
      %vm9083 = vmand %vm9081, %vm9082
      %v9084 = vsel %vm9083, %v9080, %v9078
      %v9085 = vand.u32 2147483647, %v9084
      %v9086 = vand.u32 %v6130, 2147483648
      %v9087 = vor.u32 %v9085, %v9086
      %v9088 = vand.u32 2147483647, %v6032
      %v9089 = vand.u32 2147483647, %v6131
      %v9090 = vmin.f32 %v9088, %v9089
      %v9091 = vmax.f32 %v9088, %v9089
      %v9092 = vrcp.pop %v9091
      %v9093 = vmul.f32 %v9091, %v9092
      %v9094 = vsub.f32 1.0, %v9093
      %v9095 = vmul.f32 %v9092, %v9094
      %v9096 = vadd.f32 %v9092, %v9095
      %vm9097 = vweird.f32 %v9091
      %vm9098 = vweird.f32 %v9092
      %vm9099 = vmor %vm9097, %vm9098
      %v9100 = vsel %vm9099, %v9092, %v9096
      %v9101 = vand.u32 2147483647, %v9091
      %vm9102 = vcmp.eq.f32.partialorder %v9101, 8.507059e+37
      %v9103 = vand.u32 %v9091, 2147483648
      %v9104 = vor.u32 1.1754944e-38, %v9103
      %v9105 = vsel %vm9102, %v9104, %v9100
      %v9106 = vmul.f32 %v9090, %v9105
      %v9107 = vmul.f32 %v9106, %v9106
      %v9108 = vmul.f32 0.002785687, %v9107
      %v9109 = vadd.f32 %v9108, -0.015866
      %v9110 = vmul.f32 %v9109, %v9107
      %v9111 = vadd.f32 %v9110, 0.04247222
      %v9112 = vmul.f32 %v9111, %v9107
      %v9113 = vadd.f32 %v9112, -0.074975304
      %v9114 = vmul.f32 %v9113, %v9107
      %v9115 = vadd.f32 %v9114, 0.1064488
      %v9116 = vmul.f32 %v9115, %v9107
      %v9117 = vadd.f32 %v9116, -0.14207031
      %v9118 = vmul.f32 %v9117, %v9107
      %v9119 = vadd.f32 %v9118, 0.19993454
      %v9120 = vmul.f32 %v9119, %v9107
      %v9121 = vadd.f32 %v9120, -0.33333147
      %v9122 = vmul.f32 %v9121, %v9107
      %v9123 = vmul.f32 %v9122, %v9106
      %v9124 = vadd.f32 %v9123, %v9106
      %vm9125 = vcmp.gt.f32.partialorder %v9089, %v9088
      %v9126 = vsub.f32 1.5707964, %v9124
      %v9127 = vsel %vm9125, %v9126, %v9124
      %vm9128 = vcmp.lt.f32.partialorder %v6032, 0.0
      %v9129 = vsub.f32 3.1415927, %v9127
      %v9130 = vsel %vm9128, %v9129, %v9127
      %vm9131 = vcmp.lt.s32.totalorder %v6032, 0
      %v9132 = vsel %vm9131, 3.1415927, 0.0
      %vm9133 = vcmp.eq.f32.partialorder %v6131, 0.0
      %v9134 = vsel %vm9133, %v9132, %v9130
      %vm9135 = vcmp.ne.f32.partialorder %v6032, %v6032
      %vm9136 = vcmp.ne.f32.partialorder %v6131, %v6131
      %vm9137 = vmor %vm9135, %vm9136
      %v9138 = vsel %vm9137, nan, %v9134
      %vm9139 = vcmp.lt.f32.partialorder %v6032, 0.0
      %v9140 = vsel %vm9139, 2.3561945, 0.7853982
      %vm9141 = vcmp.eq.s32.totalorder %v9088, inf
      %vm9142 = vcmp.eq.s32.totalorder %v9089, inf
      %vm9143 = vmand %vm9141, %vm9142
      %v9144 = vsel %vm9143, %v9140, %v9138
      %v9145 = vand.u32 2147483647, %v9144
      %v9146 = vand.u32 %v6131, 2147483648
      %v9147 = vor.u32 %v9145, %v9146
      %v9148 = vand.u32 2147483647, %v6033
      %v9149 = vand.u32 2147483647, %v6132
      %v9150 = vmin.f32 %v9148, %v9149
      %v9151 = vmax.f32 %v9148, %v9149
      %v9152 = vrcp.pop %v9151
      %v9153 = vmul.f32 %v9151, %v9152
      %v9154 = vsub.f32 1.0, %v9153
      %v9155 = vmul.f32 %v9152, %v9154
      %v9156 = vadd.f32 %v9152, %v9155
      %vm9157 = vweird.f32 %v9151
      %vm9158 = vweird.f32 %v9152
      %vm9159 = vmor %vm9157, %vm9158
      %v9160 = vsel %vm9159, %v9152, %v9156
      %v9161 = vand.u32 2147483647, %v9151
      %vm9162 = vcmp.eq.f32.partialorder %v9161, 8.507059e+37
      %v9163 = vand.u32 %v9151, 2147483648
      %v9164 = vor.u32 1.1754944e-38, %v9163
      %v9165 = vsel %vm9162, %v9164, %v9160
      %v9166 = vmul.f32 %v9150, %v9165
      %v9167 = vmul.f32 %v9166, %v9166
      %v9168 = vmul.f32 0.002785687, %v9167
      %v9169 = vadd.f32 %v9168, -0.015866
      %v9170 = vmul.f32 %v9169, %v9167
      %v9171 = vadd.f32 %v9170, 0.04247222
      %v9172 = vmul.f32 %v9171, %v9167
      %v9173 = vadd.f32 %v9172, -0.074975304
      %v9174 = vmul.f32 %v9173, %v9167
      %v9175 = vadd.f32 %v9174, 0.1064488
      %v9176 = vmul.f32 %v9175, %v9167
      %v9177 = vadd.f32 %v9176, -0.14207031
      %v9178 = vmul.f32 %v9177, %v9167
      %v9179 = vadd.f32 %v9178, 0.19993454
      %v9180 = vmul.f32 %v9179, %v9167
      %v9181 = vadd.f32 %v9180, -0.33333147
      %v9182 = vmul.f32 %v9181, %v9167
      %v9183 = vmul.f32 %v9182, %v9166
      %v9184 = vadd.f32 %v9183, %v9166
      %vm9185 = vcmp.gt.f32.partialorder %v9149, %v9148
      %v9186 = vsub.f32 1.5707964, %v9184
      %v9187 = vsel %vm9185, %v9186, %v9184
      %vm9188 = vcmp.lt.f32.partialorder %v6033, 0.0
      %v9189 = vsub.f32 3.1415927, %v9187
      %v9190 = vsel %vm9188, %v9189, %v9187
      %vm9191 = vcmp.lt.s32.totalorder %v6033, 0
      %v9192 = vsel %vm9191, 3.1415927, 0.0
      %vm9193 = vcmp.eq.f32.partialorder %v6132, 0.0
      %v9194 = vsel %vm9193, %v9192, %v9190
      %vm9195 = vcmp.ne.f32.partialorder %v6033, %v6033
      %vm9196 = vcmp.ne.f32.partialorder %v6132, %v6132
      %vm9197 = vmor %vm9195, %vm9196
      %v9198 = vsel %vm9197, nan, %v9194
      %vm9199 = vcmp.lt.f32.partialorder %v6033, 0.0
      %v9200 = vsel %vm9199, 2.3561945, 0.7853982
      %vm9201 = vcmp.eq.s32.totalorder %v9148, inf
      %vm9202 = vcmp.eq.s32.totalorder %v9149, inf
      %vm9203 = vmand %vm9201, %vm9202
      %v9204 = vsel %vm9203, %v9200, %v9198
      %v9205 = vand.u32 2147483647, %v9204
      %v9206 = vand.u32 %v6132, 2147483648
      %v9207 = vor.u32 %v9205, %v9206
      %v9208 = vand.u32 2147483647, %v6034
      %v9209 = vand.u32 2147483647, %v6133
      %v9210 = vmin.f32 %v9208, %v9209
      %v9211 = vmax.f32 %v9208, %v9209
      %v9212 = vrcp.pop %v9211
      %v9213 = vmul.f32 %v9211, %v9212
      %v9214 = vsub.f32 1.0, %v9213
      %v9215 = vmul.f32 %v9212, %v9214
      %v9216 = vadd.f32 %v9212, %v9215
      %vm9217 = vweird.f32 %v9211
      %vm9218 = vweird.f32 %v9212
      %vm9219 = vmor %vm9217, %vm9218
      %v9220 = vsel %vm9219, %v9212, %v9216
      %v9221 = vand.u32 2147483647, %v9211
      %vm9222 = vcmp.eq.f32.partialorder %v9221, 8.507059e+37
      %v9223 = vand.u32 %v9211, 2147483648
      %v9224 = vor.u32 1.1754944e-38, %v9223
      %v9225 = vsel %vm9222, %v9224, %v9220
      %v9226 = vmul.f32 %v9210, %v9225
      %v9227 = vmul.f32 %v9226, %v9226
      %v9228 = vmul.f32 0.002785687, %v9227
      %v9229 = vadd.f32 %v9228, -0.015866
      %v9230 = vmul.f32 %v9229, %v9227
      %v9231 = vadd.f32 %v9230, 0.04247222
      %v9232 = vmul.f32 %v9231, %v9227
      %v9233 = vadd.f32 %v9232, -0.074975304
      %v9234 = vmul.f32 %v9233, %v9227
      %v9235 = vadd.f32 %v9234, 0.1064488
      %v9236 = vmul.f32 %v9235, %v9227
      %v9237 = vadd.f32 %v9236, -0.14207031
      %v9238 = vmul.f32 %v9237, %v9227
      %v9239 = vadd.f32 %v9238, 0.19993454
      %v9240 = vmul.f32 %v9239, %v9227
      %v9241 = vadd.f32 %v9240, -0.33333147
      %v9242 = vmul.f32 %v9241, %v9227
      %v9243 = vmul.f32 %v9242, %v9226
      %v9244 = vadd.f32 %v9243, %v9226
      %vm9245 = vcmp.gt.f32.partialorder %v9209, %v9208
      %v9246 = vsub.f32 1.5707964, %v9244
      %v9247 = vsel %vm9245, %v9246, %v9244
      %vm9248 = vcmp.lt.f32.partialorder %v6034, 0.0
      %v9249 = vsub.f32 3.1415927, %v9247
      %v9250 = vsel %vm9248, %v9249, %v9247
      %vm9251 = vcmp.lt.s32.totalorder %v6034, 0
      %v9252 = vsel %vm9251, 3.1415927, 0.0
      %vm9253 = vcmp.eq.f32.partialorder %v6133, 0.0
      %v9254 = vsel %vm9253, %v9252, %v9250
      %vm9255 = vcmp.ne.f32.partialorder %v6034, %v6034
      %vm9256 = vcmp.ne.f32.partialorder %v6133, %v6133
      %vm9257 = vmor %vm9255, %vm9256
      %v9258 = vsel %vm9257, nan, %v9254
      %vm9259 = vcmp.lt.f32.partialorder %v6034, 0.0
      %v9260 = vsel %vm9259, 2.3561945, 0.7853982
      %vm9261 = vcmp.eq.s32.totalorder %v9208, inf
      %vm9262 = vcmp.eq.s32.totalorder %v9209, inf
      %vm9263 = vmand %vm9261, %vm9262
      %v9264 = vsel %vm9263, %v9260, %v9258
      %v9265 = vand.u32 2147483647, %v9264
      %v9266 = vand.u32 %v6133, 2147483648
      %v9267 = vor.u32 %v9265, %v9266
      %v9268 = vand.u32 2147483647, %v6035
      %v9269 = vand.u32 2147483647, %v6134
      %v9270 = vmin.f32 %v9268, %v9269
      %v9271 = vmax.f32 %v9268, %v9269
      %v9272 = vrcp.pop %v9271
      %v9273 = vmul.f32 %v9271, %v9272
      %v9274 = vsub.f32 1.0, %v9273
      %v9275 = vmul.f32 %v9272, %v9274
      %v9276 = vadd.f32 %v9272, %v9275
      %vm9277 = vweird.f32 %v9271
      %vm9278 = vweird.f32 %v9272
      %vm9279 = vmor %vm9277, %vm9278
      %v9280 = vsel %vm9279, %v9272, %v9276
      %v9281 = vand.u32 2147483647, %v9271
      %vm9282 = vcmp.eq.f32.partialorder %v9281, 8.507059e+37
      %v9283 = vand.u32 %v9271, 2147483648
      %v9284 = vor.u32 1.1754944e-38, %v9283
      %v9285 = vsel %vm9282, %v9284, %v9280
      %v9286 = vmul.f32 %v9270, %v9285
      %v9287 = vmul.f32 %v9286, %v9286
      %v9288 = vmul.f32 0.002785687, %v9287
      %v9289 = vadd.f32 %v9288, -0.015866
      %v9290 = vmul.f32 %v9289, %v9287
      %v9291 = vadd.f32 %v9290, 0.04247222
      %v9292 = vmul.f32 %v9291, %v9287
      %v9293 = vadd.f32 %v9292, -0.074975304
      %v9294 = vmul.f32 %v9293, %v9287
      %v9295 = vadd.f32 %v9294, 0.1064488
      %v9296 = vmul.f32 %v9295, %v9287
      %v9297 = vadd.f32 %v9296, -0.14207031
      %v9298 = vmul.f32 %v9297, %v9287
      %v9299 = vadd.f32 %v9298, 0.19993454
      %v9300 = vmul.f32 %v9299, %v9287
      %v9301 = vadd.f32 %v9300, -0.33333147
      %v9302 = vmul.f32 %v9301, %v9287
      %v9303 = vmul.f32 %v9302, %v9286
      %v9304 = vadd.f32 %v9303, %v9286
      %vm9305 = vcmp.gt.f32.partialorder %v9269, %v9268
      %v9306 = vsub.f32 1.5707964, %v9304
      %v9307 = vsel %vm9305, %v9306, %v9304
      %vm9308 = vcmp.lt.f32.partialorder %v6035, 0.0
      %v9309 = vsub.f32 3.1415927, %v9307
      %v9310 = vsel %vm9308, %v9309, %v9307
      %vm9311 = vcmp.lt.s32.totalorder %v6035, 0
      %v9312 = vsel %vm9311, 3.1415927, 0.0
      %vm9313 = vcmp.eq.f32.partialorder %v6134, 0.0
      %v9314 = vsel %vm9313, %v9312, %v9310
      %vm9315 = vcmp.ne.f32.partialorder %v6035, %v6035
      %vm9316 = vcmp.ne.f32.partialorder %v6134, %v6134
      %vm9317 = vmor %vm9315, %vm9316
      %v9318 = vsel %vm9317, nan, %v9314
      %vm9319 = vcmp.lt.f32.partialorder %v6035, 0.0
      %v9320 = vsel %vm9319, 2.3561945, 0.7853982
      %vm9321 = vcmp.eq.s32.totalorder %v9268, inf
      %vm9322 = vcmp.eq.s32.totalorder %v9269, inf
      %vm9323 = vmand %vm9321, %vm9322
      %v9324 = vsel %vm9323, %v9320, %v9318
      %v9325 = vand.u32 2147483647, %v9324
      %v9326 = vand.u32 %v6134, 2147483648
      %v9327 = vor.u32 %v9325, %v9326
      %v9328 = vand.u32 2147483647, %v6036
      %v9329 = vand.u32 2147483647, %v6135
      %v9330 = vmin.f32 %v9328, %v9329
      %v9331 = vmax.f32 %v9328, %v9329
      %v9332 = vrcp.pop %v9331
      %v9333 = vmul.f32 %v9331, %v9332
      %v9334 = vsub.f32 1.0, %v9333
      %v9335 = vmul.f32 %v9332, %v9334
      %v9336 = vadd.f32 %v9332, %v9335
      %vm9337 = vweird.f32 %v9331
      %vm9338 = vweird.f32 %v9332
      %vm9339 = vmor %vm9337, %vm9338
      %v9340 = vsel %vm9339, %v9332, %v9336
      %v9341 = vand.u32 2147483647, %v9331
      %vm9342 = vcmp.eq.f32.partialorder %v9341, 8.507059e+37
      %v9343 = vand.u32 %v9331, 2147483648
      %v9344 = vor.u32 1.1754944e-38, %v9343
      %v9345 = vsel %vm9342, %v9344, %v9340
      %v9346 = vmul.f32 %v9330, %v9345
      %v9347 = vmul.f32 %v9346, %v9346
      %v9348 = vmul.f32 0.002785687, %v9347
      %v9349 = vadd.f32 %v9348, -0.015866
      %v9350 = vmul.f32 %v9349, %v9347
      %v9351 = vadd.f32 %v9350, 0.04247222
      %v9352 = vmul.f32 %v9351, %v9347
      %v9353 = vadd.f32 %v9352, -0.074975304
      %v9354 = vmul.f32 %v9353, %v9347
      %v9355 = vadd.f32 %v9354, 0.1064488
      %v9356 = vmul.f32 %v9355, %v9347
      %v9357 = vadd.f32 %v9356, -0.14207031
      %v9358 = vmul.f32 %v9357, %v9347
      %v9359 = vadd.f32 %v9358, 0.19993454
      %v9360 = vmul.f32 %v9359, %v9347
      %v9361 = vadd.f32 %v9360, -0.33333147
      %v9362 = vmul.f32 %v9361, %v9347
      %v9363 = vmul.f32 %v9362, %v9346
      %v9364 = vadd.f32 %v9363, %v9346
      %vm9365 = vcmp.gt.f32.partialorder %v9329, %v9328
      %v9366 = vsub.f32 1.5707964, %v9364
      %v9367 = vsel %vm9365, %v9366, %v9364
      %vm9368 = vcmp.lt.f32.partialorder %v6036, 0.0
      %v9369 = vsub.f32 3.1415927, %v9367
      %v9370 = vsel %vm9368, %v9369, %v9367
      %vm9371 = vcmp.lt.s32.totalorder %v6036, 0
      %v9372 = vsel %vm9371, 3.1415927, 0.0
      %vm9373 = vcmp.eq.f32.partialorder %v6135, 0.0
      %v9374 = vsel %vm9373, %v9372, %v9370
      %vm9375 = vcmp.ne.f32.partialorder %v6036, %v6036
      %vm9376 = vcmp.ne.f32.partialorder %v6135, %v6135
      %vm9377 = vmor %vm9375, %vm9376
      %v9378 = vsel %vm9377, nan, %v9374
      %vm9379 = vcmp.lt.f32.partialorder %v6036, 0.0
      %v9380 = vsel %vm9379, 2.3561945, 0.7853982
      %vm9381 = vcmp.eq.s32.totalorder %v9328, inf
      %vm9382 = vcmp.eq.s32.totalorder %v9329, inf
      %vm9383 = vmand %vm9381, %vm9382
      %v9384 = vsel %vm9383, %v9380, %v9378
      %v9385 = vand.u32 2147483647, %v9384
      %v9386 = vand.u32 %v6135, 2147483648
      %v9387 = vor.u32 %v9385, %v9386
      %v9388 = vand.u32 2147483647, %v6037
      %v9389 = vand.u32 2147483647, %v6136
      %v9390 = vmin.f32 %v9388, %v9389
      %v9391 = vmax.f32 %v9388, %v9389
      %v9392 = vrcp.pop %v9391
      %v9393 = vmul.f32 %v9391, %v9392
      %v9394 = vsub.f32 1.0, %v9393
      %v9395 = vmul.f32 %v9392, %v9394
      %v9396 = vadd.f32 %v9392, %v9395
      %vm9397 = vweird.f32 %v9391
      %vm9398 = vweird.f32 %v9392
      %vm9399 = vmor %vm9397, %vm9398
      %v9400 = vsel %vm9399, %v9392, %v9396
      %v9401 = vand.u32 2147483647, %v9391
      %vm9402 = vcmp.eq.f32.partialorder %v9401, 8.507059e+37
      %v9403 = vand.u32 %v9391, 2147483648
      %v9404 = vor.u32 1.1754944e-38, %v9403
      %v9405 = vsel %vm9402, %v9404, %v9400
      %v9406 = vmul.f32 %v9390, %v9405
      %v9407 = vmul.f32 %v9406, %v9406
      %v9408 = vmul.f32 0.002785687, %v9407
      %v9409 = vadd.f32 %v9408, -0.015866
      %v9410 = vmul.f32 %v9409, %v9407
      %v9411 = vadd.f32 %v9410, 0.04247222
      %v9412 = vmul.f32 %v9411, %v9407
      %v9413 = vadd.f32 %v9412, -0.074975304
      %v9414 = vmul.f32 %v9413, %v9407
      %v9415 = vadd.f32 %v9414, 0.1064488
      %v9416 = vmul.f32 %v9415, %v9407
      %v9417 = vadd.f32 %v9416, -0.14207031
      %v9418 = vmul.f32 %v9417, %v9407
      %v9419 = vadd.f32 %v9418, 0.19993454
      %v9420 = vmul.f32 %v9419, %v9407
      %v9421 = vadd.f32 %v9420, -0.33333147
      %v9422 = vmul.f32 %v9421, %v9407
      %v9423 = vmul.f32 %v9422, %v9406
      %v9424 = vadd.f32 %v9423, %v9406
      %vm9425 = vcmp.gt.f32.partialorder %v9389, %v9388
      %v9426 = vsub.f32 1.5707964, %v9424
      %v9427 = vsel %vm9425, %v9426, %v9424
      %vm9428 = vcmp.lt.f32.partialorder %v6037, 0.0
      %v9429 = vsub.f32 3.1415927, %v9427
      %v9430 = vsel %vm9428, %v9429, %v9427
      %vm9431 = vcmp.lt.s32.totalorder %v6037, 0
      %v9432 = vsel %vm9431, 3.1415927, 0.0
      %vm9433 = vcmp.eq.f32.partialorder %v6136, 0.0
      %v9434 = vsel %vm9433, %v9432, %v9430
      %vm9435 = vcmp.ne.f32.partialorder %v6037, %v6037
      %vm9436 = vcmp.ne.f32.partialorder %v6136, %v6136
      %vm9437 = vmor %vm9435, %vm9436
      %v9438 = vsel %vm9437, nan, %v9434
      %vm9439 = vcmp.lt.f32.partialorder %v6037, 0.0
      %v9440 = vsel %vm9439, 2.3561945, 0.7853982
      %vm9441 = vcmp.eq.s32.totalorder %v9388, inf
      %vm9442 = vcmp.eq.s32.totalorder %v9389, inf
      %vm9443 = vmand %vm9441, %vm9442
      %v9444 = vsel %vm9443, %v9440, %v9438
      %v9445 = vand.u32 2147483647, %v9444
      %v9446 = vand.u32 %v6136, 2147483648
      %v9447 = vor.u32 %v9445, %v9446
      %v9448 = vand.u32 2147483647, %v6038
      %v9449 = vand.u32 2147483647, %v6137
      %v9450 = vmin.f32 %v9448, %v9449
      %v9451 = vmax.f32 %v9448, %v9449
      %v9452 = vrcp.pop %v9451
      %v9453 = vmul.f32 %v9451, %v9452
      %v9454 = vsub.f32 1.0, %v9453
      %v9455 = vmul.f32 %v9452, %v9454
      %v9456 = vadd.f32 %v9452, %v9455
      %vm9457 = vweird.f32 %v9451
      %vm9458 = vweird.f32 %v9452
      %vm9459 = vmor %vm9457, %vm9458
      %v9460 = vsel %vm9459, %v9452, %v9456
      %v9461 = vand.u32 2147483647, %v9451
      %vm9462 = vcmp.eq.f32.partialorder %v9461, 8.507059e+37
      %v9463 = vand.u32 %v9451, 2147483648
      %v9464 = vor.u32 1.1754944e-38, %v9463
      %v9465 = vsel %vm9462, %v9464, %v9460
      %v9466 = vmul.f32 %v9450, %v9465
      %v9467 = vmul.f32 %v9466, %v9466
      %v9468 = vmul.f32 0.002785687, %v9467
      %v9469 = vadd.f32 %v9468, -0.015866
      %v9470 = vmul.f32 %v9469, %v9467
      %v9471 = vadd.f32 %v9470, 0.04247222
      %v9472 = vmul.f32 %v9471, %v9467
      %v9473 = vadd.f32 %v9472, -0.074975304
      %v9474 = vmul.f32 %v9473, %v9467
      %v9475 = vadd.f32 %v9474, 0.1064488
      %v9476 = vmul.f32 %v9475, %v9467
      %v9477 = vadd.f32 %v9476, -0.14207031
      %v9478 = vmul.f32 %v9477, %v9467
      %v9479 = vadd.f32 %v9478, 0.19993454
      %v9480 = vmul.f32 %v9479, %v9467
      %v9481 = vadd.f32 %v9480, -0.33333147
      %v9482 = vmul.f32 %v9481, %v9467
      %v9483 = vmul.f32 %v9482, %v9466
      %v9484 = vadd.f32 %v9483, %v9466
      %vm9485 = vcmp.gt.f32.partialorder %v9449, %v9448
      %v9486 = vsub.f32 1.5707964, %v9484
      %v9487 = vsel %vm9485, %v9486, %v9484
      %vm9488 = vcmp.lt.f32.partialorder %v6038, 0.0
      %v9489 = vsub.f32 3.1415927, %v9487
      %v9490 = vsel %vm9488, %v9489, %v9487
      %vm9491 = vcmp.lt.s32.totalorder %v6038, 0
      %v9492 = vsel %vm9491, 3.1415927, 0.0
      %vm9493 = vcmp.eq.f32.partialorder %v6137, 0.0
      %v9494 = vsel %vm9493, %v9492, %v9490
      %vm9495 = vcmp.ne.f32.partialorder %v6038, %v6038
      %vm9496 = vcmp.ne.f32.partialorder %v6137, %v6137
      %vm9497 = vmor %vm9495, %vm9496
      %v9498 = vsel %vm9497, nan, %v9494
      %vm9499 = vcmp.lt.f32.partialorder %v6038, 0.0
      %v9500 = vsel %vm9499, 2.3561945, 0.7853982
      %vm9501 = vcmp.eq.s32.totalorder %v9448, inf
      %vm9502 = vcmp.eq.s32.totalorder %v9449, inf
      %vm9503 = vmand %vm9501, %vm9502
      %v9504 = vsel %vm9503, %v9500, %v9498
      %v9505 = vand.u32 2147483647, %v9504
      %v9506 = vand.u32 %v6137, 2147483648
      %v9507 = vor.u32 %v9505, %v9506
      %v9508 = vand.u32 2147483647, %v6039
      %v9509 = vand.u32 2147483647, %v6138
      %v9510 = vmin.f32 %v9508, %v9509
      %v9511 = vmax.f32 %v9508, %v9509
      %v9512 = vrcp.pop %v9511
      %v9513 = vmul.f32 %v9511, %v9512
      %v9514 = vsub.f32 1.0, %v9513
      %v9515 = vmul.f32 %v9512, %v9514
      %v9516 = vadd.f32 %v9512, %v9515
      %vm9517 = vweird.f32 %v9511
      %vm9518 = vweird.f32 %v9512
      %vm9519 = vmor %vm9517, %vm9518
      %v9520 = vsel %vm9519, %v9512, %v9516
      %v9521 = vand.u32 2147483647, %v9511
      %vm9522 = vcmp.eq.f32.partialorder %v9521, 8.507059e+37
      %v9523 = vand.u32 %v9511, 2147483648
      %v9524 = vor.u32 1.1754944e-38, %v9523
      %v9525 = vsel %vm9522, %v9524, %v9520
      %v9526 = vmul.f32 %v9510, %v9525
      %v9527 = vmul.f32 %v9526, %v9526
      %v9528 = vmul.f32 0.002785687, %v9527
      %v9529 = vadd.f32 %v9528, -0.015866
      %v9530 = vmul.f32 %v9529, %v9527
      %v9531 = vadd.f32 %v9530, 0.04247222
      %v9532 = vmul.f32 %v9531, %v9527
      %v9533 = vadd.f32 %v9532, -0.074975304
      %v9534 = vmul.f32 %v9533, %v9527
      %v9535 = vadd.f32 %v9534, 0.1064488
      %v9536 = vmul.f32 %v9535, %v9527
      %v9537 = vadd.f32 %v9536, -0.14207031
      %v9538 = vmul.f32 %v9537, %v9527
      %v9539 = vadd.f32 %v9538, 0.19993454
      %v9540 = vmul.f32 %v9539, %v9527
      %v9541 = vadd.f32 %v9540, -0.33333147
      %v9542 = vmul.f32 %v9541, %v9527
      %v9543 = vmul.f32 %v9542, %v9526
      %v9544 = vadd.f32 %v9543, %v9526
      %vm9545 = vcmp.gt.f32.partialorder %v9509, %v9508
      %v9546 = vsub.f32 1.5707964, %v9544
      %v9547 = vsel %vm9545, %v9546, %v9544
      %vm9548 = vcmp.lt.f32.partialorder %v6039, 0.0
      %v9549 = vsub.f32 3.1415927, %v9547
      %v9550 = vsel %vm9548, %v9549, %v9547
      %vm9551 = vcmp.lt.s32.totalorder %v6039, 0
      %v9552 = vsel %vm9551, 3.1415927, 0.0
      %vm9553 = vcmp.eq.f32.partialorder %v6138, 0.0
      %v9554 = vsel %vm9553, %v9552, %v9550
      %vm9555 = vcmp.ne.f32.partialorder %v6039, %v6039
      %vm9556 = vcmp.ne.f32.partialorder %v6138, %v6138
      %vm9557 = vmor %vm9555, %vm9556
      %v9558 = vsel %vm9557, nan, %v9554
      %vm9559 = vcmp.lt.f32.partialorder %v6039, 0.0
      %v9560 = vsel %vm9559, 2.3561945, 0.7853982
      %vm9561 = vcmp.eq.s32.totalorder %v9508, inf
      %vm9562 = vcmp.eq.s32.totalorder %v9509, inf
      %vm9563 = vmand %vm9561, %vm9562
      %v9564 = vsel %vm9563, %v9560, %v9558
      %v9565 = vand.u32 2147483647, %v9564
      %v9566 = vand.u32 %v6138, 2147483648
      %v9567 = vor.u32 %v9565, %v9566
      %v9568 = vand.u32 2147483647, %v6040
      %v9569 = vand.u32 2147483647, %v6139
      %v9570 = vmin.f32 %v9568, %v9569
      %v9571 = vmax.f32 %v9568, %v9569
      %v9572 = vrcp.pop %v9571
      %v9573 = vmul.f32 %v9571, %v9572
      %v9574 = vsub.f32 1.0, %v9573
      %v9575 = vmul.f32 %v9572, %v9574
      %v9576 = vadd.f32 %v9572, %v9575
      %vm9577 = vweird.f32 %v9571
      %vm9578 = vweird.f32 %v9572
      %vm9579 = vmor %vm9577, %vm9578
      %v9580 = vsel %vm9579, %v9572, %v9576
      %v9581 = vand.u32 2147483647, %v9571
      %vm9582 = vcmp.eq.f32.partialorder %v9581, 8.507059e+37
      %v9583 = vand.u32 %v9571, 2147483648
      %v9584 = vor.u32 1.1754944e-38, %v9583
      %v9585 = vsel %vm9582, %v9584, %v9580
      %v9586 = vmul.f32 %v9570, %v9585
      %v9587 = vmul.f32 %v9586, %v9586
      %v9588 = vmul.f32 0.002785687, %v9587
      %v9589 = vadd.f32 %v9588, -0.015866
      %v9590 = vmul.f32 %v9589, %v9587
      %v9591 = vadd.f32 %v9590, 0.04247222
      %v9592 = vmul.f32 %v9591, %v9587
      %v9593 = vadd.f32 %v9592, -0.074975304
      %v9594 = vmul.f32 %v9593, %v9587
      %v9595 = vadd.f32 %v9594, 0.1064488
      %v9596 = vmul.f32 %v9595, %v9587
      %v9597 = vadd.f32 %v9596, -0.14207031
      %v9598 = vmul.f32 %v9597, %v9587
      %v9599 = vadd.f32 %v9598, 0.19993454
      %v9600 = vmul.f32 %v9599, %v9587
      %v9601 = vadd.f32 %v9600, -0.33333147
      %v9602 = vmul.f32 %v9601, %v9587
      %v9603 = vmul.f32 %v9602, %v9586
      %v9604 = vadd.f32 %v9603, %v9586
      %vm9605 = vcmp.gt.f32.partialorder %v9569, %v9568
      %v9606 = vsub.f32 1.5707964, %v9604
      %v9607 = vsel %vm9605, %v9606, %v9604
      %vm9608 = vcmp.lt.f32.partialorder %v6040, 0.0
      %v9609 = vsub.f32 3.1415927, %v9607
      %v9610 = vsel %vm9608, %v9609, %v9607
      %vm9611 = vcmp.lt.s32.totalorder %v6040, 0
      %v9612 = vsel %vm9611, 3.1415927, 0.0
      %vm9613 = vcmp.eq.f32.partialorder %v6139, 0.0
      %v9614 = vsel %vm9613, %v9612, %v9610
      %vm9615 = vcmp.ne.f32.partialorder %v6040, %v6040
      %vm9616 = vcmp.ne.f32.partialorder %v6139, %v6139
      %vm9617 = vmor %vm9615, %vm9616
      %v9618 = vsel %vm9617, nan, %v9614
      %vm9619 = vcmp.lt.f32.partialorder %v6040, 0.0
      %v9620 = vsel %vm9619, 2.3561945, 0.7853982
      %vm9621 = vcmp.eq.s32.totalorder %v9568, inf
      %vm9622 = vcmp.eq.s32.totalorder %v9569, inf
      %vm9623 = vmand %vm9621, %vm9622
      %v9624 = vsel %vm9623, %v9620, %v9618
      %v9625 = vand.u32 2147483647, %v9624
      %v9626 = vand.u32 %v6139, 2147483648
      %v9627 = vor.u32 %v9625, %v9626
      %v9628 = vand.u32 2147483647, %v6041
      %v9629 = vand.u32 2147483647, %v6140
      %v9630 = vmin.f32 %v9628, %v9629
      %v9631 = vmax.f32 %v9628, %v9629
      %v9632 = vrcp.pop %v9631
      %v9633 = vmul.f32 %v9631, %v9632
      %v9634 = vsub.f32 1.0, %v9633
      %v9635 = vmul.f32 %v9632, %v9634
      %v9636 = vadd.f32 %v9632, %v9635
      %vm9637 = vweird.f32 %v9631
      %vm9638 = vweird.f32 %v9632
      %vm9639 = vmor %vm9637, %vm9638
      %v9640 = vsel %vm9639, %v9632, %v9636
      %v9641 = vand.u32 2147483647, %v9631
      %vm9642 = vcmp.eq.f32.partialorder %v9641, 8.507059e+37
      %v9643 = vand.u32 %v9631, 2147483648
      %v9644 = vor.u32 1.1754944e-38, %v9643
      %v9645 = vsel %vm9642, %v9644, %v9640
      %v9646 = vmul.f32 %v9630, %v9645
      %v9647 = vmul.f32 %v9646, %v9646
      %v9648 = vmul.f32 0.002785687, %v9647
      %v9649 = vadd.f32 %v9648, -0.015866
      %v9650 = vmul.f32 %v9649, %v9647
      %v9651 = vadd.f32 %v9650, 0.04247222
      %v9652 = vmul.f32 %v9651, %v9647
      %v9653 = vadd.f32 %v9652, -0.074975304
      %v9654 = vmul.f32 %v9653, %v9647
      %v9655 = vadd.f32 %v9654, 0.1064488
      %v9656 = vmul.f32 %v9655, %v9647
      %v9657 = vadd.f32 %v9656, -0.14207031
      %v9658 = vmul.f32 %v9657, %v9647
      %v9659 = vadd.f32 %v9658, 0.19993454
      %v9660 = vmul.f32 %v9659, %v9647
      %v9661 = vadd.f32 %v9660, -0.33333147
      %v9662 = vmul.f32 %v9661, %v9647
      %v9663 = vmul.f32 %v9662, %v9646
      %v9664 = vadd.f32 %v9663, %v9646
      %vm9665 = vcmp.gt.f32.partialorder %v9629, %v9628
      %v9666 = vsub.f32 1.5707964, %v9664
      %v9667 = vsel %vm9665, %v9666, %v9664
      %vm9668 = vcmp.lt.f32.partialorder %v6041, 0.0
      %v9669 = vsub.f32 3.1415927, %v9667
      %v9670 = vsel %vm9668, %v9669, %v9667
      %vm9671 = vcmp.lt.s32.totalorder %v6041, 0
      %v9672 = vsel %vm9671, 3.1415927, 0.0
      %vm9673 = vcmp.eq.f32.partialorder %v6140, 0.0
      %v9674 = vsel %vm9673, %v9672, %v9670
      %vm9675 = vcmp.ne.f32.partialorder %v6041, %v6041
      %vm9676 = vcmp.ne.f32.partialorder %v6140, %v6140
      %vm9677 = vmor %vm9675, %vm9676
      %v9678 = vsel %vm9677, nan, %v9674
      %vm9679 = vcmp.lt.f32.partialorder %v6041, 0.0
      %v9680 = vsel %vm9679, 2.3561945, 0.7853982
      %vm9681 = vcmp.eq.s32.totalorder %v9628, inf
      %vm9682 = vcmp.eq.s32.totalorder %v9629, inf
      %vm9683 = vmand %vm9681, %vm9682
      %v9684 = vsel %vm9683, %v9680, %v9678
      %v9685 = vand.u32 2147483647, %v9684
      %v9686 = vand.u32 %v6140, 2147483648
      %v9687 = vor.u32 %v9685, %v9686
      %v9688 = vand.u32 2147483647, %v6042
      %v9689 = vand.u32 2147483647, %v6141
      %v9690 = vmin.f32 %v9688, %v9689
      %v9691 = vmax.f32 %v9688, %v9689
      %v9692 = vrcp.pop %v9691
      %v9693 = vmul.f32 %v9691, %v9692
      %v9694 = vsub.f32 1.0, %v9693
      %v9695 = vmul.f32 %v9692, %v9694
      %v9696 = vadd.f32 %v9692, %v9695
      %vm9697 = vweird.f32 %v9691
      %vm9698 = vweird.f32 %v9692
      %vm9699 = vmor %vm9697, %vm9698
      %v9700 = vsel %vm9699, %v9692, %v9696
      %v9701 = vand.u32 2147483647, %v9691
      %vm9702 = vcmp.eq.f32.partialorder %v9701, 8.507059e+37
      %v9703 = vand.u32 %v9691, 2147483648
      %v9704 = vor.u32 1.1754944e-38, %v9703
      %v9705 = vsel %vm9702, %v9704, %v9700
      %v9706 = vmul.f32 %v9690, %v9705
      %v9707 = vmul.f32 %v9706, %v9706
      %v9708 = vmul.f32 0.002785687, %v9707
      %v9709 = vadd.f32 %v9708, -0.015866
      %v9710 = vmul.f32 %v9709, %v9707
      %v9711 = vadd.f32 %v9710, 0.04247222
      %v9712 = vmul.f32 %v9711, %v9707
      %v9713 = vadd.f32 %v9712, -0.074975304
      %v9714 = vmul.f32 %v9713, %v9707
      %v9715 = vadd.f32 %v9714, 0.1064488
      %v9716 = vmul.f32 %v9715, %v9707
      %v9717 = vadd.f32 %v9716, -0.14207031
      %v9718 = vmul.f32 %v9717, %v9707
      %v9719 = vadd.f32 %v9718, 0.19993454
      %v9720 = vmul.f32 %v9719, %v9707
      %v9721 = vadd.f32 %v9720, -0.33333147
      %v9722 = vmul.f32 %v9721, %v9707
      %v9723 = vmul.f32 %v9722, %v9706
      %v9724 = vadd.f32 %v9723, %v9706
      %vm9725 = vcmp.gt.f32.partialorder %v9689, %v9688
      %v9726 = vsub.f32 1.5707964, %v9724
      %v9727 = vsel %vm9725, %v9726, %v9724
      %vm9728 = vcmp.lt.f32.partialorder %v6042, 0.0
      %v9729 = vsub.f32 3.1415927, %v9727
      %v9730 = vsel %vm9728, %v9729, %v9727
      %vm9731 = vcmp.lt.s32.totalorder %v6042, 0
      %v9732 = vsel %vm9731, 3.1415927, 0.0
      %vm9733 = vcmp.eq.f32.partialorder %v6141, 0.0
      %v9734 = vsel %vm9733, %v9732, %v9730
      %vm9735 = vcmp.ne.f32.partialorder %v6042, %v6042
      %vm9736 = vcmp.ne.f32.partialorder %v6141, %v6141
      %vm9737 = vmor %vm9735, %vm9736
      %v9738 = vsel %vm9737, nan, %v9734
      %vm9739 = vcmp.lt.f32.partialorder %v6042, 0.0
      %v9740 = vsel %vm9739, 2.3561945, 0.7853982
      %vm9741 = vcmp.eq.s32.totalorder %v9688, inf
      %vm9742 = vcmp.eq.s32.totalorder %v9689, inf
      %vm9743 = vmand %vm9741, %vm9742
      %v9744 = vsel %vm9743, %v9740, %v9738
      %v9745 = vand.u32 2147483647, %v9744
      %v9746 = vand.u32 %v6141, 2147483648
      %v9747 = vor.u32 %v9745, %v9746
      %v9748 = vand.u32 2147483647, %v6043
      %v9749 = vand.u32 2147483647, %v6142
      %v9750 = vmin.f32 %v9748, %v9749
      %v9751 = vmax.f32 %v9748, %v9749
      %v9752 = vrcp.pop %v9751
      %v9753 = vmul.f32 %v9751, %v9752
      %v9754 = vsub.f32 1.0, %v9753
      %v9755 = vmul.f32 %v9752, %v9754
      %v9756 = vadd.f32 %v9752, %v9755
      %vm9757 = vweird.f32 %v9751
      %vm9758 = vweird.f32 %v9752
      %vm9759 = vmor %vm9757, %vm9758
      %v9760 = vsel %vm9759, %v9752, %v9756
      %v9761 = vand.u32 2147483647, %v9751
      %vm9762 = vcmp.eq.f32.partialorder %v9761, 8.507059e+37
      %v9763 = vand.u32 %v9751, 2147483648
      %v9764 = vor.u32 1.1754944e-38, %v9763
      %v9765 = vsel %vm9762, %v9764, %v9760
      %v9766 = vmul.f32 %v9750, %v9765
      %v9767 = vmul.f32 %v9766, %v9766
      %v9768 = vmul.f32 0.002785687, %v9767
      %v9769 = vadd.f32 %v9768, -0.015866
      %v9770 = vmul.f32 %v9769, %v9767
      %v9771 = vadd.f32 %v9770, 0.04247222
      %v9772 = vmul.f32 %v9771, %v9767
      %v9773 = vadd.f32 %v9772, -0.074975304
      %v9774 = vmul.f32 %v9773, %v9767
      %v9775 = vadd.f32 %v9774, 0.1064488
      %v9776 = vmul.f32 %v9775, %v9767
      %v9777 = vadd.f32 %v9776, -0.14207031
      %v9778 = vmul.f32 %v9777, %v9767
      %v9779 = vadd.f32 %v9778, 0.19993454
      %v9780 = vmul.f32 %v9779, %v9767
      %v9781 = vadd.f32 %v9780, -0.33333147
      %v9782 = vmul.f32 %v9781, %v9767
      %v9783 = vmul.f32 %v9782, %v9766
      %v9784 = vadd.f32 %v9783, %v9766
      %vm9785 = vcmp.gt.f32.partialorder %v9749, %v9748
      %v9786 = vsub.f32 1.5707964, %v9784
      %v9787 = vsel %vm9785, %v9786, %v9784
      %vm9788 = vcmp.lt.f32.partialorder %v6043, 0.0
      %v9789 = vsub.f32 3.1415927, %v9787
      %v9790 = vsel %vm9788, %v9789, %v9787
      %vm9791 = vcmp.lt.s32.totalorder %v6043, 0
      %v9792 = vsel %vm9791, 3.1415927, 0.0
      %vm9793 = vcmp.eq.f32.partialorder %v6142, 0.0
      %v9794 = vsel %vm9793, %v9792, %v9790
      %vm9795 = vcmp.ne.f32.partialorder %v6043, %v6043
      %vm9796 = vcmp.ne.f32.partialorder %v6142, %v6142
      %vm9797 = vmor %vm9795, %vm9796
      %v9798 = vsel %vm9797, nan, %v9794
      %vm9799 = vcmp.lt.f32.partialorder %v6043, 0.0
      %v9800 = vsel %vm9799, 2.3561945, 0.7853982
      %vm9801 = vcmp.eq.s32.totalorder %v9748, inf
      %vm9802 = vcmp.eq.s32.totalorder %v9749, inf
      %vm9803 = vmand %vm9801, %vm9802
      %v9804 = vsel %vm9803, %v9800, %v9798
      %v9805 = vand.u32 2147483647, %v9804
      %v9806 = vand.u32 %v6142, 2147483648
      %v9807 = vor.u32 %v9805, %v9806
      %v9808 = vand.u32 2147483647, %v6044
      %v9809 = vand.u32 2147483647, %v6143
      %v9810 = vmin.f32 %v9808, %v9809
      %v9811 = vmax.f32 %v9808, %v9809
      %v9812 = vrcp.pop %v9811
      %v9813 = vmul.f32 %v9811, %v9812
      %v9814 = vsub.f32 1.0, %v9813
      %v9815 = vmul.f32 %v9812, %v9814
      %v9816 = vadd.f32 %v9812, %v9815
      %vm9817 = vweird.f32 %v9811
      %vm9818 = vweird.f32 %v9812
      %vm9819 = vmor %vm9817, %vm9818
      %v9820 = vsel %vm9819, %v9812, %v9816
      %v9821 = vand.u32 2147483647, %v9811
      %vm9822 = vcmp.eq.f32.partialorder %v9821, 8.507059e+37
      %v9823 = vand.u32 %v9811, 2147483648
      %v9824 = vor.u32 1.1754944e-38, %v9823
      %v9825 = vsel %vm9822, %v9824, %v9820
      %v9826 = vmul.f32 %v9810, %v9825
      %v9827 = vmul.f32 %v9826, %v9826
      %v9828 = vmul.f32 0.002785687, %v9827
      %v9829 = vadd.f32 %v9828, -0.015866
      %v9830 = vmul.f32 %v9829, %v9827
      %v9831 = vadd.f32 %v9830, 0.04247222
      %v9832 = vmul.f32 %v9831, %v9827
      %v9833 = vadd.f32 %v9832, -0.074975304
      %v9834 = vmul.f32 %v9833, %v9827
      %v9835 = vadd.f32 %v9834, 0.1064488
      %v9836 = vmul.f32 %v9835, %v9827
      %v9837 = vadd.f32 %v9836, -0.14207031
      %v9838 = vmul.f32 %v9837, %v9827
      %v9839 = vadd.f32 %v9838, 0.19993454
      %v9840 = vmul.f32 %v9839, %v9827
      %v9841 = vadd.f32 %v9840, -0.33333147
      %v9842 = vmul.f32 %v9841, %v9827
      %v9843 = vmul.f32 %v9842, %v9826
      %v9844 = vadd.f32 %v9843, %v9826
      %vm9845 = vcmp.gt.f32.partialorder %v9809, %v9808
      %v9846 = vsub.f32 1.5707964, %v9844
      %v9847 = vsel %vm9845, %v9846, %v9844
      %vm9848 = vcmp.lt.f32.partialorder %v6044, 0.0
      %v9849 = vsub.f32 3.1415927, %v9847
      %v9850 = vsel %vm9848, %v9849, %v9847
      %vm9851 = vcmp.lt.s32.totalorder %v6044, 0
      %v9852 = vsel %vm9851, 3.1415927, 0.0
      %vm9853 = vcmp.eq.f32.partialorder %v6143, 0.0
      %v9854 = vsel %vm9853, %v9852, %v9850
      %vm9855 = vcmp.ne.f32.partialorder %v6044, %v6044
      %vm9856 = vcmp.ne.f32.partialorder %v6143, %v6143
      %vm9857 = vmor %vm9855, %vm9856
      %v9858 = vsel %vm9857, nan, %v9854
      %vm9859 = vcmp.lt.f32.partialorder %v6044, 0.0
      %v9860 = vsel %vm9859, 2.3561945, 0.7853982
      %vm9861 = vcmp.eq.s32.totalorder %v9808, inf
      %vm9862 = vcmp.eq.s32.totalorder %v9809, inf
      %vm9863 = vmand %vm9861, %vm9862
      %v9864 = vsel %vm9863, %v9860, %v9858
      %v9865 = vand.u32 2147483647, %v9864
      %v9866 = vand.u32 %v6143, 2147483648
      %v9867 = vor.u32 %v9865, %v9866
      %v9868 = vand.u32 2147483647, %v6045
      %v9869 = vand.u32 2147483647, %v6144
      %v9870 = vmin.f32 %v9868, %v9869
      %v9871 = vmax.f32 %v9868, %v9869
      %v9872 = vrcp.pop %v9871
      %v9873 = vmul.f32 %v9871, %v9872
      %v9874 = vsub.f32 1.0, %v9873
      %v9875 = vmul.f32 %v9872, %v9874
      %v9876 = vadd.f32 %v9872, %v9875
      %vm9877 = vweird.f32 %v9871
      %vm9878 = vweird.f32 %v9872
      %vm9879 = vmor %vm9877, %vm9878
      %v9880 = vsel %vm9879, %v9872, %v9876
      %v9881 = vand.u32 2147483647, %v9871
      %vm9882 = vcmp.eq.f32.partialorder %v9881, 8.507059e+37
      %v9883 = vand.u32 %v9871, 2147483648
      %v9884 = vor.u32 1.1754944e-38, %v9883
      %v9885 = vsel %vm9882, %v9884, %v9880
      %v9886 = vmul.f32 %v9870, %v9885
      %v9887 = vmul.f32 %v9886, %v9886
      %v9888 = vmul.f32 0.002785687, %v9887
      %v9889 = vadd.f32 %v9888, -0.015866
      %v9890 = vmul.f32 %v9889, %v9887
      %v9891 = vadd.f32 %v9890, 0.04247222
      %v9892 = vmul.f32 %v9891, %v9887
      %v9893 = vadd.f32 %v9892, -0.074975304
      %v9894 = vmul.f32 %v9893, %v9887
      %v9895 = vadd.f32 %v9894, 0.1064488
      %v9896 = vmul.f32 %v9895, %v9887
      %v9897 = vadd.f32 %v9896, -0.14207031
      %v9898 = vmul.f32 %v9897, %v9887
      %v9899 = vadd.f32 %v9898, 0.19993454
      %v9900 = vmul.f32 %v9899, %v9887
      %v9901 = vadd.f32 %v9900, -0.33333147
      %v9902 = vmul.f32 %v9901, %v9887
      %v9903 = vmul.f32 %v9902, %v9886
      %v9904 = vadd.f32 %v9903, %v9886
      %vm9905 = vcmp.gt.f32.partialorder %v9869, %v9868
      %v9906 = vsub.f32 1.5707964, %v9904
      %v9907 = vsel %vm9905, %v9906, %v9904
      %vm9908 = vcmp.lt.f32.partialorder %v6045, 0.0
      %v9909 = vsub.f32 3.1415927, %v9907
      %v9910 = vsel %vm9908, %v9909, %v9907
      %vm9911 = vcmp.lt.s32.totalorder %v6045, 0
      %v9912 = vsel %vm9911, 3.1415927, 0.0
      %vm9913 = vcmp.eq.f32.partialorder %v6144, 0.0
      %v9914 = vsel %vm9913, %v9912, %v9910
      %vm9915 = vcmp.ne.f32.partialorder %v6045, %v6045
      %vm9916 = vcmp.ne.f32.partialorder %v6144, %v6144
      %vm9917 = vmor %vm9915, %vm9916
      %v9918 = vsel %vm9917, nan, %v9914
      %vm9919 = vcmp.lt.f32.partialorder %v6045, 0.0
      %v9920 = vsel %vm9919, 2.3561945, 0.7853982
      %vm9921 = vcmp.eq.s32.totalorder %v9868, inf
      %vm9922 = vcmp.eq.s32.totalorder %v9869, inf
      %vm9923 = vmand %vm9921, %vm9922
      %v9924 = vsel %vm9923, %v9920, %v9918
      %v9925 = vand.u32 2147483647, %v9924
      %v9926 = vand.u32 %v6144, 2147483648
      %v9927 = vor.u32 %v9925, %v9926
      %v9928 = vand.u32 2147483647, %v6046
      %v9929 = vand.u32 2147483647, %v6145
      %v9930 = vmin.f32 %v9928, %v9929
      %v9931 = vmax.f32 %v9928, %v9929
      %v9932 = vrcp.pop %v9931
      %v9933 = vmul.f32 %v9931, %v9932
      %v9934 = vsub.f32 1.0, %v9933
      %v9935 = vmul.f32 %v9932, %v9934
      %v9936 = vadd.f32 %v9932, %v9935
      %vm9937 = vweird.f32 %v9931
      %vm9938 = vweird.f32 %v9932
      %vm9939 = vmor %vm9937, %vm9938
      %v9940 = vsel %vm9939, %v9932, %v9936
      %v9941 = vand.u32 2147483647, %v9931
      %vm9942 = vcmp.eq.f32.partialorder %v9941, 8.507059e+37
      %v9943 = vand.u32 %v9931, 2147483648
      %v9944 = vor.u32 1.1754944e-38, %v9943
      %v9945 = vsel %vm9942, %v9944, %v9940
      %v9946 = vmul.f32 %v9930, %v9945
      %v9947 = vmul.f32 %v9946, %v9946
      %v9948 = vmul.f32 0.002785687, %v9947
      %v9949 = vadd.f32 %v9948, -0.015866
      %v9950 = vmul.f32 %v9949, %v9947
      %v9951 = vadd.f32 %v9950, 0.04247222
      %v9952 = vmul.f32 %v9951, %v9947
      %v9953 = vadd.f32 %v9952, -0.074975304
      %v9954 = vmul.f32 %v9953, %v9947
      %v9955 = vadd.f32 %v9954, 0.1064488
      %v9956 = vmul.f32 %v9955, %v9947
      %v9957 = vadd.f32 %v9956, -0.14207031
      %v9958 = vmul.f32 %v9957, %v9947
      %v9959 = vadd.f32 %v9958, 0.19993454
      %v9960 = vmul.f32 %v9959, %v9947
      %v9961 = vadd.f32 %v9960, -0.33333147
      %v9962 = vmul.f32 %v9961, %v9947
      %v9963 = vmul.f32 %v9962, %v9946
      %v9964 = vadd.f32 %v9963, %v9946
      %vm9965 = vcmp.gt.f32.partialorder %v9929, %v9928
      %v9966 = vsub.f32 1.5707964, %v9964
      %v9967 = vsel %vm9965, %v9966, %v9964
      %vm9968 = vcmp.lt.f32.partialorder %v6046, 0.0
      %v9969 = vsub.f32 3.1415927, %v9967
      %v9970 = vsel %vm9968, %v9969, %v9967
      %vm9971 = vcmp.lt.s32.totalorder %v6046, 0
      %v9972 = vsel %vm9971, 3.1415927, 0.0
      %vm9973 = vcmp.eq.f32.partialorder %v6145, 0.0
      %v9974 = vsel %vm9973, %v9972, %v9970
      %vm9975 = vcmp.ne.f32.partialorder %v6046, %v6046
      %vm9976 = vcmp.ne.f32.partialorder %v6145, %v6145
      %vm9977 = vmor %vm9975, %vm9976
      %v9978 = vsel %vm9977, nan, %v9974
      %vm9979 = vcmp.lt.f32.partialorder %v6046, 0.0
      %v9980 = vsel %vm9979, 2.3561945, 0.7853982
      %vm9981 = vcmp.eq.s32.totalorder %v9928, inf
      %vm9982 = vcmp.eq.s32.totalorder %v9929, inf
      %vm9983 = vmand %vm9981, %vm9982
      %v9984 = vsel %vm9983, %v9980, %v9978
      %v9985 = vand.u32 2147483647, %v9984
      %v9986 = vand.u32 %v6145, 2147483648
      %v9987 = vor.u32 %v9985, %v9986
      %v9988 = vand.u32 2147483647, %v6047
      %v9989 = vand.u32 2147483647, %v6146
      %v9990 = vmin.f32 %v9988, %v9989
      %v9991 = vmax.f32 %v9988, %v9989
      %v9992 = vrcp.pop %v9991
      %v9993 = vmul.f32 %v9991, %v9992
      %v9994 = vsub.f32 1.0, %v9993
      %v9995 = vmul.f32 %v9992, %v9994
      %v9996 = vadd.f32 %v9992, %v9995
      %vm9997 = vweird.f32 %v9991
      %vm9998 = vweird.f32 %v9992
      %vm9999 = vmor %vm9997, %vm9998
      %v10000 = vsel %vm9999, %v9992, %v9996
      %v10001 = vand.u32 2147483647, %v9991
      %vm10002 = vcmp.eq.f32.partialorder %v10001, 8.507059e+37
      %v10003 = vand.u32 %v9991, 2147483648
      %v10004 = vor.u32 1.1754944e-38, %v10003
      %v10005 = vsel %vm10002, %v10004, %v10000
      %v10006 = vmul.f32 %v9990, %v10005
      %v10007 = vmul.f32 %v10006, %v10006
      %v10008 = vmul.f32 0.002785687, %v10007
      %v10009 = vadd.f32 %v10008, -0.015866
      %v10010 = vmul.f32 %v10009, %v10007
      %v10011 = vadd.f32 %v10010, 0.04247222
      %v10012 = vmul.f32 %v10011, %v10007
      %v10013 = vadd.f32 %v10012, -0.074975304
      %v10014 = vmul.f32 %v10013, %v10007
      %v10015 = vadd.f32 %v10014, 0.1064488
      %v10016 = vmul.f32 %v10015, %v10007
      %v10017 = vadd.f32 %v10016, -0.14207031
      %v10018 = vmul.f32 %v10017, %v10007
      %v10019 = vadd.f32 %v10018, 0.19993454
      %v10020 = vmul.f32 %v10019, %v10007
      %v10021 = vadd.f32 %v10020, -0.33333147
      %v10022 = vmul.f32 %v10021, %v10007
      %v10023 = vmul.f32 %v10022, %v10006
      %v10024 = vadd.f32 %v10023, %v10006
      %vm10025 = vcmp.gt.f32.partialorder %v9989, %v9988
      %v10026 = vsub.f32 1.5707964, %v10024
      %v10027 = vsel %vm10025, %v10026, %v10024
      %vm10028 = vcmp.lt.f32.partialorder %v6047, 0.0
      %v10029 = vsub.f32 3.1415927, %v10027
      %v10030 = vsel %vm10028, %v10029, %v10027
      %vm10031 = vcmp.lt.s32.totalorder %v6047, 0
      %v10032 = vsel %vm10031, 3.1415927, 0.0
      %vm10033 = vcmp.eq.f32.partialorder %v6146, 0.0
      %v10034 = vsel %vm10033, %v10032, %v10030
      %vm10035 = vcmp.ne.f32.partialorder %v6047, %v6047
      %vm10036 = vcmp.ne.f32.partialorder %v6146, %v6146
      %vm10037 = vmor %vm10035, %vm10036
      %v10038 = vsel %vm10037, nan, %v10034
      %vm10039 = vcmp.lt.f32.partialorder %v6047, 0.0
      %v10040 = vsel %vm10039, 2.3561945, 0.7853982
      %vm10041 = vcmp.eq.s32.totalorder %v9988, inf
      %vm10042 = vcmp.eq.s32.totalorder %v9989, inf
      %vm10043 = vmand %vm10041, %vm10042
      %v10044 = vsel %vm10043, %v10040, %v10038
      %v10045 = vand.u32 2147483647, %v10044
      %v10046 = vand.u32 %v6146, 2147483648
      %v10047 = vor.u32 %v10045, %v10046
      %v10048 = vand.u32 2147483647, %v6048
      %v10049 = vand.u32 2147483647, %v6147
      %v10050 = vmin.f32 %v10048, %v10049
      %v10051 = vmax.f32 %v10048, %v10049
      %v10052 = vrcp.pop %v10051
      %v10053 = vmul.f32 %v10051, %v10052
      %v10054 = vsub.f32 1.0, %v10053
      %v10055 = vmul.f32 %v10052, %v10054
      %v10056 = vadd.f32 %v10052, %v10055
      %vm10057 = vweird.f32 %v10051
      %vm10058 = vweird.f32 %v10052
      %vm10059 = vmor %vm10057, %vm10058
      %v10060 = vsel %vm10059, %v10052, %v10056
      %v10061 = vand.u32 2147483647, %v10051
      %vm10062 = vcmp.eq.f32.partialorder %v10061, 8.507059e+37
      %v10063 = vand.u32 %v10051, 2147483648
      %v10064 = vor.u32 1.1754944e-38, %v10063
      %v10065 = vsel %vm10062, %v10064, %v10060
      %v10066 = vmul.f32 %v10050, %v10065
      %v10067 = vmul.f32 %v10066, %v10066
      %v10068 = vmul.f32 0.002785687, %v10067
      %v10069 = vadd.f32 %v10068, -0.015866
      %v10070 = vmul.f32 %v10069, %v10067
      %v10071 = vadd.f32 %v10070, 0.04247222
      %v10072 = vmul.f32 %v10071, %v10067
      %v10073 = vadd.f32 %v10072, -0.074975304
      %v10074 = vmul.f32 %v10073, %v10067
      %v10075 = vadd.f32 %v10074, 0.1064488
      %v10076 = vmul.f32 %v10075, %v10067
      %v10077 = vadd.f32 %v10076, -0.14207031
      %v10078 = vmul.f32 %v10077, %v10067
      %v10079 = vadd.f32 %v10078, 0.19993454
      %v10080 = vmul.f32 %v10079, %v10067
      %v10081 = vadd.f32 %v10080, -0.33333147
      %v10082 = vmul.f32 %v10081, %v10067
      %v10083 = vmul.f32 %v10082, %v10066
      %v10084 = vadd.f32 %v10083, %v10066
      %vm10085 = vcmp.gt.f32.partialorder %v10049, %v10048
      %v10086 = vsub.f32 1.5707964, %v10084
      %v10087 = vsel %vm10085, %v10086, %v10084
      %vm10088 = vcmp.lt.f32.partialorder %v6048, 0.0
      %v10089 = vsub.f32 3.1415927, %v10087
      %v10090 = vsel %vm10088, %v10089, %v10087
      %vm10091 = vcmp.lt.s32.totalorder %v6048, 0
      %v10092 = vsel %vm10091, 3.1415927, 0.0
      %vm10093 = vcmp.eq.f32.partialorder %v6147, 0.0
      %v10094 = vsel %vm10093, %v10092, %v10090
      %vm10095 = vcmp.ne.f32.partialorder %v6048, %v6048
      %vm10096 = vcmp.ne.f32.partialorder %v6147, %v6147
      %vm10097 = vmor %vm10095, %vm10096
      %v10098 = vsel %vm10097, nan, %v10094
      %vm10099 = vcmp.lt.f32.partialorder %v6048, 0.0
      %v10100 = vsel %vm10099, 2.3561945, 0.7853982
      %vm10101 = vcmp.eq.s32.totalorder %v10048, inf
      %vm10102 = vcmp.eq.s32.totalorder %v10049, inf
      %vm10103 = vmand %vm10101, %vm10102
      %v10104 = vsel %vm10103, %v10100, %v10098
      %v10105 = vand.u32 2147483647, %v10104
      %v10106 = vand.u32 %v6147, 2147483648
      %v10107 = vor.u32 %v10105, %v10106
      %v10108 = vsub.f32 %v6207, %v8187
      %v10109 = vsub.f32 %v6267, %v8247
      %v10110 = vsub.f32 %v6327, %v8307
      %v10111 = vsub.f32 %v6387, %v8367
      %v10112 = vsub.f32 %v6447, %v8427
      %v10113 = vsub.f32 %v6507, %v8487
      %v10114 = vsub.f32 %v6567, %v8547
      %v10115 = vsub.f32 %v6627, %v8607
      %v10116 = vsub.f32 %v6687, %v8667
      %v10117 = vsub.f32 %v6747, %v8727
      %v10118 = vsub.f32 %v6807, %v8787
      %v10119 = vsub.f32 %v6867, %v8847
      %v10120 = vsub.f32 %v6927, %v8907
      %v10121 = vsub.f32 %v6987, %v8967
      %v10122 = vsub.f32 %v7047, %v9027
      %v10123 = vsub.f32 %v7107, %v9087
      %v10124 = vsub.f32 %v7167, %v9147
      %v10125 = vsub.f32 %v7227, %v9207
      %v10126 = vsub.f32 %v7287, %v9267
      %v10127 = vsub.f32 %v7347, %v9327
      %v10128 = vsub.f32 %v7407, %v9387
      %v10129 = vsub.f32 %v7467, %v9447
      %v10130 = vsub.f32 %v7527, %v9507
      %v10131 = vsub.f32 %v7587, %v9567
      %v10132 = vsub.f32 %v7647, %v9627
      %v10133 = vsub.f32 %v7707, %v9687
      %v10134 = vsub.f32 %v7767, %v9747
      %v10135 = vsub.f32 %v7827, %v9807
      %v10136 = vsub.f32 %v7887, %v9867
      %v10137 = vsub.f32 %v7947, %v9927
      %v10138 = vsub.f32 %v8007, %v9987
      %v10139 = vsub.f32 %v8067, %v10047
      %v10140 = vsub.f32 %v8127, %v10107
      %v10141 = vand.u32 2147483647, %v10108
      %v10142 = vand.u32 2147483647, %v10109
      %v10143 = vand.u32 2147483647, %v10110
      %v10144 = vand.u32 2147483647, %v10111
      %v10145 = vand.u32 2147483647, %v10112
      %v10146 = vand.u32 2147483647, %v10113
      %v10147 = vand.u32 2147483647, %v10114
      %v10148 = vand.u32 2147483647, %v10115
      %v10149 = vand.u32 2147483647, %v10116
      %v10150 = vand.u32 2147483647, %v10117
      %v10151 = vand.u32 2147483647, %v10118
      %v10152 = vand.u32 2147483647, %v10119
      %v10153 = vand.u32 2147483647, %v10120
      %v10154 = vand.u32 2147483647, %v10121
      %v10155 = vand.u32 2147483647, %v10122
      %v10156 = vand.u32 2147483647, %v10123
      %v10157 = vand.u32 2147483647, %v10124
      %v10158 = vand.u32 2147483647, %v10125
      %v10159 = vand.u32 2147483647, %v10126
      %v10160 = vand.u32 2147483647, %v10127
      %v10161 = vand.u32 2147483647, %v10128
      %v10162 = vand.u32 2147483647, %v10129
      %v10163 = vand.u32 2147483647, %v10130
      %v10164 = vand.u32 2147483647, %v10131
      %v10165 = vand.u32 2147483647, %v10132
      %v10166 = vand.u32 2147483647, %v10133
      %v10167 = vand.u32 2147483647, %v10134
      %v10168 = vand.u32 2147483647, %v10135
      %v10169 = vand.u32 2147483647, %v10136
      %v10170 = vand.u32 2147483647, %v10137
      %v10171 = vand.u32 2147483647, %v10138
      %v10172 = vand.u32 2147483647, %v10139
      %v10173 = vand.u32 2147483647, %v10140
      %s10174 = sadd.s32 %s19, %s20
      %s10175 = smul.u32 %s10174, 128
      %v10176 = vlaneseq
      %v10177 = vand.u32 %v10176, 127
      %v10178 = vstv %s10175
      %v10179 = vadd.s32 %v10177, %v10178
      %vm10180 = vcmp.lt.s32.totalorder %v10179, 17
      %v10181 = vadd.f32 %v5719, %v5720
      %v10182 = vadd.f32 %v10181, %v5721
      %v10183 = vadd.f32 %v10182, %v5722
      %v10184 = vadd.f32 %v10183, %v5723
      %v10185 = vadd.f32 %v10184, %v5724
      %v10186 = vadd.f32 %v10185, %v5725
      %v10187 = vadd.f32 %v10186, %v5726
      %v10188 = vadd.f32 %v10187, %v5727
      %v10189 = vadd.f32 %v10188, %v5728
      %v10190 = vadd.f32 %v10189, %v5729
      %v10191 = vadd.f32 %v10190, %v5730
      %v10192 = vadd.f32 %v10191, %v5731
      %v10193 = vadd.f32 %v10192, %v5732
      %v10194 = vadd.f32 %v10193, %v5733
      %v10195 = vadd.f32 %v10194, %v5734
      %v10196 = vadd.f32 %v10195, %v5735
      %v10197 = vadd.f32 %v10196, %v5736
      %v10198 = vadd.f32 %v10197, %v5737
      %v10199 = vadd.f32 %v10198, %v5738
      %v10200 = vadd.f32 %v10199, %v5739
      %v10201 = vadd.f32 %v10200, %v5740
      %v10202 = vadd.f32 %v10201, %v5741
      %v10203 = vadd.f32 %v10202, %v5742
      %v10204 = vadd.f32 %v10203, %v5743
      %v10205 = vadd.f32 %v10204, %v5744
      %v10206 = vadd.f32 %v10205, %v5745
      %v10207 = vadd.f32 %v10206, %v5746
      %v10208 = vadd.f32 %v10207, %v5747
      %v10209 = vadd.f32 %v10208, %v5748
      %v10210 = vadd.f32 %v10209, %v5749
      %v10211 = vadd.f32 %v10210, %v5750
      %v10212 = vadd.f32 %v10211, %v5751
      %v10213 = vrot.slane %v10212, 4
      %v10214 = vadd.f32 %v10212, %v10213
      %v10215 = vrot.slane %v10214, 2
      %v10216 = vadd.f32 %v10214, %v10215
      %v10217 = vrot.slane %v10216, 1
      %v10218 = vadd.f32 %v10216, %v10217
      %v10219 = vsel %vm10180, %v10218, 0.0
      %v10220 = vadd.f32 %v10141, %v10142
      %v10221 = vadd.f32 %v10220, %v10143
      %v10222 = vadd.f32 %v10221, %v10144
      %v10223 = vadd.f32 %v10222, %v10145
      %v10224 = vadd.f32 %v10223, %v10146
      %v10225 = vadd.f32 %v10224, %v10147
      %v10226 = vadd.f32 %v10225, %v10148
      %v10227 = vadd.f32 %v10226, %v10149
      %v10228 = vadd.f32 %v10227, %v10150
      %v10229 = vadd.f32 %v10228, %v10151
      %v10230 = vadd.f32 %v10229, %v10152
      %v10231 = vadd.f32 %v10230, %v10153
      %v10232 = vadd.f32 %v10231, %v10154
      %v10233 = vadd.f32 %v10232, %v10155
      %v10234 = vadd.f32 %v10233, %v10156
      %v10235 = vadd.f32 %v10234, %v10157
      %v10236 = vadd.f32 %v10235, %v10158
      %v10237 = vadd.f32 %v10236, %v10159
      %v10238 = vadd.f32 %v10237, %v10160
      %v10239 = vadd.f32 %v10238, %v10161
      %v10240 = vadd.f32 %v10239, %v10162
      %v10241 = vadd.f32 %v10240, %v10163
      %v10242 = vadd.f32 %v10241, %v10164
      %v10243 = vadd.f32 %v10242, %v10165
      %v10244 = vadd.f32 %v10243, %v10166
      %v10245 = vadd.f32 %v10244, %v10167
      %v10246 = vadd.f32 %v10245, %v10168
      %v10247 = vadd.f32 %v10246, %v10169
      %v10248 = vadd.f32 %v10247, %v10170
      %v10249 = vadd.f32 %v10248, %v10171
      %v10250 = vadd.f32 %v10249, %v10172
      %v10251 = vadd.f32 %v10250, %v10173
      %v10252 = vrot.slane %v10251, 4
      %v10253 = vadd.f32 %v10251, %v10252
      %v10254 = vrot.slane %v10253, 2
      %v10255 = vadd.f32 %v10253, %v10254
      %v10256 = vrot.slane %v10255, 1
      %v10257 = vadd.f32 %v10255, %v10256
      %v10258 = vsel %vm10180, %v10257, 0.0
      %v10259 = vld [vmem:[%s186] sm:$0x3]
      %vm10260 = vcmask 1040384
      %v10261 = vsel %vm10260, %v10219, %v10258
      %v10262 = vadd.f32 %v10259, %v10261
      %10263 = vst [vmem:[%s186] sm:$0x3] %v10262
      %p10264 = scmp.lt.s32.totalorder %s18, 1
      %s10265 = scalar_select %p10264, %s18, 1
      %p10266 = scmp.lt.s32.totalorder %s19, 0
      %s10267 = scalar_select %p10266, %s19, 0
      %s10268 = sadd.s32 %s10267, %s10265
      %s10269 = smul.addr %s10268, 2
      %s10270 = scalar_lea.vmem %s2, %s10269
      // Predicated region
      $region33: #{binaural_loss.1} parent=27 // pred_check
        %p10271 = pneg %p103
      $region34: #{binaural_loss.1} parent=27 // pred_check_branch
        %10273 = sbr.rel (%p10271) target = $region36
      $region35: #{binaural_loss.1} parent=27 // pred_region
        _
      $region36: #{binaural_loss.1} parent=27 // pred_fallthru
        _
    $region28: #{binaural_loss.1} parent=5 // pred_fallthru
      _
    %p10274 = scmp.le.s32.totalorder 2, %s8
    // Predicated region
    $region37: #{binaural_loss.1} parent=5 // pred_check
      %p10275 = pneg %p10274
    $region38: #{binaural_loss.1} parent=5 // pred_check_branch
      %10277 = sbr.rel (%p10275) target = $region40
    $region39: #{binaural_loss.1} parent=5 // pred_region
      %s10278 = ssub.s32 %s8, 2
      // Predicated region
      $region41: #{binaural_loss.1} parent=39 // pred_check
        %p10279 = pneg %p109
      $region42: #{binaural_loss.1} parent=39 // pred_check_branch
        %10281 = sbr.rel (%p10279) target = $region44
      $region43: #{binaural_loss.1} parent=39 // pred_region
        %p10282 = scmp.lt.s32.totalorder %s21, 1
        %s10283 = scalar_select %p10282, %s21, 1
        %p10284 = scmp.lt.s32.totalorder %s22, 0
        %s10285 = scalar_select %p10284, %s22, 0
        %s10286 = sadd.s32 %s10285, %s10283
        %s10287 = smul.addr %s10286, 2
        %s10288 = scalar_lea.vmem %s2, %s10287
      $region44: #{binaural_loss.1} parent=39 // pred_fallthru
        _
    $region40: #{binaural_loss.1} parent=5 // pred_fallthru
      _
  $region6: #{binaural_loss.1} parent=0 // loop_footer
    %s12 = sadd.s32 1, %s8
  $region7: #{binaural_loss.1} parent=0 // loop_footer_branch
    %7 = sbr.rel target = $region3
  $region8: #{binaural_loss.1} parent=0 // loop_exit
    _

</llo_original>
